<compile_context>
chip_gen: v7x
topology: tpu7x:2x2x1
jax: 0.10.0
libtpu: 0.0.40
codegen_flags: <defaults>
</compile_context>

<pallas_src>
import functools

import jax
import jax.numpy as jnp
from jax import lax
from jax.experimental import pallas as pl
from jax.experimental.pallas import tpu as pltpu


def basic_block_kernel(x_ref, w1_ref, w2_ref,
                       s1_ref, b1_ref, s2_ref, b2_ref,
                       out_ref, x3_ref, hpad_ref, acc_ref, *, H, W, Wp):
    """Fused conv3x3 -> BN -> ReLU -> conv3x3 -> BN -> (+identity) -> ReLU.

    One grid step = one batch image, on a padded-width flat grid (row pitch Wp).

    x_ref    : ((H+3)*Wp, Cpad)      flat zero-padded input (compute dtype)
    w1_ref   : (3, 3*Cpad, Cpad)     dx-merged HWIO weights, conv1
    w2_ref   : (3, 3*Cpad, Cpad)     dx-merged HWIO weights, conv2
    s*/b*    : (1, Cpad)             folded BN scale / shift (f32)
    out_ref  : (H*Wp, Cpad)          compute-dtype output (garbage cols kept)
    x3_ref   : ((H+2)*Wp, 3*Cpad)    VMEM scratch: dx-merged LHS (reused)
    hpad_ref : ((H+3)*Wp, Cpad)      VMEM scratch: re-padded intermediate
    acc_ref  : (H*Wp, Cpad)          VMEM scratch: f32 accumulator
    """
    Cp = x_ref.shape[-1]
    Lin = (H + 3) * Wp
    L3 = (H + 2) * Wp
    Mrows = H * Wp
    cdt = x_ref.dtype

    # Hoist BN params (read once).
    s1 = s1_ref[...]
    b1 = b1_ref[...]
    s2 = s2_ref[...]
    b2 = b2_ref[...]

    # Valid-column mask on the padded-width grid (cols [W, Wp) are garbage).
    col = lax.broadcasted_iota(jnp.int32, (Mrows, 1), 0) % Wp
    valid = col < W

    # ---- conv1: build the dx-merged LHS once (three contiguous copies), then
    # 3 MXU matmuls with K = 3*Cpad accumulating into the f32 scratch.
    for dx in range(3):
        x3_ref[:, dx * Cp:(dx + 1) * Cp] = x_ref[dx:dx + L3, :]

    acc_ref[...] = jnp.dot(x3_ref[0:Mrows, :], w1_ref[0],
                           preferred_element_type=jnp.float32)
    acc_ref[...] += jnp.dot(x3_ref[Wp:Wp + Mrows, :], w1_ref[1],
                            preferred_element_type=jnp.float32)
    acc_ref[...] += jnp.dot(x3_ref[2 * Wp:2 * Wp + Mrows, :], w1_ref[2],
                            preferred_element_type=jnp.float32)

    # ---- bn1 (folded, f32) + relu; zero garbage columns (this also zeroes the
    # left/right column halos of the re-padded intermediate for free).
    h = jnp.maximum(acc_ref[...] * s1 + b1, 0.0)
    h = jnp.where(valid, h, 0.0).astype(cdt)

    # ---- re-pad intermediate with three contiguous stores covering the whole
    # scratch (no stale data across parallel grid steps, no per-pixel stores).
    hpad_ref[0:Wp + 1, :] = jnp.zeros((Wp + 1, Cp), cdt)
    hpad_ref[Wp + 1:Wp + 1 + Mrows, :] = h
    hpad_ref[Wp + 1 + Mrows:Lin, :] = jnp.zeros((2 * Wp - 1, Cp), cdt)

    # ---- conv2: same dx-merged scheme, reusing x3_ref.
    for dx in range(3):
        x3_ref[:, dx * Cp:(dx + 1) * Cp] = hpad_ref[dx:dx + L3, :]

    acc_ref[...] = jnp.dot(x3_ref[0:Mrows, :], w2_ref[0],
                           preferred_element_type=jnp.float32)
    acc_ref[...] += jnp.dot(x3_ref[Wp:Wp + Mrows, :], w2_ref[1],
                            preferred_element_type=jnp.float32)
    acc_ref[...] += jnp.dot(x3_ref[2 * Wp:2 * Wp + Mrows, :], w2_ref[2],
                            preferred_element_type=jnp.float32)

    # ---- bn2 (folded) + residual (identity is a contiguous slice of the
    # padded input) + relu; lane-dense compute-dtype store.  Garbage columns
    # and padded channels are sliced off in the wrapper.
    ident = x_ref[Wp + 1:Wp + 1 + Mrows, :].astype(jnp.float32)
    out = jnp.maximum(acc_ref[...] * s2 + b2 + ident, 0.0)
    out_ref[...] = out.astype(out_ref.dtype)


def basic_block_pallas(x_nchw, w1_oihw, w2_oihw,
                       g1, be1, rm1, rv1, g2, be2, rm2, rv2,
                       eps=1e-5, compute_dtype=jnp.bfloat16):
    """BasicBlock forward (stride=1, downsample=None). NCHW in, NCHW (f32) out."""
    N, Cin, H, W = x_nchw.shape
    Cout = w1_oihw.shape[0]
    assert Cin == Cout, "stride=1 / downsample=None path requires Cin == Cout"
    assert w1_oihw.shape == (Cout, Cin, 3, 3) and w2_oihw.shape == (Cout, Cout, 3, 3)

    itemsize = jnp.dtype(compute_dtype).itemsize
    Cpad = ((max(Cout, 1) + 127) // 128) * 128      # lane-dense channel pad
    Wp = ((W + 2 + 7) // 8) * 8                     # row pitch >= W+2, sublane aligned
    Lin = (H + 3) * Wp                              # 1 top halo + H + 1 bottom halo + 1 spare row
    Mrows = H * Wp                                  # output rows on the padded-width grid
    L3 = (H + 2) * Wp                               # rows of the dx-merged LHS buffer

    # ---- glue (plain JAX): NCHW -> NHWC, spatial + channel zero-pad, flatten
    # to the padded-width row pitch, cast to the compute dtype.
    x_nhwc = jnp.transpose(x_nchw, (0, 2, 3, 1))
    x_pad = jnp.pad(x_nhwc, ((0, 0), (1, 2), (1, Wp - W - 1), (0, Cpad - Cin)))
    x_flat = x_pad.reshape(N, Lin, Cpad).astype(compute_dtype)

    def prep_w(w_oihw):
        w_hwio = jnp.transpose(w_oihw, (2, 3, 1, 0))          # (3, 3, I, O)
        w_hwio = jnp.pad(w_hwio, ((0, 0), (0, 0),
                                  (0, Cpad - Cin), (0, Cpad - Cout)))
        # dx-merge along the K axis: (dy, dx*Cpad + i, o)
        return w_hwio.reshape(3, 3 * Cpad, Cpad).astype(compute_dtype)

    w1p = prep_w(w1_oihw)
    w2p = prep_w(w2_oihw)

    def fold_bn(g, be, rm, rv):
        s = (g / jnp.sqrt(rv + eps)).astype(jnp.float32)
        b = (be - rm * (g / jnp.sqrt(rv + eps))).astype(jnp.float32)
        s = jnp.pad(s, (0, Cpad - Cout)).reshape(1, Cpad)
        b = jnp.pad(b, (0, Cpad - Cout)).reshape(1, Cpad)
        return s, b

    s1, b1 = fold_bn(g1, be1, rm1, rv1)
    s2, b2 = fold_bn(g2, be2, rm2, rv2)

    kern = functools.partial(basic_block_kernel, H=H, W=W, Wp=Wp)

    cost = pl.CostEstimate(
        flops=36 * N * Mrows * Cpad * Cpad,              # 2 convs x 3 dots x 2*M*K*N
        transcendentals=0,
        bytes_accessed=(N * Lin * Cpad * itemsize        # padded input
                        + 2 * 3 * 3 * Cpad * Cpad * itemsize   # weights
                        + 4 * Cpad * 4                   # folded BN params
                        + N * Mrows * Cpad * itemsize))  # output

    out_flat = pl.pallas_call(
        kern,
        out_shape=jax.ShapeDtypeStruct((N, Mrows, Cpad), compute_dtype),
        grid=(N,),
        in_specs=[
            pl.BlockSpec((None, Lin, Cpad), lambda n: (n, 0, 0)),
            pl.BlockSpec((3, 3 * Cpad, Cpad), lambda n: (0, 0, 0)),
            pl.BlockSpec((3, 3 * Cpad, Cpad), lambda n: (0, 0, 0)),
            pl.BlockSpec((1, Cpad), lambda n: (0, 0)),
            pl.BlockSpec((1, Cpad), lambda n: (0, 0)),
            pl.BlockSpec((1, Cpad), lambda n: (0, 0)),
            pl.BlockSpec((1, Cpad), lambda n: (0, 0)),
        ],
        out_specs=pl.BlockSpec((None, Mrows, Cpad), lambda n: (n, 0, 0)),
        scratch_shapes=[
            pltpu.VMEM((L3, 3 * Cpad), compute_dtype),   # dx-merged LHS (reused)
            pltpu.VMEM((Lin, Cpad), compute_dtype),      # padded intermediate
            pltpu.VMEM((Mrows, Cpad), jnp.float32),      # f32 accumulator
        ],
        compiler_params=pltpu.CompilerParams(
            dimension_semantics=("parallel",),
            vmem_limit_bytes=48 * 1024 * 1024),
        cost_estimate=cost,
    )(x_flat, w1p, w2p, s1, b1, s2, b2)

    # Slice off garbage columns / channel padding, back to NCHW f32.
    out = out_flat.reshape(N, H, Wp, Cpad)[:, :, :W, :Cout]
    return jnp.transpose(out, (0, 3, 1, 2)).astype(jnp.float32)


# ---------------- pure-JAX reference (same bf16 cast points, f32 accum) ------
def _bn_inf(x, g, b, rm, rv, eps=1e-5):
    s = g / jnp.sqrt(rv + eps)
    return x * s[None, :, None, None] + (b - rm * s)[None, :, None, None]


def basic_block_ref(x, w1, w2, g1, be1, rm1, rv1, g2, be2, rm2, rv2,
                    eps=1e-5, compute_dtype=jnp.bfloat16):
    dn = ('NCHW', 'OIHW', 'NCHW')
    xc = x.astype(compute_dtype)
    out = lax.conv_general_dilated(xc, w1.astype(compute_dtype), (1, 1),
                                   ((1, 1), (1, 1)), dimension_numbers=dn,
                                   preferred_element_type=jnp.float32)
    out = jnp.maximum(_bn_inf(out, g1, be1, rm1, rv1, eps), 0.0)
    out = lax.conv_general_dilated(out.astype(compute_dtype),
                                   w2.astype(compute_dtype), (1, 1),
                                   ((1, 1), (1, 1)), dimension_numbers=dn,
                                   preferred_element_type=jnp.float32)
    out = _bn_inf(out, g2, be2, rm2, rv2, eps) + xc.astype(jnp.float32)
    return jnp.maximum(out, 0.0)


if __name__ == "__main__":
    key = jax.random.PRNGKey(0)
    ks = jax.random.split(key, 11)

    N, C, H, W = 2, 4, 16, 16          # inplanes = planes = 4, stride = 1
    x = jax.random.normal(ks[0], (N, C, H, W), jnp.float32)

    w1 = jax.random.normal(ks[1], (C, C, 3, 3), jnp.float32) * 0.2   # OIHW
    w2 = jax.random.normal(ks[2], (C, C, 3, 3), jnp.float32) * 0.2   # OIHW

    g1 = 1.0 + 0.1 * jax.random.normal(ks[3], (C,), jnp.float32)
    be1 = 0.1 * jax.random.normal(ks[4], (C,), jnp.float32)
    rm1 = 0.1 * jax.random.normal(ks[5], (C,), jnp.float32)
    rv1 = jnp.abs(jax.random.normal(ks[6], (C,), jnp.float32)) + 0.5

    g2 = 1.0 + 0.1 * jax.random.normal(ks[7], (C,), jnp.float32)
    be2 = 0.1 * jax.random.normal(ks[8], (C,), jnp.float32)
    rm2 = 0.1 * jax.random.normal(ks[9], (C,), jnp.float32)
    rv2 = jnp.abs(jax.random.normal(ks[10], (C,), jnp.float32)) + 0.5

    out = basic_block_pallas(x, w1, w2, g1, be1, rm1, rv1, g2, be2, rm2, rv2)
    out = jax.block_until_ready(out)

    ref = basic_block_ref(x, w1, w2, g1, be1, rm1, rv1, g2, be2, rm2, rv2)
    assert out.shape == ref.shape == (N, C, H, W)
    err = jnp.max(jnp.abs(out - ref))
    # Kernel emits a bf16 (compute-dtype) output; compare with bf16-level tolerance.
    assert jnp.allclose(out, ref, atol=2e-2, rtol=2e-2), f"max err {err}"

    print("KERNEL_OK")
</pallas_src>

<mosaic_0001>
module attributes {stable_mosaic.version = 11 : i64} {
  func.func @basic_block_kernel(%arg0: i32, %arg1: memref<1x456x128xbf16, #tpu.memory_space<vmem>>, %arg2: memref<3x384x128xbf16, #tpu.memory_space<vmem>>, %arg3: memref<3x384x128xbf16, #tpu.memory_space<vmem>>, %arg4: memref<1x128xf32, #tpu.memory_space<vmem>>, %arg5: memref<1x128xf32, #tpu.memory_space<vmem>>, %arg6: memref<1x128xf32, #tpu.memory_space<vmem>>, %arg7: memref<1x128xf32, #tpu.memory_space<vmem>>, %arg8: memref<1x384x128xbf16, #tpu.memory_space<vmem>>, %arg9: memref<432x384xbf16, #tpu.memory_space<vmem>>, %arg10: memref<456x128xbf16, #tpu.memory_space<vmem>>, %arg11: memref<384x128xf32, #tpu.memory_space<vmem>>) attributes {dimension_semantics = [#tpu.dimension_semantics<parallel>], iteration_bounds = array<i64: 2>, scalar_prefetch = 0 : i64, scratch_operands = 3 : i64, tpu.core_type = #tpu.core_type<tc>, window_params = [{transform_indices = @transform_0, window_bounds = array<i64: 1, 456, 128>}, {pipeline_mode = #tpu.pipeline_mode<synchronous>, transform_indices = @transform_1, window_bounds = array<i64: 3, 384, 128>}, {pipeline_mode = #tpu.pipeline_mode<synchronous>, transform_indices = @transform_2, window_bounds = array<i64: 3, 384, 128>}, {pipeline_mode = #tpu.pipeline_mode<synchronous>, transform_indices = @transform_3, window_bounds = array<i64: 1, 128>}, {pipeline_mode = #tpu.pipeline_mode<synchronous>, transform_indices = @transform_4, window_bounds = array<i64: 1, 128>}, {pipeline_mode = #tpu.pipeline_mode<synchronous>, transform_indices = @transform_5, window_bounds = array<i64: 1, 128>}, {pipeline_mode = #tpu.pipeline_mode<synchronous>, transform_indices = @transform_6, window_bounds = array<i64: 1, 128>}, {transform_indices = @transform_7, window_bounds = array<i64: 1, 384, 128>}]} {
    %c0 = arith.constant 0 : index
    %c0_0 = arith.constant 0 : index
    %0 = vector.load %arg4[%c0, %c0_0] : memref<1x128xf32, #tpu.memory_space<vmem>>, vector<1x128xf32>
    %c0_1 = arith.constant 0 : index
    %c0_2 = arith.constant 0 : index
    %1 = vector.load %arg5[%c0_1, %c0_2] : memref<1x128xf32, #tpu.memory_space<vmem>>, vector<1x128xf32>
    %c0_3 = arith.constant 0 : index
    %c0_4 = arith.constant 0 : index
    %2 = vector.load %arg6[%c0_3, %c0_4] : memref<1x128xf32, #tpu.memory_space<vmem>>, vector<1x128xf32>
    %c0_5 = arith.constant 0 : index
    %c0_6 = arith.constant 0 : index
    %3 = vector.load %arg7[%c0_5, %c0_6] : memref<1x128xf32, #tpu.memory_space<vmem>>, vector<1x128xf32>
    %4 = tpu.iota {dimensions = array<i32: 0>} : vector<384x1xi32>
    %c24_i32 = arith.constant 24 : i32
    %c0_i32 = arith.constant 0 : i32
    %5 = arith.cmpi eq, %c24_i32, %c0_i32 : i32
    %c1_i32 = arith.constant 1 : i32
    %6 = arith.select %5, %c1_i32, %c24_i32 : i32
    %7 = vector.broadcast %6 : i32 to vector<384x1xi32>
    %8 = arith.remsi %4, %7 : vector<384x1xi32>
    %c0_i32_7 = arith.constant 0 : i32
    %9 = vector.broadcast %c0_i32_7 : i32 to vector<384x1xi32>
    %10 = arith.cmpi ne, %8, %9 : vector<384x1xi32>
    %c0_i32_8 = arith.constant 0 : i32
    %11 = vector.broadcast %c0_i32_8 : i32 to vector<384x1xi32>
    %12 = arith.cmpi slt, %8, %11 : vector<384x1xi32>
    %c0_i32_9 = arith.constant 0 : i32
    %13 = arith.cmpi slt, %6, %c0_i32_9 : i32
    %14 = vector.broadcast %13 : i1 to vector<384x1xi1>
    %15 = vector.broadcast %14 : vector<384x1xi1> to vector<384x1xi1>
    %16 = arith.xori %12, %15 : vector<384x1xi1>
    %17 = arith.andi %16, %10 : vector<384x1xi1>
    %18 = vector.broadcast %6 : i32 to vector<384x1xi32>
    %19 = arith.addi %8, %18 : vector<384x1xi32>
    %20 = arith.select %17, %19, %8 : vector<384x1xi1>, vector<384x1xi32>
    %c16_i32 = arith.constant 16 : i32
    %21 = vector.broadcast %c16_i32 : i32 to vector<384x1xi32>
    %22 = arith.cmpi slt, %20, %21 : vector<384x1xi32>
    %c0_10 = arith.constant 0 : index
    %c0_11 = arith.constant 0 : index
    %c0_12 = arith.constant 0 : index
    %23 = vector.load %arg1[%c0_10, %c0_11, %c0_12] : memref<1x456x128xbf16, #tpu.memory_space<vmem>>, vector<1x432x128xbf16>
    %24 = vector.shape_cast %23 : vector<1x432x128xbf16> to vector<432x128xbf16>
    %c0_13 = arith.constant 0 : index
    %c0_14 = arith.constant 0 : index
    %25 = vector.load %arg9[%c0_13, %c0_14] : memref<432x384xbf16, #tpu.memory_space<vmem>>, vector<432x128xbf16>
    tpu.vector_store %arg9[%c0_13, %c0_14], %24 {strides = array<i32>} : memref<432x384xbf16, #tpu.memory_space<vmem>>, vector<432x128xbf16>,
    %c0_15 = arith.constant 0 : index
    %c1 = arith.constant 1 : index
    %c0_16 = arith.constant 0 : index
    %26 = vector.load %arg1[%c0_15, %c1, %c0_16] : memref<1x456x128xbf16, #tpu.memory_space<vmem>>, vector<1x432x128xbf16>
    %27 = vector.shape_cast %26 : vector<1x432x128xbf16> to vector<432x128xbf16>
    %c0_17 = arith.constant 0 : index
    %c128 = arith.constant 128 : index
    %28 = vector.load %arg9[%c0_17, %c128] : memref<432x384xbf16, #tpu.memory_space<vmem>>, vector<432x128xbf16>
    tpu.vector_store %arg9[%c0_17, %c128], %27 {strides = array<i32>} : memref<432x384xbf16, #tpu.memory_space<vmem>>, vector<432x128xbf16>,
    %c0_18 = arith.constant 0 : index
    %c2 = arith.constant 2 : index
    %c0_19 = arith.constant 0 : index
    %29 = vector.load %arg1[%c0_18, %c2, %c0_19] : memref<1x456x128xbf16, #tpu.memory_space<vmem>>, vector<1x432x128xbf16>
    %30 = vector.shape_cast %29 : vector<1x432x128xbf16> to vector<432x128xbf16>
    %c0_20 = arith.constant 0 : index
    %c256 = arith.constant 256 : index
    %31 = vector.load %arg9[%c0_20, %c256] : memref<432x384xbf16, #tpu.memory_space<vmem>>, vector<432x128xbf16>
    tpu.vector_store %arg9[%c0_20, %c256], %30 {strides = array<i32>} : memref<432x384xbf16, #tpu.memory_space<vmem>>, vector<432x128xbf16>,
    %c0_21 = arith.constant 0 : index
    %c0_22 = arith.constant 0 : index
    %32 = vector.load %arg9[%c0_21, %c0_22] : memref<432x384xbf16, #tpu.memory_space<vmem>>, vector<384x384xbf16>
    %c0_23 = arith.constant 0 : index
    %c0_24 = arith.constant 0 : index
    %c0_25 = arith.constant 0 : index
    %33 = vector.load %arg2[%c0_23, %c0_24, %c0_25] : memref<3x384x128xbf16, #tpu.memory_space<vmem>>, vector<1x384x128xbf16>
    %34 = vector.shape_cast %33 : vector<1x384x128xbf16> to vector<384x128xbf16>
    %cst = arith.constant dense<0.000000e+00> : vector<384x128xf32>
    %35 = tpu.matmul %32, %34, %cst {dimension_numbers = #tpu.dot_dimension_numbers<[1], [0], [0], [1], [0, 0, 1, 1], [], []>} : vector<384x384xbf16>, vector<384x128xbf16>, vector<384x128xf32> -> vector<384x128xf32>
    %c0_26 = arith.constant 0 : index
    %c0_27 = arith.constant 0 : index
    %36 = vector.load %arg11[%c0_26, %c0_27] : memref<384x128xf32, #tpu.memory_space<vmem>>, vector<384x128xf32>
    tpu.vector_store %arg11[%c0_26, %c0_27], %35 {strides = array<i32>} : memref<384x128xf32, #tpu.memory_space<vmem>>, vector<384x128xf32>,
    %c0_28 = arith.constant 0 : index
    %c0_29 = arith.constant 0 : index
    %37 = vector.load %arg11[%c0_28, %c0_29] : memref<384x128xf32, #tpu.memory_space<vmem>>, vector<384x128xf32>
    %c24 = arith.constant 24 : index
    %c0_30 = arith.constant 0 : index
    %38 = vector.load %arg9[%c24, %c0_30] : memref<432x384xbf16, #tpu.memory_space<vmem>>, vector<384x384xbf16>
    %c1_31 = arith.constant 1 : index
    %c0_32 = arith.constant 0 : index
    %c0_33 = arith.constant 0 : index
    %39 = vector.load %arg2[%c1_31, %c0_32, %c0_33] : memref<3x384x128xbf16, #tpu.memory_space<vmem>>, vector<1x384x128xbf16>
    %40 = vector.shape_cast %39 : vector<1x384x128xbf16> to vector<384x128xbf16>
    %cst_34 = arith.constant dense<0.000000e+00> : vector<384x128xf32>
    %41 = tpu.matmul %38, %40, %cst_34 {dimension_numbers = #tpu.dot_dimension_numbers<[1], [0], [0], [1], [0, 0, 1, 1], [], []>} : vector<384x384xbf16>, vector<384x128xbf16>, vector<384x128xf32> -> vector<384x128xf32>
    %42 = arith.addf %37, %41 : vector<384x128xf32>
    %c0_35 = arith.constant 0 : index
    %c0_36 = arith.constant 0 : index
    %43 = vector.load %arg11[%c0_35, %c0_36] : memref<384x128xf32, #tpu.memory_space<vmem>>, vector<384x128xf32>
    tpu.vector_store %arg11[%c0_35, %c0_36], %42 {strides = array<i32>} : memref<384x128xf32, #tpu.memory_space<vmem>>, vector<384x128xf32>,
    %c0_37 = arith.constant 0 : index
    %c0_38 = arith.constant 0 : index
    %44 = vector.load %arg11[%c0_37, %c0_38] : memref<384x128xf32, #tpu.memory_space<vmem>>, vector<384x128xf32>
    %c48 = arith.constant 48 : index
    %c0_39 = arith.constant 0 : index
    %45 = vector.load %arg9[%c48, %c0_39] : memref<432x384xbf16, #tpu.memory_space<vmem>>, vector<384x384xbf16>
    %c2_40 = arith.constant 2 : index
    %c0_41 = arith.constant 0 : index
    %c0_42 = arith.constant 0 : index
    %46 = vector.load %arg2[%c2_40, %c0_41, %c0_42] : memref<3x384x128xbf16, #tpu.memory_space<vmem>>, vector<1x384x128xbf16>
    %47 = vector.shape_cast %46 : vector<1x384x128xbf16> to vector<384x128xbf16>
    %cst_43 = arith.constant dense<0.000000e+00> : vector<384x128xf32>
    %48 = tpu.matmul %45, %47, %cst_43 {dimension_numbers = #tpu.dot_dimension_numbers<[1], [0], [0], [1], [0, 0, 1, 1], [], []>} : vector<384x384xbf16>, vector<384x128xbf16>, vector<384x128xf32> -> vector<384x128xf32>
    %49 = arith.addf %44, %48 : vector<384x128xf32>
    %c0_44 = arith.constant 0 : index
    %c0_45 = arith.constant 0 : index
    %50 = vector.load %arg11[%c0_44, %c0_45] : memref<384x128xf32, #tpu.memory_space<vmem>>, vector<384x128xf32>
    tpu.vector_store %arg11[%c0_44, %c0_45], %49 {strides = array<i32>} : memref<384x128xf32, #tpu.memory_space<vmem>>, vector<384x128xf32>,
    %c0_46 = arith.constant 0 : index
    %c0_47 = arith.constant 0 : index
    %51 = vector.load %arg11[%c0_46, %c0_47] : memref<384x128xf32, #tpu.memory_space<vmem>>, vector<384x128xf32>
    %52 = vector.broadcast %0 : vector<1x128xf32> to vector<384x128xf32>
    %53 = arith.mulf %51, %52 : vector<384x128xf32>
    %54 = vector.broadcast %1 : vector<1x128xf32> to vector<384x128xf32>
    %55 = arith.addf %53, %54 : vector<384x128xf32>
    %cst_48 = arith.constant 0.000000e+00 : f32
    %56 = vector.broadcast %cst_48 : f32 to vector<384x128xf32>
    %57 = arith.maximumf %55, %56 : vector<384x128xf32>
    %cst_49 = arith.constant 0.000000e+00 : f32
    %58 = vector.shape_cast %22 : vector<384x1xi1> to vector<384x1xi1>
    %59 = vector.broadcast %58 : vector<384x1xi1> to vector<384x128xi1>
    %60 = vector.broadcast %cst_49 : f32 to vector<384x128xf32>
    %61 = arith.select %59, %57, %60 : vector<384x128xi1>, vector<384x128xf32>
    %62 = arith.truncf %61 : vector<384x128xf32> to vector<384x128xbf16>
    %cst_50 = arith.constant 0.000000e+00 : bf16
    %63 = vector.broadcast %cst_50 : bf16 to vector<25x128xbf16>
    %c0_51 = arith.constant 0 : index
    %c0_52 = arith.constant 0 : index
    %64 = vector.load %arg10[%c0_51, %c0_52] : memref<456x128xbf16, #tpu.memory_space<vmem>>, vector<25x128xbf16>
    tpu.vector_store %arg10[%c0_51, %c0_52], %63 {strides = array<i32>} : memref<456x128xbf16, #tpu.memory_space<vmem>>, vector<25x128xbf16>,
    %c25 = arith.constant 25 : index
    %c0_53 = arith.constant 0 : index
    %65 = vector.load %arg10[%c25, %c0_53] : memref<456x128xbf16, #tpu.memory_space<vmem>>, vector<384x128xbf16>
    tpu.vector_store %arg10[%c25, %c0_53], %62 {strides = array<i32>} : memref<456x128xbf16, #tpu.memory_space<vmem>>, vector<384x128xbf16>,
    %cst_54 = arith.constant 0.000000e+00 : bf16
    %66 = vector.broadcast %cst_54 : bf16 to vector<47x128xbf16>
    %c409 = arith.constant 409 : index
    %c0_55 = arith.constant 0 : index
    %67 = vector.load %arg10[%c409, %c0_55] : memref<456x128xbf16, #tpu.memory_space<vmem>>, vector<47x128xbf16>
    tpu.vector_store %arg10[%c409, %c0_55], %66 {strides = array<i32>} : memref<456x128xbf16, #tpu.memory_space<vmem>>, vector<47x128xbf16>,
    %c0_56 = arith.constant 0 : index
    %c0_57 = arith.constant 0 : index
    %68 = vector.load %arg10[%c0_56, %c0_57] : memref<456x128xbf16, #tpu.memory_space<vmem>>, vector<432x128xbf16>
    %c0_58 = arith.constant 0 : index
    %c0_59 = arith.constant 0 : index
    %69 = vector.load %arg9[%c0_58, %c0_59] : memref<432x384xbf16, #tpu.memory_space<vmem>>, vector<432x128xbf16>
    tpu.vector_store %arg9[%c0_58, %c0_59], %68 {strides = array<i32>} : memref<432x384xbf16, #tpu.memory_space<vmem>>, vector<432x128xbf16>,
    %c1_60 = arith.constant 1 : index
    %c0_61 = arith.constant 0 : index
    %70 = vector.load %arg10[%c1_60, %c0_61] : memref<456x128xbf16, #tpu.memory_space<vmem>>, vector<432x128xbf16>
    %c0_62 = arith.constant 0 : index
    %c128_63 = arith.constant 128 : index
    %71 = vector.load %arg9[%c0_62, %c128_63] : memref<432x384xbf16, #tpu.memory_space<vmem>>, vector<432x128xbf16>
    tpu.vector_store %arg9[%c0_62, %c128_63], %70 {strides = array<i32>} : memref<432x384xbf16, #tpu.memory_space<vmem>>, vector<432x128xbf16>,
    %c2_64 = arith.constant 2 : index
    %c0_65 = arith.constant 0 : index
    %72 = vector.load %arg10[%c2_64, %c0_65] : memref<456x128xbf16, #tpu.memory_space<vmem>>, vector<432x128xbf16>
    %c0_66 = arith.constant 0 : index
    %c256_67 = arith.constant 256 : index
    %73 = vector.load %arg9[%c0_66, %c256_67] : memref<432x384xbf16, #tpu.memory_space<vmem>>, vector<432x128xbf16>
    tpu.vector_store %arg9[%c0_66, %c256_67], %72 {strides = array<i32>} : memref<432x384xbf16, #tpu.memory_space<vmem>>, vector<432x128xbf16>,
    %c0_68 = arith.constant 0 : index
    %c0_69 = arith.constant 0 : index
    %74 = vector.load %arg9[%c0_68, %c0_69] : memref<432x384xbf16, #tpu.memory_space<vmem>>, vector<384x384xbf16>
    %c0_70 = arith.constant 0 : index
    %c0_71 = arith.constant 0 : index
    %c0_72 = arith.constant 0 : index
    %75 = vector.load %arg3[%c0_70, %c0_71, %c0_72] : memref<3x384x128xbf16, #tpu.memory_space<vmem>>, vector<1x384x128xbf16>
    %76 = vector.shape_cast %75 : vector<1x384x128xbf16> to vector<384x128xbf16>
    %cst_73 = arith.constant dense<0.000000e+00> : vector<384x128xf32>
    %77 = tpu.matmul %74, %76, %cst_73 {dimension_numbers = #tpu.dot_dimension_numbers<[1], [0], [0], [1], [0, 0, 1, 1], [], []>} : vector<384x384xbf16>, vector<384x128xbf16>, vector<384x128xf32> -> vector<384x128xf32>
    %c0_74 = arith.constant 0 : index
    %c0_75 = arith.constant 0 : index
    %78 = vector.load %arg11[%c0_74, %c0_75] : memref<384x128xf32, #tpu.memory_space<vmem>>, vector<384x128xf32>
    tpu.vector_store %arg11[%c0_74, %c0_75], %77 {strides = array<i32>} : memref<384x128xf32, #tpu.memory_space<vmem>>, vector<384x128xf32>,
    %c0_76 = arith.constant 0 : index
    %c0_77 = arith.constant 0 : index
    %79 = vector.load %arg11[%c0_76, %c0_77] : memref<384x128xf32, #tpu.memory_space<vmem>>, vector<384x128xf32>
    %c24_78 = arith.constant 24 : index
    %c0_79 = arith.constant 0 : index
    %80 = vector.load %arg9[%c24_78, %c0_79] : memref<432x384xbf16, #tpu.memory_space<vmem>>, vector<384x384xbf16>
    %c1_80 = arith.constant 1 : index
    %c0_81 = arith.constant 0 : index
    %c0_82 = arith.constant 0 : index
    %81 = vector.load %arg3[%c1_80, %c0_81, %c0_82] : memref<3x384x128xbf16, #tpu.memory_space<vmem>>, vector<1x384x128xbf16>
    %82 = vector.shape_cast %81 : vector<1x384x128xbf16> to vector<384x128xbf16>
    %cst_83 = arith.constant dense<0.000000e+00> : vector<384x128xf32>
    %83 = tpu.matmul %80, %82, %cst_83 {dimension_numbers = #tpu.dot_dimension_numbers<[1], [0], [0], [1], [0, 0, 1, 1], [], []>} : vector<384x384xbf16>, vector<384x128xbf16>, vector<384x128xf32> -> vector<384x128xf32>
    %84 = arith.addf %79, %83 : vector<384x128xf32>
    %c0_84 = arith.constant 0 : index
    %c0_85 = arith.constant 0 : index
    %85 = vector.load %arg11[%c0_84, %c0_85] : memref<384x128xf32, #tpu.memory_space<vmem>>, vector<384x128xf32>
    tpu.vector_store %arg11[%c0_84, %c0_85], %84 {strides = array<i32>} : memref<384x128xf32, #tpu.memory_space<vmem>>, vector<384x128xf32>,
    %c0_86 = arith.constant 0 : index
    %c0_87 = arith.constant 0 : index
    %86 = vector.load %arg11[%c0_86, %c0_87] : memref<384x128xf32, #tpu.memory_space<vmem>>, vector<384x128xf32>
    %c48_88 = arith.constant 48 : index
    %c0_89 = arith.constant 0 : index
    %87 = vector.load %arg9[%c48_88, %c0_89] : memref<432x384xbf16, #tpu.memory_space<vmem>>, vector<384x384xbf16>
    %c2_90 = arith.constant 2 : index
    %c0_91 = arith.constant 0 : index
    %c0_92 = arith.constant 0 : index
    %88 = vector.load %arg3[%c2_90, %c0_91, %c0_92] : memref<3x384x128xbf16, #tpu.memory_space<vmem>>, vector<1x384x128xbf16>
    %89 = vector.shape_cast %88 : vector<1x384x128xbf16> to vector<384x128xbf16>
    %cst_93 = arith.constant dense<0.000000e+00> : vector<384x128xf32>
    %90 = tpu.matmul %87, %89, %cst_93 {dimension_numbers = #tpu.dot_dimension_numbers<[1], [0], [0], [1], [0, 0, 1, 1], [], []>} : vector<384x384xbf16>, vector<384x128xbf16>, vector<384x128xf32> -> vector<384x128xf32>
    %91 = arith.addf %86, %90 : vector<384x128xf32>
    %c0_94 = arith.constant 0 : index
    %c0_95 = arith.constant 0 : index
    %92 = vector.load %arg11[%c0_94, %c0_95] : memref<384x128xf32, #tpu.memory_space<vmem>>, vector<384x128xf32>
    tpu.vector_store %arg11[%c0_94, %c0_95], %91 {strides = array<i32>} : memref<384x128xf32, #tpu.memory_space<vmem>>, vector<384x128xf32>,
    %c0_96 = arith.constant 0 : index
    %c25_97 = arith.constant 25 : index
    %c0_98 = arith.constant 0 : index
    %93 = vector.load %arg1[%c0_96, %c25_97, %c0_98] : memref<1x456x128xbf16, #tpu.memory_space<vmem>>, vector<1x384x128xbf16>
    %94 = vector.shape_cast %93 : vector<1x384x128xbf16> to vector<384x128xbf16>
    %95 = arith.extf %94 : vector<384x128xbf16> to vector<384x128xf32>
    %c0_99 = arith.constant 0 : index
    %c0_100 = arith.constant 0 : index
    %96 = vector.load %arg11[%c0_99, %c0_100] : memref<384x128xf32, #tpu.memory_space<vmem>>, vector<384x128xf32>
    %97 = vector.broadcast %2 : vector<1x128xf32> to vector<384x128xf32>
    %98 = arith.mulf %96, %97 : vector<384x128xf32>
    %99 = vector.broadcast %3 : vector<1x128xf32> to vector<384x128xf32>
    %100 = arith.addf %98, %99 : vector<384x128xf32>
    %101 = arith.addf %100, %95 : vector<384x128xf32>
    %cst_101 = arith.constant 0.000000e+00 : f32
    %102 = vector.broadcast %cst_101 : f32 to vector<384x128xf32>
    %103 = arith.maximumf %101, %102 : vector<384x128xf32>
    %104 = arith.truncf %103 : vector<384x128xf32> to vector<384x128xbf16>
    %c0_102 = arith.constant 0 : index
    %c0_103 = arith.constant 0 : index
    %c0_104 = arith.constant 0 : index
    %105 = vector.load %arg8[%c0_102, %c0_103, %c0_104] : memref<1x384x128xbf16, #tpu.memory_space<vmem>>, vector<1x384x128xbf16>
    %106 = vector.shape_cast %105 : vector<1x384x128xbf16> to vector<384x128xbf16>
    %107 = vector.shape_cast %104 : vector<384x128xbf16> to vector<1x384x128xbf16>
    tpu.vector_store %arg8[%c0_102, %c0_103, %c0_104], %107 {strides = array<i32>} : memref<1x384x128xbf16, #tpu.memory_space<vmem>>, vector<1x384x128xbf16>,
    return
  }
  func.func @transform_0(%arg0: i32) -> (i32, i32, i32) {
    %c0_i32 = arith.constant 0 : i32
    %c0_i32_0 = arith.constant 0 : i32
    %c0_i32_1 = arith.constant 0 : i32
    return %arg0, %c0_i32, %c0_i32_0 : i32, i32, i32
  }
  func.func @transform_1(%arg0: i32) -> (i32, i32, i32) {
    %c0_i32 = arith.constant 0 : i32
    %c0_i32_0 = arith.constant 0 : i32
    %c0_i32_1 = arith.constant 0 : i32
    %c0_i32_2 = arith.constant 0 : i32
    return %c0_i32, %c0_i32_0, %c0_i32_1 : i32, i32, i32
  }
  func.func @transform_2(%arg0: i32) -> (i32, i32, i32) {
    %c0_i32 = arith.constant 0 : i32
    %c0_i32_0 = arith.constant 0 : i32
    %c0_i32_1 = arith.constant 0 : i32
    %c0_i32_2 = arith.constant 0 : i32
    return %c0_i32, %c0_i32_0, %c0_i32_1 : i32, i32, i32
  }
  func.func @transform_3(%arg0: i32) -> (i32, i32) {
    %c0_i32 = arith.constant 0 : i32
    %c0_i32_0 = arith.constant 0 : i32
    %c0_i32_1 = arith.constant 0 : i32
    return %c0_i32, %c0_i32_0 : i32, i32
  }
  func.func @transform_4(%arg0: i32) -> (i32, i32) {
    %c0_i32 = arith.constant 0 : i32
    %c0_i32_0 = arith.constant 0 : i32
    %c0_i32_1 = arith.constant 0 : i32
    return %c0_i32, %c0_i32_0 : i32, i32
  }
  func.func @transform_5(%arg0: i32) -> (i32, i32) {
    %c0_i32 = arith.constant 0 : i32
    %c0_i32_0 = arith.constant 0 : i32
    %c0_i32_1 = arith.constant 0 : i32
    return %c0_i32, %c0_i32_0 : i32, i32
  }
  func.func @transform_6(%arg0: i32) -> (i32, i32) {
    %c0_i32 = arith.constant 0 : i32
    %c0_i32_0 = arith.constant 0 : i32
    %c0_i32_1 = arith.constant 0 : i32
    return %c0_i32, %c0_i32_0 : i32, i32
  }
  func.func @transform_7(%arg0: i32) -> (i32, i32, i32) {
    %c0_i32 = arith.constant 0 : i32
    %c0_i32_0 = arith.constant 0 : i32
    %c0_i32_1 = arith.constant 0 : i32
    return %arg0, %c0_i32, %c0_i32_0 : i32, i32, i32
  }
}

</mosaic_0001>

<llo_original>
// kernel: tpu_custom_call.1
$region0: #{tpu_custom_call.1}
  #allocation0 [shape = 'u32[]', space=smem, size = 0x4, offset = 0x4, fixed_abs, tag = 'smem constant byte address 0x4 - core index']
  #allocation1 [shape = 'u32[144,128]{1,0:T(1,128)}', space=vmem, size = 0x12000, scoped, tag = 'internal scratch']
  #allocation2 [shape = 'bf16[432,384]{1,0:T(16,128)(2,1)}', space=vmem, size = 0x51000, scoped, tag = 'scratch operand']
  #allocation3 [shape = 'bf16[456,128]{1,0:T(8,128)(2,1)}', space=vmem, size = 0x1c800, scoped, tag = 'scratch operand']
  #allocation4 [shape = 'f32[384,128]{1,0:T(8,128)}', space=vmem, size = 0x30000, scoped, tag = 'scratch operand']
  %s0 = inlined_call_operand.hbm [shape: bf16[2,456,128], index: 0, kind: input, shape index: {}]
  %s1 = inlined_call_operand.hbm [shape: bf16[3,384,128], index: 1, kind: input, shape index: {}]
  %s2 = inlined_call_operand.hbm [shape: bf16[3,384,128], index: 2, kind: input, shape index: {}]
  %s3 = inlined_call_operand.vmem [shape: f32[1,128], index: 3, kind: input, shape index: {}]
  %s4 = inlined_call_operand.vmem [shape: f32[1,128], index: 4, kind: input, shape index: {}]
  %s5 = inlined_call_operand.vmem [shape: f32[1,128], index: 5, kind: input, shape index: {}]
  %s6 = inlined_call_operand.vmem [shape: f32[1,128], index: 6, kind: input, shape index: {}]
  %s7 = inlined_call_operand.hbm [shape: bf16[2,384,128], index: 7, kind: output, shape index: {}]
  %s8 = sld [smem:[#allocation0]]
  $region73: #{tpu_custom_call.1} parent=0
    _
  %s10 = ssub.s32 1, %s8
  %s11 = scalar_select 0, %s10, %s8
  $region1: #{tpu_custom_call.1} parent=0
    #allocation5 [shape = 'u8[233472]{0}', space=vmem, size = 0x39000, scoped, tag = 'input window, operand 0']
    #allocation6 [shape = 's32[2]{0}', space=sflag, size = 0x8, scoped, tag = 'scoped memory for tpu_custom_call.1']
    #allocation7 [shape = 's32[2]{0}', space=sflag, size = 0x8, scoped, tag = 'scoped memory for tpu_custom_call.1']
    #allocation8 [shape = 'u8[294912]{0}', space=vmem, size = 0x48000, scoped, tag = 'input window, operand 1, single buffered']
    #allocation9 [shape = 's32[1]{0}', space=sflag, size = 0x4, scoped, tag = 'scoped memory for tpu_custom_call.1']
    #allocation10 [shape = 'u8[294912]{0}', space=vmem, size = 0x48000, scoped, tag = 'input window, operand 2, single buffered']
    #allocation11 [shape = 'u8[196608]{0}', space=vmem, size = 0x30000, scoped, tag = 'output window, operand 0']
    %12 = vsyncpa [#allocation6], 0
    %s13 = scalar_lea.sflag [#allocation6], 1
    %14 = vsyncpa %s13, 0
    %15 = vsyncpa [#allocation9], 0
    %16 = vsyncpa [#allocation7], 0
    %s17 = scalar_lea.sflag [#allocation7], 1
    %18 = vsyncpa %s17, 0
    loop: start=0, step=1, limit=4
    $region2: #{tpu_custom_call.1} parent=1 // loop_pre_header
      _
    $region3: #{tpu_custom_call.1} parent=1 // loop_header
      %s20 = sphi 0, %s24
      %p21 = scmp.ge.s32.totalorder %s20, 4
      %s30 = sphi 0, %s32
      %s33 = sphi 0, %s30
      %s34 = sphi 0, %s33
      %s50 = sphi 0, %s34
      %s54 = sphi 0, %s54
      %s56 = sphi 0, %s54
      %s57 = sphi 0, %s56
      %s71 = sphi 0, %s57
      %s75 = sphi 0, %s75
      %s77 = sphi 0, %s75
      %s78 = sphi 0, %s77
      %s92 = sphi 0, %s78
      %s96 = sphi 0, %s96
      %s98 = sphi 0, %s96
      %s99 = sphi 0, %s98
      %s113 = sphi 0, %s99
      %s117 = sphi 0, %s117
      %s119 = sphi 0, %s117
      %s120 = sphi 0, %s119
      %s134 = sphi 0, %s120
      %s138 = sphi 0, %s138
      %s140 = sphi 0, %s138
      %s141 = sphi 0, %s140
      %s155 = sphi 0, %s141
      %s159 = sphi 0, %s159
      %s161 = sphi 0, %s159
      %s162 = sphi 0, %s161
      %s176 = sphi 0, %s162
      %s182 = sphi 0, %s184
      %s185 = sphi 0, %s182
      %s186 = sphi 0, %s185
      %s202 = sphi 0, %s186
    $region4: #{tpu_custom_call.1} parent=1 // loop_header_branch
      %23 = sbr.rel (%p21) target = $region8
    $region5: #{tpu_custom_call.1} parent=1 // loop_body
      %s25 = ssub.s32 %s20, 1
      %s26 = ssub.s32 %s20, 2
      %s27 = sadd.s32 %s20, 1
      %s28 = ssub.s32 %s20, %s27
      %p29 = scmp.eq.s32.totalorder %s28, 0
      %s31 = sadd.s32 %s30, 1
      %s32 = scalar_select %p29, %s30, %s31
      %p35 = pneg %p29
      %p36 = scmp.eq.s32.totalorder %s20, 1
      %p37 = por %p35, %p36
      %p38 = scmp.ne.s32.totalorder %s30, %s33
      %p39 = scmp.eq.s32.totalorder %s20, 0
      %p40 = por %p38, %p39
      %p41 = scmp.ne.s32.totalorder %s30, %s33
      %p42 = scmp.eq.s32.totalorder %s25, 1
      %p43 = por %p41, %p42
      %p44 = scmp.ne.s32.totalorder %s33, %s34
      %p45 = scmp.eq.s32.totalorder %s25, 0
      %p46 = por %p44, %p45
      %p47 = scmp.ne.s32.totalorder %s33, %s34
      %p48 = scmp.eq.s32.totalorder %s26, 1
      %p49 = por %p47, %p48
      %p51 = scmp.ne.s32.totalorder %s34, %s50
      %p52 = scmp.eq.s32.totalorder %s26, 0
      %p53 = por %p51, %p52
      %s55 = sadd.s32 %s54, 1
      %p58 = scmp.eq.s32.totalorder %s20, 1
      %p59 = scmp.ne.s32.totalorder %s54, %s56
      %p60 = scmp.eq.s32.totalorder %s20, 0
      %p61 = por %p59, %p60
      %p62 = scmp.ne.s32.totalorder %s54, %s56
      %p63 = scmp.eq.s32.totalorder %s25, 1
      %p64 = por %p62, %p63
      %p65 = scmp.ne.s32.totalorder %s56, %s57
      %p66 = scmp.eq.s32.totalorder %s25, 0
      %p67 = por %p65, %p66
      %p68 = scmp.ne.s32.totalorder %s56, %s57
      %p69 = scmp.eq.s32.totalorder %s26, 1
      %p70 = por %p68, %p69
      %p72 = scmp.ne.s32.totalorder %s57, %s71
      %p73 = scmp.eq.s32.totalorder %s26, 0
      %p74 = por %p72, %p73
      %s76 = sadd.s32 %s75, 1
      %p79 = scmp.eq.s32.totalorder %s20, 1
      %p80 = scmp.ne.s32.totalorder %s75, %s77
      %p81 = scmp.eq.s32.totalorder %s20, 0
      %p82 = por %p80, %p81
      %p83 = scmp.ne.s32.totalorder %s75, %s77
      %p84 = scmp.eq.s32.totalorder %s25, 1
      %p85 = por %p83, %p84
      %p86 = scmp.ne.s32.totalorder %s77, %s78
      %p87 = scmp.eq.s32.totalorder %s25, 0
      %p88 = por %p86, %p87
      %p89 = scmp.ne.s32.totalorder %s77, %s78
      %p90 = scmp.eq.s32.totalorder %s26, 1
      %p91 = por %p89, %p90
      %p93 = scmp.ne.s32.totalorder %s78, %s92
      %p94 = scmp.eq.s32.totalorder %s26, 0
      %p95 = por %p93, %p94
      %s97 = sadd.s32 %s96, 1
      %p100 = scmp.eq.s32.totalorder %s20, 1
      %p101 = scmp.ne.s32.totalorder %s96, %s98
      %p102 = scmp.eq.s32.totalorder %s20, 0
      %p103 = por %p101, %p102
      %p104 = scmp.ne.s32.totalorder %s96, %s98
      %p105 = scmp.eq.s32.totalorder %s25, 1
      %p106 = por %p104, %p105
      %p107 = scmp.ne.s32.totalorder %s98, %s99
      %p108 = scmp.eq.s32.totalorder %s25, 0
      %p109 = por %p107, %p108
      %p110 = scmp.ne.s32.totalorder %s98, %s99
      %p111 = scmp.eq.s32.totalorder %s26, 1
      %p112 = por %p110, %p111
      %p114 = scmp.ne.s32.totalorder %s99, %s113
      %p115 = scmp.eq.s32.totalorder %s26, 0
      %p116 = por %p114, %p115
      %s118 = sadd.s32 %s117, 1
      %p121 = scmp.eq.s32.totalorder %s20, 1
      %p122 = scmp.ne.s32.totalorder %s117, %s119
      %p123 = scmp.eq.s32.totalorder %s20, 0
      %p124 = por %p122, %p123
      %p125 = scmp.ne.s32.totalorder %s117, %s119
      %p126 = scmp.eq.s32.totalorder %s25, 1
      %p127 = por %p125, %p126
      %p128 = scmp.ne.s32.totalorder %s119, %s120
      %p129 = scmp.eq.s32.totalorder %s25, 0
      %p130 = por %p128, %p129
      %p131 = scmp.ne.s32.totalorder %s119, %s120
      %p132 = scmp.eq.s32.totalorder %s26, 1
      %p133 = por %p131, %p132
      %p135 = scmp.ne.s32.totalorder %s120, %s134
      %p136 = scmp.eq.s32.totalorder %s26, 0
      %p137 = por %p135, %p136
      %s139 = sadd.s32 %s138, 1
      %p142 = scmp.eq.s32.totalorder %s20, 1
      %p143 = scmp.ne.s32.totalorder %s138, %s140
      %p144 = scmp.eq.s32.totalorder %s20, 0
      %p145 = por %p143, %p144
      %p146 = scmp.ne.s32.totalorder %s138, %s140
      %p147 = scmp.eq.s32.totalorder %s25, 1
      %p148 = por %p146, %p147
      %p149 = scmp.ne.s32.totalorder %s140, %s141
      %p150 = scmp.eq.s32.totalorder %s25, 0
      %p151 = por %p149, %p150
      %p152 = scmp.ne.s32.totalorder %s140, %s141
      %p153 = scmp.eq.s32.totalorder %s26, 1
      %p154 = por %p152, %p153
      %p156 = scmp.ne.s32.totalorder %s141, %s155
      %p157 = scmp.eq.s32.totalorder %s26, 0
      %p158 = por %p156, %p157
      %s160 = sadd.s32 %s159, 1
      %p163 = scmp.eq.s32.totalorder %s20, 1
      %p164 = scmp.ne.s32.totalorder %s159, %s161
      %p165 = scmp.eq.s32.totalorder %s20, 0
      %p166 = por %p164, %p165
      %p167 = scmp.ne.s32.totalorder %s159, %s161
      %p168 = scmp.eq.s32.totalorder %s25, 1
      %p169 = por %p167, %p168
      %p170 = scmp.ne.s32.totalorder %s161, %s162
      %p171 = scmp.eq.s32.totalorder %s25, 0
      %p172 = por %p170, %p171
      %p173 = scmp.ne.s32.totalorder %s161, %s162
      %p174 = scmp.eq.s32.totalorder %s26, 1
      %p175 = por %p173, %p174
      %p177 = scmp.ne.s32.totalorder %s162, %s176
      %p178 = scmp.eq.s32.totalorder %s26, 0
      %p179 = por %p177, %p178
      %s180 = ssub.s32 %s20, %s27
      %p181 = scmp.eq.s32.totalorder %s180, 0
      %s183 = sadd.s32 %s182, 1
      %s184 = scalar_select %p181, %s182, %s183
      %p187 = pneg %p181
      %p188 = scmp.eq.s32.totalorder %s20, 1
      %p189 = por %p187, %p188
      %p190 = scmp.ne.s32.totalorder %s182, %s185
      %p191 = scmp.eq.s32.totalorder %s20, 0
      %p192 = por %p190, %p191
      %p193 = scmp.ne.s32.totalorder %s182, %s185
      %p194 = scmp.eq.s32.totalorder %s25, 1
      %p195 = por %p193, %p194
      %p196 = scmp.ne.s32.totalorder %s185, %s186
      %p197 = scmp.eq.s32.totalorder %s25, 0
      %p198 = por %p196, %p197
      %p199 = scmp.ne.s32.totalorder %s185, %s186
      %p200 = scmp.eq.s32.totalorder %s26, 1
      %p201 = por %p199, %p200
      %p203 = scmp.ne.s32.totalorder %s186, %s202
      %p204 = scmp.eq.s32.totalorder %s26, 0
      %p205 = por %p203, %p204
      %p206 = scmp.le.s32.totalorder 1, %s20
      %p207 = scmp.lt.s32.totalorder %s20, 3
      %p208 = pnand %p206, %p207
      %p209 = pneg %p208
      // Predicated region
      $region9: #{tpu_custom_call.1} parent=5 // pred_check
        _
      $region10: #{tpu_custom_call.1} parent=5 // pred_check_branch
        %211 = sbr.rel (%p208) target = $region12
      $region11: #{tpu_custom_call.1} parent=5 // pred_region
        %s212 = ssub.s32 %s20, 1
        // Predicated region
        $region13: #{tpu_custom_call.1} parent=11 // pred_check
          %p213 = pneg %p67
        $region14: #{tpu_custom_call.1} parent=11 // pred_check_branch
          %215 = sbr.rel (%p213) target = $region16
        $region15: #{tpu_custom_call.1} parent=11 // pred_region
          %s217 = ssub.s32 9216, 9216
          %218 = vsyncadd [#allocation9], %s217
          %s219 = sshll.u32 [#allocation8], 4
          %s220 = int_to_ptr.vmem [resolvable:$true] %s219
          %225 = dma.hbm_to_vmem [thread:$0]  %s1, 9216, %s220, [#allocation9], 64, 64, 4
        $region16: #{tpu_custom_call.1} parent=11 // pred_fallthru
          _
        // Predicated region
        $region17: #{tpu_custom_call.1} parent=11 // pred_check
          %p226 = pneg %p88
        $region18: #{tpu_custom_call.1} parent=11 // pred_check_branch
          %228 = sbr.rel (%p226) target = $region20
        $region19: #{tpu_custom_call.1} parent=11 // pred_region
          %s230 = ssub.s32 9216, 9216
          %231 = vsyncadd [#allocation9], %s230
          %s232 = sshll.u32 [#allocation10], 4
          %s233 = int_to_ptr.vmem [resolvable:$true] %s232
          %238 = dma.hbm_to_vmem [thread:$0]  %s2, 9216, %s233, [#allocation9], 64, 64, 4
        $region20: #{tpu_custom_call.1} parent=11 // pred_fallthru
          _
        // Predicated region
        $region21: #{tpu_custom_call.1} parent=11 // pred_check
          %p239 = pneg %p109
        $region22: #{tpu_custom_call.1} parent=11 // pred_check_branch
          %241 = sbr.rel (%p239) target = $region24
        $region23: #{tpu_custom_call.1} parent=11 // pred_region
          _
        $region24: #{tpu_custom_call.1} parent=11 // pred_fallthru
          _
        // Predicated region
        $region25: #{tpu_custom_call.1} parent=11 // pred_check
          %p242 = pneg %p130
        $region26: #{tpu_custom_call.1} parent=11 // pred_check_branch
          %244 = sbr.rel (%p242) target = $region28
        $region27: #{tpu_custom_call.1} parent=11 // pred_region
          _
        $region28: #{tpu_custom_call.1} parent=11 // pred_fallthru
          _
        // Predicated region
        $region29: #{tpu_custom_call.1} parent=11 // pred_check
          %p245 = pneg %p151
        $region30: #{tpu_custom_call.1} parent=11 // pred_check_branch
          %247 = sbr.rel (%p245) target = $region32
        $region31: #{tpu_custom_call.1} parent=11 // pred_region
          _
        $region32: #{tpu_custom_call.1} parent=11 // pred_fallthru
          _
        // Predicated region
        $region33: #{tpu_custom_call.1} parent=11 // pred_check
          %p248 = pneg %p172
        $region34: #{tpu_custom_call.1} parent=11 // pred_check_branch
          %250 = sbr.rel (%p248) target = $region36
        $region35: #{tpu_custom_call.1} parent=11 // pred_region
          _
        $region36: #{tpu_custom_call.1} parent=11 // pred_fallthru
          _
      $region12: #{tpu_custom_call.1} parent=5 // pred_fallthru
        _
      %p251 = scmp.lt.s32.totalorder %s20, 2
      // Predicated region
      $region37: #{tpu_custom_call.1} parent=5 // pred_check
        %p252 = pneg %p251
      $region38: #{tpu_custom_call.1} parent=5 // pred_check_branch
        %254 = sbr.rel (%p252) target = $region40
      $region39: #{tpu_custom_call.1} parent=5 // pred_region
        // Predicated region
        $region41: #{tpu_custom_call.1} parent=39 // pred_check
          %p255 = pneg %p40
        $region42: #{tpu_custom_call.1} parent=39 // pred_check_branch
          %257 = sbr.rel (%p255) target = $region44
        $region43: #{tpu_custom_call.1} parent=39 // pred_region
          %s258 = sand.u32 %s30, 1
          %s259 = scalar_lea.sflag [#allocation6], %s258
          %s260 = sand.u32 %s30, 1
          %s261 = smul.addr %s260, 228
          %s262 = scalar_lea.vmem [#allocation5], %s261
          %s264 = ssub.s32 3648, 3648
          %265 = vsyncadd %s259, %s264
          %s266 = smul.addr %s20, 57
          %s267 = smul.addr %s266, 64
          %s268 = scalar_lea.hbm %s0, %s267
          %s269 = sshll.u32 %s262, 4
          %s270 = int_to_ptr.vmem [resolvable:$true] %s269
          %275 = dma.hbm_to_vmem [thread:$0]  %s268, 3648, %s270, %s259, 64, 64, 4
        $region44: #{tpu_custom_call.1} parent=39 // pred_fallthru
          _
      $region40: #{tpu_custom_call.1} parent=5 // pred_fallthru
        _
      %p276 = scmp.le.s32.totalorder 1, %s20
      %p277 = scmp.lt.s32.totalorder %s20, 3
      %p278 = pnand %p276, %p277
      %p279 = pneg %p278
      // Predicated region
      $region45: #{tpu_custom_call.1} parent=5 // pred_check
        _
      $region46: #{tpu_custom_call.1} parent=5 // pred_check_branch
        %281 = sbr.rel (%p278) target = $region48
      $region47: #{tpu_custom_call.1} parent=5 // pred_region
        %s282 = ssub.s32 %s20, 1
        %s283 = sand.u32 %s33, 1
        %s284 = scalar_lea.sflag [#allocation6], %s283
        %s285 = sand.u32 %s33, 1
        %s286 = smul.addr %s285, 228
        %s287 = scalar_lea.vmem [#allocation5], %s286
        // Predicated region
        $region49: #{tpu_custom_call.1} parent=47 // pred_check
          %p288 = pneg %p46
        $region50: #{tpu_custom_call.1} parent=47 // pred_check_branch
          %290 = sbr.rel (%p288) target = $region52
        $region51: #{tpu_custom_call.1} parent=47 // pred_region
          %291 = dma.done %s284, 3648
        $region52: #{tpu_custom_call.1} parent=47 // pred_fallthru
          _
        // Predicated region
        $region53: #{tpu_custom_call.1} parent=47 // pred_check
          %p292 = pneg %p67
        $region54: #{tpu_custom_call.1} parent=47 // pred_check_branch
          %294 = sbr.rel (%p292) target = $region56
        $region55: #{tpu_custom_call.1} parent=47 // pred_region
          %295 = dma.done [#allocation9], 9216
        $region56: #{tpu_custom_call.1} parent=47 // pred_fallthru
          _
        // Predicated region
        $region57: #{tpu_custom_call.1} parent=47 // pred_check
          %p296 = pneg %p88
        $region58: #{tpu_custom_call.1} parent=47 // pred_check_branch
          %298 = sbr.rel (%p296) target = $region60
        $region59: #{tpu_custom_call.1} parent=47 // pred_region
          %299 = dma.done [#allocation9], 9216
        $region60: #{tpu_custom_call.1} parent=47 // pred_fallthru
          _
        %s300 = sand.u32 %s33, 1
        %s301 = scalar_lea.sflag [#allocation6], %s300
        %s302 = sand.u32 %s33, 1
        %s303 = smul.addr %s302, 228
        %s304 = scalar_lea.vmem [#allocation5], %s303
        %p305 = pneg %p46
        %p306 = pneg %p43
        %p307 = pneg %p67
        %p308 = pneg %p64
        %p309 = pneg %p88
        %p310 = pneg %p85
        %p311 = pneg %p109
        %p312 = pneg %p106
        %p313 = pneg %p130
        %p314 = pneg %p127
        %p315 = pneg %p151
        %p316 = pneg %p148
        %p317 = pneg %p172
        %p318 = pneg %p169
        %p319 = pneg %p198
        %p320 = pneg %p195
        %s321 = sand.u32 %s185, 1
        %s322 = scalar_lea.sflag [#allocation7], %s321
        %s323 = sand.u32 %s185, 1
        %s324 = smul.addr %s323, 192
        %s325 = scalar_lea.vmem [#allocation11], %s324
        %v327 = vld [vmem:[%s3] sm:$0x1]
        %v328 = vld [vmem:[%s4] sm:$0x1]
        %v329 = vld [vmem:[%s5] sm:$0x1]
        %v330 = vld [vmem:[%s6] sm:$0x1]
        %v331 = vlaneseq
        %v332 = vshrl.u32 %v331, 7
        %v333 = vadd.s32 %v332, 8
        %v334 = vadd.s32 %v332, 16
        %v335 = vadd.s32 %v332, 24
        %v336 = vadd.s32 %v332, 32
        %v337 = vadd.s32 %v332, 40
        %v338 = vadd.s32 %v332, 48
        %v339 = vadd.s32 %v332, 56
        %v340 = vadd.s32 %v332, 64
        %v341 = vadd.s32 %v332, 72
        %v342 = vadd.s32 %v332, 80
        %v343 = vadd.s32 %v332, 88
        %v344 = vadd.s32 %v332, 96
        %v345 = vadd.s32 %v332, 104
        %v346 = vadd.s32 %v332, 112
        %v347 = vadd.s32 %v332, 120
        %v348 = vadd.s32 %v332, 128
        %v349 = vadd.s32 %v332, 136
        %v350 = vadd.s32 %v332, 144
        %v351 = vadd.s32 %v332, 152
        %v352 = vadd.s32 %v332, 160
        %v353 = vadd.s32 %v332, 168
        %v354 = vadd.s32 %v332, 176
        %v355 = vadd.s32 %v332, 184
        %v356 = vadd.s32 %v332, 192
        %v357 = vadd.s32 %v332, 200
        %v358 = vadd.s32 %v332, 208
        %v359 = vadd.s32 %v332, 216
        %v360 = vadd.s32 %v332, 224
        %v361 = vadd.s32 %v332, 232
        %v362 = vadd.s32 %v332, 240
        %v363 = vadd.s32 %v332, 248
        %v364 = vadd.s32 %v332, 256
        %v365 = vadd.s32 %v332, 264
        %v366 = vadd.s32 %v332, 272
        %v367 = vadd.s32 %v332, 280
        %v368 = vadd.s32 %v332, 288
        %v369 = vadd.s32 %v332, 296
        %v370 = vadd.s32 %v332, 304
        %v371 = vadd.s32 %v332, 312
        %v372 = vadd.s32 %v332, 320
        %v373 = vadd.s32 %v332, 328
        %v374 = vadd.s32 %v332, 336
        %v375 = vadd.s32 %v332, 344
        %v376 = vadd.s32 %v332, 352
        %v377 = vadd.s32 %v332, 360
        %v378 = vadd.s32 %v332, 368
        %v379 = vadd.s32 %v332, 376
        %vm380 = vcmp.lt.s32.totalorder %v332, 0
        %v381 = vsub.s32 0, %v332
        %v382 = vsel %vm380, %v381, %v332
        %v383 = vmul.u32.u64.compose %v382, 2863311531
        %v384 = vextract.low.u32 %v383
        %v385 = vextract.high.u32 %v383
        %v386 = vshrl.u32 %v385, 4
        %v387 = vmul.u32 %v386, 24
        %v388 = vsub.s32 %v382, %v387
        %v389 = vsub.s32 0, %v388
        %v390 = vsel %vm380, %v389, %v388
        %vm391 = vcmp.lt.s32.totalorder %v333, 0
        %v392 = vsub.s32 0, %v333
        %v393 = vsel %vm391, %v392, %v333
        %v394 = vmul.u32.u64.compose %v393, 2863311531
        %v395 = vextract.low.u32 %v394
        %v396 = vextract.high.u32 %v394
        %v397 = vshrl.u32 %v396, 4
        %v398 = vmul.u32 %v397, 24
        %v399 = vsub.s32 %v393, %v398
        %v400 = vsub.s32 0, %v399
        %v401 = vsel %vm391, %v400, %v399
        %vm402 = vcmp.lt.s32.totalorder %v334, 0
        %v403 = vsub.s32 0, %v334
        %v404 = vsel %vm402, %v403, %v334
        %v405 = vmul.u32.u64.compose %v404, 2863311531
        %v406 = vextract.low.u32 %v405
        %v407 = vextract.high.u32 %v405
        %v408 = vshrl.u32 %v407, 4
        %v409 = vmul.u32 %v408, 24
        %v410 = vsub.s32 %v404, %v409
        %v411 = vsub.s32 0, %v410
        %v412 = vsel %vm402, %v411, %v410
        %vm413 = vcmp.lt.s32.totalorder %v335, 0
        %v414 = vsub.s32 0, %v335
        %v415 = vsel %vm413, %v414, %v335
        %v416 = vmul.u32.u64.compose %v415, 2863311531
        %v417 = vextract.low.u32 %v416
        %v418 = vextract.high.u32 %v416
        %v419 = vshrl.u32 %v418, 4
        %v420 = vmul.u32 %v419, 24
        %v421 = vsub.s32 %v415, %v420
        %v422 = vsub.s32 0, %v421
        %v423 = vsel %vm413, %v422, %v421
        %vm424 = vcmp.lt.s32.totalorder %v336, 0
        %v425 = vsub.s32 0, %v336
        %v426 = vsel %vm424, %v425, %v336
        %v427 = vmul.u32.u64.compose %v426, 2863311531
        %v428 = vextract.low.u32 %v427
        %v429 = vextract.high.u32 %v427
        %v430 = vshrl.u32 %v429, 4
        %v431 = vmul.u32 %v430, 24
        %v432 = vsub.s32 %v426, %v431
        %v433 = vsub.s32 0, %v432
        %v434 = vsel %vm424, %v433, %v432
        %vm435 = vcmp.lt.s32.totalorder %v337, 0
        %v436 = vsub.s32 0, %v337
        %v437 = vsel %vm435, %v436, %v337
        %v438 = vmul.u32.u64.compose %v437, 2863311531
        %v439 = vextract.low.u32 %v438
        %v440 = vextract.high.u32 %v438
        %v441 = vshrl.u32 %v440, 4
        %v442 = vmul.u32 %v441, 24
        %v443 = vsub.s32 %v437, %v442
        %v444 = vsub.s32 0, %v443
        %v445 = vsel %vm435, %v444, %v443
        %vm446 = vcmp.lt.s32.totalorder %v338, 0
        %v447 = vsub.s32 0, %v338
        %v448 = vsel %vm446, %v447, %v338
        %v449 = vmul.u32.u64.compose %v448, 2863311531
        %v450 = vextract.low.u32 %v449
        %v451 = vextract.high.u32 %v449
        %v452 = vshrl.u32 %v451, 4
        %v453 = vmul.u32 %v452, 24
        %v454 = vsub.s32 %v448, %v453
        %v455 = vsub.s32 0, %v454
        %v456 = vsel %vm446, %v455, %v454
        %vm457 = vcmp.lt.s32.totalorder %v339, 0
        %v458 = vsub.s32 0, %v339
        %v459 = vsel %vm457, %v458, %v339
        %v460 = vmul.u32.u64.compose %v459, 2863311531
        %v461 = vextract.low.u32 %v460
        %v462 = vextract.high.u32 %v460
        %v463 = vshrl.u32 %v462, 4
        %v464 = vmul.u32 %v463, 24
        %v465 = vsub.s32 %v459, %v464
        %v466 = vsub.s32 0, %v465
        %v467 = vsel %vm457, %v466, %v465
        %vm468 = vcmp.lt.s32.totalorder %v340, 0
        %v469 = vsub.s32 0, %v340
        %v470 = vsel %vm468, %v469, %v340
        %v471 = vmul.u32.u64.compose %v470, 2863311531
        %v472 = vextract.low.u32 %v471
        %v473 = vextract.high.u32 %v471
        %v474 = vshrl.u32 %v473, 4
        %v475 = vmul.u32 %v474, 24
        %v476 = vsub.s32 %v470, %v475
        %v477 = vsub.s32 0, %v476
        %v478 = vsel %vm468, %v477, %v476
        %vm479 = vcmp.lt.s32.totalorder %v341, 0
        %v480 = vsub.s32 0, %v341
        %v481 = vsel %vm479, %v480, %v341
        %v482 = vmul.u32.u64.compose %v481, 2863311531
        %v483 = vextract.low.u32 %v482
        %v484 = vextract.high.u32 %v482
        %v485 = vshrl.u32 %v484, 4
        %v486 = vmul.u32 %v485, 24
        %v487 = vsub.s32 %v481, %v486
        %v488 = vsub.s32 0, %v487
        %v489 = vsel %vm479, %v488, %v487
        %vm490 = vcmp.lt.s32.totalorder %v342, 0
        %v491 = vsub.s32 0, %v342
        %v492 = vsel %vm490, %v491, %v342
        %v493 = vmul.u32.u64.compose %v492, 2863311531
        %v494 = vextract.low.u32 %v493
        %v495 = vextract.high.u32 %v493
        %v496 = vshrl.u32 %v495, 4
        %v497 = vmul.u32 %v496, 24
        %v498 = vsub.s32 %v492, %v497
        %v499 = vsub.s32 0, %v498
        %v500 = vsel %vm490, %v499, %v498
        %vm501 = vcmp.lt.s32.totalorder %v343, 0
        %v502 = vsub.s32 0, %v343
        %v503 = vsel %vm501, %v502, %v343
        %v504 = vmul.u32.u64.compose %v503, 2863311531
        %v505 = vextract.low.u32 %v504
        %v506 = vextract.high.u32 %v504
        %v507 = vshrl.u32 %v506, 4
        %v508 = vmul.u32 %v507, 24
        %v509 = vsub.s32 %v503, %v508
        %v510 = vsub.s32 0, %v509
        %v511 = vsel %vm501, %v510, %v509
        %vm512 = vcmp.lt.s32.totalorder %v344, 0
        %v513 = vsub.s32 0, %v344
        %v514 = vsel %vm512, %v513, %v344
        %v515 = vmul.u32.u64.compose %v514, 2863311531
        %v516 = vextract.low.u32 %v515
        %v517 = vextract.high.u32 %v515
        %v518 = vshrl.u32 %v517, 4
        %v519 = vmul.u32 %v518, 24
        %v520 = vsub.s32 %v514, %v519
        %v521 = vsub.s32 0, %v520
        %v522 = vsel %vm512, %v521, %v520
        %vm523 = vcmp.lt.s32.totalorder %v345, 0
        %v524 = vsub.s32 0, %v345
        %v525 = vsel %vm523, %v524, %v345
        %v526 = vmul.u32.u64.compose %v525, 2863311531
        %v527 = vextract.low.u32 %v526
        %v528 = vextract.high.u32 %v526
        %v529 = vshrl.u32 %v528, 4
        %v530 = vmul.u32 %v529, 24
        %v531 = vsub.s32 %v525, %v530
        %v532 = vsub.s32 0, %v531
        %v533 = vsel %vm523, %v532, %v531
        %vm534 = vcmp.lt.s32.totalorder %v346, 0
        %v535 = vsub.s32 0, %v346
        %v536 = vsel %vm534, %v535, %v346
        %v537 = vmul.u32.u64.compose %v536, 2863311531
        %v538 = vextract.low.u32 %v537
        %v539 = vextract.high.u32 %v537
        %v540 = vshrl.u32 %v539, 4
        %v541 = vmul.u32 %v540, 24
        %v542 = vsub.s32 %v536, %v541
        %v543 = vsub.s32 0, %v542
        %v544 = vsel %vm534, %v543, %v542
        %vm545 = vcmp.lt.s32.totalorder %v347, 0
        %v546 = vsub.s32 0, %v347
        %v547 = vsel %vm545, %v546, %v347
        %v548 = vmul.u32.u64.compose %v547, 2863311531
        %v549 = vextract.low.u32 %v548
        %v550 = vextract.high.u32 %v548
        %v551 = vshrl.u32 %v550, 4
        %v552 = vmul.u32 %v551, 24
        %v553 = vsub.s32 %v547, %v552
        %v554 = vsub.s32 0, %v553
        %v555 = vsel %vm545, %v554, %v553
        %vm556 = vcmp.lt.s32.totalorder %v348, 0
        %v557 = vsub.s32 0, %v348
        %v558 = vsel %vm556, %v557, %v348
        %v559 = vmul.u32.u64.compose %v558, 2863311531
        %v560 = vextract.low.u32 %v559
        %v561 = vextract.high.u32 %v559
        %v562 = vshrl.u32 %v561, 4
        %v563 = vmul.u32 %v562, 24
        %v564 = vsub.s32 %v558, %v563
        %v565 = vsub.s32 0, %v564
        %v566 = vsel %vm556, %v565, %v564
        %vm567 = vcmp.lt.s32.totalorder %v349, 0
        %v568 = vsub.s32 0, %v349
        %v569 = vsel %vm567, %v568, %v349
        %v570 = vmul.u32.u64.compose %v569, 2863311531
        %v571 = vextract.low.u32 %v570
        %v572 = vextract.high.u32 %v570
        %v573 = vshrl.u32 %v572, 4
        %v574 = vmul.u32 %v573, 24
        %v575 = vsub.s32 %v569, %v574
        %v576 = vsub.s32 0, %v575
        %v577 = vsel %vm567, %v576, %v575
        %vm578 = vcmp.lt.s32.totalorder %v350, 0
        %v579 = vsub.s32 0, %v350
        %v580 = vsel %vm578, %v579, %v350
        %v581 = vmul.u32.u64.compose %v580, 2863311531
        %v582 = vextract.low.u32 %v581
        %v583 = vextract.high.u32 %v581
        %v584 = vshrl.u32 %v583, 4
        %v585 = vmul.u32 %v584, 24
        %v586 = vsub.s32 %v580, %v585
        %v587 = vsub.s32 0, %v586
        %v588 = vsel %vm578, %v587, %v586
        %vm589 = vcmp.lt.s32.totalorder %v351, 0
        %v590 = vsub.s32 0, %v351
        %v591 = vsel %vm589, %v590, %v351
        %v592 = vmul.u32.u64.compose %v591, 2863311531
        %v593 = vextract.low.u32 %v592
        %v594 = vextract.high.u32 %v592
        %v595 = vshrl.u32 %v594, 4
        %v596 = vmul.u32 %v595, 24
        %v597 = vsub.s32 %v591, %v596
        %v598 = vsub.s32 0, %v597
        %v599 = vsel %vm589, %v598, %v597
        %vm600 = vcmp.lt.s32.totalorder %v352, 0
        %v601 = vsub.s32 0, %v352
        %v602 = vsel %vm600, %v601, %v352
        %v603 = vmul.u32.u64.compose %v602, 2863311531
        %v604 = vextract.low.u32 %v603
        %v605 = vextract.high.u32 %v603
        %v606 = vshrl.u32 %v605, 4
        %v607 = vmul.u32 %v606, 24
        %v608 = vsub.s32 %v602, %v607
        %v609 = vsub.s32 0, %v608
        %v610 = vsel %vm600, %v609, %v608
        %vm611 = vcmp.lt.s32.totalorder %v353, 0
        %v612 = vsub.s32 0, %v353
        %v613 = vsel %vm611, %v612, %v353
        %v614 = vmul.u32.u64.compose %v613, 2863311531
        %v615 = vextract.low.u32 %v614
        %v616 = vextract.high.u32 %v614
        %v617 = vshrl.u32 %v616, 4
        %v618 = vmul.u32 %v617, 24
        %v619 = vsub.s32 %v613, %v618
        %v620 = vsub.s32 0, %v619
        %v621 = vsel %vm611, %v620, %v619
        %vm622 = vcmp.lt.s32.totalorder %v354, 0
        %v623 = vsub.s32 0, %v354
        %v624 = vsel %vm622, %v623, %v354
        %v625 = vmul.u32.u64.compose %v624, 2863311531
        %v626 = vextract.low.u32 %v625
        %v627 = vextract.high.u32 %v625
        %v628 = vshrl.u32 %v627, 4
        %v629 = vmul.u32 %v628, 24
        %v630 = vsub.s32 %v624, %v629
        %v631 = vsub.s32 0, %v630
        %v632 = vsel %vm622, %v631, %v630
        %vm633 = vcmp.lt.s32.totalorder %v355, 0
        %v634 = vsub.s32 0, %v355
        %v635 = vsel %vm633, %v634, %v355
        %v636 = vmul.u32.u64.compose %v635, 2863311531
        %v637 = vextract.low.u32 %v636
        %v638 = vextract.high.u32 %v636
        %v639 = vshrl.u32 %v638, 4
        %v640 = vmul.u32 %v639, 24
        %v641 = vsub.s32 %v635, %v640
        %v642 = vsub.s32 0, %v641
        %v643 = vsel %vm633, %v642, %v641
        %vm644 = vcmp.lt.s32.totalorder %v356, 0
        %v645 = vsub.s32 0, %v356
        %v646 = vsel %vm644, %v645, %v356
        %v647 = vmul.u32.u64.compose %v646, 2863311531
        %v648 = vextract.low.u32 %v647
        %v649 = vextract.high.u32 %v647
        %v650 = vshrl.u32 %v649, 4
        %v651 = vmul.u32 %v650, 24
        %v652 = vsub.s32 %v646, %v651
        %v653 = vsub.s32 0, %v652
        %v654 = vsel %vm644, %v653, %v652
        %vm655 = vcmp.lt.s32.totalorder %v357, 0
        %v656 = vsub.s32 0, %v357
        %v657 = vsel %vm655, %v656, %v357
        %v658 = vmul.u32.u64.compose %v657, 2863311531
        %v659 = vextract.low.u32 %v658
        %v660 = vextract.high.u32 %v658
        %v661 = vshrl.u32 %v660, 4
        %v662 = vmul.u32 %v661, 24
        %v663 = vsub.s32 %v657, %v662
        %v664 = vsub.s32 0, %v663
        %v665 = vsel %vm655, %v664, %v663
        %vm666 = vcmp.lt.s32.totalorder %v358, 0
        %v667 = vsub.s32 0, %v358
        %v668 = vsel %vm666, %v667, %v358
        %v669 = vmul.u32.u64.compose %v668, 2863311531
        %v670 = vextract.low.u32 %v669
        %v671 = vextract.high.u32 %v669
        %v672 = vshrl.u32 %v671, 4
        %v673 = vmul.u32 %v672, 24
        %v674 = vsub.s32 %v668, %v673
        %v675 = vsub.s32 0, %v674
        %v676 = vsel %vm666, %v675, %v674
        %vm677 = vcmp.lt.s32.totalorder %v359, 0
        %v678 = vsub.s32 0, %v359
        %v679 = vsel %vm677, %v678, %v359
        %v680 = vmul.u32.u64.compose %v679, 2863311531
        %v681 = vextract.low.u32 %v680
        %v682 = vextract.high.u32 %v680
        %v683 = vshrl.u32 %v682, 4
        %v684 = vmul.u32 %v683, 24
        %v685 = vsub.s32 %v679, %v684
        %v686 = vsub.s32 0, %v685
        %v687 = vsel %vm677, %v686, %v685
        %vm688 = vcmp.lt.s32.totalorder %v360, 0
        %v689 = vsub.s32 0, %v360
        %v690 = vsel %vm688, %v689, %v360
        %v691 = vmul.u32.u64.compose %v690, 2863311531
        %v692 = vextract.low.u32 %v691
        %v693 = vextract.high.u32 %v691
        %v694 = vshrl.u32 %v693, 4
        %v695 = vmul.u32 %v694, 24
        %v696 = vsub.s32 %v690, %v695
        %v697 = vsub.s32 0, %v696
        %v698 = vsel %vm688, %v697, %v696
        %vm699 = vcmp.lt.s32.totalorder %v361, 0
        %v700 = vsub.s32 0, %v361
        %v701 = vsel %vm699, %v700, %v361
        %v702 = vmul.u32.u64.compose %v701, 2863311531
        %v703 = vextract.low.u32 %v702
        %v704 = vextract.high.u32 %v702
        %v705 = vshrl.u32 %v704, 4
        %v706 = vmul.u32 %v705, 24
        %v707 = vsub.s32 %v701, %v706
        %v708 = vsub.s32 0, %v707
        %v709 = vsel %vm699, %v708, %v707
        %vm710 = vcmp.lt.s32.totalorder %v362, 0
        %v711 = vsub.s32 0, %v362
        %v712 = vsel %vm710, %v711, %v362
        %v713 = vmul.u32.u64.compose %v712, 2863311531
        %v714 = vextract.low.u32 %v713
        %v715 = vextract.high.u32 %v713
        %v716 = vshrl.u32 %v715, 4
        %v717 = vmul.u32 %v716, 24
        %v718 = vsub.s32 %v712, %v717
        %v719 = vsub.s32 0, %v718
        %v720 = vsel %vm710, %v719, %v718
        %vm721 = vcmp.lt.s32.totalorder %v363, 0
        %v722 = vsub.s32 0, %v363
        %v723 = vsel %vm721, %v722, %v363
        %v724 = vmul.u32.u64.compose %v723, 2863311531
        %v725 = vextract.low.u32 %v724
        %v726 = vextract.high.u32 %v724
        %v727 = vshrl.u32 %v726, 4
        %v728 = vmul.u32 %v727, 24
        %v729 = vsub.s32 %v723, %v728
        %v730 = vsub.s32 0, %v729
        %v731 = vsel %vm721, %v730, %v729
        %vm732 = vcmp.lt.s32.totalorder %v364, 0
        %v733 = vsub.s32 0, %v364
        %v734 = vsel %vm732, %v733, %v364
        %v735 = vmul.u32.u64.compose %v734, 2863311531
        %v736 = vextract.low.u32 %v735
        %v737 = vextract.high.u32 %v735
        %v738 = vshrl.u32 %v737, 4
        %v739 = vmul.u32 %v738, 24
        %v740 = vsub.s32 %v734, %v739
        %v741 = vsub.s32 0, %v740
        %v742 = vsel %vm732, %v741, %v740
        %vm743 = vcmp.lt.s32.totalorder %v365, 0
        %v744 = vsub.s32 0, %v365
        %v745 = vsel %vm743, %v744, %v365
        %v746 = vmul.u32.u64.compose %v745, 2863311531
        %v747 = vextract.low.u32 %v746
        %v748 = vextract.high.u32 %v746
        %v749 = vshrl.u32 %v748, 4
        %v750 = vmul.u32 %v749, 24
        %v751 = vsub.s32 %v745, %v750
        %v752 = vsub.s32 0, %v751
        %v753 = vsel %vm743, %v752, %v751
        %vm754 = vcmp.lt.s32.totalorder %v366, 0
        %v755 = vsub.s32 0, %v366
        %v756 = vsel %vm754, %v755, %v366
        %v757 = vmul.u32.u64.compose %v756, 2863311531
        %v758 = vextract.low.u32 %v757
        %v759 = vextract.high.u32 %v757
        %v760 = vshrl.u32 %v759, 4
        %v761 = vmul.u32 %v760, 24
        %v762 = vsub.s32 %v756, %v761
        %v763 = vsub.s32 0, %v762
        %v764 = vsel %vm754, %v763, %v762
        %vm765 = vcmp.lt.s32.totalorder %v367, 0
        %v766 = vsub.s32 0, %v367
        %v767 = vsel %vm765, %v766, %v367
        %v768 = vmul.u32.u64.compose %v767, 2863311531
        %v769 = vextract.low.u32 %v768
        %v770 = vextract.high.u32 %v768
        %v771 = vshrl.u32 %v770, 4
        %v772 = vmul.u32 %v771, 24
        %v773 = vsub.s32 %v767, %v772
        %v774 = vsub.s32 0, %v773
        %v775 = vsel %vm765, %v774, %v773
        %vm776 = vcmp.lt.s32.totalorder %v368, 0
        %v777 = vsub.s32 0, %v368
        %v778 = vsel %vm776, %v777, %v368
        %v779 = vmul.u32.u64.compose %v778, 2863311531
        %v780 = vextract.low.u32 %v779
        %v781 = vextract.high.u32 %v779
        %v782 = vshrl.u32 %v781, 4
        %v783 = vmul.u32 %v782, 24
        %v784 = vsub.s32 %v778, %v783
        %v785 = vsub.s32 0, %v784
        %v786 = vsel %vm776, %v785, %v784
        %vm787 = vcmp.lt.s32.totalorder %v369, 0
        %v788 = vsub.s32 0, %v369
        %v789 = vsel %vm787, %v788, %v369
        %v790 = vmul.u32.u64.compose %v789, 2863311531
        %v791 = vextract.low.u32 %v790
        %v792 = vextract.high.u32 %v790
        %v793 = vshrl.u32 %v792, 4
        %v794 = vmul.u32 %v793, 24
        %v795 = vsub.s32 %v789, %v794
        %v796 = vsub.s32 0, %v795
        %v797 = vsel %vm787, %v796, %v795
        %vm798 = vcmp.lt.s32.totalorder %v370, 0
        %v799 = vsub.s32 0, %v370
        %v800 = vsel %vm798, %v799, %v370
        %v801 = vmul.u32.u64.compose %v800, 2863311531
        %v802 = vextract.low.u32 %v801
        %v803 = vextract.high.u32 %v801
        %v804 = vshrl.u32 %v803, 4
        %v805 = vmul.u32 %v804, 24
        %v806 = vsub.s32 %v800, %v805
        %v807 = vsub.s32 0, %v806
        %v808 = vsel %vm798, %v807, %v806
        %vm809 = vcmp.lt.s32.totalorder %v371, 0
        %v810 = vsub.s32 0, %v371
        %v811 = vsel %vm809, %v810, %v371
        %v812 = vmul.u32.u64.compose %v811, 2863311531
        %v813 = vextract.low.u32 %v812
        %v814 = vextract.high.u32 %v812
        %v815 = vshrl.u32 %v814, 4
        %v816 = vmul.u32 %v815, 24
        %v817 = vsub.s32 %v811, %v816
        %v818 = vsub.s32 0, %v817
        %v819 = vsel %vm809, %v818, %v817
        %vm820 = vcmp.lt.s32.totalorder %v372, 0
        %v821 = vsub.s32 0, %v372
        %v822 = vsel %vm820, %v821, %v372
        %v823 = vmul.u32.u64.compose %v822, 2863311531
        %v824 = vextract.low.u32 %v823
        %v825 = vextract.high.u32 %v823
        %v826 = vshrl.u32 %v825, 4
        %v827 = vmul.u32 %v826, 24
        %v828 = vsub.s32 %v822, %v827
        %v829 = vsub.s32 0, %v828
        %v830 = vsel %vm820, %v829, %v828
        %vm831 = vcmp.lt.s32.totalorder %v373, 0
        %v832 = vsub.s32 0, %v373
        %v833 = vsel %vm831, %v832, %v373
        %v834 = vmul.u32.u64.compose %v833, 2863311531
        %v835 = vextract.low.u32 %v834
        %v836 = vextract.high.u32 %v834
        %v837 = vshrl.u32 %v836, 4
        %v838 = vmul.u32 %v837, 24
        %v839 = vsub.s32 %v833, %v838
        %v840 = vsub.s32 0, %v839
        %v841 = vsel %vm831, %v840, %v839
        %vm842 = vcmp.lt.s32.totalorder %v374, 0
        %v843 = vsub.s32 0, %v374
        %v844 = vsel %vm842, %v843, %v374
        %v845 = vmul.u32.u64.compose %v844, 2863311531
        %v846 = vextract.low.u32 %v845
        %v847 = vextract.high.u32 %v845
        %v848 = vshrl.u32 %v847, 4
        %v849 = vmul.u32 %v848, 24
        %v850 = vsub.s32 %v844, %v849
        %v851 = vsub.s32 0, %v850
        %v852 = vsel %vm842, %v851, %v850
        %vm853 = vcmp.lt.s32.totalorder %v375, 0
        %v854 = vsub.s32 0, %v375
        %v855 = vsel %vm853, %v854, %v375
        %v856 = vmul.u32.u64.compose %v855, 2863311531
        %v857 = vextract.low.u32 %v856
        %v858 = vextract.high.u32 %v856
        %v859 = vshrl.u32 %v858, 4
        %v860 = vmul.u32 %v859, 24
        %v861 = vsub.s32 %v855, %v860
        %v862 = vsub.s32 0, %v861
        %v863 = vsel %vm853, %v862, %v861
        %vm864 = vcmp.lt.s32.totalorder %v376, 0
        %v865 = vsub.s32 0, %v376
        %v866 = vsel %vm864, %v865, %v376
        %v867 = vmul.u32.u64.compose %v866, 2863311531
        %v868 = vextract.low.u32 %v867
        %v869 = vextract.high.u32 %v867
        %v870 = vshrl.u32 %v869, 4
        %v871 = vmul.u32 %v870, 24
        %v872 = vsub.s32 %v866, %v871
        %v873 = vsub.s32 0, %v872
        %v874 = vsel %vm864, %v873, %v872
        %vm875 = vcmp.lt.s32.totalorder %v377, 0
        %v876 = vsub.s32 0, %v377
        %v877 = vsel %vm875, %v876, %v377
        %v878 = vmul.u32.u64.compose %v877, 2863311531
        %v879 = vextract.low.u32 %v878
        %v880 = vextract.high.u32 %v878
        %v881 = vshrl.u32 %v880, 4
        %v882 = vmul.u32 %v881, 24
        %v883 = vsub.s32 %v877, %v882
        %v884 = vsub.s32 0, %v883
        %v885 = vsel %vm875, %v884, %v883
        %vm886 = vcmp.lt.s32.totalorder %v378, 0
        %v887 = vsub.s32 0, %v378
        %v888 = vsel %vm886, %v887, %v378
        %v889 = vmul.u32.u64.compose %v888, 2863311531
        %v890 = vextract.low.u32 %v889
        %v891 = vextract.high.u32 %v889
        %v892 = vshrl.u32 %v891, 4
        %v893 = vmul.u32 %v892, 24
        %v894 = vsub.s32 %v888, %v893
        %v895 = vsub.s32 0, %v894
        %v896 = vsel %vm886, %v895, %v894
        %vm897 = vcmp.lt.s32.totalorder %v379, 0
        %v898 = vsub.s32 0, %v379
        %v899 = vsel %vm897, %v898, %v379
        %v900 = vmul.u32.u64.compose %v899, 2863311531
        %v901 = vextract.low.u32 %v900
        %v902 = vextract.high.u32 %v900
        %v903 = vshrl.u32 %v902, 4
        %v904 = vmul.u32 %v903, 24
        %v905 = vsub.s32 %v899, %v904
        %v906 = vsub.s32 0, %v905
        %v907 = vsel %vm897, %v906, %v905
        %vm908 = vcmp.ne.s32.totalorder %v390, 0
        %vm909 = vcmp.ne.s32.totalorder %v401, 0
        %vm910 = vcmp.ne.s32.totalorder %v412, 0
        %vm911 = vcmp.ne.s32.totalorder %v423, 0
        %vm912 = vcmp.ne.s32.totalorder %v434, 0
        %vm913 = vcmp.ne.s32.totalorder %v445, 0
        %vm914 = vcmp.ne.s32.totalorder %v456, 0
        %vm915 = vcmp.ne.s32.totalorder %v467, 0
        %vm916 = vcmp.ne.s32.totalorder %v478, 0
        %vm917 = vcmp.ne.s32.totalorder %v489, 0
        %vm918 = vcmp.ne.s32.totalorder %v500, 0
        %vm919 = vcmp.ne.s32.totalorder %v511, 0
        %vm920 = vcmp.ne.s32.totalorder %v522, 0
        %vm921 = vcmp.ne.s32.totalorder %v533, 0
        %vm922 = vcmp.ne.s32.totalorder %v544, 0
        %vm923 = vcmp.ne.s32.totalorder %v555, 0
        %vm924 = vcmp.ne.s32.totalorder %v566, 0
        %vm925 = vcmp.ne.s32.totalorder %v577, 0
        %vm926 = vcmp.ne.s32.totalorder %v588, 0
        %vm927 = vcmp.ne.s32.totalorder %v599, 0
        %vm928 = vcmp.ne.s32.totalorder %v610, 0
        %vm929 = vcmp.ne.s32.totalorder %v621, 0
        %vm930 = vcmp.ne.s32.totalorder %v632, 0
        %vm931 = vcmp.ne.s32.totalorder %v643, 0
        %vm932 = vcmp.ne.s32.totalorder %v654, 0
        %vm933 = vcmp.ne.s32.totalorder %v665, 0
        %vm934 = vcmp.ne.s32.totalorder %v676, 0
        %vm935 = vcmp.ne.s32.totalorder %v687, 0
        %vm936 = vcmp.ne.s32.totalorder %v698, 0
        %vm937 = vcmp.ne.s32.totalorder %v709, 0
        %vm938 = vcmp.ne.s32.totalorder %v720, 0
        %vm939 = vcmp.ne.s32.totalorder %v731, 0
        %vm940 = vcmp.ne.s32.totalorder %v742, 0
        %vm941 = vcmp.ne.s32.totalorder %v753, 0
        %vm942 = vcmp.ne.s32.totalorder %v764, 0
        %vm943 = vcmp.ne.s32.totalorder %v775, 0
        %vm944 = vcmp.ne.s32.totalorder %v786, 0
        %vm945 = vcmp.ne.s32.totalorder %v797, 0
        %vm946 = vcmp.ne.s32.totalorder %v808, 0
        %vm947 = vcmp.ne.s32.totalorder %v819, 0
        %vm948 = vcmp.ne.s32.totalorder %v830, 0
        %vm949 = vcmp.ne.s32.totalorder %v841, 0
        %vm950 = vcmp.ne.s32.totalorder %v852, 0
        %vm951 = vcmp.ne.s32.totalorder %v863, 0
        %vm952 = vcmp.ne.s32.totalorder %v874, 0
        %vm953 = vcmp.ne.s32.totalorder %v885, 0
        %vm954 = vcmp.ne.s32.totalorder %v896, 0
        %vm955 = vcmp.ne.s32.totalorder %v907, 0
        %vm956 = vcmp.lt.s32.totalorder %v390, 0
        %vm957 = vcmp.lt.s32.totalorder %v401, 0
        %vm958 = vcmp.lt.s32.totalorder %v412, 0
        %vm959 = vcmp.lt.s32.totalorder %v423, 0
        %vm960 = vcmp.lt.s32.totalorder %v434, 0
        %vm961 = vcmp.lt.s32.totalorder %v445, 0
        %vm962 = vcmp.lt.s32.totalorder %v456, 0
        %vm963 = vcmp.lt.s32.totalorder %v467, 0
        %vm964 = vcmp.lt.s32.totalorder %v478, 0
        %vm965 = vcmp.lt.s32.totalorder %v489, 0
        %vm966 = vcmp.lt.s32.totalorder %v500, 0
        %vm967 = vcmp.lt.s32.totalorder %v511, 0
        %vm968 = vcmp.lt.s32.totalorder %v522, 0
        %vm969 = vcmp.lt.s32.totalorder %v533, 0
        %vm970 = vcmp.lt.s32.totalorder %v544, 0
        %vm971 = vcmp.lt.s32.totalorder %v555, 0
        %vm972 = vcmp.lt.s32.totalorder %v566, 0
        %vm973 = vcmp.lt.s32.totalorder %v577, 0
        %vm974 = vcmp.lt.s32.totalorder %v588, 0
        %vm975 = vcmp.lt.s32.totalorder %v599, 0
        %vm976 = vcmp.lt.s32.totalorder %v610, 0
        %vm977 = vcmp.lt.s32.totalorder %v621, 0
        %vm978 = vcmp.lt.s32.totalorder %v632, 0
        %vm979 = vcmp.lt.s32.totalorder %v643, 0
        %vm980 = vcmp.lt.s32.totalorder %v654, 0
        %vm981 = vcmp.lt.s32.totalorder %v665, 0
        %vm982 = vcmp.lt.s32.totalorder %v676, 0
        %vm983 = vcmp.lt.s32.totalorder %v687, 0
        %vm984 = vcmp.lt.s32.totalorder %v698, 0
        %vm985 = vcmp.lt.s32.totalorder %v709, 0
        %vm986 = vcmp.lt.s32.totalorder %v720, 0
        %vm987 = vcmp.lt.s32.totalorder %v731, 0
        %vm988 = vcmp.lt.s32.totalorder %v742, 0
        %vm989 = vcmp.lt.s32.totalorder %v753, 0
        %vm990 = vcmp.lt.s32.totalorder %v764, 0
        %vm991 = vcmp.lt.s32.totalorder %v775, 0
        %vm992 = vcmp.lt.s32.totalorder %v786, 0
        %vm993 = vcmp.lt.s32.totalorder %v797, 0
        %vm994 = vcmp.lt.s32.totalorder %v808, 0
        %vm995 = vcmp.lt.s32.totalorder %v819, 0
        %vm996 = vcmp.lt.s32.totalorder %v830, 0
        %vm997 = vcmp.lt.s32.totalorder %v841, 0
        %vm998 = vcmp.lt.s32.totalorder %v852, 0
        %vm999 = vcmp.lt.s32.totalorder %v863, 0
        %vm1000 = vcmp.lt.s32.totalorder %v874, 0
        %vm1001 = vcmp.lt.s32.totalorder %v885, 0
        %vm1002 = vcmp.lt.s32.totalorder %v896, 0
        %vm1003 = vcmp.lt.s32.totalorder %v907, 0
        %vm1004 = vmand %vm956, %vm908
        %vm1005 = vmand %vm957, %vm909
        %vm1006 = vmand %vm958, %vm910
        %vm1007 = vmand %vm959, %vm911
        %vm1008 = vmand %vm960, %vm912
        %vm1009 = vmand %vm961, %vm913
        %vm1010 = vmand %vm962, %vm914
        %vm1011 = vmand %vm963, %vm915
        %vm1012 = vmand %vm964, %vm916
        %vm1013 = vmand %vm965, %vm917
        %vm1014 = vmand %vm966, %vm918
        %vm1015 = vmand %vm967, %vm919
        %vm1016 = vmand %vm968, %vm920
        %vm1017 = vmand %vm969, %vm921
        %vm1018 = vmand %vm970, %vm922
        %vm1019 = vmand %vm971, %vm923
        %vm1020 = vmand %vm972, %vm924
        %vm1021 = vmand %vm973, %vm925
        %vm1022 = vmand %vm974, %vm926
        %vm1023 = vmand %vm975, %vm927
        %vm1024 = vmand %vm976, %vm928
        %vm1025 = vmand %vm977, %vm929
        %vm1026 = vmand %vm978, %vm930
        %vm1027 = vmand %vm979, %vm931
        %vm1028 = vmand %vm980, %vm932
        %vm1029 = vmand %vm981, %vm933
        %vm1030 = vmand %vm982, %vm934
        %vm1031 = vmand %vm983, %vm935
        %vm1032 = vmand %vm984, %vm936
        %vm1033 = vmand %vm985, %vm937
        %vm1034 = vmand %vm986, %vm938
        %vm1035 = vmand %vm987, %vm939
        %vm1036 = vmand %vm988, %vm940
        %vm1037 = vmand %vm989, %vm941
        %vm1038 = vmand %vm990, %vm942
        %vm1039 = vmand %vm991, %vm943
        %vm1040 = vmand %vm992, %vm944
        %vm1041 = vmand %vm993, %vm945
        %vm1042 = vmand %vm994, %vm946
        %vm1043 = vmand %vm995, %vm947
        %vm1044 = vmand %vm996, %vm948
        %vm1045 = vmand %vm997, %vm949
        %vm1046 = vmand %vm998, %vm950
        %vm1047 = vmand %vm999, %vm951
        %vm1048 = vmand %vm1000, %vm952
        %vm1049 = vmand %vm1001, %vm953
        %vm1050 = vmand %vm1002, %vm954
        %vm1051 = vmand %vm1003, %vm955
        %v1052 = vadd.s32 %v390, 24
        %v1053 = vadd.s32 %v401, 24
        %v1054 = vadd.s32 %v412, 24
        %v1055 = vadd.s32 %v423, 24
        %v1056 = vadd.s32 %v434, 24
        %v1057 = vadd.s32 %v445, 24
        %v1058 = vadd.s32 %v456, 24
        %v1059 = vadd.s32 %v467, 24
        %v1060 = vadd.s32 %v478, 24
        %v1061 = vadd.s32 %v489, 24
        %v1062 = vadd.s32 %v500, 24
        %v1063 = vadd.s32 %v511, 24
        %v1064 = vadd.s32 %v522, 24
        %v1065 = vadd.s32 %v533, 24
        %v1066 = vadd.s32 %v544, 24
        %v1067 = vadd.s32 %v555, 24
        %v1068 = vadd.s32 %v566, 24
        %v1069 = vadd.s32 %v577, 24
        %v1070 = vadd.s32 %v588, 24
        %v1071 = vadd.s32 %v599, 24
        %v1072 = vadd.s32 %v610, 24
        %v1073 = vadd.s32 %v621, 24
        %v1074 = vadd.s32 %v632, 24
        %v1075 = vadd.s32 %v643, 24
        %v1076 = vadd.s32 %v654, 24
        %v1077 = vadd.s32 %v665, 24
        %v1078 = vadd.s32 %v676, 24
        %v1079 = vadd.s32 %v687, 24
        %v1080 = vadd.s32 %v698, 24
        %v1081 = vadd.s32 %v709, 24
        %v1082 = vadd.s32 %v720, 24
        %v1083 = vadd.s32 %v731, 24
        %v1084 = vadd.s32 %v742, 24
        %v1085 = vadd.s32 %v753, 24
        %v1086 = vadd.s32 %v764, 24
        %v1087 = vadd.s32 %v775, 24
        %v1088 = vadd.s32 %v786, 24
        %v1089 = vadd.s32 %v797, 24
        %v1090 = vadd.s32 %v808, 24
        %v1091 = vadd.s32 %v819, 24
        %v1092 = vadd.s32 %v830, 24
        %v1093 = vadd.s32 %v841, 24
        %v1094 = vadd.s32 %v852, 24
        %v1095 = vadd.s32 %v863, 24
        %v1096 = vadd.s32 %v874, 24
        %v1097 = vadd.s32 %v885, 24
        %v1098 = vadd.s32 %v896, 24
        %v1099 = vadd.s32 %v907, 24
        %v1100 = vsel %vm1004, %v1052, %v390
        %v1101 = vsel %vm1005, %v1053, %v401
        %v1102 = vsel %vm1006, %v1054, %v412
        %v1103 = vsel %vm1007, %v1055, %v423
        %v1104 = vsel %vm1008, %v1056, %v434
        %v1105 = vsel %vm1009, %v1057, %v445
        %v1106 = vsel %vm1010, %v1058, %v456
        %v1107 = vsel %vm1011, %v1059, %v467
        %v1108 = vsel %vm1012, %v1060, %v478
        %v1109 = vsel %vm1013, %v1061, %v489
        %v1110 = vsel %vm1014, %v1062, %v500
        %v1111 = vsel %vm1015, %v1063, %v511
        %v1112 = vsel %vm1016, %v1064, %v522
        %v1113 = vsel %vm1017, %v1065, %v533
        %v1114 = vsel %vm1018, %v1066, %v544
        %v1115 = vsel %vm1019, %v1067, %v555
        %v1116 = vsel %vm1020, %v1068, %v566
        %v1117 = vsel %vm1021, %v1069, %v577
        %v1118 = vsel %vm1022, %v1070, %v588
        %v1119 = vsel %vm1023, %v1071, %v599
        %v1120 = vsel %vm1024, %v1072, %v610
        %v1121 = vsel %vm1025, %v1073, %v621
        %v1122 = vsel %vm1026, %v1074, %v632
        %v1123 = vsel %vm1027, %v1075, %v643
        %v1124 = vsel %vm1028, %v1076, %v654
        %v1125 = vsel %vm1029, %v1077, %v665
        %v1126 = vsel %vm1030, %v1078, %v676
        %v1127 = vsel %vm1031, %v1079, %v687
        %v1128 = vsel %vm1032, %v1080, %v698
        %v1129 = vsel %vm1033, %v1081, %v709
        %v1130 = vsel %vm1034, %v1082, %v720
        %v1131 = vsel %vm1035, %v1083, %v731
        %v1132 = vsel %vm1036, %v1084, %v742
        %v1133 = vsel %vm1037, %v1085, %v753
        %v1134 = vsel %vm1038, %v1086, %v764
        %v1135 = vsel %vm1039, %v1087, %v775
        %v1136 = vsel %vm1040, %v1088, %v786
        %v1137 = vsel %vm1041, %v1089, %v797
        %v1138 = vsel %vm1042, %v1090, %v808
        %v1139 = vsel %vm1043, %v1091, %v819
        %v1140 = vsel %vm1044, %v1092, %v830
        %v1141 = vsel %vm1045, %v1093, %v841
        %v1142 = vsel %vm1046, %v1094, %v852
        %v1143 = vsel %vm1047, %v1095, %v863
        %v1144 = vsel %vm1048, %v1096, %v874
        %v1145 = vsel %vm1049, %v1097, %v885
        %v1146 = vsel %vm1050, %v1098, %v896
        %v1147 = vsel %vm1051, %v1099, %v907
        %vm1148 = vcmp.lt.s32.totalorder %v1100, 16
        %vm1149 = vcmp.lt.s32.totalorder %v1101, 16
        %vm1150 = vcmp.lt.s32.totalorder %v1102, 16
        %vm1151 = vcmp.lt.s32.totalorder %v1103, 16
        %vm1152 = vcmp.lt.s32.totalorder %v1104, 16
        %vm1153 = vcmp.lt.s32.totalorder %v1105, 16
        %vm1154 = vcmp.lt.s32.totalorder %v1106, 16
        %vm1155 = vcmp.lt.s32.totalorder %v1107, 16
        %vm1156 = vcmp.lt.s32.totalorder %v1108, 16
        %vm1157 = vcmp.lt.s32.totalorder %v1109, 16
        %vm1158 = vcmp.lt.s32.totalorder %v1110, 16
        %vm1159 = vcmp.lt.s32.totalorder %v1111, 16
        %vm1160 = vcmp.lt.s32.totalorder %v1112, 16
        %vm1161 = vcmp.lt.s32.totalorder %v1113, 16
        %vm1162 = vcmp.lt.s32.totalorder %v1114, 16
        %vm1163 = vcmp.lt.s32.totalorder %v1115, 16
        %vm1164 = vcmp.lt.s32.totalorder %v1116, 16
        %vm1165 = vcmp.lt.s32.totalorder %v1117, 16
        %vm1166 = vcmp.lt.s32.totalorder %v1118, 16
        %vm1167 = vcmp.lt.s32.totalorder %v1119, 16
        %vm1168 = vcmp.lt.s32.totalorder %v1120, 16
        %vm1169 = vcmp.lt.s32.totalorder %v1121, 16
        %vm1170 = vcmp.lt.s32.totalorder %v1122, 16
        %vm1171 = vcmp.lt.s32.totalorder %v1123, 16
        %vm1172 = vcmp.lt.s32.totalorder %v1124, 16
        %vm1173 = vcmp.lt.s32.totalorder %v1125, 16
        %vm1174 = vcmp.lt.s32.totalorder %v1126, 16
        %vm1175 = vcmp.lt.s32.totalorder %v1127, 16
        %vm1176 = vcmp.lt.s32.totalorder %v1128, 16
        %vm1177 = vcmp.lt.s32.totalorder %v1129, 16
        %vm1178 = vcmp.lt.s32.totalorder %v1130, 16
        %vm1179 = vcmp.lt.s32.totalorder %v1131, 16
        %vm1180 = vcmp.lt.s32.totalorder %v1132, 16
        %vm1181 = vcmp.lt.s32.totalorder %v1133, 16
        %vm1182 = vcmp.lt.s32.totalorder %v1134, 16
        %vm1183 = vcmp.lt.s32.totalorder %v1135, 16
        %vm1184 = vcmp.lt.s32.totalorder %v1136, 16
        %vm1185 = vcmp.lt.s32.totalorder %v1137, 16
        %vm1186 = vcmp.lt.s32.totalorder %v1138, 16
        %vm1187 = vcmp.lt.s32.totalorder %v1139, 16
        %vm1188 = vcmp.lt.s32.totalorder %v1140, 16
        %vm1189 = vcmp.lt.s32.totalorder %v1141, 16
        %vm1190 = vcmp.lt.s32.totalorder %v1142, 16
        %vm1191 = vcmp.lt.s32.totalorder %v1143, 16
        %vm1192 = vcmp.lt.s32.totalorder %v1144, 16
        %vm1193 = vcmp.lt.s32.totalorder %v1145, 16
        %vm1194 = vcmp.lt.s32.totalorder %v1146, 16
        %vm1195 = vcmp.lt.s32.totalorder %v1147, 16
        %v1196 = vld [vmem:[%s287] sm:$0xf]
        %v1197 = vld [vmem:[%s287 + $0x4] sm:$0xf]
        %v1198 = vld [vmem:[%s287 + $0x8] sm:$0xf]
        %v1199 = vld [vmem:[%s287 + $0xc] sm:$0xf]
        %v1200 = vld [vmem:[%s287 + $0x10] sm:$0xf]
        %v1201 = vld [vmem:[%s287 + $0x14] sm:$0xf]
        %v1202 = vld [vmem:[%s287 + $0x18] sm:$0xf]
        %v1203 = vld [vmem:[%s287 + $0x1c] sm:$0xf]
        %v1204 = vld [vmem:[%s287 + $0x20] sm:$0xf]
        %v1205 = vld [vmem:[%s287 + $0x24] sm:$0xf]
        %v1206 = vld [vmem:[%s287 + $0x28] sm:$0xf]
        %v1207 = vld [vmem:[%s287 + $0x2c] sm:$0xf]
        %v1208 = vld [vmem:[%s287 + $0x30] sm:$0xf]
        %v1209 = vld [vmem:[%s287 + $0x34] sm:$0xf]
        %v1210 = vld [vmem:[%s287 + $0x38] sm:$0xf]
        %v1211 = vld [vmem:[%s287 + $0x3c] sm:$0xf]
        %v1212 = vld [vmem:[%s287 + $0x40] sm:$0xf]
        %v1213 = vld [vmem:[%s287 + $0x44] sm:$0xf]
        %v1214 = vld [vmem:[%s287 + $0x48] sm:$0xf]
        %v1215 = vld [vmem:[%s287 + $0x4c] sm:$0xf]
        %v1216 = vld [vmem:[%s287 + $0x50] sm:$0xf]
        %v1217 = vld [vmem:[%s287 + $0x54] sm:$0xf]
        %v1218 = vld [vmem:[%s287 + $0x58] sm:$0xf]
        %v1219 = vld [vmem:[%s287 + $0x5c] sm:$0xf]
        %v1220 = vld [vmem:[%s287 + $0x60] sm:$0xf]
        %v1221 = vld [vmem:[%s287 + $0x64] sm:$0xf]
        %v1222 = vld [vmem:[%s287 + $0x68] sm:$0xf]
        %v1223 = vld [vmem:[%s287 + $0x6c] sm:$0xf]
        %v1224 = vld [vmem:[%s287 + $0x70] sm:$0xf]
        %v1225 = vld [vmem:[%s287 + $0x74] sm:$0xf]
        %v1226 = vld [vmem:[%s287 + $0x78] sm:$0xf]
        %v1227 = vld [vmem:[%s287 + $0x7c] sm:$0xf]
        %v1228 = vld [vmem:[%s287 + $0x80] sm:$0xf]
        %v1229 = vld [vmem:[%s287 + $0x84] sm:$0xf]
        %v1230 = vld [vmem:[%s287 + $0x88] sm:$0xf]
        %v1231 = vld [vmem:[%s287 + $0x8c] sm:$0xf]
        %v1232 = vld [vmem:[%s287 + $0x90] sm:$0xf]
        %v1233 = vld [vmem:[%s287 + $0x94] sm:$0xf]
        %v1234 = vld [vmem:[%s287 + $0x98] sm:$0xf]
        %v1235 = vld [vmem:[%s287 + $0x9c] sm:$0xf]
        %v1236 = vld [vmem:[%s287 + $0xa0] sm:$0xf]
        %v1237 = vld [vmem:[%s287 + $0xa4] sm:$0xf]
        %v1238 = vld [vmem:[%s287 + $0xa8] sm:$0xf]
        %v1239 = vld [vmem:[%s287 + $0xac] sm:$0xf]
        %v1240 = vld [vmem:[%s287 + $0xb0] sm:$0xf]
        %v1241 = vld [vmem:[%s287 + $0xb4] sm:$0xf]
        %v1242 = vld [vmem:[%s287 + $0xb8] sm:$0xf]
        %v1243 = vld [vmem:[%s287 + $0xbc] sm:$0xf]
        %v1244 = vld [vmem:[%s287 + $0xc0] sm:$0xf]
        %v1245 = vld [vmem:[%s287 + $0xc4] sm:$0xf]
        %v1246 = vld [vmem:[%s287 + $0xc8] sm:$0xf]
        %v1247 = vld [vmem:[%s287 + $0xcc] sm:$0xf]
        %v1248 = vld [vmem:[%s287 + $0xd0] sm:$0xf]
        %v1249 = vld [vmem:[%s287 + $0xd4] sm:$0xf]
        %v1304 = vunpack.c.l.b16 %v1196
        %v1305 = vunpack.c.l.b16 %v1197
        %v1306 = vunpack.c.l.b16 %v1198
        %v1307 = vunpack.c.l.b16 %v1199
        %v1308 = vunpack.c.l.b16 %v1200
        %v1309 = vunpack.c.l.b16 %v1201
        %v1310 = vunpack.c.l.b16 %v1202
        %v1311 = vunpack.c.l.b16 %v1203
        %v1312 = vunpack.c.l.b16 %v1204
        %v1313 = vunpack.c.l.b16 %v1205
        %v1314 = vunpack.c.l.b16 %v1206
        %v1315 = vunpack.c.l.b16 %v1207
        %v1316 = vunpack.c.l.b16 %v1208
        %v1317 = vunpack.c.l.b16 %v1209
        %v1318 = vunpack.c.l.b16 %v1210
        %v1319 = vunpack.c.l.b16 %v1211
        %v1320 = vunpack.c.l.b16 %v1212
        %v1321 = vunpack.c.l.b16 %v1213
        %v1322 = vunpack.c.l.b16 %v1214
        %v1323 = vunpack.c.l.b16 %v1215
        %v1324 = vunpack.c.l.b16 %v1216
        %v1325 = vunpack.c.l.b16 %v1217
        %v1326 = vunpack.c.l.b16 %v1218
        %v1327 = vunpack.c.l.b16 %v1219
        %v1328 = vunpack.c.l.b16 %v1220
        %v1329 = vunpack.c.l.b16 %v1221
        %v1330 = vunpack.c.l.b16 %v1222
        %v1331 = vunpack.c.l.b16 %v1223
        %v1332 = vunpack.c.l.b16 %v1224
        %v1333 = vunpack.c.l.b16 %v1225
        %v1334 = vunpack.c.l.b16 %v1226
        %v1335 = vunpack.c.l.b16 %v1227
        %v1336 = vunpack.c.l.b16 %v1228
        %v1337 = vunpack.c.l.b16 %v1229
        %v1338 = vunpack.c.l.b16 %v1230
        %v1339 = vunpack.c.l.b16 %v1231
        %v1340 = vunpack.c.l.b16 %v1232
        %v1341 = vunpack.c.l.b16 %v1233
        %v1342 = vunpack.c.l.b16 %v1234
        %v1343 = vunpack.c.l.b16 %v1235
        %v1344 = vunpack.c.l.b16 %v1236
        %v1345 = vunpack.c.l.b16 %v1237
        %v1346 = vunpack.c.l.b16 %v1238
        %v1347 = vunpack.c.l.b16 %v1239
        %v1348 = vunpack.c.l.b16 %v1240
        %v1349 = vunpack.c.l.b16 %v1241
        %v1350 = vunpack.c.l.b16 %v1242
        %v1351 = vunpack.c.l.b16 %v1243
        %v1352 = vunpack.c.l.b16 %v1244
        %v1353 = vunpack.c.l.b16 %v1245
        %v1354 = vunpack.c.l.b16 %v1246
        %v1355 = vunpack.c.l.b16 %v1247
        %v1356 = vunpack.c.l.b16 %v1248
        %v1357 = vunpack.c.l.b16 %v1249
        %v1358 = vpack.c.b16 %v1305, %v1304
        %v1359 = vpack.c.b16 %v1307, %v1306
        %v1360 = vpack.c.b16 %v1309, %v1308
        %v1361 = vpack.c.b16 %v1311, %v1310
        %v1362 = vpack.c.b16 %v1313, %v1312
        %v1363 = vpack.c.b16 %v1315, %v1314
        %v1364 = vpack.c.b16 %v1317, %v1316
        %v1365 = vpack.c.b16 %v1319, %v1318
        %v1366 = vpack.c.b16 %v1321, %v1320
        %v1367 = vpack.c.b16 %v1323, %v1322
        %v1368 = vpack.c.b16 %v1325, %v1324
        %v1369 = vpack.c.b16 %v1327, %v1326
        %v1370 = vpack.c.b16 %v1329, %v1328
        %v1371 = vpack.c.b16 %v1331, %v1330
        %v1372 = vpack.c.b16 %v1333, %v1332
        %v1373 = vpack.c.b16 %v1335, %v1334
        %v1374 = vpack.c.b16 %v1337, %v1336
        %v1375 = vpack.c.b16 %v1339, %v1338
        %v1376 = vpack.c.b16 %v1341, %v1340
        %v1377 = vpack.c.b16 %v1343, %v1342
        %v1378 = vpack.c.b16 %v1345, %v1344
        %v1379 = vpack.c.b16 %v1347, %v1346
        %v1380 = vpack.c.b16 %v1349, %v1348
        %v1381 = vpack.c.b16 %v1351, %v1350
        %v1382 = vpack.c.b16 %v1353, %v1352
        %v1383 = vpack.c.b16 %v1355, %v1354
        %v1384 = vpack.c.b16 %v1357, %v1356
        %1412 = vst [vmem:[#allocation2] sm:$0xff] %v1358
        %1413 = vst [vmem:[#allocation2 + $0x18] sm:$0xff] %v1359
        %1414 = vst [vmem:[#allocation2 + $0x30] sm:$0xff] %v1360
        %1415 = vst [vmem:[#allocation2 + $0x48] sm:$0xff] %v1361
        %1416 = vst [vmem:[#allocation2 + $0x60] sm:$0xff] %v1362
        %1417 = vst [vmem:[#allocation2 + $0x78] sm:$0xff] %v1363
        %1418 = vst [vmem:[#allocation2 + $0x90] sm:$0xff] %v1364
        %1419 = vst [vmem:[#allocation2 + $0xa8] sm:$0xff] %v1365
        %1420 = vst [vmem:[#allocation2 + $0xc0] sm:$0xff] %v1366
        %1421 = vst [vmem:[#allocation2 + $0xd8] sm:$0xff] %v1367
        %1422 = vst [vmem:[#allocation2 + $0xf0] sm:$0xff] %v1368
        %1423 = vst [vmem:[#allocation2 + $0x108] sm:$0xff] %v1369
        %1424 = vst [vmem:[#allocation2 + $0x120] sm:$0xff] %v1370
        %1425 = vst [vmem:[#allocation2 + $0x138] sm:$0xff] %v1371
        %1426 = vst [vmem:[#allocation2 + $0x150] sm:$0xff] %v1372
        %1427 = vst [vmem:[#allocation2 + $0x168] sm:$0xff] %v1373
        %1428 = vst [vmem:[#allocation2 + $0x180] sm:$0xff] %v1374
        %1429 = vst [vmem:[#allocation2 + $0x198] sm:$0xff] %v1375
        %1430 = vst [vmem:[#allocation2 + $0x1b0] sm:$0xff] %v1376
        %1431 = vst [vmem:[#allocation2 + $0x1c8] sm:$0xff] %v1377
        %1432 = vst [vmem:[#allocation2 + $0x1e0] sm:$0xff] %v1378
        %1433 = vst [vmem:[#allocation2 + $0x1f8] sm:$0xff] %v1379
        %1434 = vst [vmem:[#allocation2 + $0x210] sm:$0xff] %v1380
        %1435 = vst [vmem:[#allocation2 + $0x228] sm:$0xff] %v1381
        %1436 = vst [vmem:[#allocation2 + $0x240] sm:$0xff] %v1382
        %1437 = vst [vmem:[#allocation2 + $0x258] sm:$0xff] %v1383
        %1438 = vst [vmem:[#allocation2 + $0x270] sm:$0xff] %v1384
        %v1439 = vld [vmem:[%s287] sm:$0xf]
        %v1440 = vld [vmem:[%s287 + $0x4] sm:$0xf]
        %v1441 = vld [vmem:[%s287 + $0x8] sm:$0xf]
        %v1442 = vld [vmem:[%s287 + $0xc] sm:$0xf]
        %v1443 = vld [vmem:[%s287 + $0x10] sm:$0xf]
        %v1444 = vld [vmem:[%s287 + $0x14] sm:$0xf]
        %v1445 = vld [vmem:[%s287 + $0x18] sm:$0xf]
        %v1446 = vld [vmem:[%s287 + $0x1c] sm:$0xf]
        %v1447 = vld [vmem:[%s287 + $0x20] sm:$0xf]
        %v1448 = vld [vmem:[%s287 + $0x24] sm:$0xf]
        %v1449 = vld [vmem:[%s287 + $0x28] sm:$0xf]
        %v1450 = vld [vmem:[%s287 + $0x2c] sm:$0xf]
        %v1451 = vld [vmem:[%s287 + $0x30] sm:$0xf]
        %v1452 = vld [vmem:[%s287 + $0x34] sm:$0xf]
        %v1453 = vld [vmem:[%s287 + $0x38] sm:$0xf]
        %v1454 = vld [vmem:[%s287 + $0x3c] sm:$0xf]
        %v1455 = vld [vmem:[%s287 + $0x40] sm:$0xf]
        %v1456 = vld [vmem:[%s287 + $0x44] sm:$0xf]
        %v1457 = vld [vmem:[%s287 + $0x48] sm:$0xf]
        %v1458 = vld [vmem:[%s287 + $0x4c] sm:$0xf]
        %v1459 = vld [vmem:[%s287 + $0x50] sm:$0xf]
        %v1460 = vld [vmem:[%s287 + $0x54] sm:$0xf]
        %v1461 = vld [vmem:[%s287 + $0x58] sm:$0xf]
        %v1462 = vld [vmem:[%s287 + $0x5c] sm:$0xf]
        %v1463 = vld [vmem:[%s287 + $0x60] sm:$0xf]
        %v1464 = vld [vmem:[%s287 + $0x64] sm:$0xf]
        %v1465 = vld [vmem:[%s287 + $0x68] sm:$0xf]
        %v1466 = vld [vmem:[%s287 + $0x6c] sm:$0xf]
        %v1467 = vld [vmem:[%s287 + $0x70] sm:$0xf]
        %v1468 = vld [vmem:[%s287 + $0x74] sm:$0xf]
        %v1469 = vld [vmem:[%s287 + $0x78] sm:$0xf]
        %v1470 = vld [vmem:[%s287 + $0x7c] sm:$0xf]
        %v1471 = vld [vmem:[%s287 + $0x80] sm:$0xf]
        %v1472 = vld [vmem:[%s287 + $0x84] sm:$0xf]
        %v1473 = vld [vmem:[%s287 + $0x88] sm:$0xf]
        %v1474 = vld [vmem:[%s287 + $0x8c] sm:$0xf]
        %v1475 = vld [vmem:[%s287 + $0x90] sm:$0xf]
        %v1476 = vld [vmem:[%s287 + $0x94] sm:$0xf]
        %v1477 = vld [vmem:[%s287 + $0x98] sm:$0xf]
        %v1478 = vld [vmem:[%s287 + $0x9c] sm:$0xf]
        %v1479 = vld [vmem:[%s287 + $0xa0] sm:$0xf]
        %v1480 = vld [vmem:[%s287 + $0xa4] sm:$0xf]
        %v1481 = vld [vmem:[%s287 + $0xa8] sm:$0xf]
        %v1482 = vld [vmem:[%s287 + $0xac] sm:$0xf]
        %v1483 = vld [vmem:[%s287 + $0xb0] sm:$0xf]
        %v1484 = vld [vmem:[%s287 + $0xb4] sm:$0xf]
        %v1485 = vld [vmem:[%s287 + $0xb8] sm:$0xf]
        %v1486 = vld [vmem:[%s287 + $0xbc] sm:$0xf]
        %v1487 = vld [vmem:[%s287 + $0xc0] sm:$0xf]
        %v1488 = vld [vmem:[%s287 + $0xc4] sm:$0xf]
        %v1489 = vld [vmem:[%s287 + $0xc8] sm:$0xf]
        %v1490 = vld [vmem:[%s287 + $0xcc] sm:$0xf]
        %v1491 = vld [vmem:[%s287 + $0xd0] sm:$0xf]
        %v1492 = vld [vmem:[%s287 + $0xd4] sm:$0xf]
        %v1493 = vld [vmem:[%s287 + $0xd8] sm:$0x1]
        %v1549 = vunpack.c.l.b16 %v1439
        %v1550 = vunpack.c.l.b16 %v1440
        %v1551 = vunpack.c.l.b16 %v1441
        %v1552 = vunpack.c.l.b16 %v1442
        %v1553 = vunpack.c.l.b16 %v1443
        %v1554 = vunpack.c.l.b16 %v1444
        %v1555 = vunpack.c.l.b16 %v1445
        %v1556 = vunpack.c.l.b16 %v1446
        %v1557 = vunpack.c.l.b16 %v1447
        %v1558 = vunpack.c.l.b16 %v1448
        %v1559 = vunpack.c.l.b16 %v1449
        %v1560 = vunpack.c.l.b16 %v1450
        %v1561 = vunpack.c.l.b16 %v1451
        %v1562 = vunpack.c.l.b16 %v1452
        %v1563 = vunpack.c.l.b16 %v1453
        %v1564 = vunpack.c.l.b16 %v1454
        %v1565 = vunpack.c.l.b16 %v1455
        %v1566 = vunpack.c.l.b16 %v1456
        %v1567 = vunpack.c.l.b16 %v1457
        %v1568 = vunpack.c.l.b16 %v1458
        %v1569 = vunpack.c.l.b16 %v1459
        %v1570 = vunpack.c.l.b16 %v1460
        %v1571 = vunpack.c.l.b16 %v1461
        %v1572 = vunpack.c.l.b16 %v1462
        %v1573 = vunpack.c.l.b16 %v1463
        %v1574 = vunpack.c.l.b16 %v1464
        %v1575 = vunpack.c.l.b16 %v1465
        %v1576 = vunpack.c.l.b16 %v1466
        %v1577 = vunpack.c.l.b16 %v1467
        %v1578 = vunpack.c.l.b16 %v1468
        %v1579 = vunpack.c.l.b16 %v1469
        %v1580 = vunpack.c.l.b16 %v1470
        %v1581 = vunpack.c.l.b16 %v1471
        %v1582 = vunpack.c.l.b16 %v1472
        %v1583 = vunpack.c.l.b16 %v1473
        %v1584 = vunpack.c.l.b16 %v1474
        %v1585 = vunpack.c.l.b16 %v1475
        %v1586 = vunpack.c.l.b16 %v1476
        %v1587 = vunpack.c.l.b16 %v1477
        %v1588 = vunpack.c.l.b16 %v1478
        %v1589 = vunpack.c.l.b16 %v1479
        %v1590 = vunpack.c.l.b16 %v1480
        %v1591 = vunpack.c.l.b16 %v1481
        %v1592 = vunpack.c.l.b16 %v1482
        %v1593 = vunpack.c.l.b16 %v1483
        %v1594 = vunpack.c.l.b16 %v1484
        %v1595 = vunpack.c.l.b16 %v1485
        %v1596 = vunpack.c.l.b16 %v1486
        %v1597 = vunpack.c.l.b16 %v1487
        %v1598 = vunpack.c.l.b16 %v1488
        %v1599 = vunpack.c.l.b16 %v1489
        %v1600 = vunpack.c.l.b16 %v1490
        %v1601 = vunpack.c.l.b16 %v1491
        %v1602 = vunpack.c.l.b16 %v1492
        %v1603 = vunpack.c.l.b16 %v1493
        %v1604 = vpack.c.b16 %v1550, %v1549
        %v1605 = vpack.c.b16 %v1552, %v1551
        %v1606 = vpack.c.b16 %v1554, %v1553
        %v1607 = vpack.c.b16 %v1556, %v1555
        %v1608 = vpack.c.b16 %v1558, %v1557
        %v1609 = vpack.c.b16 %v1560, %v1559
        %v1610 = vpack.c.b16 %v1562, %v1561
        %v1611 = vpack.c.b16 %v1564, %v1563
        %v1612 = vpack.c.b16 %v1566, %v1565
        %v1613 = vpack.c.b16 %v1568, %v1567
        %v1614 = vpack.c.b16 %v1570, %v1569
        %v1615 = vpack.c.b16 %v1572, %v1571
        %v1616 = vpack.c.b16 %v1574, %v1573
        %v1617 = vpack.c.b16 %v1576, %v1575
        %v1618 = vpack.c.b16 %v1578, %v1577
        %v1619 = vpack.c.b16 %v1580, %v1579
        %v1620 = vpack.c.b16 %v1582, %v1581
        %v1621 = vpack.c.b16 %v1584, %v1583
        %v1622 = vpack.c.b16 %v1586, %v1585
        %v1623 = vpack.c.b16 %v1588, %v1587
        %v1624 = vpack.c.b16 %v1590, %v1589
        %v1625 = vpack.c.b16 %v1592, %v1591
        %v1626 = vpack.c.b16 %v1594, %v1593
        %v1627 = vpack.c.b16 %v1596, %v1595
        %v1628 = vpack.c.b16 %v1598, %v1597
        %v1629 = vpack.c.b16 %v1600, %v1599
        %v1630 = vpack.c.b16 %v1602, %v1601
        %v1631 = vpack.c.b16 %v1603, %v1603
        %vm1632 = vsmask.f32 7424
        %v1634 = vshrl.u32 %v1604, 16
        %v1636 = vshll.u32 %v1604, 16
        %v1638 = vrot.slane %v1636, 1
        %v1639 = vor.u32 %v1634, %v1638
        %v1641 = vshll.u32 %v1605, 16
        %v1643 = vrot.slane %v1641, 1
        %v1644 = vsel %vm1632, %v1639, %v1643
        %v1645 = vshrl.u32 %v1605, 16
        %v1647 = vor.u32 %v1645, %v1643
        %v1649 = vshll.u32 %v1606, 16
        %v1651 = vrot.slane %v1649, 1
        %v1652 = vsel %vm1632, %v1647, %v1651
        %v1653 = vshrl.u32 %v1606, 16
        %v1655 = vor.u32 %v1653, %v1651
        %v1657 = vshll.u32 %v1607, 16
        %v1659 = vrot.slane %v1657, 1
        %v1660 = vsel %vm1632, %v1655, %v1659
        %v1661 = vshrl.u32 %v1607, 16
        %v1663 = vor.u32 %v1661, %v1659
        %v1665 = vshll.u32 %v1608, 16
        %v1667 = vrot.slane %v1665, 1
        %v1668 = vsel %vm1632, %v1663, %v1667
        %v1669 = vshrl.u32 %v1608, 16
        %v1671 = vor.u32 %v1669, %v1667
        %v1673 = vshll.u32 %v1609, 16
        %v1675 = vrot.slane %v1673, 1
        %v1676 = vsel %vm1632, %v1671, %v1675
        %v1677 = vshrl.u32 %v1609, 16
        %v1679 = vor.u32 %v1677, %v1675
        %v1681 = vshll.u32 %v1610, 16
        %v1683 = vrot.slane %v1681, 1
        %v1684 = vsel %vm1632, %v1679, %v1683
        %v1685 = vshrl.u32 %v1610, 16
        %v1687 = vor.u32 %v1685, %v1683
        %v1689 = vshll.u32 %v1611, 16
        %v1691 = vrot.slane %v1689, 1
        %v1692 = vsel %vm1632, %v1687, %v1691
        %v1693 = vshrl.u32 %v1611, 16
        %v1695 = vor.u32 %v1693, %v1691
        %v1697 = vshll.u32 %v1612, 16
        %v1699 = vrot.slane %v1697, 1
        %v1700 = vsel %vm1632, %v1695, %v1699
        %v1701 = vshrl.u32 %v1612, 16
        %v1703 = vor.u32 %v1701, %v1699
        %v1705 = vshll.u32 %v1613, 16
        %v1707 = vrot.slane %v1705, 1
        %v1708 = vsel %vm1632, %v1703, %v1707
        %v1709 = vshrl.u32 %v1613, 16
        %v1711 = vor.u32 %v1709, %v1707
        %v1713 = vshll.u32 %v1614, 16
        %v1715 = vrot.slane %v1713, 1
        %v1716 = vsel %vm1632, %v1711, %v1715
        %v1717 = vshrl.u32 %v1614, 16
        %v1719 = vor.u32 %v1717, %v1715
        %v1721 = vshll.u32 %v1615, 16
        %v1723 = vrot.slane %v1721, 1
        %v1724 = vsel %vm1632, %v1719, %v1723
        %v1725 = vshrl.u32 %v1615, 16
        %v1727 = vor.u32 %v1725, %v1723
        %v1729 = vshll.u32 %v1616, 16
        %v1731 = vrot.slane %v1729, 1
        %v1732 = vsel %vm1632, %v1727, %v1731
        %v1733 = vshrl.u32 %v1616, 16
        %v1735 = vor.u32 %v1733, %v1731
        %v1737 = vshll.u32 %v1617, 16
        %v1739 = vrot.slane %v1737, 1
        %v1740 = vsel %vm1632, %v1735, %v1739
        %v1741 = vshrl.u32 %v1617, 16
        %v1743 = vor.u32 %v1741, %v1739
        %v1745 = vshll.u32 %v1618, 16
        %v1747 = vrot.slane %v1745, 1
        %v1748 = vsel %vm1632, %v1743, %v1747
        %v1749 = vshrl.u32 %v1618, 16
        %v1751 = vor.u32 %v1749, %v1747
        %v1753 = vshll.u32 %v1619, 16
        %v1755 = vrot.slane %v1753, 1
        %v1756 = vsel %vm1632, %v1751, %v1755
        %v1757 = vshrl.u32 %v1619, 16
        %v1759 = vor.u32 %v1757, %v1755
        %v1761 = vshll.u32 %v1620, 16
        %v1763 = vrot.slane %v1761, 1
        %v1764 = vsel %vm1632, %v1759, %v1763
        %v1765 = vshrl.u32 %v1620, 16
        %v1767 = vor.u32 %v1765, %v1763
        %v1769 = vshll.u32 %v1621, 16
        %v1771 = vrot.slane %v1769, 1
        %v1772 = vsel %vm1632, %v1767, %v1771
        %v1773 = vshrl.u32 %v1621, 16
        %v1775 = vor.u32 %v1773, %v1771
        %v1777 = vshll.u32 %v1622, 16
        %v1779 = vrot.slane %v1777, 1
        %v1780 = vsel %vm1632, %v1775, %v1779
        %v1781 = vshrl.u32 %v1622, 16
        %v1783 = vor.u32 %v1781, %v1779
        %v1785 = vshll.u32 %v1623, 16
        %v1787 = vrot.slane %v1785, 1
        %v1788 = vsel %vm1632, %v1783, %v1787
        %v1789 = vshrl.u32 %v1623, 16
        %v1791 = vor.u32 %v1789, %v1787
        %v1793 = vshll.u32 %v1624, 16
        %v1795 = vrot.slane %v1793, 1
        %v1796 = vsel %vm1632, %v1791, %v1795
        %v1797 = vshrl.u32 %v1624, 16
        %v1799 = vor.u32 %v1797, %v1795
        %v1801 = vshll.u32 %v1625, 16
        %v1803 = vrot.slane %v1801, 1
        %v1804 = vsel %vm1632, %v1799, %v1803
        %v1805 = vshrl.u32 %v1625, 16
        %v1807 = vor.u32 %v1805, %v1803
        %v1809 = vshll.u32 %v1626, 16
        %v1811 = vrot.slane %v1809, 1
        %v1812 = vsel %vm1632, %v1807, %v1811
        %v1813 = vshrl.u32 %v1626, 16
        %v1815 = vor.u32 %v1813, %v1811
        %v1817 = vshll.u32 %v1627, 16
        %v1819 = vrot.slane %v1817, 1
        %v1820 = vsel %vm1632, %v1815, %v1819
        %v1821 = vshrl.u32 %v1627, 16
        %v1823 = vor.u32 %v1821, %v1819
        %v1825 = vshll.u32 %v1628, 16
        %v1827 = vrot.slane %v1825, 1
        %v1828 = vsel %vm1632, %v1823, %v1827
        %v1829 = vshrl.u32 %v1628, 16
        %v1831 = vor.u32 %v1829, %v1827
        %v1833 = vshll.u32 %v1629, 16
        %v1835 = vrot.slane %v1833, 1
        %v1836 = vsel %vm1632, %v1831, %v1835
        %v1837 = vshrl.u32 %v1629, 16
        %v1839 = vor.u32 %v1837, %v1835
        %v1841 = vshll.u32 %v1630, 16
        %v1843 = vrot.slane %v1841, 1
        %v1844 = vsel %vm1632, %v1839, %v1843
        %v1845 = vshrl.u32 %v1630, 16
        %v1847 = vor.u32 %v1845, %v1843
        %v1849 = vshll.u32 %v1631, 16
        %v1851 = vrot.slane %v1849, 1
        %v1852 = vsel %vm1632, %v1847, %v1851
        %1880 = vst [vmem:[#allocation2 + $0x8] sm:$0xff] %v1644
        %1881 = vst [vmem:[#allocation2 + $0x20] sm:$0xff] %v1652
        %1882 = vst [vmem:[#allocation2 + $0x38] sm:$0xff] %v1660
        %1883 = vst [vmem:[#allocation2 + $0x50] sm:$0xff] %v1668
        %1884 = vst [vmem:[#allocation2 + $0x68] sm:$0xff] %v1676
        %1885 = vst [vmem:[#allocation2 + $0x80] sm:$0xff] %v1684
        %1886 = vst [vmem:[#allocation2 + $0x98] sm:$0xff] %v1692
        %1887 = vst [vmem:[#allocation2 + $0xb0] sm:$0xff] %v1700
        %1888 = vst [vmem:[#allocation2 + $0xc8] sm:$0xff] %v1708
        %1889 = vst [vmem:[#allocation2 + $0xe0] sm:$0xff] %v1716
        %1890 = vst [vmem:[#allocation2 + $0xf8] sm:$0xff] %v1724
        %1891 = vst [vmem:[#allocation2 + $0x110] sm:$0xff] %v1732
        %1892 = vst [vmem:[#allocation2 + $0x128] sm:$0xff] %v1740
        %1893 = vst [vmem:[#allocation2 + $0x140] sm:$0xff] %v1748
        %1894 = vst [vmem:[#allocation2 + $0x158] sm:$0xff] %v1756
        %1895 = vst [vmem:[#allocation2 + $0x170] sm:$0xff] %v1764
        %1896 = vst [vmem:[#allocation2 + $0x188] sm:$0xff] %v1772
        %1897 = vst [vmem:[#allocation2 + $0x1a0] sm:$0xff] %v1780
        %1898 = vst [vmem:[#allocation2 + $0x1b8] sm:$0xff] %v1788
        %1899 = vst [vmem:[#allocation2 + $0x1d0] sm:$0xff] %v1796
        %1900 = vst [vmem:[#allocation2 + $0x1e8] sm:$0xff] %v1804
        %1901 = vst [vmem:[#allocation2 + $0x200] sm:$0xff] %v1812
        %1902 = vst [vmem:[#allocation2 + $0x218] sm:$0xff] %v1820
        %1903 = vst [vmem:[#allocation2 + $0x230] sm:$0xff] %v1828
        %1904 = vst [vmem:[#allocation2 + $0x248] sm:$0xff] %v1836
        %1905 = vst [vmem:[#allocation2 + $0x260] sm:$0xff] %v1844
        %1906 = vst [vmem:[#allocation2 + $0x278] sm:$0xff] %v1852
        %v1907 = vld [vmem:[%s287] sm:$0xe]
        %v1908 = vld [vmem:[%s287 + $0x4] sm:$0xf]
        %v1909 = vld [vmem:[%s287 + $0x8] sm:$0xf]
        %v1910 = vld [vmem:[%s287 + $0xc] sm:$0xf]
        %v1911 = vld [vmem:[%s287 + $0x10] sm:$0xf]
        %v1912 = vld [vmem:[%s287 + $0x14] sm:$0xf]
        %v1913 = vld [vmem:[%s287 + $0x18] sm:$0xf]
        %v1914 = vld [vmem:[%s287 + $0x1c] sm:$0xf]
        %v1915 = vld [vmem:[%s287 + $0x20] sm:$0xf]
        %v1916 = vld [vmem:[%s287 + $0x24] sm:$0xf]
        %v1917 = vld [vmem:[%s287 + $0x28] sm:$0xf]
        %v1918 = vld [vmem:[%s287 + $0x2c] sm:$0xf]
        %v1919 = vld [vmem:[%s287 + $0x30] sm:$0xf]
        %v1920 = vld [vmem:[%s287 + $0x34] sm:$0xf]
        %v1921 = vld [vmem:[%s287 + $0x38] sm:$0xf]
        %v1922 = vld [vmem:[%s287 + $0x3c] sm:$0xf]
        %v1923 = vld [vmem:[%s287 + $0x40] sm:$0xf]
        %v1924 = vld [vmem:[%s287 + $0x44] sm:$0xf]
        %v1925 = vld [vmem:[%s287 + $0x48] sm:$0xf]
        %v1926 = vld [vmem:[%s287 + $0x4c] sm:$0xf]
        %v1927 = vld [vmem:[%s287 + $0x50] sm:$0xf]
        %v1928 = vld [vmem:[%s287 + $0x54] sm:$0xf]
        %v1929 = vld [vmem:[%s287 + $0x58] sm:$0xf]
        %v1930 = vld [vmem:[%s287 + $0x5c] sm:$0xf]
        %v1931 = vld [vmem:[%s287 + $0x60] sm:$0xf]
        %v1932 = vld [vmem:[%s287 + $0x64] sm:$0xf]
        %v1933 = vld [vmem:[%s287 + $0x68] sm:$0xf]
        %v1934 = vld [vmem:[%s287 + $0x6c] sm:$0xf]
        %v1935 = vld [vmem:[%s287 + $0x70] sm:$0xf]
        %v1936 = vld [vmem:[%s287 + $0x74] sm:$0xf]
        %v1937 = vld [vmem:[%s287 + $0x78] sm:$0xf]
        %v1938 = vld [vmem:[%s287 + $0x7c] sm:$0xf]
        %v1939 = vld [vmem:[%s287 + $0x80] sm:$0xf]
        %v1940 = vld [vmem:[%s287 + $0x84] sm:$0xf]
        %v1941 = vld [vmem:[%s287 + $0x88] sm:$0xf]
        %v1942 = vld [vmem:[%s287 + $0x8c] sm:$0xf]
        %v1943 = vld [vmem:[%s287 + $0x90] sm:$0xf]
        %v1944 = vld [vmem:[%s287 + $0x94] sm:$0xf]
        %v1945 = vld [vmem:[%s287 + $0x98] sm:$0xf]
        %v1946 = vld [vmem:[%s287 + $0x9c] sm:$0xf]
        %v1947 = vld [vmem:[%s287 + $0xa0] sm:$0xf]
        %v1948 = vld [vmem:[%s287 + $0xa4] sm:$0xf]
        %v1949 = vld [vmem:[%s287 + $0xa8] sm:$0xf]
        %v1950 = vld [vmem:[%s287 + $0xac] sm:$0xf]
        %v1951 = vld [vmem:[%s287 + $0xb0] sm:$0xf]
        %v1952 = vld [vmem:[%s287 + $0xb4] sm:$0xf]
        %v1953 = vld [vmem:[%s287 + $0xb8] sm:$0xf]
        %v1954 = vld [vmem:[%s287 + $0xbc] sm:$0xf]
        %v1955 = vld [vmem:[%s287 + $0xc0] sm:$0xf]
        %v1956 = vld [vmem:[%s287 + $0xc4] sm:$0xf]
        %v1957 = vld [vmem:[%s287 + $0xc8] sm:$0xf]
        %v1958 = vld [vmem:[%s287 + $0xcc] sm:$0xf]
        %v1959 = vld [vmem:[%s287 + $0xd0] sm:$0xf]
        %v1960 = vld [vmem:[%s287 + $0xd4] sm:$0xf]
        %v1961 = vld [vmem:[%s287 + $0xd8] sm:$0x1]
        %v2017 = vunpack.c.l.b16 %v1907
        %v2018 = vunpack.c.l.b16 %v1908
        %v2019 = vunpack.c.l.b16 %v1909
        %v2020 = vunpack.c.l.b16 %v1910
        %v2021 = vunpack.c.l.b16 %v1911
        %v2022 = vunpack.c.l.b16 %v1912
        %v2023 = vunpack.c.l.b16 %v1913
        %v2024 = vunpack.c.l.b16 %v1914
        %v2025 = vunpack.c.l.b16 %v1915
        %v2026 = vunpack.c.l.b16 %v1916
        %v2027 = vunpack.c.l.b16 %v1917
        %v2028 = vunpack.c.l.b16 %v1918
        %v2029 = vunpack.c.l.b16 %v1919
        %v2030 = vunpack.c.l.b16 %v1920
        %v2031 = vunpack.c.l.b16 %v1921
        %v2032 = vunpack.c.l.b16 %v1922
        %v2033 = vunpack.c.l.b16 %v1923
        %v2034 = vunpack.c.l.b16 %v1924
        %v2035 = vunpack.c.l.b16 %v1925
        %v2036 = vunpack.c.l.b16 %v1926
        %v2037 = vunpack.c.l.b16 %v1927
        %v2038 = vunpack.c.l.b16 %v1928
        %v2039 = vunpack.c.l.b16 %v1929
        %v2040 = vunpack.c.l.b16 %v1930
        %v2041 = vunpack.c.l.b16 %v1931
        %v2042 = vunpack.c.l.b16 %v1932
        %v2043 = vunpack.c.l.b16 %v1933
        %v2044 = vunpack.c.l.b16 %v1934
        %v2045 = vunpack.c.l.b16 %v1935
        %v2046 = vunpack.c.l.b16 %v1936
        %v2047 = vunpack.c.l.b16 %v1937
        %v2048 = vunpack.c.l.b16 %v1938
        %v2049 = vunpack.c.l.b16 %v1939
        %v2050 = vunpack.c.l.b16 %v1940
        %v2051 = vunpack.c.l.b16 %v1941
        %v2052 = vunpack.c.l.b16 %v1942
        %v2053 = vunpack.c.l.b16 %v1943
        %v2054 = vunpack.c.l.b16 %v1944
        %v2055 = vunpack.c.l.b16 %v1945
        %v2056 = vunpack.c.l.b16 %v1946
        %v2057 = vunpack.c.l.b16 %v1947
        %v2058 = vunpack.c.l.b16 %v1948
        %v2059 = vunpack.c.l.b16 %v1949
        %v2060 = vunpack.c.l.b16 %v1950
        %v2061 = vunpack.c.l.b16 %v1951
        %v2062 = vunpack.c.l.b16 %v1952
        %v2063 = vunpack.c.l.b16 %v1953
        %v2064 = vunpack.c.l.b16 %v1954
        %v2065 = vunpack.c.l.b16 %v1955
        %v2066 = vunpack.c.l.b16 %v1956
        %v2067 = vunpack.c.l.b16 %v1957
        %v2068 = vunpack.c.l.b16 %v1958
        %v2069 = vunpack.c.l.b16 %v1959
        %v2070 = vunpack.c.l.b16 %v1960
        %v2071 = vunpack.c.l.b16 %v1961
        %v2072 = vpack.c.b16 %v2018, %v2017
        %v2073 = vpack.c.b16 %v2020, %v2019
        %v2074 = vpack.c.b16 %v2022, %v2021
        %v2075 = vpack.c.b16 %v2024, %v2023
        %v2076 = vpack.c.b16 %v2026, %v2025
        %v2077 = vpack.c.b16 %v2028, %v2027
        %v2078 = vpack.c.b16 %v2030, %v2029
        %v2079 = vpack.c.b16 %v2032, %v2031
        %v2080 = vpack.c.b16 %v2034, %v2033
        %v2081 = vpack.c.b16 %v2036, %v2035
        %v2082 = vpack.c.b16 %v2038, %v2037
        %v2083 = vpack.c.b16 %v2040, %v2039
        %v2084 = vpack.c.b16 %v2042, %v2041
        %v2085 = vpack.c.b16 %v2044, %v2043
        %v2086 = vpack.c.b16 %v2046, %v2045
        %v2087 = vpack.c.b16 %v2048, %v2047
        %v2088 = vpack.c.b16 %v2050, %v2049
        %v2089 = vpack.c.b16 %v2052, %v2051
        %v2090 = vpack.c.b16 %v2054, %v2053
        %v2091 = vpack.c.b16 %v2056, %v2055
        %v2092 = vpack.c.b16 %v2058, %v2057
        %v2093 = vpack.c.b16 %v2060, %v2059
        %v2094 = vpack.c.b16 %v2062, %v2061
        %v2095 = vpack.c.b16 %v2064, %v2063
        %v2096 = vpack.c.b16 %v2066, %v2065
        %v2097 = vpack.c.b16 %v2068, %v2067
        %v2098 = vpack.c.b16 %v2070, %v2069
        %v2099 = vpack.c.b16 %v2071, %v2071
        %vm2100 = vcmask 1046528
        %v2101 = vrot.slane %v2072, 1
        %v2102 = vrot.slane %v2073, 1
        %v2103 = vsel %vm2100, %v2101, %v2102
        %v2104 = vrot.slane %v2074, 1
        %v2105 = vsel %vm2100, %v2102, %v2104
        %v2106 = vrot.slane %v2075, 1
        %v2107 = vsel %vm2100, %v2104, %v2106
        %v2108 = vrot.slane %v2076, 1
        %v2109 = vsel %vm2100, %v2106, %v2108
        %v2110 = vrot.slane %v2077, 1
        %v2111 = vsel %vm2100, %v2108, %v2110
        %v2112 = vrot.slane %v2078, 1
        %v2113 = vsel %vm2100, %v2110, %v2112
        %v2114 = vrot.slane %v2079, 1
        %v2115 = vsel %vm2100, %v2112, %v2114
        %v2116 = vrot.slane %v2080, 1
        %v2117 = vsel %vm2100, %v2114, %v2116
        %v2118 = vrot.slane %v2081, 1
        %v2119 = vsel %vm2100, %v2116, %v2118
        %v2120 = vrot.slane %v2082, 1
        %v2121 = vsel %vm2100, %v2118, %v2120
        %v2122 = vrot.slane %v2083, 1
        %v2123 = vsel %vm2100, %v2120, %v2122
        %v2124 = vrot.slane %v2084, 1
        %v2125 = vsel %vm2100, %v2122, %v2124
        %v2126 = vrot.slane %v2085, 1
        %v2127 = vsel %vm2100, %v2124, %v2126
        %v2128 = vrot.slane %v2086, 1
        %v2129 = vsel %vm2100, %v2126, %v2128
        %v2130 = vrot.slane %v2087, 1
        %v2131 = vsel %vm2100, %v2128, %v2130
        %v2132 = vrot.slane %v2088, 1
        %v2133 = vsel %vm2100, %v2130, %v2132
        %v2134 = vrot.slane %v2089, 1
        %v2135 = vsel %vm2100, %v2132, %v2134
        %v2136 = vrot.slane %v2090, 1
        %v2137 = vsel %vm2100, %v2134, %v2136
        %v2138 = vrot.slane %v2091, 1
        %v2139 = vsel %vm2100, %v2136, %v2138
        %v2140 = vrot.slane %v2092, 1
        %v2141 = vsel %vm2100, %v2138, %v2140
        %v2142 = vrot.slane %v2093, 1
        %v2143 = vsel %vm2100, %v2140, %v2142
        %v2144 = vrot.slane %v2094, 1
        %v2145 = vsel %vm2100, %v2142, %v2144
        %v2146 = vrot.slane %v2095, 1
        %v2147 = vsel %vm2100, %v2144, %v2146
        %v2148 = vrot.slane %v2096, 1
        %v2149 = vsel %vm2100, %v2146, %v2148
        %v2150 = vrot.slane %v2097, 1
        %v2151 = vsel %vm2100, %v2148, %v2150
        %v2152 = vrot.slane %v2098, 1
        %v2153 = vsel %vm2100, %v2150, %v2152
        %v2154 = vrot.slane %v2099, 1
        %v2155 = vsel %vm2100, %v2152, %v2154
        %2183 = vst [vmem:[#allocation2 + $0x10] sm:$0xff] %v2103
        %2184 = vst [vmem:[#allocation2 + $0x28] sm:$0xff] %v2105
        %2185 = vst [vmem:[#allocation2 + $0x40] sm:$0xff] %v2107
        %2186 = vst [vmem:[#allocation2 + $0x58] sm:$0xff] %v2109
        %2187 = vst [vmem:[#allocation2 + $0x70] sm:$0xff] %v2111
        %2188 = vst [vmem:[#allocation2 + $0x88] sm:$0xff] %v2113
        %2189 = vst [vmem:[#allocation2 + $0xa0] sm:$0xff] %v2115
        %2190 = vst [vmem:[#allocation2 + $0xb8] sm:$0xff] %v2117
        %2191 = vst [vmem:[#allocation2 + $0xd0] sm:$0xff] %v2119
        %2192 = vst [vmem:[#allocation2 + $0xe8] sm:$0xff] %v2121
        %2193 = vst [vmem:[#allocation2 + $0x100] sm:$0xff] %v2123
        %2194 = vst [vmem:[#allocation2 + $0x118] sm:$0xff] %v2125
        %2195 = vst [vmem:[#allocation2 + $0x130] sm:$0xff] %v2127
        %2196 = vst [vmem:[#allocation2 + $0x148] sm:$0xff] %v2129
        %2197 = vst [vmem:[#allocation2 + $0x160] sm:$0xff] %v2131
        %2198 = vst [vmem:[#allocation2 + $0x178] sm:$0xff] %v2133
        %2199 = vst [vmem:[#allocation2 + $0x190] sm:$0xff] %v2135
        %2200 = vst [vmem:[#allocation2 + $0x1a8] sm:$0xff] %v2137
        %2201 = vst [vmem:[#allocation2 + $0x1c0] sm:$0xff] %v2139
        %2202 = vst [vmem:[#allocation2 + $0x1d8] sm:$0xff] %v2141
        %2203 = vst [vmem:[#allocation2 + $0x1f0] sm:$0xff] %v2143
        %2204 = vst [vmem:[#allocation2 + $0x208] sm:$0xff] %v2145
        %2205 = vst [vmem:[#allocation2 + $0x220] sm:$0xff] %v2147
        %2206 = vst [vmem:[#allocation2 + $0x238] sm:$0xff] %v2149
        %2207 = vst [vmem:[#allocation2 + $0x250] sm:$0xff] %v2151
        %2208 = vst [vmem:[#allocation2 + $0x268] sm:$0xff] %v2153
        %2209 = vst [vmem:[#allocation2 + $0x280] sm:$0xff] %v2155
        %v2210 = vld [vmem:[#allocation2] sm:$0xff]
        %v2211 = vld [vmem:[#allocation2 + $0x8] sm:$0xff]
        %v2212 = vld [vmem:[#allocation2 + $0x10] sm:$0xff]
        %v2213 = vld [vmem:[#allocation2 + $0x18] sm:$0xff]
        %v2214 = vld [vmem:[#allocation2 + $0x20] sm:$0xff]
        %v2215 = vld [vmem:[#allocation2 + $0x28] sm:$0xff]
        %v2216 = vld [vmem:[#allocation2 + $0x30] sm:$0xff]
        %v2217 = vld [vmem:[#allocation2 + $0x38] sm:$0xff]
        %v2218 = vld [vmem:[#allocation2 + $0x40] sm:$0xff]
        %v2219 = vld [vmem:[#allocation2 + $0x48] sm:$0xff]
        %v2220 = vld [vmem:[#allocation2 + $0x50] sm:$0xff]
        %v2221 = vld [vmem:[#allocation2 + $0x58] sm:$0xff]
        %v2222 = vld [vmem:[#allocation2 + $0x60] sm:$0xff]
        %v2223 = vld [vmem:[#allocation2 + $0x68] sm:$0xff]
        %v2224 = vld [vmem:[#allocation2 + $0x70] sm:$0xff]
        %v2225 = vld [vmem:[#allocation2 + $0x78] sm:$0xff]
        %v2226 = vld [vmem:[#allocation2 + $0x80] sm:$0xff]
        %v2227 = vld [vmem:[#allocation2 + $0x88] sm:$0xff]
        %v2228 = vld [vmem:[#allocation2 + $0x90] sm:$0xff]
        %v2229 = vld [vmem:[#allocation2 + $0x98] sm:$0xff]
        %v2230 = vld [vmem:[#allocation2 + $0xa0] sm:$0xff]
        %v2231 = vld [vmem:[#allocation2 + $0xa8] sm:$0xff]
        %v2232 = vld [vmem:[#allocation2 + $0xb0] sm:$0xff]
        %v2233 = vld [vmem:[#allocation2 + $0xb8] sm:$0xff]
        %v2234 = vld [vmem:[#allocation2 + $0xc0] sm:$0xff]
        %v2235 = vld [vmem:[#allocation2 + $0xc8] sm:$0xff]
        %v2236 = vld [vmem:[#allocation2 + $0xd0] sm:$0xff]
        %v2237 = vld [vmem:[#allocation2 + $0xd8] sm:$0xff]
        %v2238 = vld [vmem:[#allocation2 + $0xe0] sm:$0xff]
        %v2239 = vld [vmem:[#allocation2 + $0xe8] sm:$0xff]
        %v2240 = vld [vmem:[#allocation2 + $0xf0] sm:$0xff]
        %v2241 = vld [vmem:[#allocation2 + $0xf8] sm:$0xff]
        %v2242 = vld [vmem:[#allocation2 + $0x100] sm:$0xff]
        %v2243 = vld [vmem:[#allocation2 + $0x108] sm:$0xff]
        %v2244 = vld [vmem:[#allocation2 + $0x110] sm:$0xff]
        %v2245 = vld [vmem:[#allocation2 + $0x118] sm:$0xff]
        %v2246 = vld [vmem:[#allocation2 + $0x120] sm:$0xff]
        %v2247 = vld [vmem:[#allocation2 + $0x128] sm:$0xff]
        %v2248 = vld [vmem:[#allocation2 + $0x130] sm:$0xff]
        %v2249 = vld [vmem:[#allocation2 + $0x138] sm:$0xff]
        %v2250 = vld [vmem:[#allocation2 + $0x140] sm:$0xff]
        %v2251 = vld [vmem:[#allocation2 + $0x148] sm:$0xff]
        %v2252 = vld [vmem:[#allocation2 + $0x150] sm:$0xff]
        %v2253 = vld [vmem:[#allocation2 + $0x158] sm:$0xff]
        %v2254 = vld [vmem:[#allocation2 + $0x160] sm:$0xff]
        %v2255 = vld [vmem:[#allocation2 + $0x168] sm:$0xff]
        %v2256 = vld [vmem:[#allocation2 + $0x170] sm:$0xff]
        %v2257 = vld [vmem:[#allocation2 + $0x178] sm:$0xff]
        %v2258 = vld [vmem:[#allocation2 + $0x180] sm:$0xff]
        %v2259 = vld [vmem:[#allocation2 + $0x188] sm:$0xff]
        %v2260 = vld [vmem:[#allocation2 + $0x190] sm:$0xff]
        %v2261 = vld [vmem:[#allocation2 + $0x198] sm:$0xff]
        %v2262 = vld [vmem:[#allocation2 + $0x1a0] sm:$0xff]
        %v2263 = vld [vmem:[#allocation2 + $0x1a8] sm:$0xff]
        %v2264 = vld [vmem:[#allocation2 + $0x1b0] sm:$0xff]
        %v2265 = vld [vmem:[#allocation2 + $0x1b8] sm:$0xff]
        %v2266 = vld [vmem:[#allocation2 + $0x1c0] sm:$0xff]
        %v2267 = vld [vmem:[#allocation2 + $0x1c8] sm:$0xff]
        %v2268 = vld [vmem:[#allocation2 + $0x1d0] sm:$0xff]
        %v2269 = vld [vmem:[#allocation2 + $0x1d8] sm:$0xff]
        %v2270 = vld [vmem:[#allocation2 + $0x1e0] sm:$0xff]
        %v2271 = vld [vmem:[#allocation2 + $0x1e8] sm:$0xff]
        %v2272 = vld [vmem:[#allocation2 + $0x1f0] sm:$0xff]
        %v2273 = vld [vmem:[#allocation2 + $0x1f8] sm:$0xff]
        %v2274 = vld [vmem:[#allocation2 + $0x200] sm:$0xff]
        %v2275 = vld [vmem:[#allocation2 + $0x208] sm:$0xff]
        %v2276 = vld [vmem:[#allocation2 + $0x210] sm:$0xff]
        %v2277 = vld [vmem:[#allocation2 + $0x218] sm:$0xff]
        %v2278 = vld [vmem:[#allocation2 + $0x220] sm:$0xff]
        %v2279 = vld [vmem:[#allocation2 + $0x228] sm:$0xff]
        %v2280 = vld [vmem:[#allocation2 + $0x230] sm:$0xff]
        %v2281 = vld [vmem:[#allocation2 + $0x238] sm:$0xff]
        %v2282 = vld [vmem:[#allocation8] sm:$0xf]
        %v2283 = vld [vmem:[#allocation8 + $0x4] sm:$0xf]
        %v2284 = vld [vmem:[#allocation8 + $0x8] sm:$0xf]
        %v2285 = vld [vmem:[#allocation8 + $0xc] sm:$0xf]
        %v2286 = vld [vmem:[#allocation8 + $0x10] sm:$0xf]
        %v2287 = vld [vmem:[#allocation8 + $0x14] sm:$0xf]
        %v2288 = vld [vmem:[#allocation8 + $0x18] sm:$0xf]
        %v2289 = vld [vmem:[#allocation8 + $0x1c] sm:$0xf]
        %v2290 = vld [vmem:[#allocation8 + $0x20] sm:$0xf]
        %v2291 = vld [vmem:[#allocation8 + $0x24] sm:$0xf]
        %v2292 = vld [vmem:[#allocation8 + $0x28] sm:$0xf]
        %v2293 = vld [vmem:[#allocation8 + $0x2c] sm:$0xf]
        %v2294 = vld [vmem:[#allocation8 + $0x30] sm:$0xf]
        %v2295 = vld [vmem:[#allocation8 + $0x34] sm:$0xf]
        %v2296 = vld [vmem:[#allocation8 + $0x38] sm:$0xf]
        %v2297 = vld [vmem:[#allocation8 + $0x3c] sm:$0xf]
        %v2298 = vld [vmem:[#allocation8 + $0x40] sm:$0xf]
        %v2299 = vld [vmem:[#allocation8 + $0x44] sm:$0xf]
        %v2300 = vld [vmem:[#allocation8 + $0x48] sm:$0xf]
        %v2301 = vld [vmem:[#allocation8 + $0x4c] sm:$0xf]
        %v2302 = vld [vmem:[#allocation8 + $0x50] sm:$0xf]
        %v2303 = vld [vmem:[#allocation8 + $0x54] sm:$0xf]
        %v2304 = vld [vmem:[#allocation8 + $0x58] sm:$0xf]
        %v2305 = vld [vmem:[#allocation8 + $0x5c] sm:$0xf]
        %v2306 = vld [vmem:[#allocation8 + $0x60] sm:$0xf]
        %v2307 = vld [vmem:[#allocation8 + $0x64] sm:$0xf]
        %v2308 = vld [vmem:[#allocation8 + $0x68] sm:$0xf]
        %v2309 = vld [vmem:[#allocation8 + $0x6c] sm:$0xf]
        %v2310 = vld [vmem:[#allocation8 + $0x70] sm:$0xf]
        %v2311 = vld [vmem:[#allocation8 + $0x74] sm:$0xf]
        %v2312 = vld [vmem:[#allocation8 + $0x78] sm:$0xf]
        %v2313 = vld [vmem:[#allocation8 + $0x7c] sm:$0xf]
        %v2314 = vld [vmem:[#allocation8 + $0x80] sm:$0xf]
        %v2315 = vld [vmem:[#allocation8 + $0x84] sm:$0xf]
        %v2316 = vld [vmem:[#allocation8 + $0x88] sm:$0xf]
        %v2317 = vld [vmem:[#allocation8 + $0x8c] sm:$0xf]
        %v2318 = vld [vmem:[#allocation8 + $0x90] sm:$0xf]
        %v2319 = vld [vmem:[#allocation8 + $0x94] sm:$0xf]
        %v2320 = vld [vmem:[#allocation8 + $0x98] sm:$0xf]
        %v2321 = vld [vmem:[#allocation8 + $0x9c] sm:$0xf]
        %v2322 = vld [vmem:[#allocation8 + $0xa0] sm:$0xf]
        %v2323 = vld [vmem:[#allocation8 + $0xa4] sm:$0xf]
        %v2324 = vld [vmem:[#allocation8 + $0xa8] sm:$0xf]
        %v2325 = vld [vmem:[#allocation8 + $0xac] sm:$0xf]
        %v2326 = vld [vmem:[#allocation8 + $0xb0] sm:$0xf]
        %v2327 = vld [vmem:[#allocation8 + $0xb4] sm:$0xf]
        %v2328 = vld [vmem:[#allocation8 + $0xb8] sm:$0xf]
        %v2329 = vld [vmem:[#allocation8 + $0xbc] sm:$0xf]
        %v2378 = vunpack.c.l.b16 %v2282
        %v2379 = vunpack.c.l.b16 %v2283
        %v2380 = vunpack.c.l.b16 %v2284
        %v2381 = vunpack.c.l.b16 %v2285
        %v2382 = vunpack.c.l.b16 %v2286
        %v2383 = vunpack.c.l.b16 %v2287
        %v2384 = vunpack.c.l.b16 %v2288
        %v2385 = vunpack.c.l.b16 %v2289
        %v2386 = vunpack.c.l.b16 %v2290
        %v2387 = vunpack.c.l.b16 %v2291
        %v2388 = vunpack.c.l.b16 %v2292
        %v2389 = vunpack.c.l.b16 %v2293
        %v2390 = vunpack.c.l.b16 %v2294
        %v2391 = vunpack.c.l.b16 %v2295
        %v2392 = vunpack.c.l.b16 %v2296
        %v2393 = vunpack.c.l.b16 %v2297
        %v2394 = vunpack.c.l.b16 %v2298
        %v2395 = vunpack.c.l.b16 %v2299
        %v2396 = vunpack.c.l.b16 %v2300
        %v2397 = vunpack.c.l.b16 %v2301
        %v2398 = vunpack.c.l.b16 %v2302
        %v2399 = vunpack.c.l.b16 %v2303
        %v2400 = vunpack.c.l.b16 %v2304
        %v2401 = vunpack.c.l.b16 %v2305
        %v2402 = vunpack.c.l.b16 %v2306
        %v2403 = vunpack.c.l.b16 %v2307
        %v2404 = vunpack.c.l.b16 %v2308
        %v2405 = vunpack.c.l.b16 %v2309
        %v2406 = vunpack.c.l.b16 %v2310
        %v2407 = vunpack.c.l.b16 %v2311
        %v2408 = vunpack.c.l.b16 %v2312
        %v2409 = vunpack.c.l.b16 %v2313
        %v2410 = vunpack.c.l.b16 %v2314
        %v2411 = vunpack.c.l.b16 %v2315
        %v2412 = vunpack.c.l.b16 %v2316
        %v2413 = vunpack.c.l.b16 %v2317
        %v2414 = vunpack.c.l.b16 %v2318
        %v2415 = vunpack.c.l.b16 %v2319
        %v2416 = vunpack.c.l.b16 %v2320
        %v2417 = vunpack.c.l.b16 %v2321
        %v2418 = vunpack.c.l.b16 %v2322
        %v2419 = vunpack.c.l.b16 %v2323
        %v2420 = vunpack.c.l.b16 %v2324
        %v2421 = vunpack.c.l.b16 %v2325
        %v2422 = vunpack.c.l.b16 %v2326
        %v2423 = vunpack.c.l.b16 %v2327
        %v2424 = vunpack.c.l.b16 %v2328
        %v2425 = vunpack.c.l.b16 %v2329
        %v2426 = vpack.c.b16 %v2379, %v2378
        %v2427 = vpack.c.b16 %v2381, %v2380
        %v2428 = vpack.c.b16 %v2383, %v2382
        %v2429 = vpack.c.b16 %v2385, %v2384
        %v2430 = vpack.c.b16 %v2387, %v2386
        %v2431 = vpack.c.b16 %v2389, %v2388
        %v2432 = vpack.c.b16 %v2391, %v2390
        %v2433 = vpack.c.b16 %v2393, %v2392
        %v2434 = vpack.c.b16 %v2395, %v2394
        %v2435 = vpack.c.b16 %v2397, %v2396
        %v2436 = vpack.c.b16 %v2399, %v2398
        %v2437 = vpack.c.b16 %v2401, %v2400
        %v2438 = vpack.c.b16 %v2403, %v2402
        %v2439 = vpack.c.b16 %v2405, %v2404
        %v2440 = vpack.c.b16 %v2407, %v2406
        %v2441 = vpack.c.b16 %v2409, %v2408
        %v2442 = vpack.c.b16 %v2411, %v2410
        %v2443 = vpack.c.b16 %v2413, %v2412
        %v2444 = vpack.c.b16 %v2415, %v2414
        %v2445 = vpack.c.b16 %v2417, %v2416
        %v2446 = vpack.c.b16 %v2419, %v2418
        %v2447 = vpack.c.b16 %v2421, %v2420
        %v2448 = vpack.c.b16 %v2423, %v2422
        %v2449 = vpack.c.b16 %v2425, %v2424
        %2474 = vmatprep.subr.bf16.mxu0 0
        %2475 = vmatpush1.bf16.msra.mxu0 %v2426
        %2476 = vmatprep.subr.bf16.mxu0 0
        %2477 = vmatpush1.bf16.msra.mxu0 %v2427
        %2478 = vmatprep.subr.bf16.mxu0 0
        %2479 = vmatpush1.bf16.msra.mxu0 %v2428
        %2480 = vmatprep.subr.bf16.mxu0 0
        %2481 = vmatpush1.bf16.msra.mxu0 %v2429
        %2482 = vmatprep.subr.bf16.mxu0 0
        %2483 = vmatpush1.bf16.msra.mxu0 %v2430
        %2484 = vmatprep.subr.bf16.mxu0 0
        %2485 = vmatpush1.bf16.msra.mxu0 %v2431
        %2486 = vmatprep.subr.bf16.mxu0 0
        %2487 = vmatpush1.bf16.msra.mxu0 %v2432
        %2488 = vmatprep.subr.bf16.mxu0 0
        %2489 = vmatpush1.bf16.msra.mxu0 %v2433
        %2490 = vmatprep.subr.bf16.mxu0 0
        %2491 = vmatpush1.bf16.msra.mxu0 %v2434
        %2492 = vmatprep.subr.bf16.mxu0 0
        %2493 = vmatpush1.bf16.msra.mxu0 %v2435
        %2494 = vmatprep.subr.bf16.mxu0 0
        %2495 = vmatpush1.bf16.msra.mxu0 %v2436
        %2496 = vmatprep.subr.bf16.mxu0 0
        %2497 = vmatpush1.bf16.msra.mxu0 %v2437
        %2498 = vmatprep.subr.bf16.mxu0 0
        %2499 = vmatpush1.bf16.msra.mxu0 %v2438
        %2500 = vmatprep.subr.bf16.mxu0 0
        %2501 = vmatpush1.bf16.msra.mxu0 %v2439
        %2502 = vmatprep.subr.bf16.mxu0 0
        %2503 = vmatpush1.bf16.msra.mxu0 %v2440
        %2504 = vmatprep.subr.bf16.mxu0 0
        %2505 = vmatpush1.bf16.msra.mxu0 %v2441
        %2506 = vmatprep.mubr.bf16.mxu0 %v2211
        %2507 = vmatmul.mubr.bf16.gmra.mrb[0].mxu0 %v2210
        %v2508 = vpop.f32.mrb[0].mxu0
        %v2509 = vadd.f32 0.0, %v2508
        %v2510 = vpop.f32.mrb[0].mxu0
        %v2511 = vpop.f32.mrb[0].mxu0
        %v2512 = vadd.f32 0.0, %v2511
        %v2513 = vpop.f32.mrb[0].mxu0
        %2514 = vmatprep.mubr.bf16.mxu0 %v2214
        %2515 = vmatmul.mubr.bf16.gmra.mrb[0].mxu0 %v2213
        %v2516 = vpop.f32.mrb[0].mxu0
        %v2517 = vadd.f32 0.0, %v2516
        %v2518 = vpop.f32.mrb[0].mxu0
        %v2519 = vpop.f32.mrb[0].mxu0
        %v2520 = vadd.f32 0.0, %v2519
        %v2521 = vpop.f32.mrb[0].mxu0
        %2522 = vmatprep.mubr.bf16.mxu0 %v2217
        %2523 = vmatmul.mubr.bf16.gmra.mrb[0].mxu0 %v2216
        %v2524 = vpop.f32.mrb[0].mxu0
        %v2525 = vadd.f32 0.0, %v2524
        %v2526 = vpop.f32.mrb[0].mxu0
        %v2527 = vpop.f32.mrb[0].mxu0
        %v2528 = vadd.f32 0.0, %v2527
        %v2529 = vpop.f32.mrb[0].mxu0
        %2530 = vmatprep.mubr.bf16.mxu0 %v2220
        %2531 = vmatmul.mubr.bf16.gmra.mrb[0].mxu0 %v2219
        %v2532 = vpop.f32.mrb[0].mxu0
        %v2533 = vadd.f32 0.0, %v2532
        %v2534 = vpop.f32.mrb[0].mxu0
        %v2535 = vpop.f32.mrb[0].mxu0
        %v2536 = vadd.f32 0.0, %v2535
        %v2537 = vpop.f32.mrb[0].mxu0
        %2538 = vmatprep.mubr.bf16.mxu0 %v2223
        %2539 = vmatmul.mubr.bf16.gmra.mrb[0].mxu0 %v2222
        %v2540 = vpop.f32.mrb[0].mxu0
        %v2541 = vadd.f32 0.0, %v2540
        %v2542 = vpop.f32.mrb[0].mxu0
        %v2543 = vpop.f32.mrb[0].mxu0
        %v2544 = vadd.f32 0.0, %v2543
        %v2545 = vpop.f32.mrb[0].mxu0
        %2546 = vmatprep.mubr.bf16.mxu0 %v2226
        %2547 = vmatmul.mubr.bf16.gmra.mrb[0].mxu0 %v2225
        %v2548 = vpop.f32.mrb[0].mxu0
        %v2549 = vadd.f32 0.0, %v2548
        %v2550 = vpop.f32.mrb[0].mxu0
        %v2551 = vpop.f32.mrb[0].mxu0
        %v2552 = vadd.f32 0.0, %v2551
        %v2553 = vpop.f32.mrb[0].mxu0
        %2554 = vmatprep.mubr.bf16.mxu0 %v2229
        %2555 = vmatmul.mubr.bf16.gmra.mrb[0].mxu0 %v2228
        %v2556 = vpop.f32.mrb[0].mxu0
        %v2557 = vadd.f32 0.0, %v2556
        %v2558 = vpop.f32.mrb[0].mxu0
        %v2559 = vpop.f32.mrb[0].mxu0
        %v2560 = vadd.f32 0.0, %v2559
        %v2561 = vpop.f32.mrb[0].mxu0
        %2562 = vmatprep.mubr.bf16.mxu0 %v2232
        %2563 = vmatmul.mubr.bf16.gmra.mrb[0].mxu0 %v2231
        %v2564 = vpop.f32.mrb[0].mxu0
        %v2565 = vadd.f32 0.0, %v2564
        %v2566 = vpop.f32.mrb[0].mxu0
        %v2567 = vpop.f32.mrb[0].mxu0
        %v2568 = vadd.f32 0.0, %v2567
        %v2569 = vpop.f32.mrb[0].mxu0
        %2570 = vmatprep.mubr.bf16.mxu0 %v2235
        %2571 = vmatmul.mubr.bf16.gmra.mrb[0].mxu0 %v2234
        %v2572 = vpop.f32.mrb[0].mxu0
        %v2573 = vadd.f32 0.0, %v2572
        %v2574 = vpop.f32.mrb[0].mxu0
        %v2575 = vpop.f32.mrb[0].mxu0
        %v2576 = vadd.f32 0.0, %v2575
        %v2577 = vpop.f32.mrb[0].mxu0
        %2578 = vmatprep.mubr.bf16.mxu0 %v2238
        %2579 = vmatmul.mubr.bf16.gmra.mrb[0].mxu0 %v2237
        %v2580 = vpop.f32.mrb[0].mxu0
        %v2581 = vadd.f32 0.0, %v2580
        %v2582 = vpop.f32.mrb[0].mxu0
        %v2583 = vpop.f32.mrb[0].mxu0
        %v2584 = vadd.f32 0.0, %v2583
        %v2585 = vpop.f32.mrb[0].mxu0
        %2586 = vmatprep.mubr.bf16.mxu0 %v2241
        %2587 = vmatmul.mubr.bf16.gmra.mrb[0].mxu0 %v2240
        %v2588 = vpop.f32.mrb[0].mxu0
        %v2589 = vadd.f32 0.0, %v2588
        %v2590 = vpop.f32.mrb[0].mxu0
        %v2591 = vpop.f32.mrb[0].mxu0
        %v2592 = vadd.f32 0.0, %v2591
        %v2593 = vpop.f32.mrb[0].mxu0
        %2594 = vmatprep.mubr.bf16.mxu0 %v2244
        %2595 = vmatmul.mubr.bf16.gmra.mrb[0].mxu0 %v2243
        %v2596 = vpop.f32.mrb[0].mxu0
        %v2597 = vadd.f32 0.0, %v2596
        %v2598 = vpop.f32.mrb[0].mxu0
        %v2599 = vpop.f32.mrb[0].mxu0
        %v2600 = vadd.f32 0.0, %v2599
        %v2601 = vpop.f32.mrb[0].mxu0
        %2602 = vmatprep.mubr.bf16.mxu0 %v2247
        %2603 = vmatmul.mubr.bf16.gmra.mrb[0].mxu0 %v2246
        %v2604 = vpop.f32.mrb[0].mxu0
        %v2605 = vadd.f32 0.0, %v2604
        %v2606 = vpop.f32.mrb[0].mxu0
        %v2607 = vpop.f32.mrb[0].mxu0
        %v2608 = vadd.f32 0.0, %v2607
        %v2609 = vpop.f32.mrb[0].mxu0
        %2610 = vmatprep.mubr.bf16.mxu0 %v2250
        %2611 = vmatmul.mubr.bf16.gmra.mrb[0].mxu0 %v2249
        %v2612 = vpop.f32.mrb[0].mxu0
        %v2613 = vadd.f32 0.0, %v2612
        %v2614 = vpop.f32.mrb[0].mxu0
        %v2615 = vpop.f32.mrb[0].mxu0
        %v2616 = vadd.f32 0.0, %v2615
        %v2617 = vpop.f32.mrb[0].mxu0
        %2618 = vmatprep.mubr.bf16.mxu0 %v2253
        %2619 = vmatmul.mubr.bf16.gmra.mrb[0].mxu0 %v2252
        %v2620 = vpop.f32.mrb[0].mxu0
        %v2621 = vadd.f32 0.0, %v2620
        %v2622 = vpop.f32.mrb[0].mxu0
        %v2623 = vpop.f32.mrb[0].mxu0
        %v2624 = vadd.f32 0.0, %v2623
        %v2625 = vpop.f32.mrb[0].mxu0
        %2626 = vmatprep.mubr.bf16.mxu0 %v2256
        %2627 = vmatmul.mubr.bf16.gmra.mrb[0].mxu0 %v2255
        %v2628 = vpop.f32.mrb[0].mxu0
        %v2629 = vadd.f32 0.0, %v2628
        %v2630 = vpop.f32.mrb[0].mxu0
        %v2631 = vpop.f32.mrb[0].mxu0
        %v2632 = vadd.f32 0.0, %v2631
        %v2633 = vpop.f32.mrb[0].mxu0
        %2634 = vmatprep.mubr.bf16.mxu0 %v2259
        %2635 = vmatmul.mubr.bf16.gmra.mrb[0].mxu0 %v2258
        %v2636 = vpop.f32.mrb[0].mxu0
        %v2637 = vadd.f32 0.0, %v2636
        %v2638 = vpop.f32.mrb[0].mxu0
        %v2639 = vpop.f32.mrb[0].mxu0
        %v2640 = vadd.f32 0.0, %v2639
        %v2641 = vpop.f32.mrb[0].mxu0
        %2642 = vmatprep.mubr.bf16.mxu0 %v2262
        %2643 = vmatmul.mubr.bf16.gmra.mrb[0].mxu0 %v2261
        %v2644 = vpop.f32.mrb[0].mxu0
        %v2645 = vadd.f32 0.0, %v2644
        %v2646 = vpop.f32.mrb[0].mxu0
        %v2647 = vpop.f32.mrb[0].mxu0
        %v2648 = vadd.f32 0.0, %v2647
        %v2649 = vpop.f32.mrb[0].mxu0
        %2650 = vmatprep.mubr.bf16.mxu0 %v2265
        %2651 = vmatmul.mubr.bf16.gmra.mrb[0].mxu0 %v2264
        %v2652 = vpop.f32.mrb[0].mxu0
        %v2653 = vadd.f32 0.0, %v2652
        %v2654 = vpop.f32.mrb[0].mxu0
        %v2655 = vpop.f32.mrb[0].mxu0
        %v2656 = vadd.f32 0.0, %v2655
        %v2657 = vpop.f32.mrb[0].mxu0
        %2658 = vmatprep.mubr.bf16.mxu0 %v2268
        %2659 = vmatmul.mubr.bf16.gmra.mrb[0].mxu0 %v2267
        %v2660 = vpop.f32.mrb[0].mxu0
        %v2661 = vadd.f32 0.0, %v2660
        %v2662 = vpop.f32.mrb[0].mxu0
        %v2663 = vpop.f32.mrb[0].mxu0
        %v2664 = vadd.f32 0.0, %v2663
        %v2665 = vpop.f32.mrb[0].mxu0
        %2666 = vmatprep.mubr.bf16.mxu0 %v2271
        %2667 = vmatmul.mubr.bf16.gmra.mrb[0].mxu0 %v2270
        %v2668 = vpop.f32.mrb[0].mxu0
        %v2669 = vadd.f32 0.0, %v2668
        %v2670 = vpop.f32.mrb[0].mxu0
        %v2671 = vpop.f32.mrb[0].mxu0
        %v2672 = vadd.f32 0.0, %v2671
        %v2673 = vpop.f32.mrb[0].mxu0
        %2674 = vmatprep.mubr.bf16.mxu0 %v2274
        %2675 = vmatmul.mubr.bf16.gmra.mrb[0].mxu0 %v2273
        %v2676 = vpop.f32.mrb[0].mxu0
        %v2677 = vadd.f32 0.0, %v2676
        %v2678 = vpop.f32.mrb[0].mxu0
        %v2679 = vpop.f32.mrb[0].mxu0
        %v2680 = vadd.f32 0.0, %v2679
        %v2681 = vpop.f32.mrb[0].mxu0
        %2682 = vmatprep.mubr.bf16.mxu0 %v2277
        %2683 = vmatmul.mubr.bf16.gmra.mrb[0].mxu0 %v2276
        %v2684 = vpop.f32.mrb[0].mxu0
        %v2685 = vadd.f32 0.0, %v2684
        %v2686 = vpop.f32.mrb[0].mxu0
        %v2687 = vpop.f32.mrb[0].mxu0
        %v2688 = vadd.f32 0.0, %v2687
        %v2689 = vpop.f32.mrb[0].mxu0
        %2690 = vmatprep.mubr.bf16.mxu0 %v2280
        %2691 = vmatmul.mubr.bf16.gmra.mrb[0].mxu0 %v2279
        %v2692 = vpop.f32.mrb[0].mxu0
        %v2693 = vadd.f32 0.0, %v2692
        %v2694 = vpop.f32.mrb[0].mxu0
        %v2695 = vpop.f32.mrb[0].mxu0
        %v2696 = vadd.f32 0.0, %v2695
        %v2697 = vpop.f32.mrb[0].mxu0
        %2698 = vdwg.mxu0
        %2699 = vmatprep.subr.bf16.mxu0 0
        %2700 = vmatpush1.bf16.msra.mxu0 %v2442
        %2701 = vmatprep.subr.bf16.mxu0 0
        %2702 = vmatpush1.bf16.msra.mxu0 %v2443
        %2703 = vmatprep.subr.bf16.mxu0 0
        %2704 = vmatpush1.bf16.msra.mxu0 %v2444
        %2705 = vmatprep.subr.bf16.mxu0 0
        %2706 = vmatpush1.bf16.msra.mxu0 %v2445
        %2707 = vmatprep.subr.bf16.mxu0 0
        %2708 = vmatpush1.bf16.msra.mxu0 %v2446
        %2709 = vmatprep.subr.bf16.mxu0 0
        %2710 = vmatpush1.bf16.msra.mxu0 %v2447
        %2711 = vmatprep.subr.bf16.mxu0 0
        %2712 = vmatpush1.bf16.msra.mxu0 %v2448
        %2713 = vmatprep.subr.bf16.mxu0 0
        %2714 = vmatpush1.bf16.msra.mxu0 %v2449
        %2715 = vmatprep.subr.bf16.mxu0 0
        %2716 = vmatpush1.bf16.msra.mxu0 0
        %2717 = vmatprep.subr.bf16.mxu0 0
        %2718 = vmatpush1.bf16.msra.mxu0 0
        %2719 = vmatprep.subr.bf16.mxu0 0
        %2720 = vmatpush1.bf16.msra.mxu0 0
        %2721 = vmatprep.subr.bf16.mxu0 0
        %2722 = vmatpush1.bf16.msra.mxu0 0
        %2723 = vmatprep.subr.bf16.mxu0 0
        %2724 = vmatpush1.bf16.msra.mxu0 0
        %2725 = vmatprep.subr.bf16.mxu0 0
        %2726 = vmatpush1.bf16.msra.mxu0 0
        %2727 = vmatprep.subr.bf16.mxu0 0
        %2728 = vmatpush1.bf16.msra.mxu0 0
        %2729 = vmatprep.subr.bf16.mxu0 0
        %2730 = vmatpush1.bf16.msra.mxu0 0
        %2731 = vmatprep.mubr.bf16.mxu0 0
        %2732 = vmatmul.mubr.bf16.gmra.mrb[0].mxu0 %v2212
        %v2733 = vpop.f32.mrb[0].mxu0
        %v2734 = vadd.f32 %v2509, %v2733
        %v2735 = vpop.f32.mrb[0].mxu0
        %v2736 = vpop.f32.mrb[0].mxu0
        %v2737 = vadd.f32 %v2512, %v2736
        %v2738 = vpop.f32.mrb[0].mxu0
        %2739 = vmatprep.mubr.bf16.mxu0 0
        %2740 = vmatmul.mubr.bf16.gmra.mrb[0].mxu0 %v2215
        %v2741 = vpop.f32.mrb[0].mxu0
        %v2742 = vadd.f32 %v2517, %v2741
        %v2743 = vpop.f32.mrb[0].mxu0
        %v2744 = vpop.f32.mrb[0].mxu0
        %v2745 = vadd.f32 %v2520, %v2744
        %v2746 = vpop.f32.mrb[0].mxu0
        %2747 = vmatprep.mubr.bf16.mxu0 0
        %2748 = vmatmul.mubr.bf16.gmra.mrb[0].mxu0 %v2218
        %v2749 = vpop.f32.mrb[0].mxu0
        %v2750 = vadd.f32 %v2525, %v2749
        %v2751 = vpop.f32.mrb[0].mxu0
        %v2752 = vpop.f32.mrb[0].mxu0
        %v2753 = vadd.f32 %v2528, %v2752
        %v2754 = vpop.f32.mrb[0].mxu0
        %2755 = vmatprep.mubr.bf16.mxu0 0
        %2756 = vmatmul.mubr.bf16.gmra.mrb[0].mxu0 %v2221
        %v2757 = vpop.f32.mrb[0].mxu0
        %v2758 = vadd.f32 %v2533, %v2757
        %v2759 = vpop.f32.mrb[0].mxu0
        %v2760 = vpop.f32.mrb[0].mxu0
        %v2761 = vadd.f32 %v2536, %v2760
        %v2762 = vpop.f32.mrb[0].mxu0
        %2763 = vmatprep.mubr.bf16.mxu0 0
        %2764 = vmatmul.mubr.bf16.gmra.mrb[0].mxu0 %v2224
        %v2765 = vpop.f32.mrb[0].mxu0
        %v2766 = vadd.f32 %v2541, %v2765
        %v2767 = vpop.f32.mrb[0].mxu0
        %v2768 = vpop.f32.mrb[0].mxu0
        %v2769 = vadd.f32 %v2544, %v2768
        %v2770 = vpop.f32.mrb[0].mxu0
        %2771 = vmatprep.mubr.bf16.mxu0 0
        %2772 = vmatmul.mubr.bf16.gmra.mrb[0].mxu0 %v2227
        %v2773 = vpop.f32.mrb[0].mxu0
        %v2774 = vadd.f32 %v2549, %v2773
        %v2775 = vpop.f32.mrb[0].mxu0
        %v2776 = vpop.f32.mrb[0].mxu0
        %v2777 = vadd.f32 %v2552, %v2776
        %v2778 = vpop.f32.mrb[0].mxu0
        %2779 = vmatprep.mubr.bf16.mxu0 0
        %2780 = vmatmul.mubr.bf16.gmra.mrb[0].mxu0 %v2230
        %v2781 = vpop.f32.mrb[0].mxu0
        %v2782 = vadd.f32 %v2557, %v2781
        %v2783 = vpop.f32.mrb[0].mxu0
        %v2784 = vpop.f32.mrb[0].mxu0
        %v2785 = vadd.f32 %v2560, %v2784
        %v2786 = vpop.f32.mrb[0].mxu0
        %2787 = vmatprep.mubr.bf16.mxu0 0
        %2788 = vmatmul.mubr.bf16.gmra.mrb[0].mxu0 %v2233
        %v2789 = vpop.f32.mrb[0].mxu0
        %v2790 = vadd.f32 %v2565, %v2789
        %v2791 = vpop.f32.mrb[0].mxu0
        %v2792 = vpop.f32.mrb[0].mxu0
        %v2793 = vadd.f32 %v2568, %v2792
        %v2794 = vpop.f32.mrb[0].mxu0
        %2795 = vmatprep.mubr.bf16.mxu0 0
        %2796 = vmatmul.mubr.bf16.gmra.mrb[0].mxu0 %v2236
        %v2797 = vpop.f32.mrb[0].mxu0
        %v2798 = vadd.f32 %v2573, %v2797
        %v2799 = vpop.f32.mrb[0].mxu0
        %v2800 = vpop.f32.mrb[0].mxu0
        %v2801 = vadd.f32 %v2576, %v2800
        %v2802 = vpop.f32.mrb[0].mxu0
        %2803 = vmatprep.mubr.bf16.mxu0 0
        %2804 = vmatmul.mubr.bf16.gmra.mrb[0].mxu0 %v2239
        %v2805 = vpop.f32.mrb[0].mxu0
        %v2806 = vadd.f32 %v2581, %v2805
        %v2807 = vpop.f32.mrb[0].mxu0
        %v2808 = vpop.f32.mrb[0].mxu0
        %v2809 = vadd.f32 %v2584, %v2808
        %v2810 = vpop.f32.mrb[0].mxu0
        %2811 = vmatprep.mubr.bf16.mxu0 0
        %2812 = vmatmul.mubr.bf16.gmra.mrb[0].mxu0 %v2242
        %v2813 = vpop.f32.mrb[0].mxu0
        %v2814 = vadd.f32 %v2589, %v2813
        %v2815 = vpop.f32.mrb[0].mxu0
        %v2816 = vpop.f32.mrb[0].mxu0
        %v2817 = vadd.f32 %v2592, %v2816
        %v2818 = vpop.f32.mrb[0].mxu0
        %2819 = vmatprep.mubr.bf16.mxu0 0
        %2820 = vmatmul.mubr.bf16.gmra.mrb[0].mxu0 %v2245
        %v2821 = vpop.f32.mrb[0].mxu0
        %v2822 = vadd.f32 %v2597, %v2821
        %v2823 = vpop.f32.mrb[0].mxu0
        %v2824 = vpop.f32.mrb[0].mxu0
        %v2825 = vadd.f32 %v2600, %v2824
        %v2826 = vpop.f32.mrb[0].mxu0
        %2827 = vmatprep.mubr.bf16.mxu0 0
        %2828 = vmatmul.mubr.bf16.gmra.mrb[0].mxu0 %v2248
        %v2829 = vpop.f32.mrb[0].mxu0
        %v2830 = vadd.f32 %v2605, %v2829
        %v2831 = vpop.f32.mrb[0].mxu0
        %v2832 = vpop.f32.mrb[0].mxu0
        %v2833 = vadd.f32 %v2608, %v2832
        %v2834 = vpop.f32.mrb[0].mxu0
        %2835 = vmatprep.mubr.bf16.mxu0 0
        %2836 = vmatmul.mubr.bf16.gmra.mrb[0].mxu0 %v2251
        %v2837 = vpop.f32.mrb[0].mxu0
        %v2838 = vadd.f32 %v2613, %v2837
        %v2839 = vpop.f32.mrb[0].mxu0
        %v2840 = vpop.f32.mrb[0].mxu0
        %v2841 = vadd.f32 %v2616, %v2840
        %v2842 = vpop.f32.mrb[0].mxu0
        %2843 = vmatprep.mubr.bf16.mxu0 0
        %2844 = vmatmul.mubr.bf16.gmra.mrb[0].mxu0 %v2254
        %v2845 = vpop.f32.mrb[0].mxu0
        %v2846 = vadd.f32 %v2621, %v2845
        %v2847 = vpop.f32.mrb[0].mxu0
        %v2848 = vpop.f32.mrb[0].mxu0
        %v2849 = vadd.f32 %v2624, %v2848
        %v2850 = vpop.f32.mrb[0].mxu0
        %2851 = vmatprep.mubr.bf16.mxu0 0
        %2852 = vmatmul.mubr.bf16.gmra.mrb[0].mxu0 %v2257
        %v2853 = vpop.f32.mrb[0].mxu0
        %v2854 = vadd.f32 %v2629, %v2853
        %v2855 = vpop.f32.mrb[0].mxu0
        %v2856 = vpop.f32.mrb[0].mxu0
        %v2857 = vadd.f32 %v2632, %v2856
        %v2858 = vpop.f32.mrb[0].mxu0
        %2859 = vmatprep.mubr.bf16.mxu0 0
        %2860 = vmatmul.mubr.bf16.gmra.mrb[0].mxu0 %v2260
        %v2861 = vpop.f32.mrb[0].mxu0
        %v2862 = vadd.f32 %v2637, %v2861
        %v2863 = vpop.f32.mrb[0].mxu0
        %v2864 = vpop.f32.mrb[0].mxu0
        %v2865 = vadd.f32 %v2640, %v2864
        %v2866 = vpop.f32.mrb[0].mxu0
        %2867 = vmatprep.mubr.bf16.mxu0 0
        %2868 = vmatmul.mubr.bf16.gmra.mrb[0].mxu0 %v2263
        %v2869 = vpop.f32.mrb[0].mxu0
        %v2870 = vadd.f32 %v2645, %v2869
        %v2871 = vpop.f32.mrb[0].mxu0
        %v2872 = vpop.f32.mrb[0].mxu0
        %v2873 = vadd.f32 %v2648, %v2872
        %v2874 = vpop.f32.mrb[0].mxu0
        %2875 = vmatprep.mubr.bf16.mxu0 0
        %2876 = vmatmul.mubr.bf16.gmra.mrb[0].mxu0 %v2266
        %v2877 = vpop.f32.mrb[0].mxu0
        %v2878 = vadd.f32 %v2653, %v2877
        %v2879 = vpop.f32.mrb[0].mxu0
        %v2880 = vpop.f32.mrb[0].mxu0
        %v2881 = vadd.f32 %v2656, %v2880
        %v2882 = vpop.f32.mrb[0].mxu0
        %2883 = vmatprep.mubr.bf16.mxu0 0
        %2884 = vmatmul.mubr.bf16.gmra.mrb[0].mxu0 %v2269
        %v2885 = vpop.f32.mrb[0].mxu0
        %v2886 = vadd.f32 %v2661, %v2885
        %v2887 = vpop.f32.mrb[0].mxu0
        %v2888 = vpop.f32.mrb[0].mxu0
        %v2889 = vadd.f32 %v2664, %v2888
        %v2890 = vpop.f32.mrb[0].mxu0
        %2891 = vmatprep.mubr.bf16.mxu0 0
        %2892 = vmatmul.mubr.bf16.gmra.mrb[0].mxu0 %v2272
        %v2893 = vpop.f32.mrb[0].mxu0
        %v2894 = vadd.f32 %v2669, %v2893
        %v2895 = vpop.f32.mrb[0].mxu0
        %v2896 = vpop.f32.mrb[0].mxu0
        %v2897 = vadd.f32 %v2672, %v2896
        %v2898 = vpop.f32.mrb[0].mxu0
        %2899 = vmatprep.mubr.bf16.mxu0 0
        %2900 = vmatmul.mubr.bf16.gmra.mrb[0].mxu0 %v2275
        %v2901 = vpop.f32.mrb[0].mxu0
        %v2902 = vadd.f32 %v2677, %v2901
        %v2903 = vpop.f32.mrb[0].mxu0
        %v2904 = vpop.f32.mrb[0].mxu0
        %v2905 = vadd.f32 %v2680, %v2904
        %v2906 = vpop.f32.mrb[0].mxu0
        %2907 = vmatprep.mubr.bf16.mxu0 0
        %2908 = vmatmul.mubr.bf16.gmra.mrb[0].mxu0 %v2278
        %v2909 = vpop.f32.mrb[0].mxu0
        %v2910 = vadd.f32 %v2685, %v2909
        %v2911 = vpop.f32.mrb[0].mxu0
        %v2912 = vpop.f32.mrb[0].mxu0
        %v2913 = vadd.f32 %v2688, %v2912
        %v2914 = vpop.f32.mrb[0].mxu0
        %2915 = vmatprep.mubr.bf16.mxu0 0
        %2916 = vmatmul.mubr.bf16.gmra.mrb[0].mxu0 %v2281
        %v2917 = vpop.f32.mrb[0].mxu0
        %v2918 = vadd.f32 %v2693, %v2917
        %v2919 = vpop.f32.mrb[0].mxu0
        %v2920 = vpop.f32.mrb[0].mxu0
        %v2921 = vadd.f32 %v2696, %v2920
        %v2922 = vpop.f32.mrb[0].mxu0
        %2923 = vdwg.mxu0
        %2924 = vst [vmem:[#allocation4] sm:$0xff] %v2734
        %2925 = vst [vmem:[#allocation4 + $0x8] sm:$0xff] %v2737
        %2926 = vst [vmem:[#allocation4 + $0x10] sm:$0xff] %v2742
        %2927 = vst [vmem:[#allocation4 + $0x18] sm:$0xff] %v2745
        %2928 = vst [vmem:[#allocation4 + $0x20] sm:$0xff] %v2750
        %2929 = vst [vmem:[#allocation4 + $0x28] sm:$0xff] %v2753
        %2930 = vst [vmem:[#allocation4 + $0x30] sm:$0xff] %v2758
        %2931 = vst [vmem:[#allocation4 + $0x38] sm:$0xff] %v2761
        %2932 = vst [vmem:[#allocation4 + $0x40] sm:$0xff] %v2766
        %2933 = vst [vmem:[#allocation4 + $0x48] sm:$0xff] %v2769
        %2934 = vst [vmem:[#allocation4 + $0x50] sm:$0xff] %v2774
        %2935 = vst [vmem:[#allocation4 + $0x58] sm:$0xff] %v2777
        %2936 = vst [vmem:[#allocation4 + $0x60] sm:$0xff] %v2782
        %2937 = vst [vmem:[#allocation4 + $0x68] sm:$0xff] %v2785
        %2938 = vst [vmem:[#allocation4 + $0x70] sm:$0xff] %v2790
        %2939 = vst [vmem:[#allocation4 + $0x78] sm:$0xff] %v2793
        %2940 = vst [vmem:[#allocation4 + $0x80] sm:$0xff] %v2798
        %2941 = vst [vmem:[#allocation4 + $0x88] sm:$0xff] %v2801
        %2942 = vst [vmem:[#allocation4 + $0x90] sm:$0xff] %v2806
        %2943 = vst [vmem:[#allocation4 + $0x98] sm:$0xff] %v2809
        %2944 = vst [vmem:[#allocation4 + $0xa0] sm:$0xff] %v2814
        %2945 = vst [vmem:[#allocation4 + $0xa8] sm:$0xff] %v2817
        %2946 = vst [vmem:[#allocation4 + $0xb0] sm:$0xff] %v2822
        %2947 = vst [vmem:[#allocation4 + $0xb8] sm:$0xff] %v2825
        %2948 = vst [vmem:[#allocation4 + $0xc0] sm:$0xff] %v2830
        %2949 = vst [vmem:[#allocation4 + $0xc8] sm:$0xff] %v2833
        %2950 = vst [vmem:[#allocation4 + $0xd0] sm:$0xff] %v2838
        %2951 = vst [vmem:[#allocation4 + $0xd8] sm:$0xff] %v2841
        %2952 = vst [vmem:[#allocation4 + $0xe0] sm:$0xff] %v2846
        %2953 = vst [vmem:[#allocation4 + $0xe8] sm:$0xff] %v2849
        %2954 = vst [vmem:[#allocation4 + $0xf0] sm:$0xff] %v2854
        %2955 = vst [vmem:[#allocation4 + $0xf8] sm:$0xff] %v2857
        %2956 = vst [vmem:[#allocation4 + $0x100] sm:$0xff] %v2862
        %2957 = vst [vmem:[#allocation4 + $0x108] sm:$0xff] %v2865
        %2958 = vst [vmem:[#allocation4 + $0x110] sm:$0xff] %v2870
        %2959 = vst [vmem:[#allocation4 + $0x118] sm:$0xff] %v2873
        %2960 = vst [vmem:[#allocation4 + $0x120] sm:$0xff] %v2878
        %2961 = vst [vmem:[#allocation4 + $0x128] sm:$0xff] %v2881
        %2962 = vst [vmem:[#allocation4 + $0x130] sm:$0xff] %v2886
        %2963 = vst [vmem:[#allocation4 + $0x138] sm:$0xff] %v2889
        %2964 = vst [vmem:[#allocation4 + $0x140] sm:$0xff] %v2894
        %2965 = vst [vmem:[#allocation4 + $0x148] sm:$0xff] %v2897
        %2966 = vst [vmem:[#allocation4 + $0x150] sm:$0xff] %v2902
        %2967 = vst [vmem:[#allocation4 + $0x158] sm:$0xff] %v2905
        %2968 = vst [vmem:[#allocation4 + $0x160] sm:$0xff] %v2910
        %2969 = vst [vmem:[#allocation4 + $0x168] sm:$0xff] %v2913
        %2970 = vst [vmem:[#allocation4 + $0x170] sm:$0xff] %v2918
        %2971 = vst [vmem:[#allocation4 + $0x178] sm:$0xff] %v2921
        %v2972 = vld [vmem:[#allocation4] sm:$0xff]
        %v2973 = vld [vmem:[#allocation4 + $0x8] sm:$0xff]
        %v2974 = vld [vmem:[#allocation4 + $0x10] sm:$0xff]
        %v2975 = vld [vmem:[#allocation4 + $0x18] sm:$0xff]
        %v2976 = vld [vmem:[#allocation4 + $0x20] sm:$0xff]
        %v2977 = vld [vmem:[#allocation4 + $0x28] sm:$0xff]
        %v2978 = vld [vmem:[#allocation4 + $0x30] sm:$0xff]
        %v2979 = vld [vmem:[#allocation4 + $0x38] sm:$0xff]
        %v2980 = vld [vmem:[#allocation4 + $0x40] sm:$0xff]
        %v2981 = vld [vmem:[#allocation4 + $0x48] sm:$0xff]
        %v2982 = vld [vmem:[#allocation4 + $0x50] sm:$0xff]
        %v2983 = vld [vmem:[#allocation4 + $0x58] sm:$0xff]
        %v2984 = vld [vmem:[#allocation4 + $0x60] sm:$0xff]
        %v2985 = vld [vmem:[#allocation4 + $0x68] sm:$0xff]
        %v2986 = vld [vmem:[#allocation4 + $0x70] sm:$0xff]
        %v2987 = vld [vmem:[#allocation4 + $0x78] sm:$0xff]
        %v2988 = vld [vmem:[#allocation4 + $0x80] sm:$0xff]
        %v2989 = vld [vmem:[#allocation4 + $0x88] sm:$0xff]
        %v2990 = vld [vmem:[#allocation4 + $0x90] sm:$0xff]
        %v2991 = vld [vmem:[#allocation4 + $0x98] sm:$0xff]
        %v2992 = vld [vmem:[#allocation4 + $0xa0] sm:$0xff]
        %v2993 = vld [vmem:[#allocation4 + $0xa8] sm:$0xff]
        %v2994 = vld [vmem:[#allocation4 + $0xb0] sm:$0xff]
        %v2995 = vld [vmem:[#allocation4 + $0xb8] sm:$0xff]
        %v2996 = vld [vmem:[#allocation4 + $0xc0] sm:$0xff]
        %v2997 = vld [vmem:[#allocation4 + $0xc8] sm:$0xff]
        %v2998 = vld [vmem:[#allocation4 + $0xd0] sm:$0xff]
        %v2999 = vld [vmem:[#allocation4 + $0xd8] sm:$0xff]
        %v3000 = vld [vmem:[#allocation4 + $0xe0] sm:$0xff]
        %v3001 = vld [vmem:[#allocation4 + $0xe8] sm:$0xff]
        %v3002 = vld [vmem:[#allocation4 + $0xf0] sm:$0xff]
        %v3003 = vld [vmem:[#allocation4 + $0xf8] sm:$0xff]
        %v3004 = vld [vmem:[#allocation4 + $0x100] sm:$0xff]
        %v3005 = vld [vmem:[#allocation4 + $0x108] sm:$0xff]
        %v3006 = vld [vmem:[#allocation4 + $0x110] sm:$0xff]
        %v3007 = vld [vmem:[#allocation4 + $0x118] sm:$0xff]
        %v3008 = vld [vmem:[#allocation4 + $0x120] sm:$0xff]
        %v3009 = vld [vmem:[#allocation4 + $0x128] sm:$0xff]
        %v3010 = vld [vmem:[#allocation4 + $0x130] sm:$0xff]
        %v3011 = vld [vmem:[#allocation4 + $0x138] sm:$0xff]
        %v3012 = vld [vmem:[#allocation4 + $0x140] sm:$0xff]
        %v3013 = vld [vmem:[#allocation4 + $0x148] sm:$0xff]
        %v3014 = vld [vmem:[#allocation4 + $0x150] sm:$0xff]
        %v3015 = vld [vmem:[#allocation4 + $0x158] sm:$0xff]
        %v3016 = vld [vmem:[#allocation4 + $0x160] sm:$0xff]
        %v3017 = vld [vmem:[#allocation4 + $0x168] sm:$0xff]
        %v3018 = vld [vmem:[#allocation4 + $0x170] sm:$0xff]
        %v3019 = vld [vmem:[#allocation4 + $0x178] sm:$0xff]
        %v3020 = vld [vmem:[#allocation2 + $0x18] sm:$0xf0]
        %v3021 = vld [vmem:[#allocation2 + $0x20] sm:$0xf0]
        %v3022 = vld [vmem:[#allocation2 + $0x28] sm:$0xf0]
        %v3023 = vld [vmem:[#allocation2 + $0x30] sm:$0xff]
        %v3024 = vld [vmem:[#allocation2 + $0x38] sm:$0xff]
        %v3025 = vld [vmem:[#allocation2 + $0x40] sm:$0xff]
        %v3026 = vld [vmem:[#allocation2 + $0x48] sm:$0xff]
        %v3027 = vld [vmem:[#allocation2 + $0x50] sm:$0xff]
        %v3028 = vld [vmem:[#allocation2 + $0x58] sm:$0xff]
        %v3029 = vld [vmem:[#allocation2 + $0x60] sm:$0xff]
        %v3030 = vld [vmem:[#allocation2 + $0x68] sm:$0xff]
        %v3031 = vld [vmem:[#allocation2 + $0x70] sm:$0xff]
        %v3032 = vld [vmem:[#allocation2 + $0x78] sm:$0xff]
        %v3033 = vld [vmem:[#allocation2 + $0x80] sm:$0xff]
        %v3034 = vld [vmem:[#allocation2 + $0x88] sm:$0xff]
        %v3035 = vld [vmem:[#allocation2 + $0x90] sm:$0xff]
        %v3036 = vld [vmem:[#allocation2 + $0x98] sm:$0xff]
        %v3037 = vld [vmem:[#allocation2 + $0xa0] sm:$0xff]
        %v3038 = vld [vmem:[#allocation2 + $0xa8] sm:$0xff]
        %v3039 = vld [vmem:[#allocation2 + $0xb0] sm:$0xff]
        %v3040 = vld [vmem:[#allocation2 + $0xb8] sm:$0xff]
        %v3041 = vld [vmem:[#allocation2 + $0xc0] sm:$0xff]
        %v3042 = vld [vmem:[#allocation2 + $0xc8] sm:$0xff]
        %v3043 = vld [vmem:[#allocation2 + $0xd0] sm:$0xff]
        %v3044 = vld [vmem:[#allocation2 + $0xd8] sm:$0xff]
        %v3045 = vld [vmem:[#allocation2 + $0xe0] sm:$0xff]
        %v3046 = vld [vmem:[#allocation2 + $0xe8] sm:$0xff]
        %v3047 = vld [vmem:[#allocation2 + $0xf0] sm:$0xff]
        %v3048 = vld [vmem:[#allocation2 + $0xf8] sm:$0xff]
        %v3049 = vld [vmem:[#allocation2 + $0x100] sm:$0xff]
        %v3050 = vld [vmem:[#allocation2 + $0x108] sm:$0xff]
        %v3051 = vld [vmem:[#allocation2 + $0x110] sm:$0xff]
        %v3052 = vld [vmem:[#allocation2 + $0x118] sm:$0xff]
        %v3053 = vld [vmem:[#allocation2 + $0x120] sm:$0xff]
        %v3054 = vld [vmem:[#allocation2 + $0x128] sm:$0xff]
        %v3055 = vld [vmem:[#allocation2 + $0x130] sm:$0xff]
        %v3056 = vld [vmem:[#allocation2 + $0x138] sm:$0xff]
        %v3057 = vld [vmem:[#allocation2 + $0x140] sm:$0xff]
        %v3058 = vld [vmem:[#allocation2 + $0x148] sm:$0xff]
        %v3059 = vld [vmem:[#allocation2 + $0x150] sm:$0xff]
        %v3060 = vld [vmem:[#allocation2 + $0x158] sm:$0xff]
        %v3061 = vld [vmem:[#allocation2 + $0x160] sm:$0xff]
        %v3062 = vld [vmem:[#allocation2 + $0x168] sm:$0xff]
        %v3063 = vld [vmem:[#allocation2 + $0x170] sm:$0xff]
        %v3064 = vld [vmem:[#allocation2 + $0x178] sm:$0xff]
        %v3065 = vld [vmem:[#allocation2 + $0x180] sm:$0xff]
        %v3066 = vld [vmem:[#allocation2 + $0x188] sm:$0xff]
        %v3067 = vld [vmem:[#allocation2 + $0x190] sm:$0xff]
        %v3068 = vld [vmem:[#allocation2 + $0x198] sm:$0xff]
        %v3069 = vld [vmem:[#allocation2 + $0x1a0] sm:$0xff]
        %v3070 = vld [vmem:[#allocation2 + $0x1a8] sm:$0xff]
        %v3071 = vld [vmem:[#allocation2 + $0x1b0] sm:$0xff]
        %v3072 = vld [vmem:[#allocation2 + $0x1b8] sm:$0xff]
        %v3073 = vld [vmem:[#allocation2 + $0x1c0] sm:$0xff]
        %v3074 = vld [vmem:[#allocation2 + $0x1c8] sm:$0xff]
        %v3075 = vld [vmem:[#allocation2 + $0x1d0] sm:$0xff]
        %v3076 = vld [vmem:[#allocation2 + $0x1d8] sm:$0xff]
        %v3077 = vld [vmem:[#allocation2 + $0x1e0] sm:$0xff]
        %v3078 = vld [vmem:[#allocation2 + $0x1e8] sm:$0xff]
        %v3079 = vld [vmem:[#allocation2 + $0x1f0] sm:$0xff]
        %v3080 = vld [vmem:[#allocation2 + $0x1f8] sm:$0xff]
        %v3081 = vld [vmem:[#allocation2 + $0x200] sm:$0xff]
        %v3082 = vld [vmem:[#allocation2 + $0x208] sm:$0xff]
        %v3083 = vld [vmem:[#allocation2 + $0x210] sm:$0xff]
        %v3084 = vld [vmem:[#allocation2 + $0x218] sm:$0xff]
        %v3085 = vld [vmem:[#allocation2 + $0x220] sm:$0xff]
        %v3086 = vld [vmem:[#allocation2 + $0x228] sm:$0xff]
        %v3087 = vld [vmem:[#allocation2 + $0x230] sm:$0xff]
        %v3088 = vld [vmem:[#allocation2 + $0x238] sm:$0xff]
        %v3089 = vld [vmem:[#allocation2 + $0x240] sm:$0xff]
        %v3090 = vld [vmem:[#allocation2 + $0x248] sm:$0xff]
        %v3091 = vld [vmem:[#allocation2 + $0x250] sm:$0xff]
        %v3092 = vld [vmem:[#allocation2 + $0x258] sm:$0xf]
        %v3093 = vld [vmem:[#allocation2 + $0x260] sm:$0xf]
        %v3094 = vld [vmem:[#allocation2 + $0x268] sm:$0xf]
        %s3095 = scalar_lea.vmem [#allocation8], 192
        %v3096 = vld [vmem:[%s3095] sm:$0xf]
        %v3097 = vld [vmem:[%s3095 + $0x4] sm:$0xf]
        %v3098 = vld [vmem:[%s3095 + $0x8] sm:$0xf]
        %v3099 = vld [vmem:[%s3095 + $0xc] sm:$0xf]
        %v3100 = vld [vmem:[%s3095 + $0x10] sm:$0xf]
        %v3101 = vld [vmem:[%s3095 + $0x14] sm:$0xf]
        %v3102 = vld [vmem:[%s3095 + $0x18] sm:$0xf]
        %v3103 = vld [vmem:[%s3095 + $0x1c] sm:$0xf]
        %v3104 = vld [vmem:[%s3095 + $0x20] sm:$0xf]
        %v3105 = vld [vmem:[%s3095 + $0x24] sm:$0xf]
        %v3106 = vld [vmem:[%s3095 + $0x28] sm:$0xf]
        %v3107 = vld [vmem:[%s3095 + $0x2c] sm:$0xf]
        %v3108 = vld [vmem:[%s3095 + $0x30] sm:$0xf]
        %v3109 = vld [vmem:[%s3095 + $0x34] sm:$0xf]
        %v3110 = vld [vmem:[%s3095 + $0x38] sm:$0xf]
        %v3111 = vld [vmem:[%s3095 + $0x3c] sm:$0xf]
        %v3112 = vld [vmem:[%s3095 + $0x40] sm:$0xf]
        %v3113 = vld [vmem:[%s3095 + $0x44] sm:$0xf]
        %v3114 = vld [vmem:[%s3095 + $0x48] sm:$0xf]
        %v3115 = vld [vmem:[%s3095 + $0x4c] sm:$0xf]
        %v3116 = vld [vmem:[%s3095 + $0x50] sm:$0xf]
        %v3117 = vld [vmem:[%s3095 + $0x54] sm:$0xf]
        %v3118 = vld [vmem:[%s3095 + $0x58] sm:$0xf]
        %v3119 = vld [vmem:[%s3095 + $0x5c] sm:$0xf]
        %v3120 = vld [vmem:[%s3095 + $0x60] sm:$0xf]
        %v3121 = vld [vmem:[%s3095 + $0x64] sm:$0xf]
        %v3122 = vld [vmem:[%s3095 + $0x68] sm:$0xf]
        %v3123 = vld [vmem:[%s3095 + $0x6c] sm:$0xf]
        %v3124 = vld [vmem:[%s3095 + $0x70] sm:$0xf]
        %v3125 = vld [vmem:[%s3095 + $0x74] sm:$0xf]
        %v3126 = vld [vmem:[%s3095 + $0x78] sm:$0xf]
        %v3127 = vld [vmem:[%s3095 + $0x7c] sm:$0xf]
        %v3128 = vld [vmem:[%s3095 + $0x80] sm:$0xf]
        %v3129 = vld [vmem:[%s3095 + $0x84] sm:$0xf]
        %v3130 = vld [vmem:[%s3095 + $0x88] sm:$0xf]
        %v3131 = vld [vmem:[%s3095 + $0x8c] sm:$0xf]
        %v3132 = vld [vmem:[%s3095 + $0x90] sm:$0xf]
        %v3133 = vld [vmem:[%s3095 + $0x94] sm:$0xf]
        %v3134 = vld [vmem:[%s3095 + $0x98] sm:$0xf]
        %v3135 = vld [vmem:[%s3095 + $0x9c] sm:$0xf]
        %v3136 = vld [vmem:[%s3095 + $0xa0] sm:$0xf]
        %v3137 = vld [vmem:[%s3095 + $0xa4] sm:$0xf]
        %v3138 = vld [vmem:[%s3095 + $0xa8] sm:$0xf]
        %v3139 = vld [vmem:[%s3095 + $0xac] sm:$0xf]
        %v3140 = vld [vmem:[%s3095 + $0xb0] sm:$0xf]
        %v3141 = vld [vmem:[%s3095 + $0xb4] sm:$0xf]
        %v3142 = vld [vmem:[%s3095 + $0xb8] sm:$0xf]
        %v3143 = vld [vmem:[%s3095 + $0xbc] sm:$0xf]
        %vm3219 = vcmask 1043456
        %v3220 = vrot.slane %v3020, 4
        %v3221 = vrot.slane %v3023, 4
        %v3222 = vsel %vm3219, %v3220, %v3221
        %v3223 = vrot.slane %v3021, 4
        %v3224 = vrot.slane %v3024, 4
        %v3225 = vsel %vm3219, %v3223, %v3224
        %v3226 = vrot.slane %v3022, 4
        %v3227 = vrot.slane %v3025, 4
        %v3228 = vsel %vm3219, %v3226, %v3227
        %v3229 = vrot.slane %v3026, 4
        %v3230 = vsel %vm3219, %v3221, %v3229
        %v3231 = vrot.slane %v3027, 4
        %v3232 = vsel %vm3219, %v3224, %v3231
        %v3233 = vrot.slane %v3028, 4
        %v3234 = vsel %vm3219, %v3227, %v3233
        %v3235 = vrot.slane %v3029, 4
        %v3236 = vsel %vm3219, %v3229, %v3235
        %v3237 = vrot.slane %v3030, 4
        %v3238 = vsel %vm3219, %v3231, %v3237
        %v3239 = vrot.slane %v3031, 4
        %v3240 = vsel %vm3219, %v3233, %v3239
        %v3241 = vrot.slane %v3032, 4
        %v3242 = vsel %vm3219, %v3235, %v3241
        %v3243 = vrot.slane %v3033, 4
        %v3244 = vsel %vm3219, %v3237, %v3243
        %v3245 = vrot.slane %v3034, 4
        %v3246 = vsel %vm3219, %v3239, %v3245
        %v3247 = vrot.slane %v3035, 4
        %v3248 = vsel %vm3219, %v3241, %v3247
        %v3249 = vrot.slane %v3036, 4
        %v3250 = vsel %vm3219, %v3243, %v3249
        %v3251 = vrot.slane %v3037, 4
        %v3252 = vsel %vm3219, %v3245, %v3251
        %v3253 = vrot.slane %v3038, 4
        %v3254 = vsel %vm3219, %v3247, %v3253
        %v3255 = vrot.slane %v3039, 4
        %v3256 = vsel %vm3219, %v3249, %v3255
        %v3257 = vrot.slane %v3040, 4
        %v3258 = vsel %vm3219, %v3251, %v3257
        %v3259 = vrot.slane %v3041, 4
        %v3260 = vsel %vm3219, %v3253, %v3259
        %v3261 = vrot.slane %v3042, 4
        %v3262 = vsel %vm3219, %v3255, %v3261
        %v3263 = vrot.slane %v3043, 4
        %v3264 = vsel %vm3219, %v3257, %v3263
        %v3265 = vrot.slane %v3044, 4
        %v3266 = vsel %vm3219, %v3259, %v3265
        %v3267 = vrot.slane %v3045, 4
        %v3268 = vsel %vm3219, %v3261, %v3267
        %v3269 = vrot.slane %v3046, 4
        %v3270 = vsel %vm3219, %v3263, %v3269
        %v3271 = vrot.slane %v3047, 4
        %v3272 = vsel %vm3219, %v3265, %v3271
        %v3273 = vrot.slane %v3048, 4
        %v3274 = vsel %vm3219, %v3267, %v3273
        %v3275 = vrot.slane %v3049, 4
        %v3276 = vsel %vm3219, %v3269, %v3275
        %v3277 = vrot.slane %v3050, 4
        %v3278 = vsel %vm3219, %v3271, %v3277
        %v3279 = vrot.slane %v3051, 4
        %v3280 = vsel %vm3219, %v3273, %v3279
        %v3281 = vrot.slane %v3052, 4
        %v3282 = vsel %vm3219, %v3275, %v3281
        %v3283 = vrot.slane %v3053, 4
        %v3284 = vsel %vm3219, %v3277, %v3283
        %v3285 = vrot.slane %v3054, 4
        %v3286 = vsel %vm3219, %v3279, %v3285
        %v3287 = vrot.slane %v3055, 4
        %v3288 = vsel %vm3219, %v3281, %v3287
        %v3289 = vrot.slane %v3056, 4
        %v3290 = vsel %vm3219, %v3283, %v3289
        %v3291 = vrot.slane %v3057, 4
        %v3292 = vsel %vm3219, %v3285, %v3291
        %v3293 = vrot.slane %v3058, 4
        %v3294 = vsel %vm3219, %v3287, %v3293
        %v3295 = vrot.slane %v3059, 4
        %v3296 = vsel %vm3219, %v3289, %v3295
        %v3297 = vrot.slane %v3060, 4
        %v3298 = vsel %vm3219, %v3291, %v3297
        %v3299 = vrot.slane %v3061, 4
        %v3300 = vsel %vm3219, %v3293, %v3299
        %v3301 = vrot.slane %v3062, 4
        %v3302 = vsel %vm3219, %v3295, %v3301
        %v3303 = vrot.slane %v3063, 4
        %v3304 = vsel %vm3219, %v3297, %v3303
        %v3305 = vrot.slane %v3064, 4
        %v3306 = vsel %vm3219, %v3299, %v3305
        %v3307 = vrot.slane %v3065, 4
        %v3308 = vsel %vm3219, %v3301, %v3307
        %v3309 = vrot.slane %v3066, 4
        %v3310 = vsel %vm3219, %v3303, %v3309
        %v3311 = vrot.slane %v3067, 4
        %v3312 = vsel %vm3219, %v3305, %v3311
        %v3313 = vrot.slane %v3068, 4
        %v3314 = vsel %vm3219, %v3307, %v3313
        %v3315 = vrot.slane %v3069, 4
        %v3316 = vsel %vm3219, %v3309, %v3315
        %v3317 = vrot.slane %v3070, 4
        %v3318 = vsel %vm3219, %v3311, %v3317
        %v3319 = vrot.slane %v3071, 4
        %v3320 = vsel %vm3219, %v3313, %v3319
        %v3321 = vrot.slane %v3072, 4
        %v3322 = vsel %vm3219, %v3315, %v3321
        %v3323 = vrot.slane %v3073, 4
        %v3324 = vsel %vm3219, %v3317, %v3323
        %v3325 = vrot.slane %v3074, 4
        %v3326 = vsel %vm3219, %v3319, %v3325
        %v3327 = vrot.slane %v3075, 4
        %v3328 = vsel %vm3219, %v3321, %v3327
        %v3329 = vrot.slane %v3076, 4
        %v3330 = vsel %vm3219, %v3323, %v3329
        %v3331 = vrot.slane %v3077, 4
        %v3332 = vsel %vm3219, %v3325, %v3331
        %v3333 = vrot.slane %v3078, 4
        %v3334 = vsel %vm3219, %v3327, %v3333
        %v3335 = vrot.slane %v3079, 4
        %v3336 = vsel %vm3219, %v3329, %v3335
        %v3337 = vrot.slane %v3080, 4
        %v3338 = vsel %vm3219, %v3331, %v3337
        %v3339 = vrot.slane %v3081, 4
        %v3340 = vsel %vm3219, %v3333, %v3339
        %v3341 = vrot.slane %v3082, 4
        %v3342 = vsel %vm3219, %v3335, %v3341
        %v3343 = vrot.slane %v3083, 4
        %v3344 = vsel %vm3219, %v3337, %v3343
        %v3345 = vrot.slane %v3084, 4
        %v3346 = vsel %vm3219, %v3339, %v3345
        %v3347 = vrot.slane %v3085, 4
        %v3348 = vsel %vm3219, %v3341, %v3347
        %v3349 = vrot.slane %v3086, 4
        %v3350 = vsel %vm3219, %v3343, %v3349
        %v3351 = vrot.slane %v3087, 4
        %v3352 = vsel %vm3219, %v3345, %v3351
        %v3353 = vrot.slane %v3088, 4
        %v3354 = vsel %vm3219, %v3347, %v3353
        %v3355 = vrot.slane %v3089, 4
        %v3356 = vsel %vm3219, %v3349, %v3355
        %v3357 = vrot.slane %v3090, 4
        %v3358 = vsel %vm3219, %v3351, %v3357
        %v3359 = vrot.slane %v3091, 4
        %v3360 = vsel %vm3219, %v3353, %v3359
        %v3361 = vrot.slane %v3092, 4
        %v3362 = vsel %vm3219, %v3355, %v3361
        %v3363 = vrot.slane %v3093, 4
        %v3364 = vsel %vm3219, %v3357, %v3363
        %v3365 = vrot.slane %v3094, 4
        %v3366 = vsel %vm3219, %v3359, %v3365
        %v3487 = vunpack.c.l.b16 %v3096
        %v3488 = vunpack.c.l.b16 %v3097
        %v3489 = vunpack.c.l.b16 %v3098
        %v3490 = vunpack.c.l.b16 %v3099
        %v3491 = vunpack.c.l.b16 %v3100
        %v3492 = vunpack.c.l.b16 %v3101
        %v3493 = vunpack.c.l.b16 %v3102
        %v3494 = vunpack.c.l.b16 %v3103
        %v3495 = vunpack.c.l.b16 %v3104
        %v3496 = vunpack.c.l.b16 %v3105
        %v3497 = vunpack.c.l.b16 %v3106
        %v3498 = vunpack.c.l.b16 %v3107
        %v3499 = vunpack.c.l.b16 %v3108
        %v3500 = vunpack.c.l.b16 %v3109
        %v3501 = vunpack.c.l.b16 %v3110
        %v3502 = vunpack.c.l.b16 %v3111
        %v3503 = vunpack.c.l.b16 %v3112
        %v3504 = vunpack.c.l.b16 %v3113
        %v3505 = vunpack.c.l.b16 %v3114
        %v3506 = vunpack.c.l.b16 %v3115
        %v3507 = vunpack.c.l.b16 %v3116
        %v3508 = vunpack.c.l.b16 %v3117
        %v3509 = vunpack.c.l.b16 %v3118
        %v3510 = vunpack.c.l.b16 %v3119
        %v3511 = vunpack.c.l.b16 %v3120
        %v3512 = vunpack.c.l.b16 %v3121
        %v3513 = vunpack.c.l.b16 %v3122
        %v3514 = vunpack.c.l.b16 %v3123
        %v3515 = vunpack.c.l.b16 %v3124
        %v3516 = vunpack.c.l.b16 %v3125
        %v3517 = vunpack.c.l.b16 %v3126
        %v3518 = vunpack.c.l.b16 %v3127
        %v3519 = vunpack.c.l.b16 %v3128
        %v3520 = vunpack.c.l.b16 %v3129
        %v3521 = vunpack.c.l.b16 %v3130
        %v3522 = vunpack.c.l.b16 %v3131
        %v3523 = vunpack.c.l.b16 %v3132
        %v3524 = vunpack.c.l.b16 %v3133
        %v3525 = vunpack.c.l.b16 %v3134
        %v3526 = vunpack.c.l.b16 %v3135
        %v3527 = vunpack.c.l.b16 %v3136
        %v3528 = vunpack.c.l.b16 %v3137
        %v3529 = vunpack.c.l.b16 %v3138
        %v3530 = vunpack.c.l.b16 %v3139
        %v3531 = vunpack.c.l.b16 %v3140
        %v3532 = vunpack.c.l.b16 %v3141
        %v3533 = vunpack.c.l.b16 %v3142
        %v3534 = vunpack.c.l.b16 %v3143
        %v3535 = vpack.c.b16 %v3488, %v3487
        %v3536 = vpack.c.b16 %v3490, %v3489
        %v3537 = vpack.c.b16 %v3492, %v3491
        %v3538 = vpack.c.b16 %v3494, %v3493
        %v3539 = vpack.c.b16 %v3496, %v3495
        %v3540 = vpack.c.b16 %v3498, %v3497
        %v3541 = vpack.c.b16 %v3500, %v3499
        %v3542 = vpack.c.b16 %v3502, %v3501
        %v3543 = vpack.c.b16 %v3504, %v3503
        %v3544 = vpack.c.b16 %v3506, %v3505
        %v3545 = vpack.c.b16 %v3508, %v3507
        %v3546 = vpack.c.b16 %v3510, %v3509
        %v3547 = vpack.c.b16 %v3512, %v3511
        %v3548 = vpack.c.b16 %v3514, %v3513
        %v3549 = vpack.c.b16 %v3516, %v3515
        %v3550 = vpack.c.b16 %v3518, %v3517
        %v3551 = vpack.c.b16 %v3520, %v3519
        %v3552 = vpack.c.b16 %v3522, %v3521
        %v3553 = vpack.c.b16 %v3524, %v3523
        %v3554 = vpack.c.b16 %v3526, %v3525
        %v3555 = vpack.c.b16 %v3528, %v3527
        %v3556 = vpack.c.b16 %v3530, %v3529
        %v3557 = vpack.c.b16 %v3532, %v3531
        %v3558 = vpack.c.b16 %v3534, %v3533
        %3583 = vmatprep.subr.bf16.mxu0 0
        %3584 = vmatpush1.bf16.msra.mxu0 %v3535
        %3585 = vmatprep.subr.bf16.mxu0 0
        %3586 = vmatpush1.bf16.msra.mxu0 %v3536
        %3587 = vmatprep.subr.bf16.mxu0 0
        %3588 = vmatpush1.bf16.msra.mxu0 %v3537
        %3589 = vmatprep.subr.bf16.mxu0 0
        %3590 = vmatpush1.bf16.msra.mxu0 %v3538
        %3591 = vmatprep.subr.bf16.mxu0 0
        %3592 = vmatpush1.bf16.msra.mxu0 %v3539
        %3593 = vmatprep.subr.bf16.mxu0 0
        %3594 = vmatpush1.bf16.msra.mxu0 %v3540
        %3595 = vmatprep.subr.bf16.mxu0 0
        %3596 = vmatpush1.bf16.msra.mxu0 %v3541
        %3597 = vmatprep.subr.bf16.mxu0 0
        %3598 = vmatpush1.bf16.msra.mxu0 %v3542
        %3599 = vmatprep.subr.bf16.mxu0 0
        %3600 = vmatpush1.bf16.msra.mxu0 %v3543
        %3601 = vmatprep.subr.bf16.mxu0 0
        %3602 = vmatpush1.bf16.msra.mxu0 %v3544
        %3603 = vmatprep.subr.bf16.mxu0 0
        %3604 = vmatpush1.bf16.msra.mxu0 %v3545
        %3605 = vmatprep.subr.bf16.mxu0 0
        %3606 = vmatpush1.bf16.msra.mxu0 %v3546
        %3607 = vmatprep.subr.bf16.mxu0 0
        %3608 = vmatpush1.bf16.msra.mxu0 %v3547
        %3609 = vmatprep.subr.bf16.mxu0 0
        %3610 = vmatpush1.bf16.msra.mxu0 %v3548
        %3611 = vmatprep.subr.bf16.mxu0 0
        %3612 = vmatpush1.bf16.msra.mxu0 %v3549
        %3613 = vmatprep.subr.bf16.mxu0 0
        %3614 = vmatpush1.bf16.msra.mxu0 %v3550
        %3615 = vmatprep.mubr.bf16.mxu0 %v3225
        %3616 = vmatmul.mubr.bf16.gmra.mrb[0].mxu0 %v3222
        %v3617 = vpop.f32.mrb[0].mxu0
        %v3618 = vadd.f32 0.0, %v3617
        %v3619 = vpop.f32.mrb[0].mxu0
        %v3620 = vpop.f32.mrb[0].mxu0
        %v3621 = vadd.f32 0.0, %v3620
        %v3622 = vpop.f32.mrb[0].mxu0
        %3623 = vmatprep.mubr.bf16.mxu0 %v3232
        %3624 = vmatmul.mubr.bf16.gmra.mrb[0].mxu0 %v3230
        %v3625 = vpop.f32.mrb[0].mxu0
        %v3626 = vadd.f32 0.0, %v3625
        %v3627 = vpop.f32.mrb[0].mxu0
        %v3628 = vpop.f32.mrb[0].mxu0
        %v3629 = vadd.f32 0.0, %v3628
        %v3630 = vpop.f32.mrb[0].mxu0
        %3631 = vmatprep.mubr.bf16.mxu0 %v3238
        %3632 = vmatmul.mubr.bf16.gmra.mrb[0].mxu0 %v3236
        %v3633 = vpop.f32.mrb[0].mxu0
        %v3634 = vadd.f32 0.0, %v3633
        %v3635 = vpop.f32.mrb[0].mxu0
        %v3636 = vpop.f32.mrb[0].mxu0
        %v3637 = vadd.f32 0.0, %v3636
        %v3638 = vpop.f32.mrb[0].mxu0
        %3639 = vmatprep.mubr.bf16.mxu0 %v3244
        %3640 = vmatmul.mubr.bf16.gmra.mrb[0].mxu0 %v3242
        %v3641 = vpop.f32.mrb[0].mxu0
        %v3642 = vadd.f32 0.0, %v3641
        %v3643 = vpop.f32.mrb[0].mxu0
        %v3644 = vpop.f32.mrb[0].mxu0
        %v3645 = vadd.f32 0.0, %v3644
        %v3646 = vpop.f32.mrb[0].mxu0
        %3647 = vmatprep.mubr.bf16.mxu0 %v3250
        %3648 = vmatmul.mubr.bf16.gmra.mrb[0].mxu0 %v3248
        %v3649 = vpop.f32.mrb[0].mxu0
        %v3650 = vadd.f32 0.0, %v3649
        %v3651 = vpop.f32.mrb[0].mxu0
        %v3652 = vpop.f32.mrb[0].mxu0
        %v3653 = vadd.f32 0.0, %v3652
        %v3654 = vpop.f32.mrb[0].mxu0
        %3655 = vmatprep.mubr.bf16.mxu0 %v3256
        %3656 = vmatmul.mubr.bf16.gmra.mrb[0].mxu0 %v3254
        %v3657 = vpop.f32.mrb[0].mxu0
        %v3658 = vadd.f32 0.0, %v3657
        %v3659 = vpop.f32.mrb[0].mxu0
        %v3660 = vpop.f32.mrb[0].mxu0
        %v3661 = vadd.f32 0.0, %v3660
        %v3662 = vpop.f32.mrb[0].mxu0
        %3663 = vmatprep.mubr.bf16.mxu0 %v3262
        %3664 = vmatmul.mubr.bf16.gmra.mrb[0].mxu0 %v3260
        %v3665 = vpop.f32.mrb[0].mxu0
        %v3666 = vadd.f32 0.0, %v3665
        %v3667 = vpop.f32.mrb[0].mxu0
        %v3668 = vpop.f32.mrb[0].mxu0
        %v3669 = vadd.f32 0.0, %v3668
        %v3670 = vpop.f32.mrb[0].mxu0
        %3671 = vmatprep.mubr.bf16.mxu0 %v3268
        %3672 = vmatmul.mubr.bf16.gmra.mrb[0].mxu0 %v3266
        %v3673 = vpop.f32.mrb[0].mxu0
        %v3674 = vadd.f32 0.0, %v3673
        %v3675 = vpop.f32.mrb[0].mxu0
        %v3676 = vpop.f32.mrb[0].mxu0
        %v3677 = vadd.f32 0.0, %v3676
        %v3678 = vpop.f32.mrb[0].mxu0
        %3679 = vmatprep.mubr.bf16.mxu0 %v3274
        %3680 = vmatmul.mubr.bf16.gmra.mrb[0].mxu0 %v3272
        %v3681 = vpop.f32.mrb[0].mxu0
        %v3682 = vadd.f32 0.0, %v3681
        %v3683 = vpop.f32.mrb[0].mxu0
        %v3684 = vpop.f32.mrb[0].mxu0
        %v3685 = vadd.f32 0.0, %v3684
        %v3686 = vpop.f32.mrb[0].mxu0
        %3687 = vmatprep.mubr.bf16.mxu0 %v3280
        %3688 = vmatmul.mubr.bf16.gmra.mrb[0].mxu0 %v3278
        %v3689 = vpop.f32.mrb[0].mxu0
        %v3690 = vadd.f32 0.0, %v3689
        %v3691 = vpop.f32.mrb[0].mxu0
        %v3692 = vpop.f32.mrb[0].mxu0
        %v3693 = vadd.f32 0.0, %v3692
        %v3694 = vpop.f32.mrb[0].mxu0
        %3695 = vmatprep.mubr.bf16.mxu0 %v3286
        %3696 = vmatmul.mubr.bf16.gmra.mrb[0].mxu0 %v3284
        %v3697 = vpop.f32.mrb[0].mxu0
        %v3698 = vadd.f32 0.0, %v3697
        %v3699 = vpop.f32.mrb[0].mxu0
        %v3700 = vpop.f32.mrb[0].mxu0
        %v3701 = vadd.f32 0.0, %v3700
        %v3702 = vpop.f32.mrb[0].mxu0
        %3703 = vmatprep.mubr.bf16.mxu0 %v3292
        %3704 = vmatmul.mubr.bf16.gmra.mrb[0].mxu0 %v3290
        %v3705 = vpop.f32.mrb[0].mxu0
        %v3706 = vadd.f32 0.0, %v3705
        %v3707 = vpop.f32.mrb[0].mxu0
        %v3708 = vpop.f32.mrb[0].mxu0
        %v3709 = vadd.f32 0.0, %v3708
        %v3710 = vpop.f32.mrb[0].mxu0
        %3711 = vmatprep.mubr.bf16.mxu0 %v3298
        %3712 = vmatmul.mubr.bf16.gmra.mrb[0].mxu0 %v3296
        %v3713 = vpop.f32.mrb[0].mxu0
        %v3714 = vadd.f32 0.0, %v3713
        %v3715 = vpop.f32.mrb[0].mxu0
        %v3716 = vpop.f32.mrb[0].mxu0
        %v3717 = vadd.f32 0.0, %v3716
        %v3718 = vpop.f32.mrb[0].mxu0
        %3719 = vmatprep.mubr.bf16.mxu0 %v3304
        %3720 = vmatmul.mubr.bf16.gmra.mrb[0].mxu0 %v3302
        %v3721 = vpop.f32.mrb[0].mxu0
        %v3722 = vadd.f32 0.0, %v3721
        %v3723 = vpop.f32.mrb[0].mxu0
        %v3724 = vpop.f32.mrb[0].mxu0
        %v3725 = vadd.f32 0.0, %v3724
        %v3726 = vpop.f32.mrb[0].mxu0
        %3727 = vmatprep.mubr.bf16.mxu0 %v3310
        %3728 = vmatmul.mubr.bf16.gmra.mrb[0].mxu0 %v3308
        %v3729 = vpop.f32.mrb[0].mxu0
        %v3730 = vadd.f32 0.0, %v3729
        %v3731 = vpop.f32.mrb[0].mxu0
        %v3732 = vpop.f32.mrb[0].mxu0
        %v3733 = vadd.f32 0.0, %v3732
        %v3734 = vpop.f32.mrb[0].mxu0
        %3735 = vmatprep.mubr.bf16.mxu0 %v3316
        %3736 = vmatmul.mubr.bf16.gmra.mrb[0].mxu0 %v3314
        %v3737 = vpop.f32.mrb[0].mxu0
        %v3738 = vadd.f32 0.0, %v3737
        %v3739 = vpop.f32.mrb[0].mxu0
        %v3740 = vpop.f32.mrb[0].mxu0
        %v3741 = vadd.f32 0.0, %v3740
        %v3742 = vpop.f32.mrb[0].mxu0
        %3743 = vmatprep.mubr.bf16.mxu0 %v3322
        %3744 = vmatmul.mubr.bf16.gmra.mrb[0].mxu0 %v3320
        %v3745 = vpop.f32.mrb[0].mxu0
        %v3746 = vadd.f32 0.0, %v3745
        %v3747 = vpop.f32.mrb[0].mxu0
        %v3748 = vpop.f32.mrb[0].mxu0
        %v3749 = vadd.f32 0.0, %v3748
        %v3750 = vpop.f32.mrb[0].mxu0
        %3751 = vmatprep.mubr.bf16.mxu0 %v3328
        %3752 = vmatmul.mubr.bf16.gmra.mrb[0].mxu0 %v3326
        %v3753 = vpop.f32.mrb[0].mxu0
        %v3754 = vadd.f32 0.0, %v3753
        %v3755 = vpop.f32.mrb[0].mxu0
        %v3756 = vpop.f32.mrb[0].mxu0
        %v3757 = vadd.f32 0.0, %v3756
        %v3758 = vpop.f32.mrb[0].mxu0
        %3759 = vmatprep.mubr.bf16.mxu0 %v3334
        %3760 = vmatmul.mubr.bf16.gmra.mrb[0].mxu0 %v3332
        %v3761 = vpop.f32.mrb[0].mxu0
        %v3762 = vadd.f32 0.0, %v3761
        %v3763 = vpop.f32.mrb[0].mxu0
        %v3764 = vpop.f32.mrb[0].mxu0
        %v3765 = vadd.f32 0.0, %v3764
        %v3766 = vpop.f32.mrb[0].mxu0
        %3767 = vmatprep.mubr.bf16.mxu0 %v3340
        %3768 = vmatmul.mubr.bf16.gmra.mrb[0].mxu0 %v3338
        %v3769 = vpop.f32.mrb[0].mxu0
        %v3770 = vadd.f32 0.0, %v3769
        %v3771 = vpop.f32.mrb[0].mxu0
        %v3772 = vpop.f32.mrb[0].mxu0
        %v3773 = vadd.f32 0.0, %v3772
        %v3774 = vpop.f32.mrb[0].mxu0
        %3775 = vmatprep.mubr.bf16.mxu0 %v3346
        %3776 = vmatmul.mubr.bf16.gmra.mrb[0].mxu0 %v3344
        %v3777 = vpop.f32.mrb[0].mxu0
        %v3778 = vadd.f32 0.0, %v3777
        %v3779 = vpop.f32.mrb[0].mxu0
        %v3780 = vpop.f32.mrb[0].mxu0
        %v3781 = vadd.f32 0.0, %v3780
        %v3782 = vpop.f32.mrb[0].mxu0
        %3783 = vmatprep.mubr.bf16.mxu0 %v3352
        %3784 = vmatmul.mubr.bf16.gmra.mrb[0].mxu0 %v3350
        %v3785 = vpop.f32.mrb[0].mxu0
        %v3786 = vadd.f32 0.0, %v3785
        %v3787 = vpop.f32.mrb[0].mxu0
        %v3788 = vpop.f32.mrb[0].mxu0
        %v3789 = vadd.f32 0.0, %v3788
        %v3790 = vpop.f32.mrb[0].mxu0
        %3791 = vmatprep.mubr.bf16.mxu0 %v3358
        %3792 = vmatmul.mubr.bf16.gmra.mrb[0].mxu0 %v3356
        %v3793 = vpop.f32.mrb[0].mxu0
        %v3794 = vadd.f32 0.0, %v3793
        %v3795 = vpop.f32.mrb[0].mxu0
        %v3796 = vpop.f32.mrb[0].mxu0
        %v3797 = vadd.f32 0.0, %v3796
        %v3798 = vpop.f32.mrb[0].mxu0
        %3799 = vmatprep.mubr.bf16.mxu0 %v3364
        %3800 = vmatmul.mubr.bf16.gmra.mrb[0].mxu0 %v3362
        %v3801 = vpop.f32.mrb[0].mxu0
        %v3802 = vadd.f32 0.0, %v3801
        %v3803 = vpop.f32.mrb[0].mxu0
        %v3804 = vpop.f32.mrb[0].mxu0
        %v3805 = vadd.f32 0.0, %v3804
        %v3806 = vpop.f32.mrb[0].mxu0
        %3807 = vdwg.mxu0
        %3808 = vmatprep.subr.bf16.mxu0 0
        %3809 = vmatpush1.bf16.msra.mxu0 %v3551
        %3810 = vmatprep.subr.bf16.mxu0 0
        %3811 = vmatpush1.bf16.msra.mxu0 %v3552
        %3812 = vmatprep.subr.bf16.mxu0 0
        %3813 = vmatpush1.bf16.msra.mxu0 %v3553
        %3814 = vmatprep.subr.bf16.mxu0 0
        %3815 = vmatpush1.bf16.msra.mxu0 %v3554
        %3816 = vmatprep.subr.bf16.mxu0 0
        %3817 = vmatpush1.bf16.msra.mxu0 %v3555
        %3818 = vmatprep.subr.bf16.mxu0 0
        %3819 = vmatpush1.bf16.msra.mxu0 %v3556
        %3820 = vmatprep.subr.bf16.mxu0 0
        %3821 = vmatpush1.bf16.msra.mxu0 %v3557
        %3822 = vmatprep.subr.bf16.mxu0 0
        %3823 = vmatpush1.bf16.msra.mxu0 %v3558
        %3824 = vmatprep.subr.bf16.mxu0 0
        %3825 = vmatpush1.bf16.msra.mxu0 0
        %3826 = vmatprep.subr.bf16.mxu0 0
        %3827 = vmatpush1.bf16.msra.mxu0 0
        %3828 = vmatprep.subr.bf16.mxu0 0
        %3829 = vmatpush1.bf16.msra.mxu0 0
        %3830 = vmatprep.subr.bf16.mxu0 0
        %3831 = vmatpush1.bf16.msra.mxu0 0
        %3832 = vmatprep.subr.bf16.mxu0 0
        %3833 = vmatpush1.bf16.msra.mxu0 0
        %3834 = vmatprep.subr.bf16.mxu0 0
        %3835 = vmatpush1.bf16.msra.mxu0 0
        %3836 = vmatprep.subr.bf16.mxu0 0
        %3837 = vmatpush1.bf16.msra.mxu0 0
        %3838 = vmatprep.subr.bf16.mxu0 0
        %3839 = vmatpush1.bf16.msra.mxu0 0
        %3840 = vmatprep.mubr.bf16.mxu0 0
        %3841 = vmatmul.mubr.bf16.gmra.mrb[0].mxu0 %v3228
        %v3842 = vpop.f32.mrb[0].mxu0
        %v3843 = vadd.f32 %v3618, %v3842
        %v3844 = vpop.f32.mrb[0].mxu0
        %v3845 = vpop.f32.mrb[0].mxu0
        %v3846 = vadd.f32 %v3621, %v3845
        %v3847 = vpop.f32.mrb[0].mxu0
        %3848 = vmatprep.mubr.bf16.mxu0 0
        %3849 = vmatmul.mubr.bf16.gmra.mrb[0].mxu0 %v3234
        %v3850 = vpop.f32.mrb[0].mxu0
        %v3851 = vadd.f32 %v3626, %v3850
        %v3852 = vpop.f32.mrb[0].mxu0
        %v3853 = vpop.f32.mrb[0].mxu0
        %v3854 = vadd.f32 %v3629, %v3853
        %v3855 = vpop.f32.mrb[0].mxu0
        %3856 = vmatprep.mubr.bf16.mxu0 0
        %3857 = vmatmul.mubr.bf16.gmra.mrb[0].mxu0 %v3240
        %v3858 = vpop.f32.mrb[0].mxu0
        %v3859 = vadd.f32 %v3634, %v3858
        %v3860 = vpop.f32.mrb[0].mxu0
        %v3861 = vpop.f32.mrb[0].mxu0
        %v3862 = vadd.f32 %v3637, %v3861
        %v3863 = vpop.f32.mrb[0].mxu0
        %3864 = vmatprep.mubr.bf16.mxu0 0
        %3865 = vmatmul.mubr.bf16.gmra.mrb[0].mxu0 %v3246
        %v3866 = vpop.f32.mrb[0].mxu0
        %v3867 = vadd.f32 %v3642, %v3866
        %v3868 = vpop.f32.mrb[0].mxu0
        %v3869 = vpop.f32.mrb[0].mxu0
        %v3870 = vadd.f32 %v3645, %v3869
        %v3871 = vpop.f32.mrb[0].mxu0
        %3872 = vmatprep.mubr.bf16.mxu0 0
        %3873 = vmatmul.mubr.bf16.gmra.mrb[0].mxu0 %v3252
        %v3874 = vpop.f32.mrb[0].mxu0
        %v3875 = vadd.f32 %v3650, %v3874
        %v3876 = vpop.f32.mrb[0].mxu0
        %v3877 = vpop.f32.mrb[0].mxu0
        %v3878 = vadd.f32 %v3653, %v3877
        %v3879 = vpop.f32.mrb[0].mxu0
        %3880 = vmatprep.mubr.bf16.mxu0 0
        %3881 = vmatmul.mubr.bf16.gmra.mrb[0].mxu0 %v3258
        %v3882 = vpop.f32.mrb[0].mxu0
        %v3883 = vadd.f32 %v3658, %v3882
        %v3884 = vpop.f32.mrb[0].mxu0
        %v3885 = vpop.f32.mrb[0].mxu0
        %v3886 = vadd.f32 %v3661, %v3885
        %v3887 = vpop.f32.mrb[0].mxu0
        %3888 = vmatprep.mubr.bf16.mxu0 0
        %3889 = vmatmul.mubr.bf16.gmra.mrb[0].mxu0 %v3264
        %v3890 = vpop.f32.mrb[0].mxu0
        %v3891 = vadd.f32 %v3666, %v3890
        %v3892 = vpop.f32.mrb[0].mxu0
        %v3893 = vpop.f32.mrb[0].mxu0
        %v3894 = vadd.f32 %v3669, %v3893
        %v3895 = vpop.f32.mrb[0].mxu0
        %3896 = vmatprep.mubr.bf16.mxu0 0
        %3897 = vmatmul.mubr.bf16.gmra.mrb[0].mxu0 %v3270
        %v3898 = vpop.f32.mrb[0].mxu0
        %v3899 = vadd.f32 %v3674, %v3898
        %v3900 = vpop.f32.mrb[0].mxu0
        %v3901 = vpop.f32.mrb[0].mxu0
        %v3902 = vadd.f32 %v3677, %v3901
        %v3903 = vpop.f32.mrb[0].mxu0
        %3904 = vmatprep.mubr.bf16.mxu0 0
        %3905 = vmatmul.mubr.bf16.gmra.mrb[0].mxu0 %v3276
        %v3906 = vpop.f32.mrb[0].mxu0
        %v3907 = vadd.f32 %v3682, %v3906
        %v3908 = vpop.f32.mrb[0].mxu0
        %v3909 = vpop.f32.mrb[0].mxu0
        %v3910 = vadd.f32 %v3685, %v3909
        %v3911 = vpop.f32.mrb[0].mxu0
        %3912 = vmatprep.mubr.bf16.mxu0 0
        %3913 = vmatmul.mubr.bf16.gmra.mrb[0].mxu0 %v3282
        %v3914 = vpop.f32.mrb[0].mxu0
        %v3915 = vadd.f32 %v3690, %v3914
        %v3916 = vpop.f32.mrb[0].mxu0
        %v3917 = vpop.f32.mrb[0].mxu0
        %v3918 = vadd.f32 %v3693, %v3917
        %v3919 = vpop.f32.mrb[0].mxu0
        %3920 = vmatprep.mubr.bf16.mxu0 0
        %3921 = vmatmul.mubr.bf16.gmra.mrb[0].mxu0 %v3288
        %v3922 = vpop.f32.mrb[0].mxu0
        %v3923 = vadd.f32 %v3698, %v3922
        %v3924 = vpop.f32.mrb[0].mxu0
        %v3925 = vpop.f32.mrb[0].mxu0
        %v3926 = vadd.f32 %v3701, %v3925
        %v3927 = vpop.f32.mrb[0].mxu0
        %3928 = vmatprep.mubr.bf16.mxu0 0
        %3929 = vmatmul.mubr.bf16.gmra.mrb[0].mxu0 %v3294
        %v3930 = vpop.f32.mrb[0].mxu0
        %v3931 = vadd.f32 %v3706, %v3930
        %v3932 = vpop.f32.mrb[0].mxu0
        %v3933 = vpop.f32.mrb[0].mxu0
        %v3934 = vadd.f32 %v3709, %v3933
        %v3935 = vpop.f32.mrb[0].mxu0
        %3936 = vmatprep.mubr.bf16.mxu0 0
        %3937 = vmatmul.mubr.bf16.gmra.mrb[0].mxu0 %v3300
        %v3938 = vpop.f32.mrb[0].mxu0
        %v3939 = vadd.f32 %v3714, %v3938
        %v3940 = vpop.f32.mrb[0].mxu0
        %v3941 = vpop.f32.mrb[0].mxu0
        %v3942 = vadd.f32 %v3717, %v3941
        %v3943 = vpop.f32.mrb[0].mxu0
        %3944 = vmatprep.mubr.bf16.mxu0 0
        %3945 = vmatmul.mubr.bf16.gmra.mrb[0].mxu0 %v3306
        %v3946 = vpop.f32.mrb[0].mxu0
        %v3947 = vadd.f32 %v3722, %v3946
        %v3948 = vpop.f32.mrb[0].mxu0
        %v3949 = vpop.f32.mrb[0].mxu0
        %v3950 = vadd.f32 %v3725, %v3949
        %v3951 = vpop.f32.mrb[0].mxu0
        %3952 = vmatprep.mubr.bf16.mxu0 0
        %3953 = vmatmul.mubr.bf16.gmra.mrb[0].mxu0 %v3312
        %v3954 = vpop.f32.mrb[0].mxu0
        %v3955 = vadd.f32 %v3730, %v3954
        %v3956 = vpop.f32.mrb[0].mxu0
        %v3957 = vpop.f32.mrb[0].mxu0
        %v3958 = vadd.f32 %v3733, %v3957
        %v3959 = vpop.f32.mrb[0].mxu0
        %3960 = vmatprep.mubr.bf16.mxu0 0
        %3961 = vmatmul.mubr.bf16.gmra.mrb[0].mxu0 %v3318
        %v3962 = vpop.f32.mrb[0].mxu0
        %v3963 = vadd.f32 %v3738, %v3962
        %v3964 = vpop.f32.mrb[0].mxu0
        %v3965 = vpop.f32.mrb[0].mxu0
        %v3966 = vadd.f32 %v3741, %v3965
        %v3967 = vpop.f32.mrb[0].mxu0
        %3968 = vmatprep.mubr.bf16.mxu0 0
        %3969 = vmatmul.mubr.bf16.gmra.mrb[0].mxu0 %v3324
        %v3970 = vpop.f32.mrb[0].mxu0
        %v3971 = vadd.f32 %v3746, %v3970
        %v3972 = vpop.f32.mrb[0].mxu0
        %v3973 = vpop.f32.mrb[0].mxu0
        %v3974 = vadd.f32 %v3749, %v3973
        %v3975 = vpop.f32.mrb[0].mxu0
        %3976 = vmatprep.mubr.bf16.mxu0 0
        %3977 = vmatmul.mubr.bf16.gmra.mrb[0].mxu0 %v3330
        %v3978 = vpop.f32.mrb[0].mxu0
        %v3979 = vadd.f32 %v3754, %v3978
        %v3980 = vpop.f32.mrb[0].mxu0
        %v3981 = vpop.f32.mrb[0].mxu0
        %v3982 = vadd.f32 %v3757, %v3981
        %v3983 = vpop.f32.mrb[0].mxu0
        %3984 = vmatprep.mubr.bf16.mxu0 0
        %3985 = vmatmul.mubr.bf16.gmra.mrb[0].mxu0 %v3336
        %v3986 = vpop.f32.mrb[0].mxu0
        %v3987 = vadd.f32 %v3762, %v3986
        %v3988 = vpop.f32.mrb[0].mxu0
        %v3989 = vpop.f32.mrb[0].mxu0
        %v3990 = vadd.f32 %v3765, %v3989
        %v3991 = vpop.f32.mrb[0].mxu0
        %3992 = vmatprep.mubr.bf16.mxu0 0
        %3993 = vmatmul.mubr.bf16.gmra.mrb[0].mxu0 %v3342
        %v3994 = vpop.f32.mrb[0].mxu0
        %v3995 = vadd.f32 %v3770, %v3994
        %v3996 = vpop.f32.mrb[0].mxu0
        %v3997 = vpop.f32.mrb[0].mxu0
        %v3998 = vadd.f32 %v3773, %v3997
        %v3999 = vpop.f32.mrb[0].mxu0
        %4000 = vmatprep.mubr.bf16.mxu0 0
        %4001 = vmatmul.mubr.bf16.gmra.mrb[0].mxu0 %v3348
        %v4002 = vpop.f32.mrb[0].mxu0
        %v4003 = vadd.f32 %v3778, %v4002
        %v4004 = vpop.f32.mrb[0].mxu0
        %v4005 = vpop.f32.mrb[0].mxu0
        %v4006 = vadd.f32 %v3781, %v4005
        %v4007 = vpop.f32.mrb[0].mxu0
        %4008 = vmatprep.mubr.bf16.mxu0 0
        %4009 = vmatmul.mubr.bf16.gmra.mrb[0].mxu0 %v3354
        %v4010 = vpop.f32.mrb[0].mxu0
        %v4011 = vadd.f32 %v3786, %v4010
        %v4012 = vpop.f32.mrb[0].mxu0
        %v4013 = vpop.f32.mrb[0].mxu0
        %v4014 = vadd.f32 %v3789, %v4013
        %v4015 = vpop.f32.mrb[0].mxu0
        %4016 = vmatprep.mubr.bf16.mxu0 0
        %4017 = vmatmul.mubr.bf16.gmra.mrb[0].mxu0 %v3360
        %v4018 = vpop.f32.mrb[0].mxu0
        %v4019 = vadd.f32 %v3794, %v4018
        %v4020 = vpop.f32.mrb[0].mxu0
        %v4021 = vpop.f32.mrb[0].mxu0
        %v4022 = vadd.f32 %v3797, %v4021
        %v4023 = vpop.f32.mrb[0].mxu0
        %4024 = vmatprep.mubr.bf16.mxu0 0
        %4025 = vmatmul.mubr.bf16.gmra.mrb[0].mxu0 %v3366
        %v4026 = vpop.f32.mrb[0].mxu0
        %v4027 = vadd.f32 %v3802, %v4026
        %v4028 = vpop.f32.mrb[0].mxu0
        %v4029 = vpop.f32.mrb[0].mxu0
        %v4030 = vadd.f32 %v3805, %v4029
        %v4031 = vpop.f32.mrb[0].mxu0
        %4032 = vdwg.mxu0
        %v4033 = vadd.f32 %v2972, %v3843
        %v4034 = vadd.f32 %v2973, %v3846
        %v4035 = vadd.f32 %v2974, %v3851
        %v4036 = vadd.f32 %v2975, %v3854
        %v4037 = vadd.f32 %v2976, %v3859
        %v4038 = vadd.f32 %v2977, %v3862
        %v4039 = vadd.f32 %v2978, %v3867
        %v4040 = vadd.f32 %v2979, %v3870
        %v4041 = vadd.f32 %v2980, %v3875
        %v4042 = vadd.f32 %v2981, %v3878
        %v4043 = vadd.f32 %v2982, %v3883
        %v4044 = vadd.f32 %v2983, %v3886
        %v4045 = vadd.f32 %v2984, %v3891
        %v4046 = vadd.f32 %v2985, %v3894
        %v4047 = vadd.f32 %v2986, %v3899
        %v4048 = vadd.f32 %v2987, %v3902
        %v4049 = vadd.f32 %v2988, %v3907
        %v4050 = vadd.f32 %v2989, %v3910
        %v4051 = vadd.f32 %v2990, %v3915
        %v4052 = vadd.f32 %v2991, %v3918
        %v4053 = vadd.f32 %v2992, %v3923
        %v4054 = vadd.f32 %v2993, %v3926
        %v4055 = vadd.f32 %v2994, %v3931
        %v4056 = vadd.f32 %v2995, %v3934
        %v4057 = vadd.f32 %v2996, %v3939
        %v4058 = vadd.f32 %v2997, %v3942
        %v4059 = vadd.f32 %v2998, %v3947
        %v4060 = vadd.f32 %v2999, %v3950
        %v4061 = vadd.f32 %v3000, %v3955
        %v4062 = vadd.f32 %v3001, %v3958
        %v4063 = vadd.f32 %v3002, %v3963
        %v4064 = vadd.f32 %v3003, %v3966
        %v4065 = vadd.f32 %v3004, %v3971
        %v4066 = vadd.f32 %v3005, %v3974
        %v4067 = vadd.f32 %v3006, %v3979
        %v4068 = vadd.f32 %v3007, %v3982
        %v4069 = vadd.f32 %v3008, %v3987
        %v4070 = vadd.f32 %v3009, %v3990
        %v4071 = vadd.f32 %v3010, %v3995
        %v4072 = vadd.f32 %v3011, %v3998
        %v4073 = vadd.f32 %v3012, %v4003
        %v4074 = vadd.f32 %v3013, %v4006
        %v4075 = vadd.f32 %v3014, %v4011
        %v4076 = vadd.f32 %v3015, %v4014
        %v4077 = vadd.f32 %v3016, %v4019
        %v4078 = vadd.f32 %v3017, %v4022
        %v4079 = vadd.f32 %v3018, %v4027
        %v4080 = vadd.f32 %v3019, %v4030
        %4081 = vst [vmem:[#allocation4] sm:$0xff] %v4033
        %4082 = vst [vmem:[#allocation4 + $0x8] sm:$0xff] %v4034
        %4083 = vst [vmem:[#allocation4 + $0x10] sm:$0xff] %v4035
        %4084 = vst [vmem:[#allocation4 + $0x18] sm:$0xff] %v4036
        %4085 = vst [vmem:[#allocation4 + $0x20] sm:$0xff] %v4037
        %4086 = vst [vmem:[#allocation4 + $0x28] sm:$0xff] %v4038
        %4087 = vst [vmem:[#allocation4 + $0x30] sm:$0xff] %v4039
        %4088 = vst [vmem:[#allocation4 + $0x38] sm:$0xff] %v4040
        %4089 = vst [vmem:[#allocation4 + $0x40] sm:$0xff] %v4041
        %4090 = vst [vmem:[#allocation4 + $0x48] sm:$0xff] %v4042
        %4091 = vst [vmem:[#allocation4 + $0x50] sm:$0xff] %v4043
        %4092 = vst [vmem:[#allocation4 + $0x58] sm:$0xff] %v4044
        %4093 = vst [vmem:[#allocation4 + $0x60] sm:$0xff] %v4045
        %4094 = vst [vmem:[#allocation4 + $0x68] sm:$0xff] %v4046
        %4095 = vst [vmem:[#allocation4 + $0x70] sm:$0xff] %v4047
        %4096 = vst [vmem:[#allocation4 + $0x78] sm:$0xff] %v4048
        %4097 = vst [vmem:[#allocation4 + $0x80] sm:$0xff] %v4049
        %4098 = vst [vmem:[#allocation4 + $0x88] sm:$0xff] %v4050
        %4099 = vst [vmem:[#allocation4 + $0x90] sm:$0xff] %v4051
        %4100 = vst [vmem:[#allocation4 + $0x98] sm:$0xff] %v4052
        %4101 = vst [vmem:[#allocation4 + $0xa0] sm:$0xff] %v4053
        %4102 = vst [vmem:[#allocation4 + $0xa8] sm:$0xff] %v4054
        %4103 = vst [vmem:[#allocation4 + $0xb0] sm:$0xff] %v4055
        %4104 = vst [vmem:[#allocation4 + $0xb8] sm:$0xff] %v4056
        %4105 = vst [vmem:[#allocation4 + $0xc0] sm:$0xff] %v4057
        %4106 = vst [vmem:[#allocation4 + $0xc8] sm:$0xff] %v4058
        %4107 = vst [vmem:[#allocation4 + $0xd0] sm:$0xff] %v4059
        %4108 = vst [vmem:[#allocation4 + $0xd8] sm:$0xff] %v4060
        %4109 = vst [vmem:[#allocation4 + $0xe0] sm:$0xff] %v4061
        %4110 = vst [vmem:[#allocation4 + $0xe8] sm:$0xff] %v4062
        %4111 = vst [vmem:[#allocation4 + $0xf0] sm:$0xff] %v4063
        %4112 = vst [vmem:[#allocation4 + $0xf8] sm:$0xff] %v4064
        %4113 = vst [vmem:[#allocation4 + $0x100] sm:$0xff] %v4065
        %4114 = vst [vmem:[#allocation4 + $0x108] sm:$0xff] %v4066
        %4115 = vst [vmem:[#allocation4 + $0x110] sm:$0xff] %v4067
        %4116 = vst [vmem:[#allocation4 + $0x118] sm:$0xff] %v4068
        %4117 = vst [vmem:[#allocation4 + $0x120] sm:$0xff] %v4069
        %4118 = vst [vmem:[#allocation4 + $0x128] sm:$0xff] %v4070
        %4119 = vst [vmem:[#allocation4 + $0x130] sm:$0xff] %v4071
        %4120 = vst [vmem:[#allocation4 + $0x138] sm:$0xff] %v4072
        %4121 = vst [vmem:[#allocation4 + $0x140] sm:$0xff] %v4073
        %4122 = vst [vmem:[#allocation4 + $0x148] sm:$0xff] %v4074
        %4123 = vst [vmem:[#allocation4 + $0x150] sm:$0xff] %v4075
        %4124 = vst [vmem:[#allocation4 + $0x158] sm:$0xff] %v4076
        %4125 = vst [vmem:[#allocation4 + $0x160] sm:$0xff] %v4077
        %4126 = vst [vmem:[#allocation4 + $0x168] sm:$0xff] %v4078
        %4127 = vst [vmem:[#allocation4 + $0x170] sm:$0xff] %v4079
        %4128 = vst [vmem:[#allocation4 + $0x178] sm:$0xff] %v4080
        %v4129 = vld [vmem:[#allocation4] sm:$0xff]
        %v4130 = vld [vmem:[#allocation4 + $0x8] sm:$0xff]
        %v4131 = vld [vmem:[#allocation4 + $0x10] sm:$0xff]
        %v4132 = vld [vmem:[#allocation4 + $0x18] sm:$0xff]
        %v4133 = vld [vmem:[#allocation4 + $0x20] sm:$0xff]
        %v4134 = vld [vmem:[#allocation4 + $0x28] sm:$0xff]
        %v4135 = vld [vmem:[#allocation4 + $0x30] sm:$0xff]
        %v4136 = vld [vmem:[#allocation4 + $0x38] sm:$0xff]
        %v4137 = vld [vmem:[#allocation4 + $0x40] sm:$0xff]
        %v4138 = vld [vmem:[#allocation4 + $0x48] sm:$0xff]
        %v4139 = vld [vmem:[#allocation4 + $0x50] sm:$0xff]
        %v4140 = vld [vmem:[#allocation4 + $0x58] sm:$0xff]
        %v4141 = vld [vmem:[#allocation4 + $0x60] sm:$0xff]
        %v4142 = vld [vmem:[#allocation4 + $0x68] sm:$0xff]
        %v4143 = vld [vmem:[#allocation4 + $0x70] sm:$0xff]
        %v4144 = vld [vmem:[#allocation4 + $0x78] sm:$0xff]
        %v4145 = vld [vmem:[#allocation4 + $0x80] sm:$0xff]
        %v4146 = vld [vmem:[#allocation4 + $0x88] sm:$0xff]
        %v4147 = vld [vmem:[#allocation4 + $0x90] sm:$0xff]
        %v4148 = vld [vmem:[#allocation4 + $0x98] sm:$0xff]
        %v4149 = vld [vmem:[#allocation4 + $0xa0] sm:$0xff]
        %v4150 = vld [vmem:[#allocation4 + $0xa8] sm:$0xff]
        %v4151 = vld [vmem:[#allocation4 + $0xb0] sm:$0xff]
        %v4152 = vld [vmem:[#allocation4 + $0xb8] sm:$0xff]
        %v4153 = vld [vmem:[#allocation4 + $0xc0] sm:$0xff]
        %v4154 = vld [vmem:[#allocation4 + $0xc8] sm:$0xff]
        %v4155 = vld [vmem:[#allocation4 + $0xd0] sm:$0xff]
        %v4156 = vld [vmem:[#allocation4 + $0xd8] sm:$0xff]
        %v4157 = vld [vmem:[#allocation4 + $0xe0] sm:$0xff]
        %v4158 = vld [vmem:[#allocation4 + $0xe8] sm:$0xff]
        %v4159 = vld [vmem:[#allocation4 + $0xf0] sm:$0xff]
        %v4160 = vld [vmem:[#allocation4 + $0xf8] sm:$0xff]
        %v4161 = vld [vmem:[#allocation4 + $0x100] sm:$0xff]
        %v4162 = vld [vmem:[#allocation4 + $0x108] sm:$0xff]
        %v4163 = vld [vmem:[#allocation4 + $0x110] sm:$0xff]
        %v4164 = vld [vmem:[#allocation4 + $0x118] sm:$0xff]
        %v4165 = vld [vmem:[#allocation4 + $0x120] sm:$0xff]
        %v4166 = vld [vmem:[#allocation4 + $0x128] sm:$0xff]
        %v4167 = vld [vmem:[#allocation4 + $0x130] sm:$0xff]
        %v4168 = vld [vmem:[#allocation4 + $0x138] sm:$0xff]
        %v4169 = vld [vmem:[#allocation4 + $0x140] sm:$0xff]
        %v4170 = vld [vmem:[#allocation4 + $0x148] sm:$0xff]
        %v4171 = vld [vmem:[#allocation4 + $0x150] sm:$0xff]
        %v4172 = vld [vmem:[#allocation4 + $0x158] sm:$0xff]
        %v4173 = vld [vmem:[#allocation4 + $0x160] sm:$0xff]
        %v4174 = vld [vmem:[#allocation4 + $0x168] sm:$0xff]
        %v4175 = vld [vmem:[#allocation4 + $0x170] sm:$0xff]
        %v4176 = vld [vmem:[#allocation4 + $0x178] sm:$0xff]
        %v4177 = vld [vmem:[#allocation2 + $0x48] sm:$0xff]
        %v4178 = vld [vmem:[#allocation2 + $0x50] sm:$0xff]
        %v4179 = vld [vmem:[#allocation2 + $0x58] sm:$0xff]
        %v4180 = vld [vmem:[#allocation2 + $0x60] sm:$0xff]
        %v4181 = vld [vmem:[#allocation2 + $0x68] sm:$0xff]
        %v4182 = vld [vmem:[#allocation2 + $0x70] sm:$0xff]
        %v4183 = vld [vmem:[#allocation2 + $0x78] sm:$0xff]
        %v4184 = vld [vmem:[#allocation2 + $0x80] sm:$0xff]
        %v4185 = vld [vmem:[#allocation2 + $0x88] sm:$0xff]
        %v4186 = vld [vmem:[#allocation2 + $0x90] sm:$0xff]
        %v4187 = vld [vmem:[#allocation2 + $0x98] sm:$0xff]
        %v4188 = vld [vmem:[#allocation2 + $0xa0] sm:$0xff]
        %v4189 = vld [vmem:[#allocation2 + $0xa8] sm:$0xff]
        %v4190 = vld [vmem:[#allocation2 + $0xb0] sm:$0xff]
        %v4191 = vld [vmem:[#allocation2 + $0xb8] sm:$0xff]
        %v4192 = vld [vmem:[#allocation2 + $0xc0] sm:$0xff]
        %v4193 = vld [vmem:[#allocation2 + $0xc8] sm:$0xff]
        %v4194 = vld [vmem:[#allocation2 + $0xd0] sm:$0xff]
        %v4195 = vld [vmem:[#allocation2 + $0xd8] sm:$0xff]
        %v4196 = vld [vmem:[#allocation2 + $0xe0] sm:$0xff]
        %v4197 = vld [vmem:[#allocation2 + $0xe8] sm:$0xff]
        %v4198 = vld [vmem:[#allocation2 + $0xf0] sm:$0xff]
        %v4199 = vld [vmem:[#allocation2 + $0xf8] sm:$0xff]
        %v4200 = vld [vmem:[#allocation2 + $0x100] sm:$0xff]
        %v4201 = vld [vmem:[#allocation2 + $0x108] sm:$0xff]
        %v4202 = vld [vmem:[#allocation2 + $0x110] sm:$0xff]
        %v4203 = vld [vmem:[#allocation2 + $0x118] sm:$0xff]
        %v4204 = vld [vmem:[#allocation2 + $0x120] sm:$0xff]
        %v4205 = vld [vmem:[#allocation2 + $0x128] sm:$0xff]
        %v4206 = vld [vmem:[#allocation2 + $0x130] sm:$0xff]
        %v4207 = vld [vmem:[#allocation2 + $0x138] sm:$0xff]
        %v4208 = vld [vmem:[#allocation2 + $0x140] sm:$0xff]
        %v4209 = vld [vmem:[#allocation2 + $0x148] sm:$0xff]
        %v4210 = vld [vmem:[#allocation2 + $0x150] sm:$0xff]
        %v4211 = vld [vmem:[#allocation2 + $0x158] sm:$0xff]
        %v4212 = vld [vmem:[#allocation2 + $0x160] sm:$0xff]
        %v4213 = vld [vmem:[#allocation2 + $0x168] sm:$0xff]
        %v4214 = vld [vmem:[#allocation2 + $0x170] sm:$0xff]
        %v4215 = vld [vmem:[#allocation2 + $0x178] sm:$0xff]
        %v4216 = vld [vmem:[#allocation2 + $0x180] sm:$0xff]
        %v4217 = vld [vmem:[#allocation2 + $0x188] sm:$0xff]
        %v4218 = vld [vmem:[#allocation2 + $0x190] sm:$0xff]
        %v4219 = vld [vmem:[#allocation2 + $0x198] sm:$0xff]
        %v4220 = vld [vmem:[#allocation2 + $0x1a0] sm:$0xff]
        %v4221 = vld [vmem:[#allocation2 + $0x1a8] sm:$0xff]
        %v4222 = vld [vmem:[#allocation2 + $0x1b0] sm:$0xff]
        %v4223 = vld [vmem:[#allocation2 + $0x1b8] sm:$0xff]
        %v4224 = vld [vmem:[#allocation2 + $0x1c0] sm:$0xff]
        %v4225 = vld [vmem:[#allocation2 + $0x1c8] sm:$0xff]
        %v4226 = vld [vmem:[#allocation2 + $0x1d0] sm:$0xff]
        %v4227 = vld [vmem:[#allocation2 + $0x1d8] sm:$0xff]
        %v4228 = vld [vmem:[#allocation2 + $0x1e0] sm:$0xff]
        %v4229 = vld [vmem:[#allocation2 + $0x1e8] sm:$0xff]
        %v4230 = vld [vmem:[#allocation2 + $0x1f0] sm:$0xff]
        %v4231 = vld [vmem:[#allocation2 + $0x1f8] sm:$0xff]
        %v4232 = vld [vmem:[#allocation2 + $0x200] sm:$0xff]
        %v4233 = vld [vmem:[#allocation2 + $0x208] sm:$0xff]
        %v4234 = vld [vmem:[#allocation2 + $0x210] sm:$0xff]
        %v4235 = vld [vmem:[#allocation2 + $0x218] sm:$0xff]
        %v4236 = vld [vmem:[#allocation2 + $0x220] sm:$0xff]
        %v4237 = vld [vmem:[#allocation2 + $0x228] sm:$0xff]
        %v4238 = vld [vmem:[#allocation2 + $0x230] sm:$0xff]
        %v4239 = vld [vmem:[#allocation2 + $0x238] sm:$0xff]
        %v4240 = vld [vmem:[#allocation2 + $0x240] sm:$0xff]
        %v4241 = vld [vmem:[#allocation2 + $0x248] sm:$0xff]
        %v4242 = vld [vmem:[#allocation2 + $0x250] sm:$0xff]
        %v4243 = vld [vmem:[#allocation2 + $0x258] sm:$0xff]
        %v4244 = vld [vmem:[#allocation2 + $0x260] sm:$0xff]
        %v4245 = vld [vmem:[#allocation2 + $0x268] sm:$0xff]
        %v4246 = vld [vmem:[#allocation2 + $0x270] sm:$0xff]
        %v4247 = vld [vmem:[#allocation2 + $0x278] sm:$0xff]
        %v4248 = vld [vmem:[#allocation2 + $0x280] sm:$0xff]
        %s4249 = scalar_lea.vmem [#allocation8], 384
        %v4250 = vld [vmem:[%s4249] sm:$0xf]
        %v4251 = vld [vmem:[%s4249 + $0x4] sm:$0xf]
        %v4252 = vld [vmem:[%s4249 + $0x8] sm:$0xf]
        %v4253 = vld [vmem:[%s4249 + $0xc] sm:$0xf]
        %v4254 = vld [vmem:[%s4249 + $0x10] sm:$0xf]
        %v4255 = vld [vmem:[%s4249 + $0x14] sm:$0xf]
        %v4256 = vld [vmem:[%s4249 + $0x18] sm:$0xf]
        %v4257 = vld [vmem:[%s4249 + $0x1c] sm:$0xf]
        %v4258 = vld [vmem:[%s4249 + $0x20] sm:$0xf]
        %v4259 = vld [vmem:[%s4249 + $0x24] sm:$0xf]
        %v4260 = vld [vmem:[%s4249 + $0x28] sm:$0xf]
        %v4261 = vld [vmem:[%s4249 + $0x2c] sm:$0xf]
        %v4262 = vld [vmem:[%s4249 + $0x30] sm:$0xf]
        %v4263 = vld [vmem:[%s4249 + $0x34] sm:$0xf]
        %v4264 = vld [vmem:[%s4249 + $0x38] sm:$0xf]
        %v4265 = vld [vmem:[%s4249 + $0x3c] sm:$0xf]
        %v4266 = vld [vmem:[%s4249 + $0x40] sm:$0xf]
        %v4267 = vld [vmem:[%s4249 + $0x44] sm:$0xf]
        %v4268 = vld [vmem:[%s4249 + $0x48] sm:$0xf]
        %v4269 = vld [vmem:[%s4249 + $0x4c] sm:$0xf]
        %v4270 = vld [vmem:[%s4249 + $0x50] sm:$0xf]
        %v4271 = vld [vmem:[%s4249 + $0x54] sm:$0xf]
        %v4272 = vld [vmem:[%s4249 + $0x58] sm:$0xf]
        %v4273 = vld [vmem:[%s4249 + $0x5c] sm:$0xf]
        %v4274 = vld [vmem:[%s4249 + $0x60] sm:$0xf]
        %v4275 = vld [vmem:[%s4249 + $0x64] sm:$0xf]
        %v4276 = vld [vmem:[%s4249 + $0x68] sm:$0xf]
        %v4277 = vld [vmem:[%s4249 + $0x6c] sm:$0xf]
        %v4278 = vld [vmem:[%s4249 + $0x70] sm:$0xf]
        %v4279 = vld [vmem:[%s4249 + $0x74] sm:$0xf]
        %v4280 = vld [vmem:[%s4249 + $0x78] sm:$0xf]
        %v4281 = vld [vmem:[%s4249 + $0x7c] sm:$0xf]
        %v4282 = vld [vmem:[%s4249 + $0x80] sm:$0xf]
        %v4283 = vld [vmem:[%s4249 + $0x84] sm:$0xf]
        %v4284 = vld [vmem:[%s4249 + $0x88] sm:$0xf]
        %v4285 = vld [vmem:[%s4249 + $0x8c] sm:$0xf]
        %v4286 = vld [vmem:[%s4249 + $0x90] sm:$0xf]
        %v4287 = vld [vmem:[%s4249 + $0x94] sm:$0xf]
        %v4288 = vld [vmem:[%s4249 + $0x98] sm:$0xf]
        %v4289 = vld [vmem:[%s4249 + $0x9c] sm:$0xf]
        %v4290 = vld [vmem:[%s4249 + $0xa0] sm:$0xf]
        %v4291 = vld [vmem:[%s4249 + $0xa4] sm:$0xf]
        %v4292 = vld [vmem:[%s4249 + $0xa8] sm:$0xf]
        %v4293 = vld [vmem:[%s4249 + $0xac] sm:$0xf]
        %v4294 = vld [vmem:[%s4249 + $0xb0] sm:$0xf]
        %v4295 = vld [vmem:[%s4249 + $0xb4] sm:$0xf]
        %v4296 = vld [vmem:[%s4249 + $0xb8] sm:$0xf]
        %v4297 = vld [vmem:[%s4249 + $0xbc] sm:$0xf]
        %v4346 = vunpack.c.l.b16 %v4250
        %v4347 = vunpack.c.l.b16 %v4251
        %v4348 = vunpack.c.l.b16 %v4252
        %v4349 = vunpack.c.l.b16 %v4253
        %v4350 = vunpack.c.l.b16 %v4254
        %v4351 = vunpack.c.l.b16 %v4255
        %v4352 = vunpack.c.l.b16 %v4256
        %v4353 = vunpack.c.l.b16 %v4257
        %v4354 = vunpack.c.l.b16 %v4258
        %v4355 = vunpack.c.l.b16 %v4259
        %v4356 = vunpack.c.l.b16 %v4260
        %v4357 = vunpack.c.l.b16 %v4261
        %v4358 = vunpack.c.l.b16 %v4262
        %v4359 = vunpack.c.l.b16 %v4263
        %v4360 = vunpack.c.l.b16 %v4264
        %v4361 = vunpack.c.l.b16 %v4265
        %v4362 = vunpack.c.l.b16 %v4266
        %v4363 = vunpack.c.l.b16 %v4267
        %v4364 = vunpack.c.l.b16 %v4268
        %v4365 = vunpack.c.l.b16 %v4269
        %v4366 = vunpack.c.l.b16 %v4270
        %v4367 = vunpack.c.l.b16 %v4271
        %v4368 = vunpack.c.l.b16 %v4272
        %v4369 = vunpack.c.l.b16 %v4273
        %v4370 = vunpack.c.l.b16 %v4274
        %v4371 = vunpack.c.l.b16 %v4275
        %v4372 = vunpack.c.l.b16 %v4276
        %v4373 = vunpack.c.l.b16 %v4277
        %v4374 = vunpack.c.l.b16 %v4278
        %v4375 = vunpack.c.l.b16 %v4279
        %v4376 = vunpack.c.l.b16 %v4280
        %v4377 = vunpack.c.l.b16 %v4281
        %v4378 = vunpack.c.l.b16 %v4282
        %v4379 = vunpack.c.l.b16 %v4283
        %v4380 = vunpack.c.l.b16 %v4284
        %v4381 = vunpack.c.l.b16 %v4285
        %v4382 = vunpack.c.l.b16 %v4286
        %v4383 = vunpack.c.l.b16 %v4287
        %v4384 = vunpack.c.l.b16 %v4288
        %v4385 = vunpack.c.l.b16 %v4289
        %v4386 = vunpack.c.l.b16 %v4290
        %v4387 = vunpack.c.l.b16 %v4291
        %v4388 = vunpack.c.l.b16 %v4292
        %v4389 = vunpack.c.l.b16 %v4293
        %v4390 = vunpack.c.l.b16 %v4294
        %v4391 = vunpack.c.l.b16 %v4295
        %v4392 = vunpack.c.l.b16 %v4296
        %v4393 = vunpack.c.l.b16 %v4297
        %v4394 = vpack.c.b16 %v4347, %v4346
        %v4395 = vpack.c.b16 %v4349, %v4348
        %v4396 = vpack.c.b16 %v4351, %v4350
        %v4397 = vpack.c.b16 %v4353, %v4352
        %v4398 = vpack.c.b16 %v4355, %v4354
        %v4399 = vpack.c.b16 %v4357, %v4356
        %v4400 = vpack.c.b16 %v4359, %v4358
        %v4401 = vpack.c.b16 %v4361, %v4360
        %v4402 = vpack.c.b16 %v4363, %v4362
        %v4403 = vpack.c.b16 %v4365, %v4364
        %v4404 = vpack.c.b16 %v4367, %v4366
        %v4405 = vpack.c.b16 %v4369, %v4368
        %v4406 = vpack.c.b16 %v4371, %v4370
        %v4407 = vpack.c.b16 %v4373, %v4372
        %v4408 = vpack.c.b16 %v4375, %v4374
        %v4409 = vpack.c.b16 %v4377, %v4376
        %v4410 = vpack.c.b16 %v4379, %v4378
        %v4411 = vpack.c.b16 %v4381, %v4380
        %v4412 = vpack.c.b16 %v4383, %v4382
        %v4413 = vpack.c.b16 %v4385, %v4384
        %v4414 = vpack.c.b16 %v4387, %v4386
        %v4415 = vpack.c.b16 %v4389, %v4388
        %v4416 = vpack.c.b16 %v4391, %v4390
        %v4417 = vpack.c.b16 %v4393, %v4392
        %4442 = vmatprep.subr.bf16.mxu0 0
        %4443 = vmatpush1.bf16.msra.mxu0 %v4394
        %4444 = vmatprep.subr.bf16.mxu0 0
        %4445 = vmatpush1.bf16.msra.mxu0 %v4395
        %4446 = vmatprep.subr.bf16.mxu0 0
        %4447 = vmatpush1.bf16.msra.mxu0 %v4396
        %4448 = vmatprep.subr.bf16.mxu0 0
        %4449 = vmatpush1.bf16.msra.mxu0 %v4397
        %4450 = vmatprep.subr.bf16.mxu0 0
        %4451 = vmatpush1.bf16.msra.mxu0 %v4398
        %4452 = vmatprep.subr.bf16.mxu0 0
        %4453 = vmatpush1.bf16.msra.mxu0 %v4399
        %4454 = vmatprep.subr.bf16.mxu0 0
        %4455 = vmatpush1.bf16.msra.mxu0 %v4400
        %4456 = vmatprep.subr.bf16.mxu0 0
        %4457 = vmatpush1.bf16.msra.mxu0 %v4401
        %4458 = vmatprep.subr.bf16.mxu0 0
        %4459 = vmatpush1.bf16.msra.mxu0 %v4402
        %4460 = vmatprep.subr.bf16.mxu0 0
        %4461 = vmatpush1.bf16.msra.mxu0 %v4403
        %4462 = vmatprep.subr.bf16.mxu0 0
        %4463 = vmatpush1.bf16.msra.mxu0 %v4404
        %4464 = vmatprep.subr.bf16.mxu0 0
        %4465 = vmatpush1.bf16.msra.mxu0 %v4405
        %4466 = vmatprep.subr.bf16.mxu0 0
        %4467 = vmatpush1.bf16.msra.mxu0 %v4406
        %4468 = vmatprep.subr.bf16.mxu0 0
        %4469 = vmatpush1.bf16.msra.mxu0 %v4407
        %4470 = vmatprep.subr.bf16.mxu0 0
        %4471 = vmatpush1.bf16.msra.mxu0 %v4408
        %4472 = vmatprep.subr.bf16.mxu0 0
        %4473 = vmatpush1.bf16.msra.mxu0 %v4409
        %4474 = vmatprep.mubr.bf16.mxu0 %v4178
        %4475 = vmatmul.mubr.bf16.gmra.mrb[0].mxu0 %v4177
        %v4476 = vpop.f32.mrb[0].mxu0
        %v4477 = vadd.f32 0.0, %v4476
        %v4478 = vpop.f32.mrb[0].mxu0
        %v4479 = vpop.f32.mrb[0].mxu0
        %v4480 = vadd.f32 0.0, %v4479
        %v4481 = vpop.f32.mrb[0].mxu0
        %4482 = vmatprep.mubr.bf16.mxu0 %v4181
        %4483 = vmatmul.mubr.bf16.gmra.mrb[0].mxu0 %v4180
        %v4484 = vpop.f32.mrb[0].mxu0
        %v4485 = vadd.f32 0.0, %v4484
        %v4486 = vpop.f32.mrb[0].mxu0
        %v4487 = vpop.f32.mrb[0].mxu0
        %v4488 = vadd.f32 0.0, %v4487
        %v4489 = vpop.f32.mrb[0].mxu0
        %4490 = vmatprep.mubr.bf16.mxu0 %v4184
        %4491 = vmatmul.mubr.bf16.gmra.mrb[0].mxu0 %v4183
        %v4492 = vpop.f32.mrb[0].mxu0
        %v4493 = vadd.f32 0.0, %v4492
        %v4494 = vpop.f32.mrb[0].mxu0
        %v4495 = vpop.f32.mrb[0].mxu0
        %v4496 = vadd.f32 0.0, %v4495
        %v4497 = vpop.f32.mrb[0].mxu0
        %4498 = vmatprep.mubr.bf16.mxu0 %v4187
        %4499 = vmatmul.mubr.bf16.gmra.mrb[0].mxu0 %v4186
        %v4500 = vpop.f32.mrb[0].mxu0
        %v4501 = vadd.f32 0.0, %v4500
        %v4502 = vpop.f32.mrb[0].mxu0
        %v4503 = vpop.f32.mrb[0].mxu0
        %v4504 = vadd.f32 0.0, %v4503
        %v4505 = vpop.f32.mrb[0].mxu0
        %4506 = vmatprep.mubr.bf16.mxu0 %v4190
        %4507 = vmatmul.mubr.bf16.gmra.mrb[0].mxu0 %v4189
        %v4508 = vpop.f32.mrb[0].mxu0
        %v4509 = vadd.f32 0.0, %v4508
        %v4510 = vpop.f32.mrb[0].mxu0
        %v4511 = vpop.f32.mrb[0].mxu0
        %v4512 = vadd.f32 0.0, %v4511
        %v4513 = vpop.f32.mrb[0].mxu0
        %4514 = vmatprep.mubr.bf16.mxu0 %v4193
        %4515 = vmatmul.mubr.bf16.gmra.mrb[0].mxu0 %v4192
        %v4516 = vpop.f32.mrb[0].mxu0
        %v4517 = vadd.f32 0.0, %v4516
        %v4518 = vpop.f32.mrb[0].mxu0
        %v4519 = vpop.f32.mrb[0].mxu0
        %v4520 = vadd.f32 0.0, %v4519
        %v4521 = vpop.f32.mrb[0].mxu0
        %4522 = vmatprep.mubr.bf16.mxu0 %v4196
        %4523 = vmatmul.mubr.bf16.gmra.mrb[0].mxu0 %v4195
        %v4524 = vpop.f32.mrb[0].mxu0
        %v4525 = vadd.f32 0.0, %v4524
        %v4526 = vpop.f32.mrb[0].mxu0
        %v4527 = vpop.f32.mrb[0].mxu0
        %v4528 = vadd.f32 0.0, %v4527
        %v4529 = vpop.f32.mrb[0].mxu0
        %4530 = vmatprep.mubr.bf16.mxu0 %v4199
        %4531 = vmatmul.mubr.bf16.gmra.mrb[0].mxu0 %v4198
        %v4532 = vpop.f32.mrb[0].mxu0
        %v4533 = vadd.f32 0.0, %v4532
        %v4534 = vpop.f32.mrb[0].mxu0
        %v4535 = vpop.f32.mrb[0].mxu0
        %v4536 = vadd.f32 0.0, %v4535
        %v4537 = vpop.f32.mrb[0].mxu0
        %4538 = vmatprep.mubr.bf16.mxu0 %v4202
        %4539 = vmatmul.mubr.bf16.gmra.mrb[0].mxu0 %v4201
        %v4540 = vpop.f32.mrb[0].mxu0
        %v4541 = vadd.f32 0.0, %v4540
        %v4542 = vpop.f32.mrb[0].mxu0
        %v4543 = vpop.f32.mrb[0].mxu0
        %v4544 = vadd.f32 0.0, %v4543
        %v4545 = vpop.f32.mrb[0].mxu0
        %4546 = vmatprep.mubr.bf16.mxu0 %v4205
        %4547 = vmatmul.mubr.bf16.gmra.mrb[0].mxu0 %v4204
        %v4548 = vpop.f32.mrb[0].mxu0
        %v4549 = vadd.f32 0.0, %v4548
        %v4550 = vpop.f32.mrb[0].mxu0
        %v4551 = vpop.f32.mrb[0].mxu0
        %v4552 = vadd.f32 0.0, %v4551
        %v4553 = vpop.f32.mrb[0].mxu0
        %4554 = vmatprep.mubr.bf16.mxu0 %v4208
        %4555 = vmatmul.mubr.bf16.gmra.mrb[0].mxu0 %v4207
        %v4556 = vpop.f32.mrb[0].mxu0
        %v4557 = vadd.f32 0.0, %v4556
        %v4558 = vpop.f32.mrb[0].mxu0
        %v4559 = vpop.f32.mrb[0].mxu0
        %v4560 = vadd.f32 0.0, %v4559
        %v4561 = vpop.f32.mrb[0].mxu0
        %4562 = vmatprep.mubr.bf16.mxu0 %v4211
        %4563 = vmatmul.mubr.bf16.gmra.mrb[0].mxu0 %v4210
        %v4564 = vpop.f32.mrb[0].mxu0
        %v4565 = vadd.f32 0.0, %v4564
        %v4566 = vpop.f32.mrb[0].mxu0
        %v4567 = vpop.f32.mrb[0].mxu0
        %v4568 = vadd.f32 0.0, %v4567
        %v4569 = vpop.f32.mrb[0].mxu0
        %4570 = vmatprep.mubr.bf16.mxu0 %v4214
        %4571 = vmatmul.mubr.bf16.gmra.mrb[0].mxu0 %v4213
        %v4572 = vpop.f32.mrb[0].mxu0
        %v4573 = vadd.f32 0.0, %v4572
        %v4574 = vpop.f32.mrb[0].mxu0
        %v4575 = vpop.f32.mrb[0].mxu0
        %v4576 = vadd.f32 0.0, %v4575
        %v4577 = vpop.f32.mrb[0].mxu0
        %4578 = vmatprep.mubr.bf16.mxu0 %v4217
        %4579 = vmatmul.mubr.bf16.gmra.mrb[0].mxu0 %v4216
        %v4580 = vpop.f32.mrb[0].mxu0
        %v4581 = vadd.f32 0.0, %v4580
        %v4582 = vpop.f32.mrb[0].mxu0
        %v4583 = vpop.f32.mrb[0].mxu0
        %v4584 = vadd.f32 0.0, %v4583
        %v4585 = vpop.f32.mrb[0].mxu0
        %4586 = vmatprep.mubr.bf16.mxu0 %v4220
        %4587 = vmatmul.mubr.bf16.gmra.mrb[0].mxu0 %v4219
        %v4588 = vpop.f32.mrb[0].mxu0
        %v4589 = vadd.f32 0.0, %v4588
        %v4590 = vpop.f32.mrb[0].mxu0
        %v4591 = vpop.f32.mrb[0].mxu0
        %v4592 = vadd.f32 0.0, %v4591
        %v4593 = vpop.f32.mrb[0].mxu0
        %4594 = vmatprep.mubr.bf16.mxu0 %v4223
        %4595 = vmatmul.mubr.bf16.gmra.mrb[0].mxu0 %v4222
        %v4596 = vpop.f32.mrb[0].mxu0
        %v4597 = vadd.f32 0.0, %v4596
        %v4598 = vpop.f32.mrb[0].mxu0
        %v4599 = vpop.f32.mrb[0].mxu0
        %v4600 = vadd.f32 0.0, %v4599
        %v4601 = vpop.f32.mrb[0].mxu0
        %4602 = vmatprep.mubr.bf16.mxu0 %v4226
        %4603 = vmatmul.mubr.bf16.gmra.mrb[0].mxu0 %v4225
        %v4604 = vpop.f32.mrb[0].mxu0
        %v4605 = vadd.f32 0.0, %v4604
        %v4606 = vpop.f32.mrb[0].mxu0
        %v4607 = vpop.f32.mrb[0].mxu0
        %v4608 = vadd.f32 0.0, %v4607
        %v4609 = vpop.f32.mrb[0].mxu0
        %4610 = vmatprep.mubr.bf16.mxu0 %v4229
        %4611 = vmatmul.mubr.bf16.gmra.mrb[0].mxu0 %v4228
        %v4612 = vpop.f32.mrb[0].mxu0
        %v4613 = vadd.f32 0.0, %v4612
        %v4614 = vpop.f32.mrb[0].mxu0
        %v4615 = vpop.f32.mrb[0].mxu0
        %v4616 = vadd.f32 0.0, %v4615
        %v4617 = vpop.f32.mrb[0].mxu0
        %4618 = vmatprep.mubr.bf16.mxu0 %v4232
        %4619 = vmatmul.mubr.bf16.gmra.mrb[0].mxu0 %v4231
        %v4620 = vpop.f32.mrb[0].mxu0
        %v4621 = vadd.f32 0.0, %v4620
        %v4622 = vpop.f32.mrb[0].mxu0
        %v4623 = vpop.f32.mrb[0].mxu0
        %v4624 = vadd.f32 0.0, %v4623
        %v4625 = vpop.f32.mrb[0].mxu0
        %4626 = vmatprep.mubr.bf16.mxu0 %v4235
        %4627 = vmatmul.mubr.bf16.gmra.mrb[0].mxu0 %v4234
        %v4628 = vpop.f32.mrb[0].mxu0
        %v4629 = vadd.f32 0.0, %v4628
        %v4630 = vpop.f32.mrb[0].mxu0
        %v4631 = vpop.f32.mrb[0].mxu0
        %v4632 = vadd.f32 0.0, %v4631
        %v4633 = vpop.f32.mrb[0].mxu0
        %4634 = vmatprep.mubr.bf16.mxu0 %v4238
        %4635 = vmatmul.mubr.bf16.gmra.mrb[0].mxu0 %v4237
        %v4636 = vpop.f32.mrb[0].mxu0
        %v4637 = vadd.f32 0.0, %v4636
        %v4638 = vpop.f32.mrb[0].mxu0
        %v4639 = vpop.f32.mrb[0].mxu0
        %v4640 = vadd.f32 0.0, %v4639
        %v4641 = vpop.f32.mrb[0].mxu0
        %4642 = vmatprep.mubr.bf16.mxu0 %v4241
        %4643 = vmatmul.mubr.bf16.gmra.mrb[0].mxu0 %v4240
        %v4644 = vpop.f32.mrb[0].mxu0
        %v4645 = vadd.f32 0.0, %v4644
        %v4646 = vpop.f32.mrb[0].mxu0
        %v4647 = vpop.f32.mrb[0].mxu0
        %v4648 = vadd.f32 0.0, %v4647
        %v4649 = vpop.f32.mrb[0].mxu0
        %4650 = vmatprep.mubr.bf16.mxu0 %v4244
        %4651 = vmatmul.mubr.bf16.gmra.mrb[0].mxu0 %v4243
        %v4652 = vpop.f32.mrb[0].mxu0
        %v4653 = vadd.f32 0.0, %v4652
        %v4654 = vpop.f32.mrb[0].mxu0
        %v4655 = vpop.f32.mrb[0].mxu0
        %v4656 = vadd.f32 0.0, %v4655
        %v4657 = vpop.f32.mrb[0].mxu0
        %4658 = vmatprep.mubr.bf16.mxu0 %v4247
        %4659 = vmatmul.mubr.bf16.gmra.mrb[0].mxu0 %v4246
        %v4660 = vpop.f32.mrb[0].mxu0
        %v4661 = vadd.f32 0.0, %v4660
        %v4662 = vpop.f32.mrb[0].mxu0
        %v4663 = vpop.f32.mrb[0].mxu0
        %v4664 = vadd.f32 0.0, %v4663
        %v4665 = vpop.f32.mrb[0].mxu0
        %4666 = vdwg.mxu0
        %4667 = vmatprep.subr.bf16.mxu0 0
        %4668 = vmatpush1.bf16.msra.mxu0 %v4410
        %4669 = vmatprep.subr.bf16.mxu0 0
        %4670 = vmatpush1.bf16.msra.mxu0 %v4411
        %4671 = vmatprep.subr.bf16.mxu0 0
        %4672 = vmatpush1.bf16.msra.mxu0 %v4412
        %4673 = vmatprep.subr.bf16.mxu0 0
        %4674 = vmatpush1.bf16.msra.mxu0 %v4413
        %4675 = vmatprep.subr.bf16.mxu0 0
        %4676 = vmatpush1.bf16.msra.mxu0 %v4414
        %4677 = vmatprep.subr.bf16.mxu0 0
        %4678 = vmatpush1.bf16.msra.mxu0 %v4415
        %4679 = vmatprep.subr.bf16.mxu0 0
        %4680 = vmatpush1.bf16.msra.mxu0 %v4416
        %4681 = vmatprep.subr.bf16.mxu0 0
        %4682 = vmatpush1.bf16.msra.mxu0 %v4417
        %4683 = vmatprep.subr.bf16.mxu0 0
        %4684 = vmatpush1.bf16.msra.mxu0 0
        %4685 = vmatprep.subr.bf16.mxu0 0
        %4686 = vmatpush1.bf16.msra.mxu0 0
        %4687 = vmatprep.subr.bf16.mxu0 0
        %4688 = vmatpush1.bf16.msra.mxu0 0
        %4689 = vmatprep.subr.bf16.mxu0 0
        %4690 = vmatpush1.bf16.msra.mxu0 0
        %4691 = vmatprep.subr.bf16.mxu0 0
        %4692 = vmatpush1.bf16.msra.mxu0 0
        %4693 = vmatprep.subr.bf16.mxu0 0
        %4694 = vmatpush1.bf16.msra.mxu0 0
        %4695 = vmatprep.subr.bf16.mxu0 0
        %4696 = vmatpush1.bf16.msra.mxu0 0
        %4697 = vmatprep.subr.bf16.mxu0 0
        %4698 = vmatpush1.bf16.msra.mxu0 0
        %4699 = vmatprep.mubr.bf16.mxu0 0
        %4700 = vmatmul.mubr.bf16.gmra.mrb[0].mxu0 %v4179
        %v4701 = vpop.f32.mrb[0].mxu0
        %v4702 = vadd.f32 %v4477, %v4701
        %v4703 = vpop.f32.mrb[0].mxu0
        %v4704 = vpop.f32.mrb[0].mxu0
        %v4705 = vadd.f32 %v4480, %v4704
        %v4706 = vpop.f32.mrb[0].mxu0
        %4707 = vmatprep.mubr.bf16.mxu0 0
        %4708 = vmatmul.mubr.bf16.gmra.mrb[0].mxu0 %v4182
        %v4709 = vpop.f32.mrb[0].mxu0
        %v4710 = vadd.f32 %v4485, %v4709
        %v4711 = vpop.f32.mrb[0].mxu0
        %v4712 = vpop.f32.mrb[0].mxu0
        %v4713 = vadd.f32 %v4488, %v4712
        %v4714 = vpop.f32.mrb[0].mxu0
        %4715 = vmatprep.mubr.bf16.mxu0 0
        %4716 = vmatmul.mubr.bf16.gmra.mrb[0].mxu0 %v4185
        %v4717 = vpop.f32.mrb[0].mxu0
        %v4718 = vadd.f32 %v4493, %v4717
        %v4719 = vpop.f32.mrb[0].mxu0
        %v4720 = vpop.f32.mrb[0].mxu0
        %v4721 = vadd.f32 %v4496, %v4720
        %v4722 = vpop.f32.mrb[0].mxu0
        %4723 = vmatprep.mubr.bf16.mxu0 0
        %4724 = vmatmul.mubr.bf16.gmra.mrb[0].mxu0 %v4188
        %v4725 = vpop.f32.mrb[0].mxu0
        %v4726 = vadd.f32 %v4501, %v4725
        %v4727 = vpop.f32.mrb[0].mxu0
        %v4728 = vpop.f32.mrb[0].mxu0
        %v4729 = vadd.f32 %v4504, %v4728
        %v4730 = vpop.f32.mrb[0].mxu0
        %4731 = vmatprep.mubr.bf16.mxu0 0
        %4732 = vmatmul.mubr.bf16.gmra.mrb[0].mxu0 %v4191
        %v4733 = vpop.f32.mrb[0].mxu0
        %v4734 = vadd.f32 %v4509, %v4733
        %v4735 = vpop.f32.mrb[0].mxu0
        %v4736 = vpop.f32.mrb[0].mxu0
        %v4737 = vadd.f32 %v4512, %v4736
        %v4738 = vpop.f32.mrb[0].mxu0
        %4739 = vmatprep.mubr.bf16.mxu0 0
        %4740 = vmatmul.mubr.bf16.gmra.mrb[0].mxu0 %v4194
        %v4741 = vpop.f32.mrb[0].mxu0
        %v4742 = vadd.f32 %v4517, %v4741
        %v4743 = vpop.f32.mrb[0].mxu0
        %v4744 = vpop.f32.mrb[0].mxu0
        %v4745 = vadd.f32 %v4520, %v4744
        %v4746 = vpop.f32.mrb[0].mxu0
        %4747 = vmatprep.mubr.bf16.mxu0 0
        %4748 = vmatmul.mubr.bf16.gmra.mrb[0].mxu0 %v4197
        %v4749 = vpop.f32.mrb[0].mxu0
        %v4750 = vadd.f32 %v4525, %v4749
        %v4751 = vpop.f32.mrb[0].mxu0
        %v4752 = vpop.f32.mrb[0].mxu0
        %v4753 = vadd.f32 %v4528, %v4752
        %v4754 = vpop.f32.mrb[0].mxu0
        %4755 = vmatprep.mubr.bf16.mxu0 0
        %4756 = vmatmul.mubr.bf16.gmra.mrb[0].mxu0 %v4200
        %v4757 = vpop.f32.mrb[0].mxu0
        %v4758 = vadd.f32 %v4533, %v4757
        %v4759 = vpop.f32.mrb[0].mxu0
        %v4760 = vpop.f32.mrb[0].mxu0
        %v4761 = vadd.f32 %v4536, %v4760
        %v4762 = vpop.f32.mrb[0].mxu0
        %4763 = vmatprep.mubr.bf16.mxu0 0
        %4764 = vmatmul.mubr.bf16.gmra.mrb[0].mxu0 %v4203
        %v4765 = vpop.f32.mrb[0].mxu0
        %v4766 = vadd.f32 %v4541, %v4765
        %v4767 = vpop.f32.mrb[0].mxu0
        %v4768 = vpop.f32.mrb[0].mxu0
        %v4769 = vadd.f32 %v4544, %v4768
        %v4770 = vpop.f32.mrb[0].mxu0
        %4771 = vmatprep.mubr.bf16.mxu0 0
        %4772 = vmatmul.mubr.bf16.gmra.mrb[0].mxu0 %v4206
        %v4773 = vpop.f32.mrb[0].mxu0
        %v4774 = vadd.f32 %v4549, %v4773
        %v4775 = vpop.f32.mrb[0].mxu0
        %v4776 = vpop.f32.mrb[0].mxu0
        %v4777 = vadd.f32 %v4552, %v4776
        %v4778 = vpop.f32.mrb[0].mxu0
        %4779 = vmatprep.mubr.bf16.mxu0 0
        %4780 = vmatmul.mubr.bf16.gmra.mrb[0].mxu0 %v4209
        %v4781 = vpop.f32.mrb[0].mxu0
        %v4782 = vadd.f32 %v4557, %v4781
        %v4783 = vpop.f32.mrb[0].mxu0
        %v4784 = vpop.f32.mrb[0].mxu0
        %v4785 = vadd.f32 %v4560, %v4784
        %v4786 = vpop.f32.mrb[0].mxu0
        %4787 = vmatprep.mubr.bf16.mxu0 0
        %4788 = vmatmul.mubr.bf16.gmra.mrb[0].mxu0 %v4212
        %v4789 = vpop.f32.mrb[0].mxu0
        %v4790 = vadd.f32 %v4565, %v4789
        %v4791 = vpop.f32.mrb[0].mxu0
        %v4792 = vpop.f32.mrb[0].mxu0
        %v4793 = vadd.f32 %v4568, %v4792
        %v4794 = vpop.f32.mrb[0].mxu0
        %4795 = vmatprep.mubr.bf16.mxu0 0
        %4796 = vmatmul.mubr.bf16.gmra.mrb[0].mxu0 %v4215
        %v4797 = vpop.f32.mrb[0].mxu0
        %v4798 = vadd.f32 %v4573, %v4797
        %v4799 = vpop.f32.mrb[0].mxu0
        %v4800 = vpop.f32.mrb[0].mxu0
        %v4801 = vadd.f32 %v4576, %v4800
        %v4802 = vpop.f32.mrb[0].mxu0
        %4803 = vmatprep.mubr.bf16.mxu0 0
        %4804 = vmatmul.mubr.bf16.gmra.mrb[0].mxu0 %v4218
        %v4805 = vpop.f32.mrb[0].mxu0
        %v4806 = vadd.f32 %v4581, %v4805
        %v4807 = vpop.f32.mrb[0].mxu0
        %v4808 = vpop.f32.mrb[0].mxu0
        %v4809 = vadd.f32 %v4584, %v4808
        %v4810 = vpop.f32.mrb[0].mxu0
        %4811 = vmatprep.mubr.bf16.mxu0 0
        %4812 = vmatmul.mubr.bf16.gmra.mrb[0].mxu0 %v4221
        %v4813 = vpop.f32.mrb[0].mxu0
        %v4814 = vadd.f32 %v4589, %v4813
        %v4815 = vpop.f32.mrb[0].mxu0
        %v4816 = vpop.f32.mrb[0].mxu0
        %v4817 = vadd.f32 %v4592, %v4816
        %v4818 = vpop.f32.mrb[0].mxu0
        %4819 = vmatprep.mubr.bf16.mxu0 0
        %4820 = vmatmul.mubr.bf16.gmra.mrb[0].mxu0 %v4224
        %v4821 = vpop.f32.mrb[0].mxu0
        %v4822 = vadd.f32 %v4597, %v4821
        %v4823 = vpop.f32.mrb[0].mxu0
        %v4824 = vpop.f32.mrb[0].mxu0
        %v4825 = vadd.f32 %v4600, %v4824
        %v4826 = vpop.f32.mrb[0].mxu0
        %4827 = vmatprep.mubr.bf16.mxu0 0
        %4828 = vmatmul.mubr.bf16.gmra.mrb[0].mxu0 %v4227
        %v4829 = vpop.f32.mrb[0].mxu0
        %v4830 = vadd.f32 %v4605, %v4829
        %v4831 = vpop.f32.mrb[0].mxu0
        %v4832 = vpop.f32.mrb[0].mxu0
        %v4833 = vadd.f32 %v4608, %v4832
        %v4834 = vpop.f32.mrb[0].mxu0
        %4835 = vmatprep.mubr.bf16.mxu0 0
        %4836 = vmatmul.mubr.bf16.gmra.mrb[0].mxu0 %v4230
        %v4837 = vpop.f32.mrb[0].mxu0
        %v4838 = vadd.f32 %v4613, %v4837
        %v4839 = vpop.f32.mrb[0].mxu0
        %v4840 = vpop.f32.mrb[0].mxu0
        %v4841 = vadd.f32 %v4616, %v4840
        %v4842 = vpop.f32.mrb[0].mxu0
        %4843 = vmatprep.mubr.bf16.mxu0 0
        %4844 = vmatmul.mubr.bf16.gmra.mrb[0].mxu0 %v4233
        %v4845 = vpop.f32.mrb[0].mxu0
        %v4846 = vadd.f32 %v4621, %v4845
        %v4847 = vpop.f32.mrb[0].mxu0
        %v4848 = vpop.f32.mrb[0].mxu0
        %v4849 = vadd.f32 %v4624, %v4848
        %v4850 = vpop.f32.mrb[0].mxu0
        %4851 = vmatprep.mubr.bf16.mxu0 0
        %4852 = vmatmul.mubr.bf16.gmra.mrb[0].mxu0 %v4236
        %v4853 = vpop.f32.mrb[0].mxu0
        %v4854 = vadd.f32 %v4629, %v4853
        %v4855 = vpop.f32.mrb[0].mxu0
        %v4856 = vpop.f32.mrb[0].mxu0
        %v4857 = vadd.f32 %v4632, %v4856
        %v4858 = vpop.f32.mrb[0].mxu0
        %4859 = vmatprep.mubr.bf16.mxu0 0
        %4860 = vmatmul.mubr.bf16.gmra.mrb[0].mxu0 %v4239
        %v4861 = vpop.f32.mrb[0].mxu0
        %v4862 = vadd.f32 %v4637, %v4861
        %v4863 = vpop.f32.mrb[0].mxu0
        %v4864 = vpop.f32.mrb[0].mxu0
        %v4865 = vadd.f32 %v4640, %v4864
        %v4866 = vpop.f32.mrb[0].mxu0
        %4867 = vmatprep.mubr.bf16.mxu0 0
        %4868 = vmatmul.mubr.bf16.gmra.mrb[0].mxu0 %v4242
        %v4869 = vpop.f32.mrb[0].mxu0
        %v4870 = vadd.f32 %v4645, %v4869
        %v4871 = vpop.f32.mrb[0].mxu0
        %v4872 = vpop.f32.mrb[0].mxu0
        %v4873 = vadd.f32 %v4648, %v4872
        %v4874 = vpop.f32.mrb[0].mxu0
        %4875 = vmatprep.mubr.bf16.mxu0 0
        %4876 = vmatmul.mubr.bf16.gmra.mrb[0].mxu0 %v4245
        %v4877 = vpop.f32.mrb[0].mxu0
        %v4878 = vadd.f32 %v4653, %v4877
        %v4879 = vpop.f32.mrb[0].mxu0
        %v4880 = vpop.f32.mrb[0].mxu0
        %v4881 = vadd.f32 %v4656, %v4880
        %v4882 = vpop.f32.mrb[0].mxu0
        %4883 = vmatprep.mubr.bf16.mxu0 0
        %4884 = vmatmul.mubr.bf16.gmra.mrb[0].mxu0 %v4248
        %v4885 = vpop.f32.mrb[0].mxu0
        %v4886 = vadd.f32 %v4661, %v4885
        %v4887 = vpop.f32.mrb[0].mxu0
        %v4888 = vpop.f32.mrb[0].mxu0
        %v4889 = vadd.f32 %v4664, %v4888
        %v4890 = vpop.f32.mrb[0].mxu0
        %4891 = vdwg.mxu0
        %v4892 = vadd.f32 %v4129, %v4702
        %v4893 = vadd.f32 %v4130, %v4705
        %v4894 = vadd.f32 %v4131, %v4710
        %v4895 = vadd.f32 %v4132, %v4713
        %v4896 = vadd.f32 %v4133, %v4718
        %v4897 = vadd.f32 %v4134, %v4721
        %v4898 = vadd.f32 %v4135, %v4726
        %v4899 = vadd.f32 %v4136, %v4729
        %v4900 = vadd.f32 %v4137, %v4734
        %v4901 = vadd.f32 %v4138, %v4737
        %v4902 = vadd.f32 %v4139, %v4742
        %v4903 = vadd.f32 %v4140, %v4745
        %v4904 = vadd.f32 %v4141, %v4750
        %v4905 = vadd.f32 %v4142, %v4753
        %v4906 = vadd.f32 %v4143, %v4758
        %v4907 = vadd.f32 %v4144, %v4761
        %v4908 = vadd.f32 %v4145, %v4766
        %v4909 = vadd.f32 %v4146, %v4769
        %v4910 = vadd.f32 %v4147, %v4774
        %v4911 = vadd.f32 %v4148, %v4777
        %v4912 = vadd.f32 %v4149, %v4782
        %v4913 = vadd.f32 %v4150, %v4785
        %v4914 = vadd.f32 %v4151, %v4790
        %v4915 = vadd.f32 %v4152, %v4793
        %v4916 = vadd.f32 %v4153, %v4798
        %v4917 = vadd.f32 %v4154, %v4801
        %v4918 = vadd.f32 %v4155, %v4806
        %v4919 = vadd.f32 %v4156, %v4809
        %v4920 = vadd.f32 %v4157, %v4814
        %v4921 = vadd.f32 %v4158, %v4817
        %v4922 = vadd.f32 %v4159, %v4822
        %v4923 = vadd.f32 %v4160, %v4825
        %v4924 = vadd.f32 %v4161, %v4830
        %v4925 = vadd.f32 %v4162, %v4833
        %v4926 = vadd.f32 %v4163, %v4838
        %v4927 = vadd.f32 %v4164, %v4841
        %v4928 = vadd.f32 %v4165, %v4846
        %v4929 = vadd.f32 %v4166, %v4849
        %v4930 = vadd.f32 %v4167, %v4854
        %v4931 = vadd.f32 %v4168, %v4857
        %v4932 = vadd.f32 %v4169, %v4862
        %v4933 = vadd.f32 %v4170, %v4865
        %v4934 = vadd.f32 %v4171, %v4870
        %v4935 = vadd.f32 %v4172, %v4873
        %v4936 = vadd.f32 %v4173, %v4878
        %v4937 = vadd.f32 %v4174, %v4881
        %v4938 = vadd.f32 %v4175, %v4886
        %v4939 = vadd.f32 %v4176, %v4889
        %4940 = vst [vmem:[#allocation4] sm:$0xff] %v4892
        %4941 = vst [vmem:[#allocation4 + $0x8] sm:$0xff] %v4893
        %4942 = vst [vmem:[#allocation4 + $0x10] sm:$0xff] %v4894
        %4943 = vst [vmem:[#allocation4 + $0x18] sm:$0xff] %v4895
        %4944 = vst [vmem:[#allocation4 + $0x20] sm:$0xff] %v4896
        %4945 = vst [vmem:[#allocation4 + $0x28] sm:$0xff] %v4897
        %4946 = vst [vmem:[#allocation4 + $0x30] sm:$0xff] %v4898
        %4947 = vst [vmem:[#allocation4 + $0x38] sm:$0xff] %v4899
        %4948 = vst [vmem:[#allocation4 + $0x40] sm:$0xff] %v4900
        %4949 = vst [vmem:[#allocation4 + $0x48] sm:$0xff] %v4901
        %4950 = vst [vmem:[#allocation4 + $0x50] sm:$0xff] %v4902
        %4951 = vst [vmem:[#allocation4 + $0x58] sm:$0xff] %v4903
        %4952 = vst [vmem:[#allocation4 + $0x60] sm:$0xff] %v4904
        %4953 = vst [vmem:[#allocation4 + $0x68] sm:$0xff] %v4905
        %4954 = vst [vmem:[#allocation4 + $0x70] sm:$0xff] %v4906
        %4955 = vst [vmem:[#allocation4 + $0x78] sm:$0xff] %v4907
        %4956 = vst [vmem:[#allocation4 + $0x80] sm:$0xff] %v4908
        %4957 = vst [vmem:[#allocation4 + $0x88] sm:$0xff] %v4909
        %4958 = vst [vmem:[#allocation4 + $0x90] sm:$0xff] %v4910
        %4959 = vst [vmem:[#allocation4 + $0x98] sm:$0xff] %v4911
        %4960 = vst [vmem:[#allocation4 + $0xa0] sm:$0xff] %v4912
        %4961 = vst [vmem:[#allocation4 + $0xa8] sm:$0xff] %v4913
        %4962 = vst [vmem:[#allocation4 + $0xb0] sm:$0xff] %v4914
        %4963 = vst [vmem:[#allocation4 + $0xb8] sm:$0xff] %v4915
        %4964 = vst [vmem:[#allocation4 + $0xc0] sm:$0xff] %v4916
        %4965 = vst [vmem:[#allocation4 + $0xc8] sm:$0xff] %v4917
        %4966 = vst [vmem:[#allocation4 + $0xd0] sm:$0xff] %v4918
        %4967 = vst [vmem:[#allocation4 + $0xd8] sm:$0xff] %v4919
        %4968 = vst [vmem:[#allocation4 + $0xe0] sm:$0xff] %v4920
        %4969 = vst [vmem:[#allocation4 + $0xe8] sm:$0xff] %v4921
        %4970 = vst [vmem:[#allocation4 + $0xf0] sm:$0xff] %v4922
        %4971 = vst [vmem:[#allocation4 + $0xf8] sm:$0xff] %v4923
        %4972 = vst [vmem:[#allocation4 + $0x100] sm:$0xff] %v4924
        %4973 = vst [vmem:[#allocation4 + $0x108] sm:$0xff] %v4925
        %4974 = vst [vmem:[#allocation4 + $0x110] sm:$0xff] %v4926
        %4975 = vst [vmem:[#allocation4 + $0x118] sm:$0xff] %v4927
        %4976 = vst [vmem:[#allocation4 + $0x120] sm:$0xff] %v4928
        %4977 = vst [vmem:[#allocation4 + $0x128] sm:$0xff] %v4929
        %4978 = vst [vmem:[#allocation4 + $0x130] sm:$0xff] %v4930
        %4979 = vst [vmem:[#allocation4 + $0x138] sm:$0xff] %v4931
        %4980 = vst [vmem:[#allocation4 + $0x140] sm:$0xff] %v4932
        %4981 = vst [vmem:[#allocation4 + $0x148] sm:$0xff] %v4933
        %4982 = vst [vmem:[#allocation4 + $0x150] sm:$0xff] %v4934
        %4983 = vst [vmem:[#allocation4 + $0x158] sm:$0xff] %v4935
        %4984 = vst [vmem:[#allocation4 + $0x160] sm:$0xff] %v4936
        %4985 = vst [vmem:[#allocation4 + $0x168] sm:$0xff] %v4937
        %4986 = vst [vmem:[#allocation4 + $0x170] sm:$0xff] %v4938
        %4987 = vst [vmem:[#allocation4 + $0x178] sm:$0xff] %v4939
        %v4988 = vld [vmem:[#allocation4] sm:$0xff]
        %v4989 = vld [vmem:[#allocation4 + $0x8] sm:$0xff]
        %v4990 = vld [vmem:[#allocation4 + $0x10] sm:$0xff]
        %v4991 = vld [vmem:[#allocation4 + $0x18] sm:$0xff]
        %v4992 = vld [vmem:[#allocation4 + $0x20] sm:$0xff]
        %v4993 = vld [vmem:[#allocation4 + $0x28] sm:$0xff]
        %v4994 = vld [vmem:[#allocation4 + $0x30] sm:$0xff]
        %v4995 = vld [vmem:[#allocation4 + $0x38] sm:$0xff]
        %v4996 = vld [vmem:[#allocation4 + $0x40] sm:$0xff]
        %v4997 = vld [vmem:[#allocation4 + $0x48] sm:$0xff]
        %v4998 = vld [vmem:[#allocation4 + $0x50] sm:$0xff]
        %v4999 = vld [vmem:[#allocation4 + $0x58] sm:$0xff]
        %v5000 = vld [vmem:[#allocation4 + $0x60] sm:$0xff]
        %v5001 = vld [vmem:[#allocation4 + $0x68] sm:$0xff]
        %v5002 = vld [vmem:[#allocation4 + $0x70] sm:$0xff]
        %v5003 = vld [vmem:[#allocation4 + $0x78] sm:$0xff]
        %v5004 = vld [vmem:[#allocation4 + $0x80] sm:$0xff]
        %v5005 = vld [vmem:[#allocation4 + $0x88] sm:$0xff]
        %v5006 = vld [vmem:[#allocation4 + $0x90] sm:$0xff]
        %v5007 = vld [vmem:[#allocation4 + $0x98] sm:$0xff]
        %v5008 = vld [vmem:[#allocation4 + $0xa0] sm:$0xff]
        %v5009 = vld [vmem:[#allocation4 + $0xa8] sm:$0xff]
        %v5010 = vld [vmem:[#allocation4 + $0xb0] sm:$0xff]
        %v5011 = vld [vmem:[#allocation4 + $0xb8] sm:$0xff]
        %v5012 = vld [vmem:[#allocation4 + $0xc0] sm:$0xff]
        %v5013 = vld [vmem:[#allocation4 + $0xc8] sm:$0xff]
        %v5014 = vld [vmem:[#allocation4 + $0xd0] sm:$0xff]
        %v5015 = vld [vmem:[#allocation4 + $0xd8] sm:$0xff]
        %v5016 = vld [vmem:[#allocation4 + $0xe0] sm:$0xff]
        %v5017 = vld [vmem:[#allocation4 + $0xe8] sm:$0xff]
        %v5018 = vld [vmem:[#allocation4 + $0xf0] sm:$0xff]
        %v5019 = vld [vmem:[#allocation4 + $0xf8] sm:$0xff]
        %v5020 = vld [vmem:[#allocation4 + $0x100] sm:$0xff]
        %v5021 = vld [vmem:[#allocation4 + $0x108] sm:$0xff]
        %v5022 = vld [vmem:[#allocation4 + $0x110] sm:$0xff]
        %v5023 = vld [vmem:[#allocation4 + $0x118] sm:$0xff]
        %v5024 = vld [vmem:[#allocation4 + $0x120] sm:$0xff]
        %v5025 = vld [vmem:[#allocation4 + $0x128] sm:$0xff]
        %v5026 = vld [vmem:[#allocation4 + $0x130] sm:$0xff]
        %v5027 = vld [vmem:[#allocation4 + $0x138] sm:$0xff]
        %v5028 = vld [vmem:[#allocation4 + $0x140] sm:$0xff]
        %v5029 = vld [vmem:[#allocation4 + $0x148] sm:$0xff]
        %v5030 = vld [vmem:[#allocation4 + $0x150] sm:$0xff]
        %v5031 = vld [vmem:[#allocation4 + $0x158] sm:$0xff]
        %v5032 = vld [vmem:[#allocation4 + $0x160] sm:$0xff]
        %v5033 = vld [vmem:[#allocation4 + $0x168] sm:$0xff]
        %v5034 = vld [vmem:[#allocation4 + $0x170] sm:$0xff]
        %v5035 = vld [vmem:[#allocation4 + $0x178] sm:$0xff]
        %v5037 = vlaneseq
        %v5038 = vshrl.u32 %v5037, 7
        %v5039 = vsub.s32 0, %v5038
        %v5040 = vrot.slane %v327, %v5039
        %v5042 = vmul.f32 %v4988, %v5040
        %v5043 = vmul.f32 %v4989, %v5040
        %v5044 = vmul.f32 %v4990, %v5040
        %v5045 = vmul.f32 %v4991, %v5040
        %v5046 = vmul.f32 %v4992, %v5040
        %v5047 = vmul.f32 %v4993, %v5040
        %v5048 = vmul.f32 %v4994, %v5040
        %v5049 = vmul.f32 %v4995, %v5040
        %v5050 = vmul.f32 %v4996, %v5040
        %v5051 = vmul.f32 %v4997, %v5040
        %v5052 = vmul.f32 %v4998, %v5040
        %v5053 = vmul.f32 %v4999, %v5040
        %v5054 = vmul.f32 %v5000, %v5040
        %v5055 = vmul.f32 %v5001, %v5040
        %v5056 = vmul.f32 %v5002, %v5040
        %v5057 = vmul.f32 %v5003, %v5040
        %v5058 = vmul.f32 %v5004, %v5040
        %v5059 = vmul.f32 %v5005, %v5040
        %v5060 = vmul.f32 %v5006, %v5040
        %v5061 = vmul.f32 %v5007, %v5040
        %v5062 = vmul.f32 %v5008, %v5040
        %v5063 = vmul.f32 %v5009, %v5040
        %v5064 = vmul.f32 %v5010, %v5040
        %v5065 = vmul.f32 %v5011, %v5040
        %v5066 = vmul.f32 %v5012, %v5040
        %v5067 = vmul.f32 %v5013, %v5040
        %v5068 = vmul.f32 %v5014, %v5040
        %v5069 = vmul.f32 %v5015, %v5040
        %v5070 = vmul.f32 %v5016, %v5040
        %v5071 = vmul.f32 %v5017, %v5040
        %v5072 = vmul.f32 %v5018, %v5040
        %v5073 = vmul.f32 %v5019, %v5040
        %v5074 = vmul.f32 %v5020, %v5040
        %v5075 = vmul.f32 %v5021, %v5040
        %v5076 = vmul.f32 %v5022, %v5040
        %v5077 = vmul.f32 %v5023, %v5040
        %v5078 = vmul.f32 %v5024, %v5040
        %v5079 = vmul.f32 %v5025, %v5040
        %v5080 = vmul.f32 %v5026, %v5040
        %v5081 = vmul.f32 %v5027, %v5040
        %v5082 = vmul.f32 %v5028, %v5040
        %v5083 = vmul.f32 %v5029, %v5040
        %v5084 = vmul.f32 %v5030, %v5040
        %v5085 = vmul.f32 %v5031, %v5040
        %v5086 = vmul.f32 %v5032, %v5040
        %v5087 = vmul.f32 %v5033, %v5040
        %v5088 = vmul.f32 %v5034, %v5040
        %v5089 = vmul.f32 %v5035, %v5040
        %v5091 = vlaneseq
        %v5092 = vshrl.u32 %v5091, 7
        %v5093 = vsub.s32 0, %v5092
        %v5094 = vrot.slane %v328, %v5093
        %v5096 = vadd.f32 %v5042, %v5094
        %v5097 = vadd.f32 %v5043, %v5094
        %v5098 = vadd.f32 %v5044, %v5094
        %v5099 = vadd.f32 %v5045, %v5094
        %v5100 = vadd.f32 %v5046, %v5094
        %v5101 = vadd.f32 %v5047, %v5094
        %v5102 = vadd.f32 %v5048, %v5094
        %v5103 = vadd.f32 %v5049, %v5094
        %v5104 = vadd.f32 %v5050, %v5094
        %v5105 = vadd.f32 %v5051, %v5094
        %v5106 = vadd.f32 %v5052, %v5094
        %v5107 = vadd.f32 %v5053, %v5094
        %v5108 = vadd.f32 %v5054, %v5094
        %v5109 = vadd.f32 %v5055, %v5094
        %v5110 = vadd.f32 %v5056, %v5094
        %v5111 = vadd.f32 %v5057, %v5094
        %v5112 = vadd.f32 %v5058, %v5094
        %v5113 = vadd.f32 %v5059, %v5094
        %v5114 = vadd.f32 %v5060, %v5094
        %v5115 = vadd.f32 %v5061, %v5094
        %v5116 = vadd.f32 %v5062, %v5094
        %v5117 = vadd.f32 %v5063, %v5094
        %v5118 = vadd.f32 %v5064, %v5094
        %v5119 = vadd.f32 %v5065, %v5094
        %v5120 = vadd.f32 %v5066, %v5094
        %v5121 = vadd.f32 %v5067, %v5094
        %v5122 = vadd.f32 %v5068, %v5094
        %v5123 = vadd.f32 %v5069, %v5094
        %v5124 = vadd.f32 %v5070, %v5094
        %v5125 = vadd.f32 %v5071, %v5094
        %v5126 = vadd.f32 %v5072, %v5094
        %v5127 = vadd.f32 %v5073, %v5094
        %v5128 = vadd.f32 %v5074, %v5094
        %v5129 = vadd.f32 %v5075, %v5094
        %v5130 = vadd.f32 %v5076, %v5094
        %v5131 = vadd.f32 %v5077, %v5094
        %v5132 = vadd.f32 %v5078, %v5094
        %v5133 = vadd.f32 %v5079, %v5094
        %v5134 = vadd.f32 %v5080, %v5094
        %v5135 = vadd.f32 %v5081, %v5094
        %v5136 = vadd.f32 %v5082, %v5094
        %v5137 = vadd.f32 %v5083, %v5094
        %v5138 = vadd.f32 %v5084, %v5094
        %v5139 = vadd.f32 %v5085, %v5094
        %v5140 = vadd.f32 %v5086, %v5094
        %v5141 = vadd.f32 %v5087, %v5094
        %v5142 = vadd.f32 %v5088, %v5094
        %v5143 = vadd.f32 %v5089, %v5094
        %v5144 = vmax.f32 %v5096, 0.0
        %v5145 = vmax.f32 %v5097, 0.0
        %v5146 = vmax.f32 %v5098, 0.0
        %v5147 = vmax.f32 %v5099, 0.0
        %v5148 = vmax.f32 %v5100, 0.0
        %v5149 = vmax.f32 %v5101, 0.0
        %v5150 = vmax.f32 %v5102, 0.0
        %v5151 = vmax.f32 %v5103, 0.0
        %v5152 = vmax.f32 %v5104, 0.0
        %v5153 = vmax.f32 %v5105, 0.0
        %v5154 = vmax.f32 %v5106, 0.0
        %v5155 = vmax.f32 %v5107, 0.0
        %v5156 = vmax.f32 %v5108, 0.0
        %v5157 = vmax.f32 %v5109, 0.0
        %v5158 = vmax.f32 %v5110, 0.0
        %v5159 = vmax.f32 %v5111, 0.0
        %v5160 = vmax.f32 %v5112, 0.0
        %v5161 = vmax.f32 %v5113, 0.0
        %v5162 = vmax.f32 %v5114, 0.0
        %v5163 = vmax.f32 %v5115, 0.0
        %v5164 = vmax.f32 %v5116, 0.0
        %v5165 = vmax.f32 %v5117, 0.0
        %v5166 = vmax.f32 %v5118, 0.0
        %v5167 = vmax.f32 %v5119, 0.0
        %v5168 = vmax.f32 %v5120, 0.0
        %v5169 = vmax.f32 %v5121, 0.0
        %v5170 = vmax.f32 %v5122, 0.0
        %v5171 = vmax.f32 %v5123, 0.0
        %v5172 = vmax.f32 %v5124, 0.0
        %v5173 = vmax.f32 %v5125, 0.0
        %v5174 = vmax.f32 %v5126, 0.0
        %v5175 = vmax.f32 %v5127, 0.0
        %v5176 = vmax.f32 %v5128, 0.0
        %v5177 = vmax.f32 %v5129, 0.0
        %v5178 = vmax.f32 %v5130, 0.0
        %v5179 = vmax.f32 %v5131, 0.0
        %v5180 = vmax.f32 %v5132, 0.0
        %v5181 = vmax.f32 %v5133, 0.0
        %v5182 = vmax.f32 %v5134, 0.0
        %v5183 = vmax.f32 %v5135, 0.0
        %v5184 = vmax.f32 %v5136, 0.0
        %v5185 = vmax.f32 %v5137, 0.0
        %v5186 = vmax.f32 %v5138, 0.0
        %v5187 = vmax.f32 %v5139, 0.0
        %v5188 = vmax.f32 %v5140, 0.0
        %v5189 = vmax.f32 %v5141, 0.0
        %v5190 = vmax.f32 %v5142, 0.0
        %v5191 = vmax.f32 %v5143, 0.0
        %v5192 = vsel %vm1148, 1, 0
        %v5193 = vsel %vm1149, 1, 0
        %v5194 = vsel %vm1150, 1, 0
        %v5195 = vsel %vm1151, 1, 0
        %v5196 = vsel %vm1152, 1, 0
        %v5197 = vsel %vm1153, 1, 0
        %v5198 = vsel %vm1154, 1, 0
        %v5199 = vsel %vm1155, 1, 0
        %v5200 = vsel %vm1156, 1, 0
        %v5201 = vsel %vm1157, 1, 0
        %v5202 = vsel %vm1158, 1, 0
        %v5203 = vsel %vm1159, 1, 0
        %v5204 = vsel %vm1160, 1, 0
        %v5205 = vsel %vm1161, 1, 0
        %v5206 = vsel %vm1162, 1, 0
        %v5207 = vsel %vm1163, 1, 0
        %v5208 = vsel %vm1164, 1, 0
        %v5209 = vsel %vm1165, 1, 0
        %v5210 = vsel %vm1166, 1, 0
        %v5211 = vsel %vm1167, 1, 0
        %v5212 = vsel %vm1168, 1, 0
        %v5213 = vsel %vm1169, 1, 0
        %v5214 = vsel %vm1170, 1, 0
        %v5215 = vsel %vm1171, 1, 0
        %v5216 = vsel %vm1172, 1, 0
        %v5217 = vsel %vm1173, 1, 0
        %v5218 = vsel %vm1174, 1, 0
        %v5219 = vsel %vm1175, 1, 0
        %v5220 = vsel %vm1176, 1, 0
        %v5221 = vsel %vm1177, 1, 0
        %v5222 = vsel %vm1178, 1, 0
        %v5223 = vsel %vm1179, 1, 0
        %v5224 = vsel %vm1180, 1, 0
        %v5225 = vsel %vm1181, 1, 0
        %v5226 = vsel %vm1182, 1, 0
        %v5227 = vsel %vm1183, 1, 0
        %v5228 = vsel %vm1184, 1, 0
        %v5229 = vsel %vm1185, 1, 0
        %v5230 = vsel %vm1186, 1, 0
        %v5231 = vsel %vm1187, 1, 0
        %v5232 = vsel %vm1188, 1, 0
        %v5233 = vsel %vm1189, 1, 0
        %v5234 = vsel %vm1190, 1, 0
        %v5235 = vsel %vm1191, 1, 0
        %v5236 = vsel %vm1192, 1, 0
        %v5237 = vsel %vm1193, 1, 0
        %v5238 = vsel %vm1194, 1, 0
        %v5239 = vsel %vm1195, 1, 0
        %vm5240 = vcmp.eq.s32.totalorder %v5192, 1
        %vm5241 = vcmp.eq.s32.totalorder %v5193, 1
        %vm5242 = vcmp.eq.s32.totalorder %v5194, 1
        %vm5243 = vcmp.eq.s32.totalorder %v5195, 1
        %vm5244 = vcmp.eq.s32.totalorder %v5196, 1
        %vm5245 = vcmp.eq.s32.totalorder %v5197, 1
        %vm5246 = vcmp.eq.s32.totalorder %v5198, 1
        %vm5247 = vcmp.eq.s32.totalorder %v5199, 1
        %vm5248 = vcmp.eq.s32.totalorder %v5200, 1
        %vm5249 = vcmp.eq.s32.totalorder %v5201, 1
        %vm5250 = vcmp.eq.s32.totalorder %v5202, 1
        %vm5251 = vcmp.eq.s32.totalorder %v5203, 1
        %vm5252 = vcmp.eq.s32.totalorder %v5204, 1
        %vm5253 = vcmp.eq.s32.totalorder %v5205, 1
        %vm5254 = vcmp.eq.s32.totalorder %v5206, 1
        %vm5255 = vcmp.eq.s32.totalorder %v5207, 1
        %vm5256 = vcmp.eq.s32.totalorder %v5208, 1
        %vm5257 = vcmp.eq.s32.totalorder %v5209, 1
        %vm5258 = vcmp.eq.s32.totalorder %v5210, 1
        %vm5259 = vcmp.eq.s32.totalorder %v5211, 1
        %vm5260 = vcmp.eq.s32.totalorder %v5212, 1
        %vm5261 = vcmp.eq.s32.totalorder %v5213, 1
        %vm5262 = vcmp.eq.s32.totalorder %v5214, 1
        %vm5263 = vcmp.eq.s32.totalorder %v5215, 1
        %vm5264 = vcmp.eq.s32.totalorder %v5216, 1
        %vm5265 = vcmp.eq.s32.totalorder %v5217, 1
        %vm5266 = vcmp.eq.s32.totalorder %v5218, 1
        %vm5267 = vcmp.eq.s32.totalorder %v5219, 1
        %vm5268 = vcmp.eq.s32.totalorder %v5220, 1
        %vm5269 = vcmp.eq.s32.totalorder %v5221, 1
        %vm5270 = vcmp.eq.s32.totalorder %v5222, 1
        %vm5271 = vcmp.eq.s32.totalorder %v5223, 1
        %vm5272 = vcmp.eq.s32.totalorder %v5224, 1
        %vm5273 = vcmp.eq.s32.totalorder %v5225, 1
        %vm5274 = vcmp.eq.s32.totalorder %v5226, 1
        %vm5275 = vcmp.eq.s32.totalorder %v5227, 1
        %vm5276 = vcmp.eq.s32.totalorder %v5228, 1
        %vm5277 = vcmp.eq.s32.totalorder %v5229, 1
        %vm5278 = vcmp.eq.s32.totalorder %v5230, 1
        %vm5279 = vcmp.eq.s32.totalorder %v5231, 1
        %vm5280 = vcmp.eq.s32.totalorder %v5232, 1
        %vm5281 = vcmp.eq.s32.totalorder %v5233, 1
        %vm5282 = vcmp.eq.s32.totalorder %v5234, 1
        %vm5283 = vcmp.eq.s32.totalorder %v5235, 1
        %vm5284 = vcmp.eq.s32.totalorder %v5236, 1
        %vm5285 = vcmp.eq.s32.totalorder %v5237, 1
        %vm5286 = vcmp.eq.s32.totalorder %v5238, 1
        %vm5287 = vcmp.eq.s32.totalorder %v5239, 1
        %v5288 = vsel %vm5240, %v5144, 0.0
        %v5289 = vsel %vm5241, %v5145, 0.0
        %v5290 = vsel %vm5242, %v5146, 0.0
        %v5291 = vsel %vm5243, %v5147, 0.0
        %v5292 = vsel %vm5244, %v5148, 0.0
        %v5293 = vsel %vm5245, %v5149, 0.0
        %v5294 = vsel %vm5246, %v5150, 0.0
        %v5295 = vsel %vm5247, %v5151, 0.0
        %v5296 = vsel %vm5248, %v5152, 0.0
        %v5297 = vsel %vm5249, %v5153, 0.0
        %v5298 = vsel %vm5250, %v5154, 0.0
        %v5299 = vsel %vm5251, %v5155, 0.0
        %v5300 = vsel %vm5252, %v5156, 0.0
        %v5301 = vsel %vm5253, %v5157, 0.0
        %v5302 = vsel %vm5254, %v5158, 0.0
        %v5303 = vsel %vm5255, %v5159, 0.0
        %v5304 = vsel %vm5256, %v5160, 0.0
        %v5305 = vsel %vm5257, %v5161, 0.0
        %v5306 = vsel %vm5258, %v5162, 0.0
        %v5307 = vsel %vm5259, %v5163, 0.0
        %v5308 = vsel %vm5260, %v5164, 0.0
        %v5309 = vsel %vm5261, %v5165, 0.0
        %v5310 = vsel %vm5262, %v5166, 0.0
        %v5311 = vsel %vm5263, %v5167, 0.0
        %v5312 = vsel %vm5264, %v5168, 0.0
        %v5313 = vsel %vm5265, %v5169, 0.0
        %v5314 = vsel %vm5266, %v5170, 0.0
        %v5315 = vsel %vm5267, %v5171, 0.0
        %v5316 = vsel %vm5268, %v5172, 0.0
        %v5317 = vsel %vm5269, %v5173, 0.0
        %v5318 = vsel %vm5270, %v5174, 0.0
        %v5319 = vsel %vm5271, %v5175, 0.0
        %v5320 = vsel %vm5272, %v5176, 0.0
        %v5321 = vsel %vm5273, %v5177, 0.0
        %v5322 = vsel %vm5274, %v5178, 0.0
        %v5323 = vsel %vm5275, %v5179, 0.0
        %v5324 = vsel %vm5276, %v5180, 0.0
        %v5325 = vsel %vm5277, %v5181, 0.0
        %v5326 = vsel %vm5278, %v5182, 0.0
        %v5327 = vsel %vm5279, %v5183, 0.0
        %v5328 = vsel %vm5280, %v5184, 0.0
        %v5329 = vsel %vm5281, %v5185, 0.0
        %v5330 = vsel %vm5282, %v5186, 0.0
        %v5331 = vsel %vm5283, %v5187, 0.0
        %v5332 = vsel %vm5284, %v5188, 0.0
        %v5333 = vsel %vm5285, %v5189, 0.0
        %v5334 = vsel %vm5286, %v5190, 0.0
        %v5335 = vsel %vm5287, %v5191, 0.0
        %v5336 = vpack.c.bf16 %v5289, %v5288
        %v5337 = vpack.c.bf16 %v5291, %v5290
        %v5338 = vpack.c.bf16 %v5293, %v5292
        %v5339 = vpack.c.bf16 %v5295, %v5294
        %v5340 = vpack.c.bf16 %v5297, %v5296
        %v5341 = vpack.c.bf16 %v5299, %v5298
        %v5342 = vpack.c.bf16 %v5301, %v5300
        %v5343 = vpack.c.bf16 %v5303, %v5302
        %v5344 = vpack.c.bf16 %v5305, %v5304
        %v5345 = vpack.c.bf16 %v5307, %v5306
        %v5346 = vpack.c.bf16 %v5309, %v5308
        %v5347 = vpack.c.bf16 %v5311, %v5310
        %v5348 = vpack.c.bf16 %v5313, %v5312
        %v5349 = vpack.c.bf16 %v5315, %v5314
        %v5350 = vpack.c.bf16 %v5317, %v5316
        %v5351 = vpack.c.bf16 %v5319, %v5318
        %v5352 = vpack.c.bf16 %v5321, %v5320
        %v5353 = vpack.c.bf16 %v5323, %v5322
        %v5354 = vpack.c.bf16 %v5325, %v5324
        %v5355 = vpack.c.bf16 %v5327, %v5326
        %v5356 = vpack.c.bf16 %v5329, %v5328
        %v5357 = vpack.c.bf16 %v5331, %v5330
        %v5358 = vpack.c.bf16 %v5333, %v5332
        %v5359 = vpack.c.bf16 %v5335, %v5334
        %5360 = vst [vmem:[#allocation3] sm:$0xf] 0
        %5361 = vst [vmem:[#allocation3 + $0x4] sm:$0xf] 0
        %5362 = vst [vmem:[#allocation3 + $0x8] sm:$0xf] 0
        %vm5363 = vcmask 1040384
        %vm5364 = vsmask.f32 256
        %vm5365 = vmand %vm5363, %vm5364
        %v5366 = vld [vmem:[#allocation3 + $0xc] sm:$0x1]
        %v5367 = vsel %vm5365, 0, %v5366
        %5368 = vst [vmem:[#allocation3 + $0xc] sm:$0x1] %v5367
        %v5393 = vunpack.c.l.b16 %v5336
        %v5394 = vunpack.c.h.b16 %v5336
        %v5395 = vunpack.c.l.b16 %v5337
        %v5396 = vunpack.c.h.b16 %v5337
        %v5397 = vunpack.c.l.b16 %v5338
        %v5398 = vunpack.c.h.b16 %v5338
        %v5399 = vunpack.c.l.b16 %v5339
        %v5400 = vunpack.c.h.b16 %v5339
        %v5401 = vunpack.c.l.b16 %v5340
        %v5402 = vunpack.c.h.b16 %v5340
        %v5403 = vunpack.c.l.b16 %v5341
        %v5404 = vunpack.c.h.b16 %v5341
        %v5405 = vunpack.c.l.b16 %v5342
        %v5406 = vunpack.c.h.b16 %v5342
        %v5407 = vunpack.c.l.b16 %v5343
        %v5408 = vunpack.c.h.b16 %v5343
        %v5409 = vunpack.c.l.b16 %v5344
        %v5410 = vunpack.c.h.b16 %v5344
        %v5411 = vunpack.c.l.b16 %v5345
        %v5412 = vunpack.c.h.b16 %v5345
        %v5413 = vunpack.c.l.b16 %v5346
        %v5414 = vunpack.c.h.b16 %v5346
        %v5415 = vunpack.c.l.b16 %v5347
        %v5416 = vunpack.c.h.b16 %v5347
        %v5417 = vunpack.c.l.b16 %v5348
        %v5418 = vunpack.c.h.b16 %v5348
        %v5419 = vunpack.c.l.b16 %v5349
        %v5420 = vunpack.c.h.b16 %v5349
        %v5421 = vunpack.c.l.b16 %v5350
        %v5422 = vunpack.c.h.b16 %v5350
        %v5423 = vunpack.c.l.b16 %v5351
        %v5424 = vunpack.c.h.b16 %v5351
        %v5425 = vunpack.c.l.b16 %v5352
        %v5426 = vunpack.c.h.b16 %v5352
        %v5427 = vunpack.c.l.b16 %v5353
        %v5428 = vunpack.c.h.b16 %v5353
        %v5429 = vunpack.c.l.b16 %v5354
        %v5430 = vunpack.c.h.b16 %v5354
        %v5431 = vunpack.c.l.b16 %v5355
        %v5432 = vunpack.c.h.b16 %v5355
        %v5433 = vunpack.c.l.b16 %v5356
        %v5434 = vunpack.c.h.b16 %v5356
        %v5435 = vunpack.c.l.b16 %v5357
        %v5436 = vunpack.c.h.b16 %v5357
        %v5437 = vunpack.c.l.b16 %v5358
        %v5438 = vunpack.c.h.b16 %v5358
        %v5439 = vunpack.c.l.b16 %v5359
        %v5440 = vunpack.c.h.b16 %v5359
        %v5441 = vpack.c.b16 %v5393, %v5393
        %v5442 = vpack.c.b16 %v5394, %v5394
        %v5443 = vpack.c.b16 %v5395, %v5395
        %v5444 = vpack.c.b16 %v5396, %v5396
        %v5445 = vpack.c.b16 %v5397, %v5397
        %v5446 = vpack.c.b16 %v5398, %v5398
        %v5447 = vpack.c.b16 %v5399, %v5399
        %v5448 = vpack.c.b16 %v5400, %v5400
        %v5449 = vpack.c.b16 %v5401, %v5401
        %v5450 = vpack.c.b16 %v5402, %v5402
        %v5451 = vpack.c.b16 %v5403, %v5403
        %v5452 = vpack.c.b16 %v5404, %v5404
        %v5453 = vpack.c.b16 %v5405, %v5405
        %v5454 = vpack.c.b16 %v5406, %v5406
        %v5455 = vpack.c.b16 %v5407, %v5407
        %v5456 = vpack.c.b16 %v5408, %v5408
        %v5457 = vpack.c.b16 %v5409, %v5409
        %v5458 = vpack.c.b16 %v5410, %v5410
        %v5459 = vpack.c.b16 %v5411, %v5411
        %v5460 = vpack.c.b16 %v5412, %v5412
        %v5461 = vpack.c.b16 %v5413, %v5413
        %v5462 = vpack.c.b16 %v5414, %v5414
        %v5463 = vpack.c.b16 %v5415, %v5415
        %v5464 = vpack.c.b16 %v5416, %v5416
        %v5465 = vpack.c.b16 %v5417, %v5417
        %v5466 = vpack.c.b16 %v5418, %v5418
        %v5467 = vpack.c.b16 %v5419, %v5419
        %v5468 = vpack.c.b16 %v5420, %v5420
        %v5469 = vpack.c.b16 %v5421, %v5421
        %v5470 = vpack.c.b16 %v5422, %v5422
        %v5471 = vpack.c.b16 %v5423, %v5423
        %v5472 = vpack.c.b16 %v5424, %v5424
        %v5473 = vpack.c.b16 %v5425, %v5425
        %v5474 = vpack.c.b16 %v5426, %v5426
        %v5475 = vpack.c.b16 %v5427, %v5427
        %v5476 = vpack.c.b16 %v5428, %v5428
        %v5477 = vpack.c.b16 %v5429, %v5429
        %v5478 = vpack.c.b16 %v5430, %v5430
        %v5479 = vpack.c.b16 %v5431, %v5431
        %v5480 = vpack.c.b16 %v5432, %v5432
        %v5481 = vpack.c.b16 %v5433, %v5433
        %v5482 = vpack.c.b16 %v5434, %v5434
        %v5483 = vpack.c.b16 %v5435, %v5435
        %v5484 = vpack.c.b16 %v5436, %v5436
        %v5485 = vpack.c.b16 %v5437, %v5437
        %v5486 = vpack.c.b16 %v5438, %v5438
        %v5487 = vpack.c.b16 %v5439, %v5439
        %v5488 = vpack.c.b16 %v5440, %v5440
        %vm5489 = vsmask.f32 4368
        %vm5490 = vmor %vm5364, %vm5489
        %v5492 = vshrl.u32 %v5441, 16
        %v5494 = vrot.slane %v5492, 7
        %v5495 = vshll.u32 %v5441, 16
        %v5497 = vor.u32 %v5494, %v5495
        %v5498 = vrot.slane %v5494, 4
        %v5500 = vshrl.u32 %v5442, 16
        %v5502 = vrot.slane %v5500, 7
        %v5503 = vshll.u32 %v5442, 16
        %v5505 = vor.u32 %v5502, %v5503
        %v5506 = vsel %vm5490, %v5498, %v5505
        %v5507 = vrot.slane %v5502, 4
        %v5509 = vshrl.u32 %v5443, 16
        %v5511 = vrot.slane %v5509, 7
        %v5512 = vshll.u32 %v5443, 16
        %v5514 = vor.u32 %v5511, %v5512
        %v5515 = vsel %vm5490, %v5507, %v5514
        %v5516 = vrot.slane %v5511, 4
        %v5518 = vshrl.u32 %v5444, 16
        %v5520 = vrot.slane %v5518, 7
        %v5521 = vshll.u32 %v5444, 16
        %v5523 = vor.u32 %v5520, %v5521
        %v5524 = vsel %vm5490, %v5516, %v5523
        %v5525 = vrot.slane %v5520, 4
        %v5527 = vshrl.u32 %v5445, 16
        %v5529 = vrot.slane %v5527, 7
        %v5530 = vshll.u32 %v5445, 16
        %v5532 = vor.u32 %v5529, %v5530
        %v5533 = vsel %vm5490, %v5525, %v5532
        %v5534 = vrot.slane %v5529, 4
        %v5536 = vshrl.u32 %v5446, 16
        %v5538 = vrot.slane %v5536, 7
        %v5539 = vshll.u32 %v5446, 16
        %v5541 = vor.u32 %v5538, %v5539
        %v5542 = vsel %vm5490, %v5534, %v5541
        %v5543 = vrot.slane %v5538, 4
        %v5545 = vshrl.u32 %v5447, 16
        %v5547 = vrot.slane %v5545, 7
        %v5548 = vshll.u32 %v5447, 16
        %v5550 = vor.u32 %v5547, %v5548
        %v5551 = vsel %vm5490, %v5543, %v5550
        %v5552 = vrot.slane %v5547, 4
        %v5554 = vshrl.u32 %v5448, 16
        %v5556 = vrot.slane %v5554, 7
        %v5557 = vshll.u32 %v5448, 16
        %v5559 = vor.u32 %v5556, %v5557
        %v5560 = vsel %vm5490, %v5552, %v5559
        %v5561 = vrot.slane %v5556, 4
        %v5563 = vshrl.u32 %v5449, 16
        %v5565 = vrot.slane %v5563, 7
        %v5566 = vshll.u32 %v5449, 16
        %v5568 = vor.u32 %v5565, %v5566
        %v5569 = vsel %vm5490, %v5561, %v5568
        %v5570 = vrot.slane %v5565, 4
        %v5572 = vshrl.u32 %v5450, 16
        %v5574 = vrot.slane %v5572, 7
        %v5575 = vshll.u32 %v5450, 16
        %v5577 = vor.u32 %v5574, %v5575
        %v5578 = vsel %vm5490, %v5570, %v5577
        %v5579 = vrot.slane %v5574, 4
        %v5581 = vshrl.u32 %v5451, 16
        %v5583 = vrot.slane %v5581, 7
        %v5584 = vshll.u32 %v5451, 16
        %v5586 = vor.u32 %v5583, %v5584
        %v5587 = vsel %vm5490, %v5579, %v5586
        %v5588 = vrot.slane %v5583, 4
        %v5590 = vshrl.u32 %v5452, 16
        %v5592 = vrot.slane %v5590, 7
        %v5593 = vshll.u32 %v5452, 16
        %v5595 = vor.u32 %v5592, %v5593
        %v5596 = vsel %vm5490, %v5588, %v5595
        %v5597 = vrot.slane %v5592, 4
        %v5599 = vshrl.u32 %v5453, 16
        %v5601 = vrot.slane %v5599, 7
        %v5602 = vshll.u32 %v5453, 16
        %v5604 = vor.u32 %v5601, %v5602
        %v5605 = vsel %vm5490, %v5597, %v5604
        %v5606 = vrot.slane %v5601, 4
        %v5608 = vshrl.u32 %v5454, 16
        %v5610 = vrot.slane %v5608, 7
        %v5611 = vshll.u32 %v5454, 16
        %v5613 = vor.u32 %v5610, %v5611
        %v5614 = vsel %vm5490, %v5606, %v5613
        %v5615 = vrot.slane %v5610, 4
        %v5617 = vshrl.u32 %v5455, 16
        %v5619 = vrot.slane %v5617, 7
        %v5620 = vshll.u32 %v5455, 16
        %v5622 = vor.u32 %v5619, %v5620
        %v5623 = vsel %vm5490, %v5615, %v5622
        %v5624 = vrot.slane %v5619, 4
        %v5626 = vshrl.u32 %v5456, 16
        %v5628 = vrot.slane %v5626, 7
        %v5629 = vshll.u32 %v5456, 16
        %v5631 = vor.u32 %v5628, %v5629
        %v5632 = vsel %vm5490, %v5624, %v5631
        %v5633 = vrot.slane %v5628, 4
        %v5635 = vshrl.u32 %v5457, 16
        %v5637 = vrot.slane %v5635, 7
        %v5638 = vshll.u32 %v5457, 16
        %v5640 = vor.u32 %v5637, %v5638
        %v5641 = vsel %vm5490, %v5633, %v5640
        %v5642 = vrot.slane %v5637, 4
        %v5644 = vshrl.u32 %v5458, 16
        %v5646 = vrot.slane %v5644, 7
        %v5647 = vshll.u32 %v5458, 16
        %v5649 = vor.u32 %v5646, %v5647
        %v5650 = vsel %vm5490, %v5642, %v5649
        %v5651 = vrot.slane %v5646, 4
        %v5653 = vshrl.u32 %v5459, 16
        %v5655 = vrot.slane %v5653, 7
        %v5656 = vshll.u32 %v5459, 16
        %v5658 = vor.u32 %v5655, %v5656
        %v5659 = vsel %vm5490, %v5651, %v5658
        %v5660 = vrot.slane %v5655, 4
        %v5662 = vshrl.u32 %v5460, 16
        %v5664 = vrot.slane %v5662, 7
        %v5665 = vshll.u32 %v5460, 16
        %v5667 = vor.u32 %v5664, %v5665
        %v5668 = vsel %vm5490, %v5660, %v5667
        %v5669 = vrot.slane %v5664, 4
        %v5671 = vshrl.u32 %v5461, 16
        %v5673 = vrot.slane %v5671, 7
        %v5674 = vshll.u32 %v5461, 16
        %v5676 = vor.u32 %v5673, %v5674
        %v5677 = vsel %vm5490, %v5669, %v5676
        %v5678 = vrot.slane %v5673, 4
        %v5680 = vshrl.u32 %v5462, 16
        %v5682 = vrot.slane %v5680, 7
        %v5683 = vshll.u32 %v5462, 16
        %v5685 = vor.u32 %v5682, %v5683
        %v5686 = vsel %vm5490, %v5678, %v5685
        %v5687 = vrot.slane %v5682, 4
        %v5689 = vshrl.u32 %v5463, 16
        %v5691 = vrot.slane %v5689, 7
        %v5692 = vshll.u32 %v5463, 16
        %v5694 = vor.u32 %v5691, %v5692
        %v5695 = vsel %vm5490, %v5687, %v5694
        %v5696 = vrot.slane %v5691, 4
        %v5698 = vshrl.u32 %v5464, 16
        %v5700 = vrot.slane %v5698, 7
        %v5701 = vshll.u32 %v5464, 16
        %v5703 = vor.u32 %v5700, %v5701
        %v5704 = vsel %vm5490, %v5696, %v5703
        %v5705 = vrot.slane %v5700, 4
        %v5707 = vshrl.u32 %v5465, 16
        %v5709 = vrot.slane %v5707, 7
        %v5710 = vshll.u32 %v5465, 16
        %v5712 = vor.u32 %v5709, %v5710
        %v5713 = vsel %vm5490, %v5705, %v5712
        %v5714 = vrot.slane %v5709, 4
        %v5716 = vshrl.u32 %v5466, 16
        %v5718 = vrot.slane %v5716, 7
        %v5719 = vshll.u32 %v5466, 16
        %v5721 = vor.u32 %v5718, %v5719
        %v5722 = vsel %vm5490, %v5714, %v5721
        %v5723 = vrot.slane %v5718, 4
        %v5725 = vshrl.u32 %v5467, 16
        %v5727 = vrot.slane %v5725, 7
        %v5728 = vshll.u32 %v5467, 16
        %v5730 = vor.u32 %v5727, %v5728
        %v5731 = vsel %vm5490, %v5723, %v5730
        %v5732 = vrot.slane %v5727, 4
        %v5734 = vshrl.u32 %v5468, 16
        %v5736 = vrot.slane %v5734, 7
        %v5737 = vshll.u32 %v5468, 16
        %v5739 = vor.u32 %v5736, %v5737
        %v5740 = vsel %vm5490, %v5732, %v5739
        %v5741 = vrot.slane %v5736, 4
        %v5743 = vshrl.u32 %v5469, 16
        %v5745 = vrot.slane %v5743, 7
        %v5746 = vshll.u32 %v5469, 16
        %v5748 = vor.u32 %v5745, %v5746
        %v5749 = vsel %vm5490, %v5741, %v5748
        %v5750 = vrot.slane %v5745, 4
        %v5752 = vshrl.u32 %v5470, 16
        %v5754 = vrot.slane %v5752, 7
        %v5755 = vshll.u32 %v5470, 16
        %v5757 = vor.u32 %v5754, %v5755
        %v5758 = vsel %vm5490, %v5750, %v5757
        %v5759 = vrot.slane %v5754, 4
        %v5761 = vshrl.u32 %v5471, 16
        %v5763 = vrot.slane %v5761, 7
        %v5764 = vshll.u32 %v5471, 16
        %v5766 = vor.u32 %v5763, %v5764
        %v5767 = vsel %vm5490, %v5759, %v5766
        %v5768 = vrot.slane %v5763, 4
        %v5770 = vshrl.u32 %v5472, 16
        %v5772 = vrot.slane %v5770, 7
        %v5773 = vshll.u32 %v5472, 16
        %v5775 = vor.u32 %v5772, %v5773
        %v5776 = vsel %vm5490, %v5768, %v5775
        %v5777 = vrot.slane %v5772, 4
        %v5779 = vshrl.u32 %v5473, 16
        %v5781 = vrot.slane %v5779, 7
        %v5782 = vshll.u32 %v5473, 16
        %v5784 = vor.u32 %v5781, %v5782
        %v5785 = vsel %vm5490, %v5777, %v5784
        %v5786 = vrot.slane %v5781, 4
        %v5788 = vshrl.u32 %v5474, 16
        %v5790 = vrot.slane %v5788, 7
        %v5791 = vshll.u32 %v5474, 16
        %v5793 = vor.u32 %v5790, %v5791
        %v5794 = vsel %vm5490, %v5786, %v5793
        %v5795 = vrot.slane %v5790, 4
        %v5797 = vshrl.u32 %v5475, 16
        %v5799 = vrot.slane %v5797, 7
        %v5800 = vshll.u32 %v5475, 16
        %v5802 = vor.u32 %v5799, %v5800
        %v5803 = vsel %vm5490, %v5795, %v5802
        %v5804 = vrot.slane %v5799, 4
        %v5806 = vshrl.u32 %v5476, 16
        %v5808 = vrot.slane %v5806, 7
        %v5809 = vshll.u32 %v5476, 16
        %v5811 = vor.u32 %v5808, %v5809
        %v5812 = vsel %vm5490, %v5804, %v5811
        %v5813 = vrot.slane %v5808, 4
        %v5815 = vshrl.u32 %v5477, 16
        %v5817 = vrot.slane %v5815, 7
        %v5818 = vshll.u32 %v5477, 16
        %v5820 = vor.u32 %v5817, %v5818
        %v5821 = vsel %vm5490, %v5813, %v5820
        %v5822 = vrot.slane %v5817, 4
        %v5824 = vshrl.u32 %v5478, 16
        %v5826 = vrot.slane %v5824, 7
        %v5827 = vshll.u32 %v5478, 16
        %v5829 = vor.u32 %v5826, %v5827
        %v5830 = vsel %vm5490, %v5822, %v5829
        %v5831 = vrot.slane %v5826, 4
        %v5833 = vshrl.u32 %v5479, 16
        %v5835 = vrot.slane %v5833, 7
        %v5836 = vshll.u32 %v5479, 16
        %v5838 = vor.u32 %v5835, %v5836
        %v5839 = vsel %vm5490, %v5831, %v5838
        %v5840 = vrot.slane %v5835, 4
        %v5842 = vshrl.u32 %v5480, 16
        %v5844 = vrot.slane %v5842, 7
        %v5845 = vshll.u32 %v5480, 16
        %v5847 = vor.u32 %v5844, %v5845
        %v5848 = vsel %vm5490, %v5840, %v5847
        %v5849 = vrot.slane %v5844, 4
        %v5851 = vshrl.u32 %v5481, 16
        %v5853 = vrot.slane %v5851, 7
        %v5854 = vshll.u32 %v5481, 16
        %v5856 = vor.u32 %v5853, %v5854
        %v5857 = vsel %vm5490, %v5849, %v5856
        %v5858 = vrot.slane %v5853, 4
        %v5860 = vshrl.u32 %v5482, 16
        %v5862 = vrot.slane %v5860, 7
        %v5863 = vshll.u32 %v5482, 16
        %v5865 = vor.u32 %v5862, %v5863
        %v5866 = vsel %vm5490, %v5858, %v5865
        %v5867 = vrot.slane %v5862, 4
        %v5869 = vshrl.u32 %v5483, 16
        %v5871 = vrot.slane %v5869, 7
        %v5872 = vshll.u32 %v5483, 16
        %v5874 = vor.u32 %v5871, %v5872
        %v5875 = vsel %vm5490, %v5867, %v5874
        %v5876 = vrot.slane %v5871, 4
        %v5878 = vshrl.u32 %v5484, 16
        %v5880 = vrot.slane %v5878, 7
        %v5881 = vshll.u32 %v5484, 16
        %v5883 = vor.u32 %v5880, %v5881
        %v5884 = vsel %vm5490, %v5876, %v5883
        %v5885 = vrot.slane %v5880, 4
        %v5887 = vshrl.u32 %v5485, 16
        %v5889 = vrot.slane %v5887, 7
        %v5890 = vshll.u32 %v5485, 16
        %v5892 = vor.u32 %v5889, %v5890
        %v5893 = vsel %vm5490, %v5885, %v5892
        %v5894 = vrot.slane %v5889, 4
        %v5896 = vshrl.u32 %v5486, 16
        %v5898 = vrot.slane %v5896, 7
        %v5899 = vshll.u32 %v5486, 16
        %v5901 = vor.u32 %v5898, %v5899
        %v5902 = vsel %vm5490, %v5894, %v5901
        %v5903 = vrot.slane %v5898, 4
        %v5905 = vshrl.u32 %v5487, 16
        %v5907 = vrot.slane %v5905, 7
        %v5908 = vshll.u32 %v5487, 16
        %v5910 = vor.u32 %v5907, %v5908
        %v5911 = vsel %vm5490, %v5903, %v5910
        %v5912 = vrot.slane %v5907, 4
        %v5914 = vshrl.u32 %v5488, 16
        %v5916 = vrot.slane %v5914, 7
        %v5917 = vshll.u32 %v5488, 16
        %v5919 = vor.u32 %v5916, %v5917
        %v5920 = vsel %vm5490, %v5912, %v5919
        %v5921 = vrot.slane %v5916, 4
        %vm5971 = vsmask.f32 7938
        %vm5972 = vmand %vm3219, %vm5971
        %v5973 = vld [vmem:[#allocation3 + $0xc] sm:$0xf]
        %v5974 = vsel %vm5972, %v5497, %v5973
        %5975 = vst [vmem:[#allocation3 + $0xc] sm:$0xf] %v5974
        %5976 = vst [vmem:[#allocation3 + $0x10] sm:$0xf] %v5506
        %5977 = vst [vmem:[#allocation3 + $0x14] sm:$0xf] %v5515
        %5978 = vst [vmem:[#allocation3 + $0x18] sm:$0xf] %v5524
        %5979 = vst [vmem:[#allocation3 + $0x1c] sm:$0xf] %v5533
        %5980 = vst [vmem:[#allocation3 + $0x20] sm:$0xf] %v5542
        %5981 = vst [vmem:[#allocation3 + $0x24] sm:$0xf] %v5551
        %5982 = vst [vmem:[#allocation3 + $0x28] sm:$0xf] %v5560
        %5983 = vst [vmem:[#allocation3 + $0x2c] sm:$0xf] %v5569
        %5984 = vst [vmem:[#allocation3 + $0x30] sm:$0xf] %v5578
        %5985 = vst [vmem:[#allocation3 + $0x34] sm:$0xf] %v5587
        %5986 = vst [vmem:[#allocation3 + $0x38] sm:$0xf] %v5596
        %5987 = vst [vmem:[#allocation3 + $0x3c] sm:$0xf] %v5605
        %5988 = vst [vmem:[#allocation3 + $0x40] sm:$0xf] %v5614
        %5989 = vst [vmem:[#allocation3 + $0x44] sm:$0xf] %v5623
        %5990 = vst [vmem:[#allocation3 + $0x48] sm:$0xf] %v5632
        %5991 = vst [vmem:[#allocation3 + $0x4c] sm:$0xf] %v5641
        %5992 = vst [vmem:[#allocation3 + $0x50] sm:$0xf] %v5650
        %5993 = vst [vmem:[#allocation3 + $0x54] sm:$0xf] %v5659
        %5994 = vst [vmem:[#allocation3 + $0x58] sm:$0xf] %v5668
        %5995 = vst [vmem:[#allocation3 + $0x5c] sm:$0xf] %v5677
        %5996 = vst [vmem:[#allocation3 + $0x60] sm:$0xf] %v5686
        %5997 = vst [vmem:[#allocation3 + $0x64] sm:$0xf] %v5695
        %5998 = vst [vmem:[#allocation3 + $0x68] sm:$0xf] %v5704
        %5999 = vst [vmem:[#allocation3 + $0x6c] sm:$0xf] %v5713
        %6000 = vst [vmem:[#allocation3 + $0x70] sm:$0xf] %v5722
        %6001 = vst [vmem:[#allocation3 + $0x74] sm:$0xf] %v5731
        %6002 = vst [vmem:[#allocation3 + $0x78] sm:$0xf] %v5740
        %6003 = vst [vmem:[#allocation3 + $0x7c] sm:$0xf] %v5749
        %6004 = vst [vmem:[#allocation3 + $0x80] sm:$0xf] %v5758
        %6005 = vst [vmem:[#allocation3 + $0x84] sm:$0xf] %v5767
        %6006 = vst [vmem:[#allocation3 + $0x88] sm:$0xf] %v5776
        %6007 = vst [vmem:[#allocation3 + $0x8c] sm:$0xf] %v5785
        %6008 = vst [vmem:[#allocation3 + $0x90] sm:$0xf] %v5794
        %6009 = vst [vmem:[#allocation3 + $0x94] sm:$0xf] %v5803
        %6010 = vst [vmem:[#allocation3 + $0x98] sm:$0xf] %v5812
        %6011 = vst [vmem:[#allocation3 + $0x9c] sm:$0xf] %v5821
        %6012 = vst [vmem:[#allocation3 + $0xa0] sm:$0xf] %v5830
        %6013 = vst [vmem:[#allocation3 + $0xa4] sm:$0xf] %v5839
        %6014 = vst [vmem:[#allocation3 + $0xa8] sm:$0xf] %v5848
        %6015 = vst [vmem:[#allocation3 + $0xac] sm:$0xf] %v5857
        %6016 = vst [vmem:[#allocation3 + $0xb0] sm:$0xf] %v5866
        %6017 = vst [vmem:[#allocation3 + $0xb4] sm:$0xf] %v5875
        %6018 = vst [vmem:[#allocation3 + $0xb8] sm:$0xf] %v5884
        %6019 = vst [vmem:[#allocation3 + $0xbc] sm:$0xf] %v5893
        %6020 = vst [vmem:[#allocation3 + $0xc0] sm:$0xf] %v5902
        %6021 = vst [vmem:[#allocation3 + $0xc4] sm:$0xf] %v5911
        %6022 = vst [vmem:[#allocation3 + $0xc8] sm:$0xf] %v5920
        %v6023 = vld [vmem:[#allocation3 + $0xcc] sm:$0x1]
        %v6024 = vsel %vm5365, %v5921, %v6023
        %6025 = vst [vmem:[#allocation3 + $0xcc] sm:$0x1] %v6024
        %v6026 = vld [vmem:[#allocation3 + $0xcc] sm:$0xf]
        %v6027 = vsel %vm5972, 0, %v6026
        %6028 = vst [vmem:[#allocation3 + $0xcc] sm:$0xf] %v6027
        %6029 = vst [vmem:[#allocation3 + $0xd0] sm:$0xf] 0
        %6030 = vst [vmem:[#allocation3 + $0xd4] sm:$0xf] 0
        %6031 = vst [vmem:[#allocation3 + $0xd8] sm:$0xf] 0
        %6032 = vst [vmem:[#allocation3 + $0xdc] sm:$0xf] 0
        %6033 = vst [vmem:[#allocation3 + $0xe0] sm:$0xf] 0
        %v6034 = vld [vmem:[#allocation3] sm:$0xf]
        %v6035 = vld [vmem:[#allocation3 + $0x4] sm:$0xf]
        %v6036 = vld [vmem:[#allocation3 + $0x8] sm:$0xf]
        %v6037 = vld [vmem:[#allocation3 + $0xc] sm:$0xf]
        %v6038 = vld [vmem:[#allocation3 + $0x10] sm:$0xf]
        %v6039 = vld [vmem:[#allocation3 + $0x14] sm:$0xf]
        %v6040 = vld [vmem:[#allocation3 + $0x18] sm:$0xf]
        %v6041 = vld [vmem:[#allocation3 + $0x1c] sm:$0xf]
        %v6042 = vld [vmem:[#allocation3 + $0x20] sm:$0xf]
        %v6043 = vld [vmem:[#allocation3 + $0x24] sm:$0xf]
        %v6044 = vld [vmem:[#allocation3 + $0x28] sm:$0xf]
        %v6045 = vld [vmem:[#allocation3 + $0x2c] sm:$0xf]
        %v6046 = vld [vmem:[#allocation3 + $0x30] sm:$0xf]
        %v6047 = vld [vmem:[#allocation3 + $0x34] sm:$0xf]
        %v6048 = vld [vmem:[#allocation3 + $0x38] sm:$0xf]
        %v6049 = vld [vmem:[#allocation3 + $0x3c] sm:$0xf]
        %v6050 = vld [vmem:[#allocation3 + $0x40] sm:$0xf]
        %v6051 = vld [vmem:[#allocation3 + $0x44] sm:$0xf]
        %v6052 = vld [vmem:[#allocation3 + $0x48] sm:$0xf]
        %v6053 = vld [vmem:[#allocation3 + $0x4c] sm:$0xf]
        %v6054 = vld [vmem:[#allocation3 + $0x50] sm:$0xf]
        %v6055 = vld [vmem:[#allocation3 + $0x54] sm:$0xf]
        %v6056 = vld [vmem:[#allocation3 + $0x58] sm:$0xf]
        %v6057 = vld [vmem:[#allocation3 + $0x5c] sm:$0xf]
        %v6058 = vld [vmem:[#allocation3 + $0x60] sm:$0xf]
        %v6059 = vld [vmem:[#allocation3 + $0x64] sm:$0xf]
        %v6060 = vld [vmem:[#allocation3 + $0x68] sm:$0xf]
        %v6061 = vld [vmem:[#allocation3 + $0x6c] sm:$0xf]
        %v6062 = vld [vmem:[#allocation3 + $0x70] sm:$0xf]
        %v6063 = vld [vmem:[#allocation3 + $0x74] sm:$0xf]
        %v6064 = vld [vmem:[#allocation3 + $0x78] sm:$0xf]
        %v6065 = vld [vmem:[#allocation3 + $0x7c] sm:$0xf]
        %v6066 = vld [vmem:[#allocation3 + $0x80] sm:$0xf]
        %v6067 = vld [vmem:[#allocation3 + $0x84] sm:$0xf]
        %v6068 = vld [vmem:[#allocation3 + $0x88] sm:$0xf]
        %v6069 = vld [vmem:[#allocation3 + $0x8c] sm:$0xf]
        %v6070 = vld [vmem:[#allocation3 + $0x90] sm:$0xf]
        %v6071 = vld [vmem:[#allocation3 + $0x94] sm:$0xf]
        %v6072 = vld [vmem:[#allocation3 + $0x98] sm:$0xf]
        %v6073 = vld [vmem:[#allocation3 + $0x9c] sm:$0xf]
        %v6074 = vld [vmem:[#allocation3 + $0xa0] sm:$0xf]
        %v6075 = vld [vmem:[#allocation3 + $0xa4] sm:$0xf]
        %v6076 = vld [vmem:[#allocation3 + $0xa8] sm:$0xf]
        %v6077 = vld [vmem:[#allocation3 + $0xac] sm:$0xf]
        %v6078 = vld [vmem:[#allocation3 + $0xb0] sm:$0xf]
        %v6079 = vld [vmem:[#allocation3 + $0xb4] sm:$0xf]
        %v6080 = vld [vmem:[#allocation3 + $0xb8] sm:$0xf]
        %v6081 = vld [vmem:[#allocation3 + $0xbc] sm:$0xf]
        %v6082 = vld [vmem:[#allocation3 + $0xc0] sm:$0xf]
        %v6083 = vld [vmem:[#allocation3 + $0xc4] sm:$0xf]
        %v6084 = vld [vmem:[#allocation3 + $0xc8] sm:$0xf]
        %v6085 = vld [vmem:[#allocation3 + $0xcc] sm:$0xf]
        %v6086 = vld [vmem:[#allocation3 + $0xd0] sm:$0xf]
        %v6087 = vld [vmem:[#allocation3 + $0xd4] sm:$0xf]
        %v6142 = vunpack.c.l.b16 %v6034
        %v6143 = vunpack.c.l.b16 %v6035
        %v6144 = vunpack.c.l.b16 %v6036
        %v6145 = vunpack.c.l.b16 %v6037
        %v6146 = vunpack.c.l.b16 %v6038
        %v6147 = vunpack.c.l.b16 %v6039
        %v6148 = vunpack.c.l.b16 %v6040
        %v6149 = vunpack.c.l.b16 %v6041
        %v6150 = vunpack.c.l.b16 %v6042
        %v6151 = vunpack.c.l.b16 %v6043
        %v6152 = vunpack.c.l.b16 %v6044
        %v6153 = vunpack.c.l.b16 %v6045
        %v6154 = vunpack.c.l.b16 %v6046
        %v6155 = vunpack.c.l.b16 %v6047
        %v6156 = vunpack.c.l.b16 %v6048
        %v6157 = vunpack.c.l.b16 %v6049
        %v6158 = vunpack.c.l.b16 %v6050
        %v6159 = vunpack.c.l.b16 %v6051
        %v6160 = vunpack.c.l.b16 %v6052
        %v6161 = vunpack.c.l.b16 %v6053
        %v6162 = vunpack.c.l.b16 %v6054
        %v6163 = vunpack.c.l.b16 %v6055
        %v6164 = vunpack.c.l.b16 %v6056
        %v6165 = vunpack.c.l.b16 %v6057
        %v6166 = vunpack.c.l.b16 %v6058
        %v6167 = vunpack.c.l.b16 %v6059
        %v6168 = vunpack.c.l.b16 %v6060
        %v6169 = vunpack.c.l.b16 %v6061
        %v6170 = vunpack.c.l.b16 %v6062
        %v6171 = vunpack.c.l.b16 %v6063
        %v6172 = vunpack.c.l.b16 %v6064
        %v6173 = vunpack.c.l.b16 %v6065
        %v6174 = vunpack.c.l.b16 %v6066
        %v6175 = vunpack.c.l.b16 %v6067
        %v6176 = vunpack.c.l.b16 %v6068
        %v6177 = vunpack.c.l.b16 %v6069
        %v6178 = vunpack.c.l.b16 %v6070
        %v6179 = vunpack.c.l.b16 %v6071
        %v6180 = vunpack.c.l.b16 %v6072
        %v6181 = vunpack.c.l.b16 %v6073
        %v6182 = vunpack.c.l.b16 %v6074
        %v6183 = vunpack.c.l.b16 %v6075
        %v6184 = vunpack.c.l.b16 %v6076
        %v6185 = vunpack.c.l.b16 %v6077
        %v6186 = vunpack.c.l.b16 %v6078
        %v6187 = vunpack.c.l.b16 %v6079
        %v6188 = vunpack.c.l.b16 %v6080
        %v6189 = vunpack.c.l.b16 %v6081
        %v6190 = vunpack.c.l.b16 %v6082
        %v6191 = vunpack.c.l.b16 %v6083
        %v6192 = vunpack.c.l.b16 %v6084
        %v6193 = vunpack.c.l.b16 %v6085
        %v6194 = vunpack.c.l.b16 %v6086
        %v6195 = vunpack.c.l.b16 %v6087
        %v6196 = vpack.c.b16 %v6143, %v6142
        %v6197 = vpack.c.b16 %v6145, %v6144
        %v6198 = vpack.c.b16 %v6147, %v6146
        %v6199 = vpack.c.b16 %v6149, %v6148
        %v6200 = vpack.c.b16 %v6151, %v6150
        %v6201 = vpack.c.b16 %v6153, %v6152
        %v6202 = vpack.c.b16 %v6155, %v6154
        %v6203 = vpack.c.b16 %v6157, %v6156
        %v6204 = vpack.c.b16 %v6159, %v6158
        %v6205 = vpack.c.b16 %v6161, %v6160
        %v6206 = vpack.c.b16 %v6163, %v6162
        %v6207 = vpack.c.b16 %v6165, %v6164
        %v6208 = vpack.c.b16 %v6167, %v6166
        %v6209 = vpack.c.b16 %v6169, %v6168
        %v6210 = vpack.c.b16 %v6171, %v6170
        %v6211 = vpack.c.b16 %v6173, %v6172
        %v6212 = vpack.c.b16 %v6175, %v6174
        %v6213 = vpack.c.b16 %v6177, %v6176
        %v6214 = vpack.c.b16 %v6179, %v6178
        %v6215 = vpack.c.b16 %v6181, %v6180
        %v6216 = vpack.c.b16 %v6183, %v6182
        %v6217 = vpack.c.b16 %v6185, %v6184
        %v6218 = vpack.c.b16 %v6187, %v6186
        %v6219 = vpack.c.b16 %v6189, %v6188
        %v6220 = vpack.c.b16 %v6191, %v6190
        %v6221 = vpack.c.b16 %v6193, %v6192
        %v6222 = vpack.c.b16 %v6195, %v6194
        %6250 = vst [vmem:[#allocation2] sm:$0xff] %v6196
        %6251 = vst [vmem:[#allocation2 + $0x18] sm:$0xff] %v6197
        %6252 = vst [vmem:[#allocation2 + $0x30] sm:$0xff] %v6198
        %6253 = vst [vmem:[#allocation2 + $0x48] sm:$0xff] %v6199
        %6254 = vst [vmem:[#allocation2 + $0x60] sm:$0xff] %v6200
        %6255 = vst [vmem:[#allocation2 + $0x78] sm:$0xff] %v6201
        %6256 = vst [vmem:[#allocation2 + $0x90] sm:$0xff] %v6202
        %6257 = vst [vmem:[#allocation2 + $0xa8] sm:$0xff] %v6203
        %6258 = vst [vmem:[#allocation2 + $0xc0] sm:$0xff] %v6204
        %6259 = vst [vmem:[#allocation2 + $0xd8] sm:$0xff] %v6205
        %6260 = vst [vmem:[#allocation2 + $0xf0] sm:$0xff] %v6206
        %6261 = vst [vmem:[#allocation2 + $0x108] sm:$0xff] %v6207
        %6262 = vst [vmem:[#allocation2 + $0x120] sm:$0xff] %v6208
        %6263 = vst [vmem:[#allocation2 + $0x138] sm:$0xff] %v6209
        %6264 = vst [vmem:[#allocation2 + $0x150] sm:$0xff] %v6210
        %6265 = vst [vmem:[#allocation2 + $0x168] sm:$0xff] %v6211
        %6266 = vst [vmem:[#allocation2 + $0x180] sm:$0xff] %v6212
        %6267 = vst [vmem:[#allocation2 + $0x198] sm:$0xff] %v6213
        %6268 = vst [vmem:[#allocation2 + $0x1b0] sm:$0xff] %v6214
        %6269 = vst [vmem:[#allocation2 + $0x1c8] sm:$0xff] %v6215
        %6270 = vst [vmem:[#allocation2 + $0x1e0] sm:$0xff] %v6216
        %6271 = vst [vmem:[#allocation2 + $0x1f8] sm:$0xff] %v6217
        %6272 = vst [vmem:[#allocation2 + $0x210] sm:$0xff] %v6218
        %6273 = vst [vmem:[#allocation2 + $0x228] sm:$0xff] %v6219
        %6274 = vst [vmem:[#allocation2 + $0x240] sm:$0xff] %v6220
        %6275 = vst [vmem:[#allocation2 + $0x258] sm:$0xff] %v6221
        %6276 = vst [vmem:[#allocation2 + $0x270] sm:$0xff] %v6222
        %v6277 = vld [vmem:[#allocation3] sm:$0xf]
        %v6278 = vld [vmem:[#allocation3 + $0x4] sm:$0xf]
        %v6279 = vld [vmem:[#allocation3 + $0x8] sm:$0xf]
        %v6280 = vld [vmem:[#allocation3 + $0xc] sm:$0xf]
        %v6281 = vld [vmem:[#allocation3 + $0x10] sm:$0xf]
        %v6282 = vld [vmem:[#allocation3 + $0x14] sm:$0xf]
        %v6283 = vld [vmem:[#allocation3 + $0x18] sm:$0xf]
        %v6284 = vld [vmem:[#allocation3 + $0x1c] sm:$0xf]
        %v6285 = vld [vmem:[#allocation3 + $0x20] sm:$0xf]
        %v6286 = vld [vmem:[#allocation3 + $0x24] sm:$0xf]
        %v6287 = vld [vmem:[#allocation3 + $0x28] sm:$0xf]
        %v6288 = vld [vmem:[#allocation3 + $0x2c] sm:$0xf]
        %v6289 = vld [vmem:[#allocation3 + $0x30] sm:$0xf]
        %v6290 = vld [vmem:[#allocation3 + $0x34] sm:$0xf]
        %v6291 = vld [vmem:[#allocation3 + $0x38] sm:$0xf]
        %v6292 = vld [vmem:[#allocation3 + $0x3c] sm:$0xf]
        %v6293 = vld [vmem:[#allocation3 + $0x40] sm:$0xf]
        %v6294 = vld [vmem:[#allocation3 + $0x44] sm:$0xf]
        %v6295 = vld [vmem:[#allocation3 + $0x48] sm:$0xf]
        %v6296 = vld [vmem:[#allocation3 + $0x4c] sm:$0xf]
        %v6297 = vld [vmem:[#allocation3 + $0x50] sm:$0xf]
        %v6298 = vld [vmem:[#allocation3 + $0x54] sm:$0xf]
        %v6299 = vld [vmem:[#allocation3 + $0x58] sm:$0xf]
        %v6300 = vld [vmem:[#allocation3 + $0x5c] sm:$0xf]
        %v6301 = vld [vmem:[#allocation3 + $0x60] sm:$0xf]
        %v6302 = vld [vmem:[#allocation3 + $0x64] sm:$0xf]
        %v6303 = vld [vmem:[#allocation3 + $0x68] sm:$0xf]
        %v6304 = vld [vmem:[#allocation3 + $0x6c] sm:$0xf]
        %v6305 = vld [vmem:[#allocation3 + $0x70] sm:$0xf]
        %v6306 = vld [vmem:[#allocation3 + $0x74] sm:$0xf]
        %v6307 = vld [vmem:[#allocation3 + $0x78] sm:$0xf]
        %v6308 = vld [vmem:[#allocation3 + $0x7c] sm:$0xf]
        %v6309 = vld [vmem:[#allocation3 + $0x80] sm:$0xf]
        %v6310 = vld [vmem:[#allocation3 + $0x84] sm:$0xf]
        %v6311 = vld [vmem:[#allocation3 + $0x88] sm:$0xf]
        %v6312 = vld [vmem:[#allocation3 + $0x8c] sm:$0xf]
        %v6313 = vld [vmem:[#allocation3 + $0x90] sm:$0xf]
        %v6314 = vld [vmem:[#allocation3 + $0x94] sm:$0xf]
        %v6315 = vld [vmem:[#allocation3 + $0x98] sm:$0xf]
        %v6316 = vld [vmem:[#allocation3 + $0x9c] sm:$0xf]
        %v6317 = vld [vmem:[#allocation3 + $0xa0] sm:$0xf]
        %v6318 = vld [vmem:[#allocation3 + $0xa4] sm:$0xf]
        %v6319 = vld [vmem:[#allocation3 + $0xa8] sm:$0xf]
        %v6320 = vld [vmem:[#allocation3 + $0xac] sm:$0xf]
        %v6321 = vld [vmem:[#allocation3 + $0xb0] sm:$0xf]
        %v6322 = vld [vmem:[#allocation3 + $0xb4] sm:$0xf]
        %v6323 = vld [vmem:[#allocation3 + $0xb8] sm:$0xf]
        %v6324 = vld [vmem:[#allocation3 + $0xbc] sm:$0xf]
        %v6325 = vld [vmem:[#allocation3 + $0xc0] sm:$0xf]
        %v6326 = vld [vmem:[#allocation3 + $0xc4] sm:$0xf]
        %v6327 = vld [vmem:[#allocation3 + $0xc8] sm:$0xf]
        %v6328 = vld [vmem:[#allocation3 + $0xcc] sm:$0xf]
        %v6329 = vld [vmem:[#allocation3 + $0xd0] sm:$0xf]
        %v6330 = vld [vmem:[#allocation3 + $0xd4] sm:$0xf]
        %v6331 = vld [vmem:[#allocation3 + $0xd8] sm:$0x1]
        %v6387 = vunpack.c.l.b16 %v6277
        %v6388 = vunpack.c.l.b16 %v6278
        %v6389 = vunpack.c.l.b16 %v6279
        %v6390 = vunpack.c.l.b16 %v6280
        %v6391 = vunpack.c.l.b16 %v6281
        %v6392 = vunpack.c.l.b16 %v6282
        %v6393 = vunpack.c.l.b16 %v6283
        %v6394 = vunpack.c.l.b16 %v6284
        %v6395 = vunpack.c.l.b16 %v6285
        %v6396 = vunpack.c.l.b16 %v6286
        %v6397 = vunpack.c.l.b16 %v6287
        %v6398 = vunpack.c.l.b16 %v6288
        %v6399 = vunpack.c.l.b16 %v6289
        %v6400 = vunpack.c.l.b16 %v6290
        %v6401 = vunpack.c.l.b16 %v6291
        %v6402 = vunpack.c.l.b16 %v6292
        %v6403 = vunpack.c.l.b16 %v6293
        %v6404 = vunpack.c.l.b16 %v6294
        %v6405 = vunpack.c.l.b16 %v6295
        %v6406 = vunpack.c.l.b16 %v6296
        %v6407 = vunpack.c.l.b16 %v6297
        %v6408 = vunpack.c.l.b16 %v6298
        %v6409 = vunpack.c.l.b16 %v6299
        %v6410 = vunpack.c.l.b16 %v6300
        %v6411 = vunpack.c.l.b16 %v6301
        %v6412 = vunpack.c.l.b16 %v6302
        %v6413 = vunpack.c.l.b16 %v6303
        %v6414 = vunpack.c.l.b16 %v6304
        %v6415 = vunpack.c.l.b16 %v6305
        %v6416 = vunpack.c.l.b16 %v6306
        %v6417 = vunpack.c.l.b16 %v6307
        %v6418 = vunpack.c.l.b16 %v6308
        %v6419 = vunpack.c.l.b16 %v6309
        %v6420 = vunpack.c.l.b16 %v6310
        %v6421 = vunpack.c.l.b16 %v6311
        %v6422 = vunpack.c.l.b16 %v6312
        %v6423 = vunpack.c.l.b16 %v6313
        %v6424 = vunpack.c.l.b16 %v6314
        %v6425 = vunpack.c.l.b16 %v6315
        %v6426 = vunpack.c.l.b16 %v6316
        %v6427 = vunpack.c.l.b16 %v6317
        %v6428 = vunpack.c.l.b16 %v6318
        %v6429 = vunpack.c.l.b16 %v6319
        %v6430 = vunpack.c.l.b16 %v6320
        %v6431 = vunpack.c.l.b16 %v6321
        %v6432 = vunpack.c.l.b16 %v6322
        %v6433 = vunpack.c.l.b16 %v6323
        %v6434 = vunpack.c.l.b16 %v6324
        %v6435 = vunpack.c.l.b16 %v6325
        %v6436 = vunpack.c.l.b16 %v6326
        %v6437 = vunpack.c.l.b16 %v6327
        %v6438 = vunpack.c.l.b16 %v6328
        %v6439 = vunpack.c.l.b16 %v6329
        %v6440 = vunpack.c.l.b16 %v6330
        %v6441 = vunpack.c.l.b16 %v6331
        %v6442 = vpack.c.b16 %v6388, %v6387
        %v6443 = vpack.c.b16 %v6390, %v6389
        %v6444 = vpack.c.b16 %v6392, %v6391
        %v6445 = vpack.c.b16 %v6394, %v6393
        %v6446 = vpack.c.b16 %v6396, %v6395
        %v6447 = vpack.c.b16 %v6398, %v6397
        %v6448 = vpack.c.b16 %v6400, %v6399
        %v6449 = vpack.c.b16 %v6402, %v6401
        %v6450 = vpack.c.b16 %v6404, %v6403
        %v6451 = vpack.c.b16 %v6406, %v6405
        %v6452 = vpack.c.b16 %v6408, %v6407
        %v6453 = vpack.c.b16 %v6410, %v6409
        %v6454 = vpack.c.b16 %v6412, %v6411
        %v6455 = vpack.c.b16 %v6414, %v6413
        %v6456 = vpack.c.b16 %v6416, %v6415
        %v6457 = vpack.c.b16 %v6418, %v6417
        %v6458 = vpack.c.b16 %v6420, %v6419
        %v6459 = vpack.c.b16 %v6422, %v6421
        %v6460 = vpack.c.b16 %v6424, %v6423
        %v6461 = vpack.c.b16 %v6426, %v6425
        %v6462 = vpack.c.b16 %v6428, %v6427
        %v6463 = vpack.c.b16 %v6430, %v6429
        %v6464 = vpack.c.b16 %v6432, %v6431
        %v6465 = vpack.c.b16 %v6434, %v6433
        %v6466 = vpack.c.b16 %v6436, %v6435
        %v6467 = vpack.c.b16 %v6438, %v6437
        %v6468 = vpack.c.b16 %v6440, %v6439
        %v6469 = vpack.c.b16 %v6441, %v6441
        %v6471 = vshrl.u32 %v6442, 16
        %v6473 = vshll.u32 %v6442, 16
        %v6475 = vrot.slane %v6473, 1
        %v6476 = vor.u32 %v6471, %v6475
        %v6478 = vshll.u32 %v6443, 16
        %v6480 = vrot.slane %v6478, 1
        %v6481 = vsel %vm1632, %v6476, %v6480
        %v6482 = vshrl.u32 %v6443, 16
        %v6484 = vor.u32 %v6482, %v6480
        %v6486 = vshll.u32 %v6444, 16
        %v6488 = vrot.slane %v6486, 1
        %v6489 = vsel %vm1632, %v6484, %v6488
        %v6490 = vshrl.u32 %v6444, 16
        %v6492 = vor.u32 %v6490, %v6488
        %v6494 = vshll.u32 %v6445, 16
        %v6496 = vrot.slane %v6494, 1
        %v6497 = vsel %vm1632, %v6492, %v6496
        %v6498 = vshrl.u32 %v6445, 16
        %v6500 = vor.u32 %v6498, %v6496
        %v6502 = vshll.u32 %v6446, 16
        %v6504 = vrot.slane %v6502, 1
        %v6505 = vsel %vm1632, %v6500, %v6504
        %v6506 = vshrl.u32 %v6446, 16
        %v6508 = vor.u32 %v6506, %v6504
        %v6510 = vshll.u32 %v6447, 16
        %v6512 = vrot.slane %v6510, 1
        %v6513 = vsel %vm1632, %v6508, %v6512
        %v6514 = vshrl.u32 %v6447, 16
        %v6516 = vor.u32 %v6514, %v6512
        %v6518 = vshll.u32 %v6448, 16
        %v6520 = vrot.slane %v6518, 1
        %v6521 = vsel %vm1632, %v6516, %v6520
        %v6522 = vshrl.u32 %v6448, 16
        %v6524 = vor.u32 %v6522, %v6520
        %v6526 = vshll.u32 %v6449, 16
        %v6528 = vrot.slane %v6526, 1
        %v6529 = vsel %vm1632, %v6524, %v6528
        %v6530 = vshrl.u32 %v6449, 16
        %v6532 = vor.u32 %v6530, %v6528
        %v6534 = vshll.u32 %v6450, 16
        %v6536 = vrot.slane %v6534, 1
        %v6537 = vsel %vm1632, %v6532, %v6536
        %v6538 = vshrl.u32 %v6450, 16
        %v6540 = vor.u32 %v6538, %v6536
        %v6542 = vshll.u32 %v6451, 16
        %v6544 = vrot.slane %v6542, 1
        %v6545 = vsel %vm1632, %v6540, %v6544
        %v6546 = vshrl.u32 %v6451, 16
        %v6548 = vor.u32 %v6546, %v6544
        %v6550 = vshll.u32 %v6452, 16
        %v6552 = vrot.slane %v6550, 1
        %v6553 = vsel %vm1632, %v6548, %v6552
        %v6554 = vshrl.u32 %v6452, 16
        %v6556 = vor.u32 %v6554, %v6552
        %v6558 = vshll.u32 %v6453, 16
        %v6560 = vrot.slane %v6558, 1
        %v6561 = vsel %vm1632, %v6556, %v6560
        %v6562 = vshrl.u32 %v6453, 16
        %v6564 = vor.u32 %v6562, %v6560
        %v6566 = vshll.u32 %v6454, 16
        %v6568 = vrot.slane %v6566, 1
        %v6569 = vsel %vm1632, %v6564, %v6568
        %v6570 = vshrl.u32 %v6454, 16
        %v6572 = vor.u32 %v6570, %v6568
        %v6574 = vshll.u32 %v6455, 16
        %v6576 = vrot.slane %v6574, 1
        %v6577 = vsel %vm1632, %v6572, %v6576
        %v6578 = vshrl.u32 %v6455, 16
        %v6580 = vor.u32 %v6578, %v6576
        %v6582 = vshll.u32 %v6456, 16
        %v6584 = vrot.slane %v6582, 1
        %v6585 = vsel %vm1632, %v6580, %v6584
        %v6586 = vshrl.u32 %v6456, 16
        %v6588 = vor.u32 %v6586, %v6584
        %v6590 = vshll.u32 %v6457, 16
        %v6592 = vrot.slane %v6590, 1
        %v6593 = vsel %vm1632, %v6588, %v6592
        %v6594 = vshrl.u32 %v6457, 16
        %v6596 = vor.u32 %v6594, %v6592
        %v6598 = vshll.u32 %v6458, 16
        %v6600 = vrot.slane %v6598, 1
        %v6601 = vsel %vm1632, %v6596, %v6600
        %v6602 = vshrl.u32 %v6458, 16
        %v6604 = vor.u32 %v6602, %v6600
        %v6606 = vshll.u32 %v6459, 16
        %v6608 = vrot.slane %v6606, 1
        %v6609 = vsel %vm1632, %v6604, %v6608
        %v6610 = vshrl.u32 %v6459, 16
        %v6612 = vor.u32 %v6610, %v6608
        %v6614 = vshll.u32 %v6460, 16
        %v6616 = vrot.slane %v6614, 1
        %v6617 = vsel %vm1632, %v6612, %v6616
        %v6618 = vshrl.u32 %v6460, 16
        %v6620 = vor.u32 %v6618, %v6616
        %v6622 = vshll.u32 %v6461, 16
        %v6624 = vrot.slane %v6622, 1
        %v6625 = vsel %vm1632, %v6620, %v6624
        %v6626 = vshrl.u32 %v6461, 16
        %v6628 = vor.u32 %v6626, %v6624
        %v6630 = vshll.u32 %v6462, 16
        %v6632 = vrot.slane %v6630, 1
        %v6633 = vsel %vm1632, %v6628, %v6632
        %v6634 = vshrl.u32 %v6462, 16
        %v6636 = vor.u32 %v6634, %v6632
        %v6638 = vshll.u32 %v6463, 16
        %v6640 = vrot.slane %v6638, 1
        %v6641 = vsel %vm1632, %v6636, %v6640
        %v6642 = vshrl.u32 %v6463, 16
        %v6644 = vor.u32 %v6642, %v6640
        %v6646 = vshll.u32 %v6464, 16
        %v6648 = vrot.slane %v6646, 1
        %v6649 = vsel %vm1632, %v6644, %v6648
        %v6650 = vshrl.u32 %v6464, 16
        %v6652 = vor.u32 %v6650, %v6648
        %v6654 = vshll.u32 %v6465, 16
        %v6656 = vrot.slane %v6654, 1
        %v6657 = vsel %vm1632, %v6652, %v6656
        %v6658 = vshrl.u32 %v6465, 16
        %v6660 = vor.u32 %v6658, %v6656
        %v6662 = vshll.u32 %v6466, 16
        %v6664 = vrot.slane %v6662, 1
        %v6665 = vsel %vm1632, %v6660, %v6664
        %v6666 = vshrl.u32 %v6466, 16
        %v6668 = vor.u32 %v6666, %v6664
        %v6670 = vshll.u32 %v6467, 16
        %v6672 = vrot.slane %v6670, 1
        %v6673 = vsel %vm1632, %v6668, %v6672
        %v6674 = vshrl.u32 %v6467, 16
        %v6676 = vor.u32 %v6674, %v6672
        %v6678 = vshll.u32 %v6468, 16
        %v6680 = vrot.slane %v6678, 1
        %v6681 = vsel %vm1632, %v6676, %v6680
        %v6682 = vshrl.u32 %v6468, 16
        %v6684 = vor.u32 %v6682, %v6680
        %v6686 = vshll.u32 %v6469, 16
        %v6688 = vrot.slane %v6686, 1
        %v6689 = vsel %vm1632, %v6684, %v6688
        %6717 = vst [vmem:[#allocation2 + $0x8] sm:$0xff] %v6481
        %6718 = vst [vmem:[#allocation2 + $0x20] sm:$0xff] %v6489
        %6719 = vst [vmem:[#allocation2 + $0x38] sm:$0xff] %v6497
        %6720 = vst [vmem:[#allocation2 + $0x50] sm:$0xff] %v6505
        %6721 = vst [vmem:[#allocation2 + $0x68] sm:$0xff] %v6513
        %6722 = vst [vmem:[#allocation2 + $0x80] sm:$0xff] %v6521
        %6723 = vst [vmem:[#allocation2 + $0x98] sm:$0xff] %v6529
        %6724 = vst [vmem:[#allocation2 + $0xb0] sm:$0xff] %v6537
        %6725 = vst [vmem:[#allocation2 + $0xc8] sm:$0xff] %v6545
        %6726 = vst [vmem:[#allocation2 + $0xe0] sm:$0xff] %v6553
        %6727 = vst [vmem:[#allocation2 + $0xf8] sm:$0xff] %v6561
        %6728 = vst [vmem:[#allocation2 + $0x110] sm:$0xff] %v6569
        %6729 = vst [vmem:[#allocation2 + $0x128] sm:$0xff] %v6577
        %6730 = vst [vmem:[#allocation2 + $0x140] sm:$0xff] %v6585
        %6731 = vst [vmem:[#allocation2 + $0x158] sm:$0xff] %v6593
        %6732 = vst [vmem:[#allocation2 + $0x170] sm:$0xff] %v6601
        %6733 = vst [vmem:[#allocation2 + $0x188] sm:$0xff] %v6609
        %6734 = vst [vmem:[#allocation2 + $0x1a0] sm:$0xff] %v6617
        %6735 = vst [vmem:[#allocation2 + $0x1b8] sm:$0xff] %v6625
        %6736 = vst [vmem:[#allocation2 + $0x1d0] sm:$0xff] %v6633
        %6737 = vst [vmem:[#allocation2 + $0x1e8] sm:$0xff] %v6641
        %6738 = vst [vmem:[#allocation2 + $0x200] sm:$0xff] %v6649
        %6739 = vst [vmem:[#allocation2 + $0x218] sm:$0xff] %v6657
        %6740 = vst [vmem:[#allocation2 + $0x230] sm:$0xff] %v6665
        %6741 = vst [vmem:[#allocation2 + $0x248] sm:$0xff] %v6673
        %6742 = vst [vmem:[#allocation2 + $0x260] sm:$0xff] %v6681
        %6743 = vst [vmem:[#allocation2 + $0x278] sm:$0xff] %v6689
        %v6744 = vld [vmem:[#allocation3] sm:$0xe]
        %v6745 = vld [vmem:[#allocation3 + $0x4] sm:$0xf]
        %v6746 = vld [vmem:[#allocation3 + $0x8] sm:$0xf]
        %v6747 = vld [vmem:[#allocation3 + $0xc] sm:$0xf]
        %v6748 = vld [vmem:[#allocation3 + $0x10] sm:$0xf]
        %v6749 = vld [vmem:[#allocation3 + $0x14] sm:$0xf]
        %v6750 = vld [vmem:[#allocation3 + $0x18] sm:$0xf]
        %v6751 = vld [vmem:[#allocation3 + $0x1c] sm:$0xf]
        %v6752 = vld [vmem:[#allocation3 + $0x20] sm:$0xf]
        %v6753 = vld [vmem:[#allocation3 + $0x24] sm:$0xf]
        %v6754 = vld [vmem:[#allocation3 + $0x28] sm:$0xf]
        %v6755 = vld [vmem:[#allocation3 + $0x2c] sm:$0xf]
        %v6756 = vld [vmem:[#allocation3 + $0x30] sm:$0xf]
        %v6757 = vld [vmem:[#allocation3 + $0x34] sm:$0xf]
        %v6758 = vld [vmem:[#allocation3 + $0x38] sm:$0xf]
        %v6759 = vld [vmem:[#allocation3 + $0x3c] sm:$0xf]
        %v6760 = vld [vmem:[#allocation3 + $0x40] sm:$0xf]
        %v6761 = vld [vmem:[#allocation3 + $0x44] sm:$0xf]
        %v6762 = vld [vmem:[#allocation3 + $0x48] sm:$0xf]
        %v6763 = vld [vmem:[#allocation3 + $0x4c] sm:$0xf]
        %v6764 = vld [vmem:[#allocation3 + $0x50] sm:$0xf]
        %v6765 = vld [vmem:[#allocation3 + $0x54] sm:$0xf]
        %v6766 = vld [vmem:[#allocation3 + $0x58] sm:$0xf]
        %v6767 = vld [vmem:[#allocation3 + $0x5c] sm:$0xf]
        %v6768 = vld [vmem:[#allocation3 + $0x60] sm:$0xf]
        %v6769 = vld [vmem:[#allocation3 + $0x64] sm:$0xf]
        %v6770 = vld [vmem:[#allocation3 + $0x68] sm:$0xf]
        %v6771 = vld [vmem:[#allocation3 + $0x6c] sm:$0xf]
        %v6772 = vld [vmem:[#allocation3 + $0x70] sm:$0xf]
        %v6773 = vld [vmem:[#allocation3 + $0x74] sm:$0xf]
        %v6774 = vld [vmem:[#allocation3 + $0x78] sm:$0xf]
        %v6775 = vld [vmem:[#allocation3 + $0x7c] sm:$0xf]
        %v6776 = vld [vmem:[#allocation3 + $0x80] sm:$0xf]
        %v6777 = vld [vmem:[#allocation3 + $0x84] sm:$0xf]
        %v6778 = vld [vmem:[#allocation3 + $0x88] sm:$0xf]
        %v6779 = vld [vmem:[#allocation3 + $0x8c] sm:$0xf]
        %v6780 = vld [vmem:[#allocation3 + $0x90] sm:$0xf]
        %v6781 = vld [vmem:[#allocation3 + $0x94] sm:$0xf]
        %v6782 = vld [vmem:[#allocation3 + $0x98] sm:$0xf]
        %v6783 = vld [vmem:[#allocation3 + $0x9c] sm:$0xf]
        %v6784 = vld [vmem:[#allocation3 + $0xa0] sm:$0xf]
        %v6785 = vld [vmem:[#allocation3 + $0xa4] sm:$0xf]
        %v6786 = vld [vmem:[#allocation3 + $0xa8] sm:$0xf]
        %v6787 = vld [vmem:[#allocation3 + $0xac] sm:$0xf]
        %v6788 = vld [vmem:[#allocation3 + $0xb0] sm:$0xf]
        %v6789 = vld [vmem:[#allocation3 + $0xb4] sm:$0xf]
        %v6790 = vld [vmem:[#allocation3 + $0xb8] sm:$0xf]
        %v6791 = vld [vmem:[#allocation3 + $0xbc] sm:$0xf]
        %v6792 = vld [vmem:[#allocation3 + $0xc0] sm:$0xf]
        %v6793 = vld [vmem:[#allocation3 + $0xc4] sm:$0xf]
        %v6794 = vld [vmem:[#allocation3 + $0xc8] sm:$0xf]
        %v6795 = vld [vmem:[#allocation3 + $0xcc] sm:$0xf]
        %v6796 = vld [vmem:[#allocation3 + $0xd0] sm:$0xf]
        %v6797 = vld [vmem:[#allocation3 + $0xd4] sm:$0xf]
        %v6798 = vld [vmem:[#allocation3 + $0xd8] sm:$0x1]
        %v6854 = vunpack.c.l.b16 %v6744
        %v6855 = vunpack.c.l.b16 %v6745
        %v6856 = vunpack.c.l.b16 %v6746
        %v6857 = vunpack.c.l.b16 %v6747
        %v6858 = vunpack.c.l.b16 %v6748
        %v6859 = vunpack.c.l.b16 %v6749
        %v6860 = vunpack.c.l.b16 %v6750
        %v6861 = vunpack.c.l.b16 %v6751
        %v6862 = vunpack.c.l.b16 %v6752
        %v6863 = vunpack.c.l.b16 %v6753
        %v6864 = vunpack.c.l.b16 %v6754
        %v6865 = vunpack.c.l.b16 %v6755
        %v6866 = vunpack.c.l.b16 %v6756
        %v6867 = vunpack.c.l.b16 %v6757
        %v6868 = vunpack.c.l.b16 %v6758
        %v6869 = vunpack.c.l.b16 %v6759
        %v6870 = vunpack.c.l.b16 %v6760
        %v6871 = vunpack.c.l.b16 %v6761
        %v6872 = vunpack.c.l.b16 %v6762
        %v6873 = vunpack.c.l.b16 %v6763
        %v6874 = vunpack.c.l.b16 %v6764
        %v6875 = vunpack.c.l.b16 %v6765
        %v6876 = vunpack.c.l.b16 %v6766
        %v6877 = vunpack.c.l.b16 %v6767
        %v6878 = vunpack.c.l.b16 %v6768
        %v6879 = vunpack.c.l.b16 %v6769
        %v6880 = vunpack.c.l.b16 %v6770
        %v6881 = vunpack.c.l.b16 %v6771
        %v6882 = vunpack.c.l.b16 %v6772
        %v6883 = vunpack.c.l.b16 %v6773
        %v6884 = vunpack.c.l.b16 %v6774
        %v6885 = vunpack.c.l.b16 %v6775
        %v6886 = vunpack.c.l.b16 %v6776
        %v6887 = vunpack.c.l.b16 %v6777
        %v6888 = vunpack.c.l.b16 %v6778
        %v6889 = vunpack.c.l.b16 %v6779
        %v6890 = vunpack.c.l.b16 %v6780
        %v6891 = vunpack.c.l.b16 %v6781
        %v6892 = vunpack.c.l.b16 %v6782
        %v6893 = vunpack.c.l.b16 %v6783
        %v6894 = vunpack.c.l.b16 %v6784
        %v6895 = vunpack.c.l.b16 %v6785
        %v6896 = vunpack.c.l.b16 %v6786
        %v6897 = vunpack.c.l.b16 %v6787
        %v6898 = vunpack.c.l.b16 %v6788
        %v6899 = vunpack.c.l.b16 %v6789
        %v6900 = vunpack.c.l.b16 %v6790
        %v6901 = vunpack.c.l.b16 %v6791
        %v6902 = vunpack.c.l.b16 %v6792
        %v6903 = vunpack.c.l.b16 %v6793
        %v6904 = vunpack.c.l.b16 %v6794
        %v6905 = vunpack.c.l.b16 %v6795
        %v6906 = vunpack.c.l.b16 %v6796
        %v6907 = vunpack.c.l.b16 %v6797
        %v6908 = vunpack.c.l.b16 %v6798
        %v6909 = vpack.c.b16 %v6855, %v6854
        %v6910 = vpack.c.b16 %v6857, %v6856
        %v6911 = vpack.c.b16 %v6859, %v6858
        %v6912 = vpack.c.b16 %v6861, %v6860
        %v6913 = vpack.c.b16 %v6863, %v6862
        %v6914 = vpack.c.b16 %v6865, %v6864
        %v6915 = vpack.c.b16 %v6867, %v6866
        %v6916 = vpack.c.b16 %v6869, %v6868
        %v6917 = vpack.c.b16 %v6871, %v6870
        %v6918 = vpack.c.b16 %v6873, %v6872
        %v6919 = vpack.c.b16 %v6875, %v6874
        %v6920 = vpack.c.b16 %v6877, %v6876
        %v6921 = vpack.c.b16 %v6879, %v6878
        %v6922 = vpack.c.b16 %v6881, %v6880
        %v6923 = vpack.c.b16 %v6883, %v6882
        %v6924 = vpack.c.b16 %v6885, %v6884
        %v6925 = vpack.c.b16 %v6887, %v6886
        %v6926 = vpack.c.b16 %v6889, %v6888
        %v6927 = vpack.c.b16 %v6891, %v6890
        %v6928 = vpack.c.b16 %v6893, %v6892
        %v6929 = vpack.c.b16 %v6895, %v6894
        %v6930 = vpack.c.b16 %v6897, %v6896
        %v6931 = vpack.c.b16 %v6899, %v6898
        %v6932 = vpack.c.b16 %v6901, %v6900
        %v6933 = vpack.c.b16 %v6903, %v6902
        %v6934 = vpack.c.b16 %v6905, %v6904
        %v6935 = vpack.c.b16 %v6907, %v6906
        %v6936 = vpack.c.b16 %v6908, %v6908
        %v6937 = vrot.slane %v6909, 1
        %v6938 = vrot.slane %v6910, 1
        %v6939 = vsel %vm2100, %v6937, %v6938
        %v6940 = vrot.slane %v6911, 1
        %v6941 = vsel %vm2100, %v6938, %v6940
        %v6942 = vrot.slane %v6912, 1
        %v6943 = vsel %vm2100, %v6940, %v6942
        %v6944 = vrot.slane %v6913, 1
        %v6945 = vsel %vm2100, %v6942, %v6944
        %v6946 = vrot.slane %v6914, 1
        %v6947 = vsel %vm2100, %v6944, %v6946
        %v6948 = vrot.slane %v6915, 1
        %v6949 = vsel %vm2100, %v6946, %v6948
        %v6950 = vrot.slane %v6916, 1
        %v6951 = vsel %vm2100, %v6948, %v6950
        %v6952 = vrot.slane %v6917, 1
        %v6953 = vsel %vm2100, %v6950, %v6952
        %v6954 = vrot.slane %v6918, 1
        %v6955 = vsel %vm2100, %v6952, %v6954
        %v6956 = vrot.slane %v6919, 1
        %v6957 = vsel %vm2100, %v6954, %v6956
        %v6958 = vrot.slane %v6920, 1
        %v6959 = vsel %vm2100, %v6956, %v6958
        %v6960 = vrot.slane %v6921, 1
        %v6961 = vsel %vm2100, %v6958, %v6960
        %v6962 = vrot.slane %v6922, 1
        %v6963 = vsel %vm2100, %v6960, %v6962
        %v6964 = vrot.slane %v6923, 1
        %v6965 = vsel %vm2100, %v6962, %v6964
        %v6966 = vrot.slane %v6924, 1
        %v6967 = vsel %vm2100, %v6964, %v6966
        %v6968 = vrot.slane %v6925, 1
        %v6969 = vsel %vm2100, %v6966, %v6968
        %v6970 = vrot.slane %v6926, 1
        %v6971 = vsel %vm2100, %v6968, %v6970
        %v6972 = vrot.slane %v6927, 1
        %v6973 = vsel %vm2100, %v6970, %v6972
        %v6974 = vrot.slane %v6928, 1
        %v6975 = vsel %vm2100, %v6972, %v6974
        %v6976 = vrot.slane %v6929, 1
        %v6977 = vsel %vm2100, %v6974, %v6976
        %v6978 = vrot.slane %v6930, 1
        %v6979 = vsel %vm2100, %v6976, %v6978
        %v6980 = vrot.slane %v6931, 1
        %v6981 = vsel %vm2100, %v6978, %v6980
        %v6982 = vrot.slane %v6932, 1
        %v6983 = vsel %vm2100, %v6980, %v6982
        %v6984 = vrot.slane %v6933, 1
        %v6985 = vsel %vm2100, %v6982, %v6984
        %v6986 = vrot.slane %v6934, 1
        %v6987 = vsel %vm2100, %v6984, %v6986
        %v6988 = vrot.slane %v6935, 1
        %v6989 = vsel %vm2100, %v6986, %v6988
        %v6990 = vrot.slane %v6936, 1
        %v6991 = vsel %vm2100, %v6988, %v6990
        %7019 = vst [vmem:[#allocation2 + $0x10] sm:$0xff] %v6939
        %7020 = vst [vmem:[#allocation2 + $0x28] sm:$0xff] %v6941
        %7021 = vst [vmem:[#allocation2 + $0x40] sm:$0xff] %v6943
        %7022 = vst [vmem:[#allocation2 + $0x58] sm:$0xff] %v6945
        %7023 = vst [vmem:[#allocation2 + $0x70] sm:$0xff] %v6947
        %7024 = vst [vmem:[#allocation2 + $0x88] sm:$0xff] %v6949
        %7025 = vst [vmem:[#allocation2 + $0xa0] sm:$0xff] %v6951
        %7026 = vst [vmem:[#allocation2 + $0xb8] sm:$0xff] %v6953
        %7027 = vst [vmem:[#allocation2 + $0xd0] sm:$0xff] %v6955
        %7028 = vst [vmem:[#allocation2 + $0xe8] sm:$0xff] %v6957
        %7029 = vst [vmem:[#allocation2 + $0x100] sm:$0xff] %v6959
        %7030 = vst [vmem:[#allocation2 + $0x118] sm:$0xff] %v6961
        %7031 = vst [vmem:[#allocation2 + $0x130] sm:$0xff] %v6963
        %7032 = vst [vmem:[#allocation2 + $0x148] sm:$0xff] %v6965
        %7033 = vst [vmem:[#allocation2 + $0x160] sm:$0xff] %v6967
        %7034 = vst [vmem:[#allocation2 + $0x178] sm:$0xff] %v6969
        %7035 = vst [vmem:[#allocation2 + $0x190] sm:$0xff] %v6971
        %7036 = vst [vmem:[#allocation2 + $0x1a8] sm:$0xff] %v6973
        %7037 = vst [vmem:[#allocation2 + $0x1c0] sm:$0xff] %v6975
        %7038 = vst [vmem:[#allocation2 + $0x1d8] sm:$0xff] %v6977
        %7039 = vst [vmem:[#allocation2 + $0x1f0] sm:$0xff] %v6979
        %7040 = vst [vmem:[#allocation2 + $0x208] sm:$0xff] %v6981
        %7041 = vst [vmem:[#allocation2 + $0x220] sm:$0xff] %v6983
        %7042 = vst [vmem:[#allocation2 + $0x238] sm:$0xff] %v6985
        %7043 = vst [vmem:[#allocation2 + $0x250] sm:$0xff] %v6987
        %7044 = vst [vmem:[#allocation2 + $0x268] sm:$0xff] %v6989
        %7045 = vst [vmem:[#allocation2 + $0x280] sm:$0xff] %v6991
        %v7046 = vld [vmem:[#allocation2] sm:$0xff]
        %v7047 = vld [vmem:[#allocation2 + $0x8] sm:$0xff]
        %v7048 = vld [vmem:[#allocation2 + $0x10] sm:$0xff]
        %v7049 = vld [vmem:[#allocation2 + $0x18] sm:$0xff]
        %v7050 = vld [vmem:[#allocation2 + $0x20] sm:$0xff]
        %v7051 = vld [vmem:[#allocation2 + $0x28] sm:$0xff]
        %v7052 = vld [vmem:[#allocation2 + $0x30] sm:$0xff]
        %v7053 = vld [vmem:[#allocation2 + $0x38] sm:$0xff]
        %v7054 = vld [vmem:[#allocation2 + $0x40] sm:$0xff]
        %v7055 = vld [vmem:[#allocation2 + $0x48] sm:$0xff]
        %v7056 = vld [vmem:[#allocation2 + $0x50] sm:$0xff]
        %v7057 = vld [vmem:[#allocation2 + $0x58] sm:$0xff]
        %v7058 = vld [vmem:[#allocation2 + $0x60] sm:$0xff]
        %v7059 = vld [vmem:[#allocation2 + $0x68] sm:$0xff]
        %v7060 = vld [vmem:[#allocation2 + $0x70] sm:$0xff]
        %v7061 = vld [vmem:[#allocation2 + $0x78] sm:$0xff]
        %v7062 = vld [vmem:[#allocation2 + $0x80] sm:$0xff]
        %v7063 = vld [vmem:[#allocation2 + $0x88] sm:$0xff]
        %v7064 = vld [vmem:[#allocation2 + $0x90] sm:$0xff]
        %v7065 = vld [vmem:[#allocation2 + $0x98] sm:$0xff]
        %v7066 = vld [vmem:[#allocation2 + $0xa0] sm:$0xff]
        %v7067 = vld [vmem:[#allocation2 + $0xa8] sm:$0xff]
        %v7068 = vld [vmem:[#allocation2 + $0xb0] sm:$0xff]
        %v7069 = vld [vmem:[#allocation2 + $0xb8] sm:$0xff]
        %v7070 = vld [vmem:[#allocation2 + $0xc0] sm:$0xff]
        %v7071 = vld [vmem:[#allocation2 + $0xc8] sm:$0xff]
        %v7072 = vld [vmem:[#allocation2 + $0xd0] sm:$0xff]
        %v7073 = vld [vmem:[#allocation2 + $0xd8] sm:$0xff]
        %v7074 = vld [vmem:[#allocation2 + $0xe0] sm:$0xff]
        %v7075 = vld [vmem:[#allocation2 + $0xe8] sm:$0xff]
        %v7076 = vld [vmem:[#allocation2 + $0xf0] sm:$0xff]
        %v7077 = vld [vmem:[#allocation2 + $0xf8] sm:$0xff]
        %v7078 = vld [vmem:[#allocation2 + $0x100] sm:$0xff]
        %v7079 = vld [vmem:[#allocation2 + $0x108] sm:$0xff]
        %v7080 = vld [vmem:[#allocation2 + $0x110] sm:$0xff]
        %v7081 = vld [vmem:[#allocation2 + $0x118] sm:$0xff]
        %v7082 = vld [vmem:[#allocation2 + $0x120] sm:$0xff]
        %v7083 = vld [vmem:[#allocation2 + $0x128] sm:$0xff]
        %v7084 = vld [vmem:[#allocation2 + $0x130] sm:$0xff]
        %v7085 = vld [vmem:[#allocation2 + $0x138] sm:$0xff]
        %v7086 = vld [vmem:[#allocation2 + $0x140] sm:$0xff]
        %v7087 = vld [vmem:[#allocation2 + $0x148] sm:$0xff]
        %v7088 = vld [vmem:[#allocation2 + $0x150] sm:$0xff]
        %v7089 = vld [vmem:[#allocation2 + $0x158] sm:$0xff]
        %v7090 = vld [vmem:[#allocation2 + $0x160] sm:$0xff]
        %v7091 = vld [vmem:[#allocation2 + $0x168] sm:$0xff]
        %v7092 = vld [vmem:[#allocation2 + $0x170] sm:$0xff]
        %v7093 = vld [vmem:[#allocation2 + $0x178] sm:$0xff]
        %v7094 = vld [vmem:[#allocation2 + $0x180] sm:$0xff]
        %v7095 = vld [vmem:[#allocation2 + $0x188] sm:$0xff]
        %v7096 = vld [vmem:[#allocation2 + $0x190] sm:$0xff]
        %v7097 = vld [vmem:[#allocation2 + $0x198] sm:$0xff]
        %v7098 = vld [vmem:[#allocation2 + $0x1a0] sm:$0xff]
        %v7099 = vld [vmem:[#allocation2 + $0x1a8] sm:$0xff]
        %v7100 = vld [vmem:[#allocation2 + $0x1b0] sm:$0xff]
        %v7101 = vld [vmem:[#allocation2 + $0x1b8] sm:$0xff]
        %v7102 = vld [vmem:[#allocation2 + $0x1c0] sm:$0xff]
        %v7103 = vld [vmem:[#allocation2 + $0x1c8] sm:$0xff]
        %v7104 = vld [vmem:[#allocation2 + $0x1d0] sm:$0xff]
        %v7105 = vld [vmem:[#allocation2 + $0x1d8] sm:$0xff]
        %v7106 = vld [vmem:[#allocation2 + $0x1e0] sm:$0xff]
        %v7107 = vld [vmem:[#allocation2 + $0x1e8] sm:$0xff]
        %v7108 = vld [vmem:[#allocation2 + $0x1f0] sm:$0xff]
        %v7109 = vld [vmem:[#allocation2 + $0x1f8] sm:$0xff]
        %v7110 = vld [vmem:[#allocation2 + $0x200] sm:$0xff]
        %v7111 = vld [vmem:[#allocation2 + $0x208] sm:$0xff]
        %v7112 = vld [vmem:[#allocation2 + $0x210] sm:$0xff]
        %v7113 = vld [vmem:[#allocation2 + $0x218] sm:$0xff]
        %v7114 = vld [vmem:[#allocation2 + $0x220] sm:$0xff]
        %v7115 = vld [vmem:[#allocation2 + $0x228] sm:$0xff]
        %v7116 = vld [vmem:[#allocation2 + $0x230] sm:$0xff]
        %v7117 = vld [vmem:[#allocation2 + $0x238] sm:$0xff]
        %v7118 = vld [vmem:[#allocation10] sm:$0xf]
        %v7119 = vld [vmem:[#allocation10 + $0x4] sm:$0xf]
        %v7120 = vld [vmem:[#allocation10 + $0x8] sm:$0xf]
        %v7121 = vld [vmem:[#allocation10 + $0xc] sm:$0xf]
        %v7122 = vld [vmem:[#allocation10 + $0x10] sm:$0xf]
        %v7123 = vld [vmem:[#allocation10 + $0x14] sm:$0xf]
        %v7124 = vld [vmem:[#allocation10 + $0x18] sm:$0xf]
        %v7125 = vld [vmem:[#allocation10 + $0x1c] sm:$0xf]
        %v7126 = vld [vmem:[#allocation10 + $0x20] sm:$0xf]
        %v7127 = vld [vmem:[#allocation10 + $0x24] sm:$0xf]
        %v7128 = vld [vmem:[#allocation10 + $0x28] sm:$0xf]
        %v7129 = vld [vmem:[#allocation10 + $0x2c] sm:$0xf]
        %v7130 = vld [vmem:[#allocation10 + $0x30] sm:$0xf]
        %v7131 = vld [vmem:[#allocation10 + $0x34] sm:$0xf]
        %v7132 = vld [vmem:[#allocation10 + $0x38] sm:$0xf]
        %v7133 = vld [vmem:[#allocation10 + $0x3c] sm:$0xf]
        %v7134 = vld [vmem:[#allocation10 + $0x40] sm:$0xf]
        %v7135 = vld [vmem:[#allocation10 + $0x44] sm:$0xf]
        %v7136 = vld [vmem:[#allocation10 + $0x48] sm:$0xf]
        %v7137 = vld [vmem:[#allocation10 + $0x4c] sm:$0xf]
        %v7138 = vld [vmem:[#allocation10 + $0x50] sm:$0xf]
        %v7139 = vld [vmem:[#allocation10 + $0x54] sm:$0xf]
        %v7140 = vld [vmem:[#allocation10 + $0x58] sm:$0xf]
        %v7141 = vld [vmem:[#allocation10 + $0x5c] sm:$0xf]
        %v7142 = vld [vmem:[#allocation10 + $0x60] sm:$0xf]
        %v7143 = vld [vmem:[#allocation10 + $0x64] sm:$0xf]
        %v7144 = vld [vmem:[#allocation10 + $0x68] sm:$0xf]
        %v7145 = vld [vmem:[#allocation10 + $0x6c] sm:$0xf]
        %v7146 = vld [vmem:[#allocation10 + $0x70] sm:$0xf]
        %v7147 = vld [vmem:[#allocation10 + $0x74] sm:$0xf]
        %v7148 = vld [vmem:[#allocation10 + $0x78] sm:$0xf]
        %v7149 = vld [vmem:[#allocation10 + $0x7c] sm:$0xf]
        %v7150 = vld [vmem:[#allocation10 + $0x80] sm:$0xf]
        %v7151 = vld [vmem:[#allocation10 + $0x84] sm:$0xf]
        %v7152 = vld [vmem:[#allocation10 + $0x88] sm:$0xf]
        %v7153 = vld [vmem:[#allocation10 + $0x8c] sm:$0xf]
        %v7154 = vld [vmem:[#allocation10 + $0x90] sm:$0xf]
        %v7155 = vld [vmem:[#allocation10 + $0x94] sm:$0xf]
        %v7156 = vld [vmem:[#allocation10 + $0x98] sm:$0xf]
        %v7157 = vld [vmem:[#allocation10 + $0x9c] sm:$0xf]
        %v7158 = vld [vmem:[#allocation10 + $0xa0] sm:$0xf]
        %v7159 = vld [vmem:[#allocation10 + $0xa4] sm:$0xf]
        %v7160 = vld [vmem:[#allocation10 + $0xa8] sm:$0xf]
        %v7161 = vld [vmem:[#allocation10 + $0xac] sm:$0xf]
        %v7162 = vld [vmem:[#allocation10 + $0xb0] sm:$0xf]
        %v7163 = vld [vmem:[#allocation10 + $0xb4] sm:$0xf]
        %v7164 = vld [vmem:[#allocation10 + $0xb8] sm:$0xf]
        %v7165 = vld [vmem:[#allocation10 + $0xbc] sm:$0xf]
        %v7214 = vunpack.c.l.b16 %v7118
        %v7215 = vunpack.c.l.b16 %v7119
        %v7216 = vunpack.c.l.b16 %v7120
        %v7217 = vunpack.c.l.b16 %v7121
        %v7218 = vunpack.c.l.b16 %v7122
        %v7219 = vunpack.c.l.b16 %v7123
        %v7220 = vunpack.c.l.b16 %v7124
        %v7221 = vunpack.c.l.b16 %v7125
        %v7222 = vunpack.c.l.b16 %v7126
        %v7223 = vunpack.c.l.b16 %v7127
        %v7224 = vunpack.c.l.b16 %v7128
        %v7225 = vunpack.c.l.b16 %v7129
        %v7226 = vunpack.c.l.b16 %v7130
        %v7227 = vunpack.c.l.b16 %v7131
        %v7228 = vunpack.c.l.b16 %v7132
        %v7229 = vunpack.c.l.b16 %v7133
        %v7230 = vunpack.c.l.b16 %v7134
        %v7231 = vunpack.c.l.b16 %v7135
        %v7232 = vunpack.c.l.b16 %v7136
        %v7233 = vunpack.c.l.b16 %v7137
        %v7234 = vunpack.c.l.b16 %v7138
        %v7235 = vunpack.c.l.b16 %v7139
        %v7236 = vunpack.c.l.b16 %v7140
        %v7237 = vunpack.c.l.b16 %v7141
        %v7238 = vunpack.c.l.b16 %v7142
        %v7239 = vunpack.c.l.b16 %v7143
        %v7240 = vunpack.c.l.b16 %v7144
        %v7241 = vunpack.c.l.b16 %v7145
        %v7242 = vunpack.c.l.b16 %v7146
        %v7243 = vunpack.c.l.b16 %v7147
        %v7244 = vunpack.c.l.b16 %v7148
        %v7245 = vunpack.c.l.b16 %v7149
        %v7246 = vunpack.c.l.b16 %v7150
        %v7247 = vunpack.c.l.b16 %v7151
        %v7248 = vunpack.c.l.b16 %v7152
        %v7249 = vunpack.c.l.b16 %v7153
        %v7250 = vunpack.c.l.b16 %v7154
        %v7251 = vunpack.c.l.b16 %v7155
        %v7252 = vunpack.c.l.b16 %v7156
        %v7253 = vunpack.c.l.b16 %v7157
        %v7254 = vunpack.c.l.b16 %v7158
        %v7255 = vunpack.c.l.b16 %v7159
        %v7256 = vunpack.c.l.b16 %v7160
        %v7257 = vunpack.c.l.b16 %v7161
        %v7258 = vunpack.c.l.b16 %v7162
        %v7259 = vunpack.c.l.b16 %v7163
        %v7260 = vunpack.c.l.b16 %v7164
        %v7261 = vunpack.c.l.b16 %v7165
        %v7262 = vpack.c.b16 %v7215, %v7214
        %v7263 = vpack.c.b16 %v7217, %v7216
        %v7264 = vpack.c.b16 %v7219, %v7218
        %v7265 = vpack.c.b16 %v7221, %v7220
        %v7266 = vpack.c.b16 %v7223, %v7222
        %v7267 = vpack.c.b16 %v7225, %v7224
        %v7268 = vpack.c.b16 %v7227, %v7226
        %v7269 = vpack.c.b16 %v7229, %v7228
        %v7270 = vpack.c.b16 %v7231, %v7230
        %v7271 = vpack.c.b16 %v7233, %v7232
        %v7272 = vpack.c.b16 %v7235, %v7234
        %v7273 = vpack.c.b16 %v7237, %v7236
        %v7274 = vpack.c.b16 %v7239, %v7238
        %v7275 = vpack.c.b16 %v7241, %v7240
        %v7276 = vpack.c.b16 %v7243, %v7242
        %v7277 = vpack.c.b16 %v7245, %v7244
        %v7278 = vpack.c.b16 %v7247, %v7246
        %v7279 = vpack.c.b16 %v7249, %v7248
        %v7280 = vpack.c.b16 %v7251, %v7250
        %v7281 = vpack.c.b16 %v7253, %v7252
        %v7282 = vpack.c.b16 %v7255, %v7254
        %v7283 = vpack.c.b16 %v7257, %v7256
        %v7284 = vpack.c.b16 %v7259, %v7258
        %v7285 = vpack.c.b16 %v7261, %v7260
        %7310 = vmatprep.subr.bf16.mxu0 0
        %7311 = vmatpush1.bf16.msra.mxu0 %v7262
        %7312 = vmatprep.subr.bf16.mxu0 0
        %7313 = vmatpush1.bf16.msra.mxu0 %v7263
        %7314 = vmatprep.subr.bf16.mxu0 0
        %7315 = vmatpush1.bf16.msra.mxu0 %v7264
        %7316 = vmatprep.subr.bf16.mxu0 0
        %7317 = vmatpush1.bf16.msra.mxu0 %v7265
        %7318 = vmatprep.subr.bf16.mxu0 0
        %7319 = vmatpush1.bf16.msra.mxu0 %v7266
        %7320 = vmatprep.subr.bf16.mxu0 0
        %7321 = vmatpush1.bf16.msra.mxu0 %v7267
        %7322 = vmatprep.subr.bf16.mxu0 0
        %7323 = vmatpush1.bf16.msra.mxu0 %v7268
        %7324 = vmatprep.subr.bf16.mxu0 0
        %7325 = vmatpush1.bf16.msra.mxu0 %v7269
        %7326 = vmatprep.subr.bf16.mxu0 0
        %7327 = vmatpush1.bf16.msra.mxu0 %v7270
        %7328 = vmatprep.subr.bf16.mxu0 0
        %7329 = vmatpush1.bf16.msra.mxu0 %v7271
        %7330 = vmatprep.subr.bf16.mxu0 0
        %7331 = vmatpush1.bf16.msra.mxu0 %v7272
        %7332 = vmatprep.subr.bf16.mxu0 0
        %7333 = vmatpush1.bf16.msra.mxu0 %v7273
        %7334 = vmatprep.subr.bf16.mxu0 0
        %7335 = vmatpush1.bf16.msra.mxu0 %v7274
        %7336 = vmatprep.subr.bf16.mxu0 0
        %7337 = vmatpush1.bf16.msra.mxu0 %v7275
        %7338 = vmatprep.subr.bf16.mxu0 0
        %7339 = vmatpush1.bf16.msra.mxu0 %v7276
        %7340 = vmatprep.subr.bf16.mxu0 0
        %7341 = vmatpush1.bf16.msra.mxu0 %v7277
        %7342 = vmatprep.mubr.bf16.mxu0 %v7047
        %7343 = vmatmul.mubr.bf16.gmra.mrb[0].mxu0 %v7046
        %v7344 = vpop.f32.mrb[0].mxu0
        %v7345 = vadd.f32 0.0, %v7344
        %v7346 = vpop.f32.mrb[0].mxu0
        %v7347 = vpop.f32.mrb[0].mxu0
        %v7348 = vadd.f32 0.0, %v7347
        %v7349 = vpop.f32.mrb[0].mxu0
        %7350 = vmatprep.mubr.bf16.mxu0 %v7050
        %7351 = vmatmul.mubr.bf16.gmra.mrb[0].mxu0 %v7049
        %v7352 = vpop.f32.mrb[0].mxu0
        %v7353 = vadd.f32 0.0, %v7352
        %v7354 = vpop.f32.mrb[0].mxu0
        %v7355 = vpop.f32.mrb[0].mxu0
        %v7356 = vadd.f32 0.0, %v7355
        %v7357 = vpop.f32.mrb[0].mxu0
        %7358 = vmatprep.mubr.bf16.mxu0 %v7053
        %7359 = vmatmul.mubr.bf16.gmra.mrb[0].mxu0 %v7052
        %v7360 = vpop.f32.mrb[0].mxu0
        %v7361 = vadd.f32 0.0, %v7360
        %v7362 = vpop.f32.mrb[0].mxu0
        %v7363 = vpop.f32.mrb[0].mxu0
        %v7364 = vadd.f32 0.0, %v7363
        %v7365 = vpop.f32.mrb[0].mxu0
        %7366 = vmatprep.mubr.bf16.mxu0 %v7056
        %7367 = vmatmul.mubr.bf16.gmra.mrb[0].mxu0 %v7055
        %v7368 = vpop.f32.mrb[0].mxu0
        %v7369 = vadd.f32 0.0, %v7368
        %v7370 = vpop.f32.mrb[0].mxu0
        %v7371 = vpop.f32.mrb[0].mxu0
        %v7372 = vadd.f32 0.0, %v7371
        %v7373 = vpop.f32.mrb[0].mxu0
        %7374 = vmatprep.mubr.bf16.mxu0 %v7059
        %7375 = vmatmul.mubr.bf16.gmra.mrb[0].mxu0 %v7058
        %v7376 = vpop.f32.mrb[0].mxu0
        %v7377 = vadd.f32 0.0, %v7376
        %v7378 = vpop.f32.mrb[0].mxu0
        %v7379 = vpop.f32.mrb[0].mxu0
        %v7380 = vadd.f32 0.0, %v7379
        %v7381 = vpop.f32.mrb[0].mxu0
        %7382 = vmatprep.mubr.bf16.mxu0 %v7062
        %7383 = vmatmul.mubr.bf16.gmra.mrb[0].mxu0 %v7061
        %v7384 = vpop.f32.mrb[0].mxu0
        %v7385 = vadd.f32 0.0, %v7384
        %v7386 = vpop.f32.mrb[0].mxu0
        %v7387 = vpop.f32.mrb[0].mxu0
        %v7388 = vadd.f32 0.0, %v7387
        %v7389 = vpop.f32.mrb[0].mxu0
        %7390 = vmatprep.mubr.bf16.mxu0 %v7065
        %7391 = vmatmul.mubr.bf16.gmra.mrb[0].mxu0 %v7064
        %v7392 = vpop.f32.mrb[0].mxu0
        %v7393 = vadd.f32 0.0, %v7392
        %v7394 = vpop.f32.mrb[0].mxu0
        %v7395 = vpop.f32.mrb[0].mxu0
        %v7396 = vadd.f32 0.0, %v7395
        %v7397 = vpop.f32.mrb[0].mxu0
        %7398 = vmatprep.mubr.bf16.mxu0 %v7068
        %7399 = vmatmul.mubr.bf16.gmra.mrb[0].mxu0 %v7067
        %v7400 = vpop.f32.mrb[0].mxu0
        %v7401 = vadd.f32 0.0, %v7400
        %v7402 = vpop.f32.mrb[0].mxu0
        %v7403 = vpop.f32.mrb[0].mxu0
        %v7404 = vadd.f32 0.0, %v7403
        %v7405 = vpop.f32.mrb[0].mxu0
        %7406 = vmatprep.mubr.bf16.mxu0 %v7071
        %7407 = vmatmul.mubr.bf16.gmra.mrb[0].mxu0 %v7070
        %v7408 = vpop.f32.mrb[0].mxu0
        %v7409 = vadd.f32 0.0, %v7408
        %v7410 = vpop.f32.mrb[0].mxu0
        %v7411 = vpop.f32.mrb[0].mxu0
        %v7412 = vadd.f32 0.0, %v7411
        %v7413 = vpop.f32.mrb[0].mxu0
        %7414 = vmatprep.mubr.bf16.mxu0 %v7074
        %7415 = vmatmul.mubr.bf16.gmra.mrb[0].mxu0 %v7073
        %v7416 = vpop.f32.mrb[0].mxu0
        %v7417 = vadd.f32 0.0, %v7416
        %v7418 = vpop.f32.mrb[0].mxu0
        %v7419 = vpop.f32.mrb[0].mxu0
        %v7420 = vadd.f32 0.0, %v7419
        %v7421 = vpop.f32.mrb[0].mxu0
        %7422 = vmatprep.mubr.bf16.mxu0 %v7077
        %7423 = vmatmul.mubr.bf16.gmra.mrb[0].mxu0 %v7076
        %v7424 = vpop.f32.mrb[0].mxu0
        %v7425 = vadd.f32 0.0, %v7424
        %v7426 = vpop.f32.mrb[0].mxu0
        %v7427 = vpop.f32.mrb[0].mxu0
        %v7428 = vadd.f32 0.0, %v7427
        %v7429 = vpop.f32.mrb[0].mxu0
        %7430 = vmatprep.mubr.bf16.mxu0 %v7080
        %7431 = vmatmul.mubr.bf16.gmra.mrb[0].mxu0 %v7079
        %v7432 = vpop.f32.mrb[0].mxu0
        %v7433 = vadd.f32 0.0, %v7432
        %v7434 = vpop.f32.mrb[0].mxu0
        %v7435 = vpop.f32.mrb[0].mxu0
        %v7436 = vadd.f32 0.0, %v7435
        %v7437 = vpop.f32.mrb[0].mxu0
        %7438 = vmatprep.mubr.bf16.mxu0 %v7083
        %7439 = vmatmul.mubr.bf16.gmra.mrb[0].mxu0 %v7082
        %v7440 = vpop.f32.mrb[0].mxu0
        %v7441 = vadd.f32 0.0, %v7440
        %v7442 = vpop.f32.mrb[0].mxu0
        %v7443 = vpop.f32.mrb[0].mxu0
        %v7444 = vadd.f32 0.0, %v7443
        %v7445 = vpop.f32.mrb[0].mxu0
        %7446 = vmatprep.mubr.bf16.mxu0 %v7086
        %7447 = vmatmul.mubr.bf16.gmra.mrb[0].mxu0 %v7085
        %v7448 = vpop.f32.mrb[0].mxu0
        %v7449 = vadd.f32 0.0, %v7448
        %v7450 = vpop.f32.mrb[0].mxu0
        %v7451 = vpop.f32.mrb[0].mxu0
        %v7452 = vadd.f32 0.0, %v7451
        %v7453 = vpop.f32.mrb[0].mxu0
        %7454 = vmatprep.mubr.bf16.mxu0 %v7089
        %7455 = vmatmul.mubr.bf16.gmra.mrb[0].mxu0 %v7088
        %v7456 = vpop.f32.mrb[0].mxu0
        %v7457 = vadd.f32 0.0, %v7456
        %v7458 = vpop.f32.mrb[0].mxu0
        %v7459 = vpop.f32.mrb[0].mxu0
        %v7460 = vadd.f32 0.0, %v7459
        %v7461 = vpop.f32.mrb[0].mxu0
        %7462 = vmatprep.mubr.bf16.mxu0 %v7092
        %7463 = vmatmul.mubr.bf16.gmra.mrb[0].mxu0 %v7091
        %v7464 = vpop.f32.mrb[0].mxu0
        %v7465 = vadd.f32 0.0, %v7464
        %v7466 = vpop.f32.mrb[0].mxu0
        %v7467 = vpop.f32.mrb[0].mxu0
        %v7468 = vadd.f32 0.0, %v7467
        %v7469 = vpop.f32.mrb[0].mxu0
        %7470 = vmatprep.mubr.bf16.mxu0 %v7095
        %7471 = vmatmul.mubr.bf16.gmra.mrb[0].mxu0 %v7094
        %v7472 = vpop.f32.mrb[0].mxu0
        %v7473 = vadd.f32 0.0, %v7472
        %v7474 = vpop.f32.mrb[0].mxu0
        %v7475 = vpop.f32.mrb[0].mxu0
        %v7476 = vadd.f32 0.0, %v7475
        %v7477 = vpop.f32.mrb[0].mxu0
        %7478 = vmatprep.mubr.bf16.mxu0 %v7098
        %7479 = vmatmul.mubr.bf16.gmra.mrb[0].mxu0 %v7097
        %v7480 = vpop.f32.mrb[0].mxu0
        %v7481 = vadd.f32 0.0, %v7480
        %v7482 = vpop.f32.mrb[0].mxu0
        %v7483 = vpop.f32.mrb[0].mxu0
        %v7484 = vadd.f32 0.0, %v7483
        %v7485 = vpop.f32.mrb[0].mxu0
        %7486 = vmatprep.mubr.bf16.mxu0 %v7101
        %7487 = vmatmul.mubr.bf16.gmra.mrb[0].mxu0 %v7100
        %v7488 = vpop.f32.mrb[0].mxu0
        %v7489 = vadd.f32 0.0, %v7488
        %v7490 = vpop.f32.mrb[0].mxu0
        %v7491 = vpop.f32.mrb[0].mxu0
        %v7492 = vadd.f32 0.0, %v7491
        %v7493 = vpop.f32.mrb[0].mxu0
        %7494 = vmatprep.mubr.bf16.mxu0 %v7104
        %7495 = vmatmul.mubr.bf16.gmra.mrb[0].mxu0 %v7103
        %v7496 = vpop.f32.mrb[0].mxu0
        %v7497 = vadd.f32 0.0, %v7496
        %v7498 = vpop.f32.mrb[0].mxu0
        %v7499 = vpop.f32.mrb[0].mxu0
        %v7500 = vadd.f32 0.0, %v7499
        %v7501 = vpop.f32.mrb[0].mxu0
        %7502 = vmatprep.mubr.bf16.mxu0 %v7107
        %7503 = vmatmul.mubr.bf16.gmra.mrb[0].mxu0 %v7106
        %v7504 = vpop.f32.mrb[0].mxu0
        %v7505 = vadd.f32 0.0, %v7504
        %v7506 = vpop.f32.mrb[0].mxu0
        %v7507 = vpop.f32.mrb[0].mxu0
        %v7508 = vadd.f32 0.0, %v7507
        %v7509 = vpop.f32.mrb[0].mxu0
        %7510 = vmatprep.mubr.bf16.mxu0 %v7110
        %7511 = vmatmul.mubr.bf16.gmra.mrb[0].mxu0 %v7109
        %v7512 = vpop.f32.mrb[0].mxu0
        %v7513 = vadd.f32 0.0, %v7512
        %v7514 = vpop.f32.mrb[0].mxu0
        %v7515 = vpop.f32.mrb[0].mxu0
        %v7516 = vadd.f32 0.0, %v7515
        %v7517 = vpop.f32.mrb[0].mxu0
        %7518 = vmatprep.mubr.bf16.mxu0 %v7113
        %7519 = vmatmul.mubr.bf16.gmra.mrb[0].mxu0 %v7112
        %v7520 = vpop.f32.mrb[0].mxu0
        %v7521 = vadd.f32 0.0, %v7520
        %v7522 = vpop.f32.mrb[0].mxu0
        %v7523 = vpop.f32.mrb[0].mxu0
        %v7524 = vadd.f32 0.0, %v7523
        %v7525 = vpop.f32.mrb[0].mxu0
        %7526 = vmatprep.mubr.bf16.mxu0 %v7116
        %7527 = vmatmul.mubr.bf16.gmra.mrb[0].mxu0 %v7115
        %v7528 = vpop.f32.mrb[0].mxu0
        %v7529 = vadd.f32 0.0, %v7528
        %v7530 = vpop.f32.mrb[0].mxu0
        %v7531 = vpop.f32.mrb[0].mxu0
        %v7532 = vadd.f32 0.0, %v7531
        %v7533 = vpop.f32.mrb[0].mxu0
        %7534 = vdwg.mxu0
        %7535 = vmatprep.subr.bf16.mxu0 0
        %7536 = vmatpush1.bf16.msra.mxu0 %v7278
        %7537 = vmatprep.subr.bf16.mxu0 0
        %7538 = vmatpush1.bf16.msra.mxu0 %v7279
        %7539 = vmatprep.subr.bf16.mxu0 0
        %7540 = vmatpush1.bf16.msra.mxu0 %v7280
        %7541 = vmatprep.subr.bf16.mxu0 0
        %7542 = vmatpush1.bf16.msra.mxu0 %v7281
        %7543 = vmatprep.subr.bf16.mxu0 0
        %7544 = vmatpush1.bf16.msra.mxu0 %v7282
        %7545 = vmatprep.subr.bf16.mxu0 0
        %7546 = vmatpush1.bf16.msra.mxu0 %v7283
        %7547 = vmatprep.subr.bf16.mxu0 0
        %7548 = vmatpush1.bf16.msra.mxu0 %v7284
        %7549 = vmatprep.subr.bf16.mxu0 0
        %7550 = vmatpush1.bf16.msra.mxu0 %v7285
        %7551 = vmatprep.subr.bf16.mxu0 0
        %7552 = vmatpush1.bf16.msra.mxu0 0
        %7553 = vmatprep.subr.bf16.mxu0 0
        %7554 = vmatpush1.bf16.msra.mxu0 0
        %7555 = vmatprep.subr.bf16.mxu0 0
        %7556 = vmatpush1.bf16.msra.mxu0 0
        %7557 = vmatprep.subr.bf16.mxu0 0
        %7558 = vmatpush1.bf16.msra.mxu0 0
        %7559 = vmatprep.subr.bf16.mxu0 0
        %7560 = vmatpush1.bf16.msra.mxu0 0
        %7561 = vmatprep.subr.bf16.mxu0 0
        %7562 = vmatpush1.bf16.msra.mxu0 0
        %7563 = vmatprep.subr.bf16.mxu0 0
        %7564 = vmatpush1.bf16.msra.mxu0 0
        %7565 = vmatprep.subr.bf16.mxu0 0
        %7566 = vmatpush1.bf16.msra.mxu0 0
        %7567 = vmatprep.mubr.bf16.mxu0 0
        %7568 = vmatmul.mubr.bf16.gmra.mrb[0].mxu0 %v7048
        %v7569 = vpop.f32.mrb[0].mxu0
        %v7570 = vadd.f32 %v7345, %v7569
        %v7571 = vpop.f32.mrb[0].mxu0
        %v7572 = vpop.f32.mrb[0].mxu0
        %v7573 = vadd.f32 %v7348, %v7572
        %v7574 = vpop.f32.mrb[0].mxu0
        %7575 = vmatprep.mubr.bf16.mxu0 0
        %7576 = vmatmul.mubr.bf16.gmra.mrb[0].mxu0 %v7051
        %v7577 = vpop.f32.mrb[0].mxu0
        %v7578 = vadd.f32 %v7353, %v7577
        %v7579 = vpop.f32.mrb[0].mxu0
        %v7580 = vpop.f32.mrb[0].mxu0
        %v7581 = vadd.f32 %v7356, %v7580
        %v7582 = vpop.f32.mrb[0].mxu0
        %7583 = vmatprep.mubr.bf16.mxu0 0
        %7584 = vmatmul.mubr.bf16.gmra.mrb[0].mxu0 %v7054
        %v7585 = vpop.f32.mrb[0].mxu0
        %v7586 = vadd.f32 %v7361, %v7585
        %v7587 = vpop.f32.mrb[0].mxu0
        %v7588 = vpop.f32.mrb[0].mxu0
        %v7589 = vadd.f32 %v7364, %v7588
        %v7590 = vpop.f32.mrb[0].mxu0
        %7591 = vmatprep.mubr.bf16.mxu0 0
        %7592 = vmatmul.mubr.bf16.gmra.mrb[0].mxu0 %v7057
        %v7593 = vpop.f32.mrb[0].mxu0
        %v7594 = vadd.f32 %v7369, %v7593
        %v7595 = vpop.f32.mrb[0].mxu0
        %v7596 = vpop.f32.mrb[0].mxu0
        %v7597 = vadd.f32 %v7372, %v7596
        %v7598 = vpop.f32.mrb[0].mxu0
        %7599 = vmatprep.mubr.bf16.mxu0 0
        %7600 = vmatmul.mubr.bf16.gmra.mrb[0].mxu0 %v7060
        %v7601 = vpop.f32.mrb[0].mxu0
        %v7602 = vadd.f32 %v7377, %v7601
        %v7603 = vpop.f32.mrb[0].mxu0
        %v7604 = vpop.f32.mrb[0].mxu0
        %v7605 = vadd.f32 %v7380, %v7604
        %v7606 = vpop.f32.mrb[0].mxu0
        %7607 = vmatprep.mubr.bf16.mxu0 0
        %7608 = vmatmul.mubr.bf16.gmra.mrb[0].mxu0 %v7063
        %v7609 = vpop.f32.mrb[0].mxu0
        %v7610 = vadd.f32 %v7385, %v7609
        %v7611 = vpop.f32.mrb[0].mxu0
        %v7612 = vpop.f32.mrb[0].mxu0
        %v7613 = vadd.f32 %v7388, %v7612
        %v7614 = vpop.f32.mrb[0].mxu0
        %7615 = vmatprep.mubr.bf16.mxu0 0
        %7616 = vmatmul.mubr.bf16.gmra.mrb[0].mxu0 %v7066
        %v7617 = vpop.f32.mrb[0].mxu0
        %v7618 = vadd.f32 %v7393, %v7617
        %v7619 = vpop.f32.mrb[0].mxu0
        %v7620 = vpop.f32.mrb[0].mxu0
        %v7621 = vadd.f32 %v7396, %v7620
        %v7622 = vpop.f32.mrb[0].mxu0
        %7623 = vmatprep.mubr.bf16.mxu0 0
        %7624 = vmatmul.mubr.bf16.gmra.mrb[0].mxu0 %v7069
        %v7625 = vpop.f32.mrb[0].mxu0
        %v7626 = vadd.f32 %v7401, %v7625
        %v7627 = vpop.f32.mrb[0].mxu0
        %v7628 = vpop.f32.mrb[0].mxu0
        %v7629 = vadd.f32 %v7404, %v7628
        %v7630 = vpop.f32.mrb[0].mxu0
        %7631 = vmatprep.mubr.bf16.mxu0 0
        %7632 = vmatmul.mubr.bf16.gmra.mrb[0].mxu0 %v7072
        %v7633 = vpop.f32.mrb[0].mxu0
        %v7634 = vadd.f32 %v7409, %v7633
        %v7635 = vpop.f32.mrb[0].mxu0
        %v7636 = vpop.f32.mrb[0].mxu0
        %v7637 = vadd.f32 %v7412, %v7636
        %v7638 = vpop.f32.mrb[0].mxu0
        %7639 = vmatprep.mubr.bf16.mxu0 0
        %7640 = vmatmul.mubr.bf16.gmra.mrb[0].mxu0 %v7075
        %v7641 = vpop.f32.mrb[0].mxu0
        %v7642 = vadd.f32 %v7417, %v7641
        %v7643 = vpop.f32.mrb[0].mxu0
        %v7644 = vpop.f32.mrb[0].mxu0
        %v7645 = vadd.f32 %v7420, %v7644
        %v7646 = vpop.f32.mrb[0].mxu0
        %7647 = vmatprep.mubr.bf16.mxu0 0
        %7648 = vmatmul.mubr.bf16.gmra.mrb[0].mxu0 %v7078
        %v7649 = vpop.f32.mrb[0].mxu0
        %v7650 = vadd.f32 %v7425, %v7649
        %v7651 = vpop.f32.mrb[0].mxu0
        %v7652 = vpop.f32.mrb[0].mxu0
        %v7653 = vadd.f32 %v7428, %v7652
        %v7654 = vpop.f32.mrb[0].mxu0
        %7655 = vmatprep.mubr.bf16.mxu0 0
        %7656 = vmatmul.mubr.bf16.gmra.mrb[0].mxu0 %v7081
        %v7657 = vpop.f32.mrb[0].mxu0
        %v7658 = vadd.f32 %v7433, %v7657
        %v7659 = vpop.f32.mrb[0].mxu0
        %v7660 = vpop.f32.mrb[0].mxu0
        %v7661 = vadd.f32 %v7436, %v7660
        %v7662 = vpop.f32.mrb[0].mxu0
        %7663 = vmatprep.mubr.bf16.mxu0 0
        %7664 = vmatmul.mubr.bf16.gmra.mrb[0].mxu0 %v7084
        %v7665 = vpop.f32.mrb[0].mxu0
        %v7666 = vadd.f32 %v7441, %v7665
        %v7667 = vpop.f32.mrb[0].mxu0
        %v7668 = vpop.f32.mrb[0].mxu0
        %v7669 = vadd.f32 %v7444, %v7668
        %v7670 = vpop.f32.mrb[0].mxu0
        %7671 = vmatprep.mubr.bf16.mxu0 0
        %7672 = vmatmul.mubr.bf16.gmra.mrb[0].mxu0 %v7087
        %v7673 = vpop.f32.mrb[0].mxu0
        %v7674 = vadd.f32 %v7449, %v7673
        %v7675 = vpop.f32.mrb[0].mxu0
        %v7676 = vpop.f32.mrb[0].mxu0
        %v7677 = vadd.f32 %v7452, %v7676
        %v7678 = vpop.f32.mrb[0].mxu0
        %7679 = vmatprep.mubr.bf16.mxu0 0
        %7680 = vmatmul.mubr.bf16.gmra.mrb[0].mxu0 %v7090
        %v7681 = vpop.f32.mrb[0].mxu0
        %v7682 = vadd.f32 %v7457, %v7681
        %v7683 = vpop.f32.mrb[0].mxu0
        %v7684 = vpop.f32.mrb[0].mxu0
        %v7685 = vadd.f32 %v7460, %v7684
        %v7686 = vpop.f32.mrb[0].mxu0
        %7687 = vmatprep.mubr.bf16.mxu0 0
        %7688 = vmatmul.mubr.bf16.gmra.mrb[0].mxu0 %v7093
        %v7689 = vpop.f32.mrb[0].mxu0
        %v7690 = vadd.f32 %v7465, %v7689
        %v7691 = vpop.f32.mrb[0].mxu0
        %v7692 = vpop.f32.mrb[0].mxu0
        %v7693 = vadd.f32 %v7468, %v7692
        %v7694 = vpop.f32.mrb[0].mxu0
        %7695 = vmatprep.mubr.bf16.mxu0 0
        %7696 = vmatmul.mubr.bf16.gmra.mrb[0].mxu0 %v7096
        %v7697 = vpop.f32.mrb[0].mxu0
        %v7698 = vadd.f32 %v7473, %v7697
        %v7699 = vpop.f32.mrb[0].mxu0
        %v7700 = vpop.f32.mrb[0].mxu0
        %v7701 = vadd.f32 %v7476, %v7700
        %v7702 = vpop.f32.mrb[0].mxu0
        %7703 = vmatprep.mubr.bf16.mxu0 0
        %7704 = vmatmul.mubr.bf16.gmra.mrb[0].mxu0 %v7099
        %v7705 = vpop.f32.mrb[0].mxu0
        %v7706 = vadd.f32 %v7481, %v7705
        %v7707 = vpop.f32.mrb[0].mxu0
        %v7708 = vpop.f32.mrb[0].mxu0
        %v7709 = vadd.f32 %v7484, %v7708
        %v7710 = vpop.f32.mrb[0].mxu0
        %7711 = vmatprep.mubr.bf16.mxu0 0
        %7712 = vmatmul.mubr.bf16.gmra.mrb[0].mxu0 %v7102
        %v7713 = vpop.f32.mrb[0].mxu0
        %v7714 = vadd.f32 %v7489, %v7713
        %v7715 = vpop.f32.mrb[0].mxu0
        %v7716 = vpop.f32.mrb[0].mxu0
        %v7717 = vadd.f32 %v7492, %v7716
        %v7718 = vpop.f32.mrb[0].mxu0
        %7719 = vmatprep.mubr.bf16.mxu0 0
        %7720 = vmatmul.mubr.bf16.gmra.mrb[0].mxu0 %v7105
        %v7721 = vpop.f32.mrb[0].mxu0
        %v7722 = vadd.f32 %v7497, %v7721
        %v7723 = vpop.f32.mrb[0].mxu0
        %v7724 = vpop.f32.mrb[0].mxu0
        %v7725 = vadd.f32 %v7500, %v7724
        %v7726 = vpop.f32.mrb[0].mxu0
        %7727 = vmatprep.mubr.bf16.mxu0 0
        %7728 = vmatmul.mubr.bf16.gmra.mrb[0].mxu0 %v7108
        %v7729 = vpop.f32.mrb[0].mxu0
        %v7730 = vadd.f32 %v7505, %v7729
        %v7731 = vpop.f32.mrb[0].mxu0
        %v7732 = vpop.f32.mrb[0].mxu0
        %v7733 = vadd.f32 %v7508, %v7732
        %v7734 = vpop.f32.mrb[0].mxu0
        %7735 = vmatprep.mubr.bf16.mxu0 0
        %7736 = vmatmul.mubr.bf16.gmra.mrb[0].mxu0 %v7111
        %v7737 = vpop.f32.mrb[0].mxu0
        %v7738 = vadd.f32 %v7513, %v7737
        %v7739 = vpop.f32.mrb[0].mxu0
        %v7740 = vpop.f32.mrb[0].mxu0
        %v7741 = vadd.f32 %v7516, %v7740
        %v7742 = vpop.f32.mrb[0].mxu0
        %7743 = vmatprep.mubr.bf16.mxu0 0
        %7744 = vmatmul.mubr.bf16.gmra.mrb[0].mxu0 %v7114
        %v7745 = vpop.f32.mrb[0].mxu0
        %v7746 = vadd.f32 %v7521, %v7745
        %v7747 = vpop.f32.mrb[0].mxu0
        %v7748 = vpop.f32.mrb[0].mxu0
        %v7749 = vadd.f32 %v7524, %v7748
        %v7750 = vpop.f32.mrb[0].mxu0
        %7751 = vmatprep.mubr.bf16.mxu0 0
        %7752 = vmatmul.mubr.bf16.gmra.mrb[0].mxu0 %v7117
        %v7753 = vpop.f32.mrb[0].mxu0
        %v7754 = vadd.f32 %v7529, %v7753
        %v7755 = vpop.f32.mrb[0].mxu0
        %v7756 = vpop.f32.mrb[0].mxu0
        %v7757 = vadd.f32 %v7532, %v7756
        %v7758 = vpop.f32.mrb[0].mxu0
        %7759 = vdwg.mxu0
        %7760 = vst [vmem:[#allocation4] sm:$0xff] %v7570
        %7761 = vst [vmem:[#allocation4 + $0x8] sm:$0xff] %v7573
        %7762 = vst [vmem:[#allocation4 + $0x10] sm:$0xff] %v7578
        %7763 = vst [vmem:[#allocation4 + $0x18] sm:$0xff] %v7581
        %7764 = vst [vmem:[#allocation4 + $0x20] sm:$0xff] %v7586
        %7765 = vst [vmem:[#allocation4 + $0x28] sm:$0xff] %v7589
        %7766 = vst [vmem:[#allocation4 + $0x30] sm:$0xff] %v7594
        %7767 = vst [vmem:[#allocation4 + $0x38] sm:$0xff] %v7597
        %7768 = vst [vmem:[#allocation4 + $0x40] sm:$0xff] %v7602
        %7769 = vst [vmem:[#allocation4 + $0x48] sm:$0xff] %v7605
        %7770 = vst [vmem:[#allocation4 + $0x50] sm:$0xff] %v7610
        %7771 = vst [vmem:[#allocation4 + $0x58] sm:$0xff] %v7613
        %7772 = vst [vmem:[#allocation4 + $0x60] sm:$0xff] %v7618
        %7773 = vst [vmem:[#allocation4 + $0x68] sm:$0xff] %v7621
        %7774 = vst [vmem:[#allocation4 + $0x70] sm:$0xff] %v7626
        %7775 = vst [vmem:[#allocation4 + $0x78] sm:$0xff] %v7629
        %7776 = vst [vmem:[#allocation4 + $0x80] sm:$0xff] %v7634
        %7777 = vst [vmem:[#allocation4 + $0x88] sm:$0xff] %v7637
        %7778 = vst [vmem:[#allocation4 + $0x90] sm:$0xff] %v7642
        %7779 = vst [vmem:[#allocation4 + $0x98] sm:$0xff] %v7645
        %7780 = vst [vmem:[#allocation4 + $0xa0] sm:$0xff] %v7650
        %7781 = vst [vmem:[#allocation4 + $0xa8] sm:$0xff] %v7653
        %7782 = vst [vmem:[#allocation4 + $0xb0] sm:$0xff] %v7658
        %7783 = vst [vmem:[#allocation4 + $0xb8] sm:$0xff] %v7661
        %7784 = vst [vmem:[#allocation4 + $0xc0] sm:$0xff] %v7666
        %7785 = vst [vmem:[#allocation4 + $0xc8] sm:$0xff] %v7669
        %7786 = vst [vmem:[#allocation4 + $0xd0] sm:$0xff] %v7674
        %7787 = vst [vmem:[#allocation4 + $0xd8] sm:$0xff] %v7677
        %7788 = vst [vmem:[#allocation4 + $0xe0] sm:$0xff] %v7682
        %7789 = vst [vmem:[#allocation4 + $0xe8] sm:$0xff] %v7685
        %7790 = vst [vmem:[#allocation4 + $0xf0] sm:$0xff] %v7690
        %7791 = vst [vmem:[#allocation4 + $0xf8] sm:$0xff] %v7693
        %7792 = vst [vmem:[#allocation4 + $0x100] sm:$0xff] %v7698
        %7793 = vst [vmem:[#allocation4 + $0x108] sm:$0xff] %v7701
        %7794 = vst [vmem:[#allocation4 + $0x110] sm:$0xff] %v7706
        %7795 = vst [vmem:[#allocation4 + $0x118] sm:$0xff] %v7709
        %7796 = vst [vmem:[#allocation4 + $0x120] sm:$0xff] %v7714
        %7797 = vst [vmem:[#allocation4 + $0x128] sm:$0xff] %v7717
        %7798 = vst [vmem:[#allocation4 + $0x130] sm:$0xff] %v7722
        %7799 = vst [vmem:[#allocation4 + $0x138] sm:$0xff] %v7725
        %7800 = vst [vmem:[#allocation4 + $0x140] sm:$0xff] %v7730
        %7801 = vst [vmem:[#allocation4 + $0x148] sm:$0xff] %v7733
        %7802 = vst [vmem:[#allocation4 + $0x150] sm:$0xff] %v7738
        %7803 = vst [vmem:[#allocation4 + $0x158] sm:$0xff] %v7741
        %7804 = vst [vmem:[#allocation4 + $0x160] sm:$0xff] %v7746
        %7805 = vst [vmem:[#allocation4 + $0x168] sm:$0xff] %v7749
        %7806 = vst [vmem:[#allocation4 + $0x170] sm:$0xff] %v7754
        %7807 = vst [vmem:[#allocation4 + $0x178] sm:$0xff] %v7757
        %v7808 = vld [vmem:[#allocation4] sm:$0xff]
        %v7809 = vld [vmem:[#allocation4 + $0x8] sm:$0xff]
        %v7810 = vld [vmem:[#allocation4 + $0x10] sm:$0xff]
        %v7811 = vld [vmem:[#allocation4 + $0x18] sm:$0xff]
        %v7812 = vld [vmem:[#allocation4 + $0x20] sm:$0xff]
        %v7813 = vld [vmem:[#allocation4 + $0x28] sm:$0xff]
        %v7814 = vld [vmem:[#allocation4 + $0x30] sm:$0xff]
        %v7815 = vld [vmem:[#allocation4 + $0x38] sm:$0xff]
        %v7816 = vld [vmem:[#allocation4 + $0x40] sm:$0xff]
        %v7817 = vld [vmem:[#allocation4 + $0x48] sm:$0xff]
        %v7818 = vld [vmem:[#allocation4 + $0x50] sm:$0xff]
        %v7819 = vld [vmem:[#allocation4 + $0x58] sm:$0xff]
        %v7820 = vld [vmem:[#allocation4 + $0x60] sm:$0xff]
        %v7821 = vld [vmem:[#allocation4 + $0x68] sm:$0xff]
        %v7822 = vld [vmem:[#allocation4 + $0x70] sm:$0xff]
        %v7823 = vld [vmem:[#allocation4 + $0x78] sm:$0xff]
        %v7824 = vld [vmem:[#allocation4 + $0x80] sm:$0xff]
        %v7825 = vld [vmem:[#allocation4 + $0x88] sm:$0xff]
        %v7826 = vld [vmem:[#allocation4 + $0x90] sm:$0xff]
        %v7827 = vld [vmem:[#allocation4 + $0x98] sm:$0xff]
        %v7828 = vld [vmem:[#allocation4 + $0xa0] sm:$0xff]
        %v7829 = vld [vmem:[#allocation4 + $0xa8] sm:$0xff]
        %v7830 = vld [vmem:[#allocation4 + $0xb0] sm:$0xff]
        %v7831 = vld [vmem:[#allocation4 + $0xb8] sm:$0xff]
        %v7832 = vld [vmem:[#allocation4 + $0xc0] sm:$0xff]
        %v7833 = vld [vmem:[#allocation4 + $0xc8] sm:$0xff]
        %v7834 = vld [vmem:[#allocation4 + $0xd0] sm:$0xff]
        %v7835 = vld [vmem:[#allocation4 + $0xd8] sm:$0xff]
        %v7836 = vld [vmem:[#allocation4 + $0xe0] sm:$0xff]
        %v7837 = vld [vmem:[#allocation4 + $0xe8] sm:$0xff]
        %v7838 = vld [vmem:[#allocation4 + $0xf0] sm:$0xff]
        %v7839 = vld [vmem:[#allocation4 + $0xf8] sm:$0xff]
        %v7840 = vld [vmem:[#allocation4 + $0x100] sm:$0xff]
        %v7841 = vld [vmem:[#allocation4 + $0x108] sm:$0xff]
        %v7842 = vld [vmem:[#allocation4 + $0x110] sm:$0xff]
        %v7843 = vld [vmem:[#allocation4 + $0x118] sm:$0xff]
        %v7844 = vld [vmem:[#allocation4 + $0x120] sm:$0xff]
        %v7845 = vld [vmem:[#allocation4 + $0x128] sm:$0xff]
        %v7846 = vld [vmem:[#allocation4 + $0x130] sm:$0xff]
        %v7847 = vld [vmem:[#allocation4 + $0x138] sm:$0xff]
        %v7848 = vld [vmem:[#allocation4 + $0x140] sm:$0xff]
        %v7849 = vld [vmem:[#allocation4 + $0x148] sm:$0xff]
        %v7850 = vld [vmem:[#allocation4 + $0x150] sm:$0xff]
        %v7851 = vld [vmem:[#allocation4 + $0x158] sm:$0xff]
        %v7852 = vld [vmem:[#allocation4 + $0x160] sm:$0xff]
        %v7853 = vld [vmem:[#allocation4 + $0x168] sm:$0xff]
        %v7854 = vld [vmem:[#allocation4 + $0x170] sm:$0xff]
        %v7855 = vld [vmem:[#allocation4 + $0x178] sm:$0xff]
        %v7856 = vld [vmem:[#allocation2 + $0x18] sm:$0xf0]
        %v7857 = vld [vmem:[#allocation2 + $0x20] sm:$0xf0]
        %v7858 = vld [vmem:[#allocation2 + $0x28] sm:$0xf0]
        %v7859 = vld [vmem:[#allocation2 + $0x30] sm:$0xff]
        %v7860 = vld [vmem:[#allocation2 + $0x38] sm:$0xff]
        %v7861 = vld [vmem:[#allocation2 + $0x40] sm:$0xff]
        %v7862 = vld [vmem:[#allocation2 + $0x48] sm:$0xff]
        %v7863 = vld [vmem:[#allocation2 + $0x50] sm:$0xff]
        %v7864 = vld [vmem:[#allocation2 + $0x58] sm:$0xff]
        %v7865 = vld [vmem:[#allocation2 + $0x60] sm:$0xff]
        %v7866 = vld [vmem:[#allocation2 + $0x68] sm:$0xff]
        %v7867 = vld [vmem:[#allocation2 + $0x70] sm:$0xff]
        %v7868 = vld [vmem:[#allocation2 + $0x78] sm:$0xff]
        %v7869 = vld [vmem:[#allocation2 + $0x80] sm:$0xff]
        %v7870 = vld [vmem:[#allocation2 + $0x88] sm:$0xff]
        %v7871 = vld [vmem:[#allocation2 + $0x90] sm:$0xff]
        %v7872 = vld [vmem:[#allocation2 + $0x98] sm:$0xff]
        %v7873 = vld [vmem:[#allocation2 + $0xa0] sm:$0xff]
        %v7874 = vld [vmem:[#allocation2 + $0xa8] sm:$0xff]
        %v7875 = vld [vmem:[#allocation2 + $0xb0] sm:$0xff]
        %v7876 = vld [vmem:[#allocation2 + $0xb8] sm:$0xff]
        %v7877 = vld [vmem:[#allocation2 + $0xc0] sm:$0xff]
        %v7878 = vld [vmem:[#allocation2 + $0xc8] sm:$0xff]
        %v7879 = vld [vmem:[#allocation2 + $0xd0] sm:$0xff]
        %v7880 = vld [vmem:[#allocation2 + $0xd8] sm:$0xff]
        %v7881 = vld [vmem:[#allocation2 + $0xe0] sm:$0xff]
        %v7882 = vld [vmem:[#allocation2 + $0xe8] sm:$0xff]
        %v7883 = vld [vmem:[#allocation2 + $0xf0] sm:$0xff]
        %v7884 = vld [vmem:[#allocation2 + $0xf8] sm:$0xff]
        %v7885 = vld [vmem:[#allocation2 + $0x100] sm:$0xff]
        %v7886 = vld [vmem:[#allocation2 + $0x108] sm:$0xff]
        %v7887 = vld [vmem:[#allocation2 + $0x110] sm:$0xff]
        %v7888 = vld [vmem:[#allocation2 + $0x118] sm:$0xff]
        %v7889 = vld [vmem:[#allocation2 + $0x120] sm:$0xff]
        %v7890 = vld [vmem:[#allocation2 + $0x128] sm:$0xff]
        %v7891 = vld [vmem:[#allocation2 + $0x130] sm:$0xff]
        %v7892 = vld [vmem:[#allocation2 + $0x138] sm:$0xff]
        %v7893 = vld [vmem:[#allocation2 + $0x140] sm:$0xff]
        %v7894 = vld [vmem:[#allocation2 + $0x148] sm:$0xff]
        %v7895 = vld [vmem:[#allocation2 + $0x150] sm:$0xff]
        %v7896 = vld [vmem:[#allocation2 + $0x158] sm:$0xff]
        %v7897 = vld [vmem:[#allocation2 + $0x160] sm:$0xff]
        %v7898 = vld [vmem:[#allocation2 + $0x168] sm:$0xff]
        %v7899 = vld [vmem:[#allocation2 + $0x170] sm:$0xff]
        %v7900 = vld [vmem:[#allocation2 + $0x178] sm:$0xff]
        %v7901 = vld [vmem:[#allocation2 + $0x180] sm:$0xff]
        %v7902 = vld [vmem:[#allocation2 + $0x188] sm:$0xff]
        %v7903 = vld [vmem:[#allocation2 + $0x190] sm:$0xff]
        %v7904 = vld [vmem:[#allocation2 + $0x198] sm:$0xff]
        %v7905 = vld [vmem:[#allocation2 + $0x1a0] sm:$0xff]
        %v7906 = vld [vmem:[#allocation2 + $0x1a8] sm:$0xff]
        %v7907 = vld [vmem:[#allocation2 + $0x1b0] sm:$0xff]
        %v7908 = vld [vmem:[#allocation2 + $0x1b8] sm:$0xff]
        %v7909 = vld [vmem:[#allocation2 + $0x1c0] sm:$0xff]
        %v7910 = vld [vmem:[#allocation2 + $0x1c8] sm:$0xff]
        %v7911 = vld [vmem:[#allocation2 + $0x1d0] sm:$0xff]
        %v7912 = vld [vmem:[#allocation2 + $0x1d8] sm:$0xff]
        %v7913 = vld [vmem:[#allocation2 + $0x1e0] sm:$0xff]
        %v7914 = vld [vmem:[#allocation2 + $0x1e8] sm:$0xff]
        %v7915 = vld [vmem:[#allocation2 + $0x1f0] sm:$0xff]
        %v7916 = vld [vmem:[#allocation2 + $0x1f8] sm:$0xff]
        %v7917 = vld [vmem:[#allocation2 + $0x200] sm:$0xff]
        %v7918 = vld [vmem:[#allocation2 + $0x208] sm:$0xff]
        %v7919 = vld [vmem:[#allocation2 + $0x210] sm:$0xff]
        %v7920 = vld [vmem:[#allocation2 + $0x218] sm:$0xff]
        %v7921 = vld [vmem:[#allocation2 + $0x220] sm:$0xff]
        %v7922 = vld [vmem:[#allocation2 + $0x228] sm:$0xff]
        %v7923 = vld [vmem:[#allocation2 + $0x230] sm:$0xff]
        %v7924 = vld [vmem:[#allocation2 + $0x238] sm:$0xff]
        %v7925 = vld [vmem:[#allocation2 + $0x240] sm:$0xff]
        %v7926 = vld [vmem:[#allocation2 + $0x248] sm:$0xff]
        %v7927 = vld [vmem:[#allocation2 + $0x250] sm:$0xff]
        %v7928 = vld [vmem:[#allocation2 + $0x258] sm:$0xf]
        %v7929 = vld [vmem:[#allocation2 + $0x260] sm:$0xf]
        %v7930 = vld [vmem:[#allocation2 + $0x268] sm:$0xf]
        %s7931 = scalar_lea.vmem [#allocation10], 192
        %v7932 = vld [vmem:[%s7931] sm:$0xf]
        %v7933 = vld [vmem:[%s7931 + $0x4] sm:$0xf]
        %v7934 = vld [vmem:[%s7931 + $0x8] sm:$0xf]
        %v7935 = vld [vmem:[%s7931 + $0xc] sm:$0xf]
        %v7936 = vld [vmem:[%s7931 + $0x10] sm:$0xf]
        %v7937 = vld [vmem:[%s7931 + $0x14] sm:$0xf]
        %v7938 = vld [vmem:[%s7931 + $0x18] sm:$0xf]
        %v7939 = vld [vmem:[%s7931 + $0x1c] sm:$0xf]
        %v7940 = vld [vmem:[%s7931 + $0x20] sm:$0xf]
        %v7941 = vld [vmem:[%s7931 + $0x24] sm:$0xf]
        %v7942 = vld [vmem:[%s7931 + $0x28] sm:$0xf]
        %v7943 = vld [vmem:[%s7931 + $0x2c] sm:$0xf]
        %v7944 = vld [vmem:[%s7931 + $0x30] sm:$0xf]
        %v7945 = vld [vmem:[%s7931 + $0x34] sm:$0xf]
        %v7946 = vld [vmem:[%s7931 + $0x38] sm:$0xf]
        %v7947 = vld [vmem:[%s7931 + $0x3c] sm:$0xf]
        %v7948 = vld [vmem:[%s7931 + $0x40] sm:$0xf]
        %v7949 = vld [vmem:[%s7931 + $0x44] sm:$0xf]
        %v7950 = vld [vmem:[%s7931 + $0x48] sm:$0xf]
        %v7951 = vld [vmem:[%s7931 + $0x4c] sm:$0xf]
        %v7952 = vld [vmem:[%s7931 + $0x50] sm:$0xf]
        %v7953 = vld [vmem:[%s7931 + $0x54] sm:$0xf]
        %v7954 = vld [vmem:[%s7931 + $0x58] sm:$0xf]
        %v7955 = vld [vmem:[%s7931 + $0x5c] sm:$0xf]
        %v7956 = vld [vmem:[%s7931 + $0x60] sm:$0xf]
        %v7957 = vld [vmem:[%s7931 + $0x64] sm:$0xf]
        %v7958 = vld [vmem:[%s7931 + $0x68] sm:$0xf]
        %v7959 = vld [vmem:[%s7931 + $0x6c] sm:$0xf]
        %v7960 = vld [vmem:[%s7931 + $0x70] sm:$0xf]
        %v7961 = vld [vmem:[%s7931 + $0x74] sm:$0xf]
        %v7962 = vld [vmem:[%s7931 + $0x78] sm:$0xf]
        %v7963 = vld [vmem:[%s7931 + $0x7c] sm:$0xf]
        %v7964 = vld [vmem:[%s7931 + $0x80] sm:$0xf]
        %v7965 = vld [vmem:[%s7931 + $0x84] sm:$0xf]
        %v7966 = vld [vmem:[%s7931 + $0x88] sm:$0xf]
        %v7967 = vld [vmem:[%s7931 + $0x8c] sm:$0xf]
        %v7968 = vld [vmem:[%s7931 + $0x90] sm:$0xf]
        %v7969 = vld [vmem:[%s7931 + $0x94] sm:$0xf]
        %v7970 = vld [vmem:[%s7931 + $0x98] sm:$0xf]
        %v7971 = vld [vmem:[%s7931 + $0x9c] sm:$0xf]
        %v7972 = vld [vmem:[%s7931 + $0xa0] sm:$0xf]
        %v7973 = vld [vmem:[%s7931 + $0xa4] sm:$0xf]
        %v7974 = vld [vmem:[%s7931 + $0xa8] sm:$0xf]
        %v7975 = vld [vmem:[%s7931 + $0xac] sm:$0xf]
        %v7976 = vld [vmem:[%s7931 + $0xb0] sm:$0xf]
        %v7977 = vld [vmem:[%s7931 + $0xb4] sm:$0xf]
        %v7978 = vld [vmem:[%s7931 + $0xb8] sm:$0xf]
        %v7979 = vld [vmem:[%s7931 + $0xbc] sm:$0xf]
        %v8055 = vrot.slane %v7856, 4
        %v8056 = vrot.slane %v7859, 4
        %v8057 = vsel %vm3219, %v8055, %v8056
        %v8058 = vrot.slane %v7857, 4
        %v8059 = vrot.slane %v7860, 4
        %v8060 = vsel %vm3219, %v8058, %v8059
        %v8061 = vrot.slane %v7858, 4
        %v8062 = vrot.slane %v7861, 4
        %v8063 = vsel %vm3219, %v8061, %v8062
        %v8064 = vrot.slane %v7862, 4
        %v8065 = vsel %vm3219, %v8056, %v8064
        %v8066 = vrot.slane %v7863, 4
        %v8067 = vsel %vm3219, %v8059, %v8066
        %v8068 = vrot.slane %v7864, 4
        %v8069 = vsel %vm3219, %v8062, %v8068
        %v8070 = vrot.slane %v7865, 4
        %v8071 = vsel %vm3219, %v8064, %v8070
        %v8072 = vrot.slane %v7866, 4
        %v8073 = vsel %vm3219, %v8066, %v8072
        %v8074 = vrot.slane %v7867, 4
        %v8075 = vsel %vm3219, %v8068, %v8074
        %v8076 = vrot.slane %v7868, 4
        %v8077 = vsel %vm3219, %v8070, %v8076
        %v8078 = vrot.slane %v7869, 4
        %v8079 = vsel %vm3219, %v8072, %v8078
        %v8080 = vrot.slane %v7870, 4
        %v8081 = vsel %vm3219, %v8074, %v8080
        %v8082 = vrot.slane %v7871, 4
        %v8083 = vsel %vm3219, %v8076, %v8082
        %v8084 = vrot.slane %v7872, 4
        %v8085 = vsel %vm3219, %v8078, %v8084
        %v8086 = vrot.slane %v7873, 4
        %v8087 = vsel %vm3219, %v8080, %v8086
        %v8088 = vrot.slane %v7874, 4
        %v8089 = vsel %vm3219, %v8082, %v8088
        %v8090 = vrot.slane %v7875, 4
        %v8091 = vsel %vm3219, %v8084, %v8090
        %v8092 = vrot.slane %v7876, 4
        %v8093 = vsel %vm3219, %v8086, %v8092
        %v8094 = vrot.slane %v7877, 4
        %v8095 = vsel %vm3219, %v8088, %v8094
        %v8096 = vrot.slane %v7878, 4
        %v8097 = vsel %vm3219, %v8090, %v8096
        %v8098 = vrot.slane %v7879, 4
        %v8099 = vsel %vm3219, %v8092, %v8098
        %v8100 = vrot.slane %v7880, 4
        %v8101 = vsel %vm3219, %v8094, %v8100
        %v8102 = vrot.slane %v7881, 4
        %v8103 = vsel %vm3219, %v8096, %v8102
        %v8104 = vrot.slane %v7882, 4
        %v8105 = vsel %vm3219, %v8098, %v8104
        %v8106 = vrot.slane %v7883, 4
        %v8107 = vsel %vm3219, %v8100, %v8106
        %v8108 = vrot.slane %v7884, 4
        %v8109 = vsel %vm3219, %v8102, %v8108
        %v8110 = vrot.slane %v7885, 4
        %v8111 = vsel %vm3219, %v8104, %v8110
        %v8112 = vrot.slane %v7886, 4
        %v8113 = vsel %vm3219, %v8106, %v8112
        %v8114 = vrot.slane %v7887, 4
        %v8115 = vsel %vm3219, %v8108, %v8114
        %v8116 = vrot.slane %v7888, 4
        %v8117 = vsel %vm3219, %v8110, %v8116
        %v8118 = vrot.slane %v7889, 4
        %v8119 = vsel %vm3219, %v8112, %v8118
        %v8120 = vrot.slane %v7890, 4
        %v8121 = vsel %vm3219, %v8114, %v8120
        %v8122 = vrot.slane %v7891, 4
        %v8123 = vsel %vm3219, %v8116, %v8122
        %v8124 = vrot.slane %v7892, 4
        %v8125 = vsel %vm3219, %v8118, %v8124
        %v8126 = vrot.slane %v7893, 4
        %v8127 = vsel %vm3219, %v8120, %v8126
        %v8128 = vrot.slane %v7894, 4
        %v8129 = vsel %vm3219, %v8122, %v8128
        %v8130 = vrot.slane %v7895, 4
        %v8131 = vsel %vm3219, %v8124, %v8130
        %v8132 = vrot.slane %v7896, 4
        %v8133 = vsel %vm3219, %v8126, %v8132
        %v8134 = vrot.slane %v7897, 4
        %v8135 = vsel %vm3219, %v8128, %v8134
        %v8136 = vrot.slane %v7898, 4
        %v8137 = vsel %vm3219, %v8130, %v8136
        %v8138 = vrot.slane %v7899, 4
        %v8139 = vsel %vm3219, %v8132, %v8138
        %v8140 = vrot.slane %v7900, 4
        %v8141 = vsel %vm3219, %v8134, %v8140
        %v8142 = vrot.slane %v7901, 4
        %v8143 = vsel %vm3219, %v8136, %v8142
        %v8144 = vrot.slane %v7902, 4
        %v8145 = vsel %vm3219, %v8138, %v8144
        %v8146 = vrot.slane %v7903, 4
        %v8147 = vsel %vm3219, %v8140, %v8146
        %v8148 = vrot.slane %v7904, 4
        %v8149 = vsel %vm3219, %v8142, %v8148
        %v8150 = vrot.slane %v7905, 4
        %v8151 = vsel %vm3219, %v8144, %v8150
        %v8152 = vrot.slane %v7906, 4
        %v8153 = vsel %vm3219, %v8146, %v8152
        %v8154 = vrot.slane %v7907, 4
        %v8155 = vsel %vm3219, %v8148, %v8154
        %v8156 = vrot.slane %v7908, 4
        %v8157 = vsel %vm3219, %v8150, %v8156
        %v8158 = vrot.slane %v7909, 4
        %v8159 = vsel %vm3219, %v8152, %v8158
        %v8160 = vrot.slane %v7910, 4
        %v8161 = vsel %vm3219, %v8154, %v8160
        %v8162 = vrot.slane %v7911, 4
        %v8163 = vsel %vm3219, %v8156, %v8162
        %v8164 = vrot.slane %v7912, 4
        %v8165 = vsel %vm3219, %v8158, %v8164
        %v8166 = vrot.slane %v7913, 4
        %v8167 = vsel %vm3219, %v8160, %v8166
        %v8168 = vrot.slane %v7914, 4
        %v8169 = vsel %vm3219, %v8162, %v8168
        %v8170 = vrot.slane %v7915, 4
        %v8171 = vsel %vm3219, %v8164, %v8170
        %v8172 = vrot.slane %v7916, 4
        %v8173 = vsel %vm3219, %v8166, %v8172
        %v8174 = vrot.slane %v7917, 4
        %v8175 = vsel %vm3219, %v8168, %v8174
        %v8176 = vrot.slane %v7918, 4
        %v8177 = vsel %vm3219, %v8170, %v8176
        %v8178 = vrot.slane %v7919, 4
        %v8179 = vsel %vm3219, %v8172, %v8178
        %v8180 = vrot.slane %v7920, 4
        %v8181 = vsel %vm3219, %v8174, %v8180
        %v8182 = vrot.slane %v7921, 4
        %v8183 = vsel %vm3219, %v8176, %v8182
        %v8184 = vrot.slane %v7922, 4
        %v8185 = vsel %vm3219, %v8178, %v8184
        %v8186 = vrot.slane %v7923, 4
        %v8187 = vsel %vm3219, %v8180, %v8186
        %v8188 = vrot.slane %v7924, 4
        %v8189 = vsel %vm3219, %v8182, %v8188
        %v8190 = vrot.slane %v7925, 4
        %v8191 = vsel %vm3219, %v8184, %v8190
        %v8192 = vrot.slane %v7926, 4
        %v8193 = vsel %vm3219, %v8186, %v8192
        %v8194 = vrot.slane %v7927, 4
        %v8195 = vsel %vm3219, %v8188, %v8194
        %v8196 = vrot.slane %v7928, 4
        %v8197 = vsel %vm3219, %v8190, %v8196
        %v8198 = vrot.slane %v7929, 4
        %v8199 = vsel %vm3219, %v8192, %v8198
        %v8200 = vrot.slane %v7930, 4
        %v8201 = vsel %vm3219, %v8194, %v8200
        %v8322 = vunpack.c.l.b16 %v7932
        %v8323 = vunpack.c.l.b16 %v7933
        %v8324 = vunpack.c.l.b16 %v7934
        %v8325 = vunpack.c.l.b16 %v7935
        %v8326 = vunpack.c.l.b16 %v7936
        %v8327 = vunpack.c.l.b16 %v7937
        %v8328 = vunpack.c.l.b16 %v7938
        %v8329 = vunpack.c.l.b16 %v7939
        %v8330 = vunpack.c.l.b16 %v7940
        %v8331 = vunpack.c.l.b16 %v7941
        %v8332 = vunpack.c.l.b16 %v7942
        %v8333 = vunpack.c.l.b16 %v7943
        %v8334 = vunpack.c.l.b16 %v7944
        %v8335 = vunpack.c.l.b16 %v7945
        %v8336 = vunpack.c.l.b16 %v7946
        %v8337 = vunpack.c.l.b16 %v7947
        %v8338 = vunpack.c.l.b16 %v7948
        %v8339 = vunpack.c.l.b16 %v7949
        %v8340 = vunpack.c.l.b16 %v7950
        %v8341 = vunpack.c.l.b16 %v7951
        %v8342 = vunpack.c.l.b16 %v7952
        %v8343 = vunpack.c.l.b16 %v7953
        %v8344 = vunpack.c.l.b16 %v7954
        %v8345 = vunpack.c.l.b16 %v7955
        %v8346 = vunpack.c.l.b16 %v7956
        %v8347 = vunpack.c.l.b16 %v7957
        %v8348 = vunpack.c.l.b16 %v7958
        %v8349 = vunpack.c.l.b16 %v7959
        %v8350 = vunpack.c.l.b16 %v7960
        %v8351 = vunpack.c.l.b16 %v7961
        %v8352 = vunpack.c.l.b16 %v7962
        %v8353 = vunpack.c.l.b16 %v7963
        %v8354 = vunpack.c.l.b16 %v7964
        %v8355 = vunpack.c.l.b16 %v7965
        %v8356 = vunpack.c.l.b16 %v7966
        %v8357 = vunpack.c.l.b16 %v7967
        %v8358 = vunpack.c.l.b16 %v7968
        %v8359 = vunpack.c.l.b16 %v7969
        %v8360 = vunpack.c.l.b16 %v7970
        %v8361 = vunpack.c.l.b16 %v7971
        %v8362 = vunpack.c.l.b16 %v7972
        %v8363 = vunpack.c.l.b16 %v7973
        %v8364 = vunpack.c.l.b16 %v7974
        %v8365 = vunpack.c.l.b16 %v7975
        %v8366 = vunpack.c.l.b16 %v7976
        %v8367 = vunpack.c.l.b16 %v7977
        %v8368 = vunpack.c.l.b16 %v7978
        %v8369 = vunpack.c.l.b16 %v7979
        %v8370 = vpack.c.b16 %v8323, %v8322
        %v8371 = vpack.c.b16 %v8325, %v8324
        %v8372 = vpack.c.b16 %v8327, %v8326
        %v8373 = vpack.c.b16 %v8329, %v8328
        %v8374 = vpack.c.b16 %v8331, %v8330
        %v8375 = vpack.c.b16 %v8333, %v8332
        %v8376 = vpack.c.b16 %v8335, %v8334
        %v8377 = vpack.c.b16 %v8337, %v8336
        %v8378 = vpack.c.b16 %v8339, %v8338
        %v8379 = vpack.c.b16 %v8341, %v8340
        %v8380 = vpack.c.b16 %v8343, %v8342
        %v8381 = vpack.c.b16 %v8345, %v8344
        %v8382 = vpack.c.b16 %v8347, %v8346
        %v8383 = vpack.c.b16 %v8349, %v8348
        %v8384 = vpack.c.b16 %v8351, %v8350
        %v8385 = vpack.c.b16 %v8353, %v8352
        %v8386 = vpack.c.b16 %v8355, %v8354
        %v8387 = vpack.c.b16 %v8357, %v8356
        %v8388 = vpack.c.b16 %v8359, %v8358
        %v8389 = vpack.c.b16 %v8361, %v8360
        %v8390 = vpack.c.b16 %v8363, %v8362
        %v8391 = vpack.c.b16 %v8365, %v8364
        %v8392 = vpack.c.b16 %v8367, %v8366
        %v8393 = vpack.c.b16 %v8369, %v8368
        %8418 = vmatprep.subr.bf16.mxu0 0
        %8419 = vmatpush1.bf16.msra.mxu0 %v8370
        %8420 = vmatprep.subr.bf16.mxu0 0
        %8421 = vmatpush1.bf16.msra.mxu0 %v8371
        %8422 = vmatprep.subr.bf16.mxu0 0
        %8423 = vmatpush1.bf16.msra.mxu0 %v8372
        %8424 = vmatprep.subr.bf16.mxu0 0
        %8425 = vmatpush1.bf16.msra.mxu0 %v8373
        %8426 = vmatprep.subr.bf16.mxu0 0
        %8427 = vmatpush1.bf16.msra.mxu0 %v8374
        %8428 = vmatprep.subr.bf16.mxu0 0
        %8429 = vmatpush1.bf16.msra.mxu0 %v8375
        %8430 = vmatprep.subr.bf16.mxu0 0
        %8431 = vmatpush1.bf16.msra.mxu0 %v8376
        %8432 = vmatprep.subr.bf16.mxu0 0
        %8433 = vmatpush1.bf16.msra.mxu0 %v8377
        %8434 = vmatprep.subr.bf16.mxu0 0
        %8435 = vmatpush1.bf16.msra.mxu0 %v8378
        %8436 = vmatprep.subr.bf16.mxu0 0
        %8437 = vmatpush1.bf16.msra.mxu0 %v8379
        %8438 = vmatprep.subr.bf16.mxu0 0
        %8439 = vmatpush1.bf16.msra.mxu0 %v8380
        %8440 = vmatprep.subr.bf16.mxu0 0
        %8441 = vmatpush1.bf16.msra.mxu0 %v8381
        %8442 = vmatprep.subr.bf16.mxu0 0
        %8443 = vmatpush1.bf16.msra.mxu0 %v8382
        %8444 = vmatprep.subr.bf16.mxu0 0
        %8445 = vmatpush1.bf16.msra.mxu0 %v8383
        %8446 = vmatprep.subr.bf16.mxu0 0
        %8447 = vmatpush1.bf16.msra.mxu0 %v8384
        %8448 = vmatprep.subr.bf16.mxu0 0
        %8449 = vmatpush1.bf16.msra.mxu0 %v8385
        %8450 = vmatprep.mubr.bf16.mxu0 %v8060
        %8451 = vmatmul.mubr.bf16.gmra.mrb[0].mxu0 %v8057
        %v8452 = vpop.f32.mrb[0].mxu0
        %v8453 = vadd.f32 0.0, %v8452
        %v8454 = vpop.f32.mrb[0].mxu0
        %v8455 = vpop.f32.mrb[0].mxu0
        %v8456 = vadd.f32 0.0, %v8455
        %v8457 = vpop.f32.mrb[0].mxu0
        %8458 = vmatprep.mubr.bf16.mxu0 %v8067
        %8459 = vmatmul.mubr.bf16.gmra.mrb[0].mxu0 %v8065
        %v8460 = vpop.f32.mrb[0].mxu0
        %v8461 = vadd.f32 0.0, %v8460
        %v8462 = vpop.f32.mrb[0].mxu0
        %v8463 = vpop.f32.mrb[0].mxu0
        %v8464 = vadd.f32 0.0, %v8463
        %v8465 = vpop.f32.mrb[0].mxu0
        %8466 = vmatprep.mubr.bf16.mxu0 %v8073
        %8467 = vmatmul.mubr.bf16.gmra.mrb[0].mxu0 %v8071
        %v8468 = vpop.f32.mrb[0].mxu0
        %v8469 = vadd.f32 0.0, %v8468
        %v8470 = vpop.f32.mrb[0].mxu0
        %v8471 = vpop.f32.mrb[0].mxu0
        %v8472 = vadd.f32 0.0, %v8471
        %v8473 = vpop.f32.mrb[0].mxu0
        %8474 = vmatprep.mubr.bf16.mxu0 %v8079
        %8475 = vmatmul.mubr.bf16.gmra.mrb[0].mxu0 %v8077
        %v8476 = vpop.f32.mrb[0].mxu0
        %v8477 = vadd.f32 0.0, %v8476
        %v8478 = vpop.f32.mrb[0].mxu0
        %v8479 = vpop.f32.mrb[0].mxu0
        %v8480 = vadd.f32 0.0, %v8479
        %v8481 = vpop.f32.mrb[0].mxu0
        %8482 = vmatprep.mubr.bf16.mxu0 %v8085
        %8483 = vmatmul.mubr.bf16.gmra.mrb[0].mxu0 %v8083
        %v8484 = vpop.f32.mrb[0].mxu0
        %v8485 = vadd.f32 0.0, %v8484
        %v8486 = vpop.f32.mrb[0].mxu0
        %v8487 = vpop.f32.mrb[0].mxu0
        %v8488 = vadd.f32 0.0, %v8487
        %v8489 = vpop.f32.mrb[0].mxu0
        %8490 = vmatprep.mubr.bf16.mxu0 %v8091
        %8491 = vmatmul.mubr.bf16.gmra.mrb[0].mxu0 %v8089
        %v8492 = vpop.f32.mrb[0].mxu0
        %v8493 = vadd.f32 0.0, %v8492
        %v8494 = vpop.f32.mrb[0].mxu0
        %v8495 = vpop.f32.mrb[0].mxu0
        %v8496 = vadd.f32 0.0, %v8495
        %v8497 = vpop.f32.mrb[0].mxu0
        %8498 = vmatprep.mubr.bf16.mxu0 %v8097
        %8499 = vmatmul.mubr.bf16.gmra.mrb[0].mxu0 %v8095
        %v8500 = vpop.f32.mrb[0].mxu0
        %v8501 = vadd.f32 0.0, %v8500
        %v8502 = vpop.f32.mrb[0].mxu0
        %v8503 = vpop.f32.mrb[0].mxu0
        %v8504 = vadd.f32 0.0, %v8503
        %v8505 = vpop.f32.mrb[0].mxu0
        %8506 = vmatprep.mubr.bf16.mxu0 %v8103
        %8507 = vmatmul.mubr.bf16.gmra.mrb[0].mxu0 %v8101
        %v8508 = vpop.f32.mrb[0].mxu0
        %v8509 = vadd.f32 0.0, %v8508
        %v8510 = vpop.f32.mrb[0].mxu0
        %v8511 = vpop.f32.mrb[0].mxu0
        %v8512 = vadd.f32 0.0, %v8511
        %v8513 = vpop.f32.mrb[0].mxu0
        %8514 = vmatprep.mubr.bf16.mxu0 %v8109
        %8515 = vmatmul.mubr.bf16.gmra.mrb[0].mxu0 %v8107
        %v8516 = vpop.f32.mrb[0].mxu0
        %v8517 = vadd.f32 0.0, %v8516
        %v8518 = vpop.f32.mrb[0].mxu0
        %v8519 = vpop.f32.mrb[0].mxu0
        %v8520 = vadd.f32 0.0, %v8519
        %v8521 = vpop.f32.mrb[0].mxu0
        %8522 = vmatprep.mubr.bf16.mxu0 %v8115
        %8523 = vmatmul.mubr.bf16.gmra.mrb[0].mxu0 %v8113
        %v8524 = vpop.f32.mrb[0].mxu0
        %v8525 = vadd.f32 0.0, %v8524
        %v8526 = vpop.f32.mrb[0].mxu0
        %v8527 = vpop.f32.mrb[0].mxu0
        %v8528 = vadd.f32 0.0, %v8527
        %v8529 = vpop.f32.mrb[0].mxu0
        %8530 = vmatprep.mubr.bf16.mxu0 %v8121
        %8531 = vmatmul.mubr.bf16.gmra.mrb[0].mxu0 %v8119
        %v8532 = vpop.f32.mrb[0].mxu0
        %v8533 = vadd.f32 0.0, %v8532
        %v8534 = vpop.f32.mrb[0].mxu0
        %v8535 = vpop.f32.mrb[0].mxu0
        %v8536 = vadd.f32 0.0, %v8535
        %v8537 = vpop.f32.mrb[0].mxu0
        %8538 = vmatprep.mubr.bf16.mxu0 %v8127
        %8539 = vmatmul.mubr.bf16.gmra.mrb[0].mxu0 %v8125
        %v8540 = vpop.f32.mrb[0].mxu0
        %v8541 = vadd.f32 0.0, %v8540
        %v8542 = vpop.f32.mrb[0].mxu0
        %v8543 = vpop.f32.mrb[0].mxu0
        %v8544 = vadd.f32 0.0, %v8543
        %v8545 = vpop.f32.mrb[0].mxu0
        %8546 = vmatprep.mubr.bf16.mxu0 %v8133
        %8547 = vmatmul.mubr.bf16.gmra.mrb[0].mxu0 %v8131
        %v8548 = vpop.f32.mrb[0].mxu0
        %v8549 = vadd.f32 0.0, %v8548
        %v8550 = vpop.f32.mrb[0].mxu0
        %v8551 = vpop.f32.mrb[0].mxu0
        %v8552 = vadd.f32 0.0, %v8551
        %v8553 = vpop.f32.mrb[0].mxu0
        %8554 = vmatprep.mubr.bf16.mxu0 %v8139
        %8555 = vmatmul.mubr.bf16.gmra.mrb[0].mxu0 %v8137
        %v8556 = vpop.f32.mrb[0].mxu0
        %v8557 = vadd.f32 0.0, %v8556
        %v8558 = vpop.f32.mrb[0].mxu0
        %v8559 = vpop.f32.mrb[0].mxu0
        %v8560 = vadd.f32 0.0, %v8559
        %v8561 = vpop.f32.mrb[0].mxu0
        %8562 = vmatprep.mubr.bf16.mxu0 %v8145
        %8563 = vmatmul.mubr.bf16.gmra.mrb[0].mxu0 %v8143
        %v8564 = vpop.f32.mrb[0].mxu0
        %v8565 = vadd.f32 0.0, %v8564
        %v8566 = vpop.f32.mrb[0].mxu0
        %v8567 = vpop.f32.mrb[0].mxu0
        %v8568 = vadd.f32 0.0, %v8567
        %v8569 = vpop.f32.mrb[0].mxu0
        %8570 = vmatprep.mubr.bf16.mxu0 %v8151
        %8571 = vmatmul.mubr.bf16.gmra.mrb[0].mxu0 %v8149
        %v8572 = vpop.f32.mrb[0].mxu0
        %v8573 = vadd.f32 0.0, %v8572
        %v8574 = vpop.f32.mrb[0].mxu0
        %v8575 = vpop.f32.mrb[0].mxu0
        %v8576 = vadd.f32 0.0, %v8575
        %v8577 = vpop.f32.mrb[0].mxu0
        %8578 = vmatprep.mubr.bf16.mxu0 %v8157
        %8579 = vmatmul.mubr.bf16.gmra.mrb[0].mxu0 %v8155
        %v8580 = vpop.f32.mrb[0].mxu0
        %v8581 = vadd.f32 0.0, %v8580
        %v8582 = vpop.f32.mrb[0].mxu0
        %v8583 = vpop.f32.mrb[0].mxu0
        %v8584 = vadd.f32 0.0, %v8583
        %v8585 = vpop.f32.mrb[0].mxu0
        %8586 = vmatprep.mubr.bf16.mxu0 %v8163
        %8587 = vmatmul.mubr.bf16.gmra.mrb[0].mxu0 %v8161
        %v8588 = vpop.f32.mrb[0].mxu0
        %v8589 = vadd.f32 0.0, %v8588
        %v8590 = vpop.f32.mrb[0].mxu0
        %v8591 = vpop.f32.mrb[0].mxu0
        %v8592 = vadd.f32 0.0, %v8591
        %v8593 = vpop.f32.mrb[0].mxu0
        %8594 = vmatprep.mubr.bf16.mxu0 %v8169
        %8595 = vmatmul.mubr.bf16.gmra.mrb[0].mxu0 %v8167
        %v8596 = vpop.f32.mrb[0].mxu0
        %v8597 = vadd.f32 0.0, %v8596
        %v8598 = vpop.f32.mrb[0].mxu0
        %v8599 = vpop.f32.mrb[0].mxu0
        %v8600 = vadd.f32 0.0, %v8599
        %v8601 = vpop.f32.mrb[0].mxu0
        %8602 = vmatprep.mubr.bf16.mxu0 %v8175
        %8603 = vmatmul.mubr.bf16.gmra.mrb[0].mxu0 %v8173
        %v8604 = vpop.f32.mrb[0].mxu0
        %v8605 = vadd.f32 0.0, %v8604
        %v8606 = vpop.f32.mrb[0].mxu0
        %v8607 = vpop.f32.mrb[0].mxu0
        %v8608 = vadd.f32 0.0, %v8607
        %v8609 = vpop.f32.mrb[0].mxu0
        %8610 = vmatprep.mubr.bf16.mxu0 %v8181
        %8611 = vmatmul.mubr.bf16.gmra.mrb[0].mxu0 %v8179
        %v8612 = vpop.f32.mrb[0].mxu0
        %v8613 = vadd.f32 0.0, %v8612
        %v8614 = vpop.f32.mrb[0].mxu0
        %v8615 = vpop.f32.mrb[0].mxu0
        %v8616 = vadd.f32 0.0, %v8615
        %v8617 = vpop.f32.mrb[0].mxu0
        %8618 = vmatprep.mubr.bf16.mxu0 %v8187
        %8619 = vmatmul.mubr.bf16.gmra.mrb[0].mxu0 %v8185
        %v8620 = vpop.f32.mrb[0].mxu0
        %v8621 = vadd.f32 0.0, %v8620
        %v8622 = vpop.f32.mrb[0].mxu0
        %v8623 = vpop.f32.mrb[0].mxu0
        %v8624 = vadd.f32 0.0, %v8623
        %v8625 = vpop.f32.mrb[0].mxu0
        %8626 = vmatprep.mubr.bf16.mxu0 %v8193
        %8627 = vmatmul.mubr.bf16.gmra.mrb[0].mxu0 %v8191
        %v8628 = vpop.f32.mrb[0].mxu0
        %v8629 = vadd.f32 0.0, %v8628
        %v8630 = vpop.f32.mrb[0].mxu0
        %v8631 = vpop.f32.mrb[0].mxu0
        %v8632 = vadd.f32 0.0, %v8631
        %v8633 = vpop.f32.mrb[0].mxu0
        %8634 = vmatprep.mubr.bf16.mxu0 %v8199
        %8635 = vmatmul.mubr.bf16.gmra.mrb[0].mxu0 %v8197
        %v8636 = vpop.f32.mrb[0].mxu0
        %v8637 = vadd.f32 0.0, %v8636
        %v8638 = vpop.f32.mrb[0].mxu0
        %v8639 = vpop.f32.mrb[0].mxu0
        %v8640 = vadd.f32 0.0, %v8639
        %v8641 = vpop.f32.mrb[0].mxu0
        %8642 = vdwg.mxu0
        %8643 = vmatprep.subr.bf16.mxu0 0
        %8644 = vmatpush1.bf16.msra.mxu0 %v8386
        %8645 = vmatprep.subr.bf16.mxu0 0
        %8646 = vmatpush1.bf16.msra.mxu0 %v8387
        %8647 = vmatprep.subr.bf16.mxu0 0
        %8648 = vmatpush1.bf16.msra.mxu0 %v8388
        %8649 = vmatprep.subr.bf16.mxu0 0
        %8650 = vmatpush1.bf16.msra.mxu0 %v8389
        %8651 = vmatprep.subr.bf16.mxu0 0
        %8652 = vmatpush1.bf16.msra.mxu0 %v8390
        %8653 = vmatprep.subr.bf16.mxu0 0
        %8654 = vmatpush1.bf16.msra.mxu0 %v8391
        %8655 = vmatprep.subr.bf16.mxu0 0
        %8656 = vmatpush1.bf16.msra.mxu0 %v8392
        %8657 = vmatprep.subr.bf16.mxu0 0
        %8658 = vmatpush1.bf16.msra.mxu0 %v8393
        %8659 = vmatprep.subr.bf16.mxu0 0
        %8660 = vmatpush1.bf16.msra.mxu0 0
        %8661 = vmatprep.subr.bf16.mxu0 0
        %8662 = vmatpush1.bf16.msra.mxu0 0
        %8663 = vmatprep.subr.bf16.mxu0 0
        %8664 = vmatpush1.bf16.msra.mxu0 0
        %8665 = vmatprep.subr.bf16.mxu0 0
        %8666 = vmatpush1.bf16.msra.mxu0 0
        %8667 = vmatprep.subr.bf16.mxu0 0
        %8668 = vmatpush1.bf16.msra.mxu0 0
        %8669 = vmatprep.subr.bf16.mxu0 0
        %8670 = vmatpush1.bf16.msra.mxu0 0
        %8671 = vmatprep.subr.bf16.mxu0 0
        %8672 = vmatpush1.bf16.msra.mxu0 0
        %8673 = vmatprep.subr.bf16.mxu0 0
        %8674 = vmatpush1.bf16.msra.mxu0 0
        %8675 = vmatprep.mubr.bf16.mxu0 0
        %8676 = vmatmul.mubr.bf16.gmra.mrb[0].mxu0 %v8063
        %v8677 = vpop.f32.mrb[0].mxu0
        %v8678 = vadd.f32 %v8453, %v8677
        %v8679 = vpop.f32.mrb[0].mxu0
        %v8680 = vpop.f32.mrb[0].mxu0
        %v8681 = vadd.f32 %v8456, %v8680
        %v8682 = vpop.f32.mrb[0].mxu0
        %8683 = vmatprep.mubr.bf16.mxu0 0
        %8684 = vmatmul.mubr.bf16.gmra.mrb[0].mxu0 %v8069
        %v8685 = vpop.f32.mrb[0].mxu0
        %v8686 = vadd.f32 %v8461, %v8685
        %v8687 = vpop.f32.mrb[0].mxu0
        %v8688 = vpop.f32.mrb[0].mxu0
        %v8689 = vadd.f32 %v8464, %v8688
        %v8690 = vpop.f32.mrb[0].mxu0
        %8691 = vmatprep.mubr.bf16.mxu0 0
        %8692 = vmatmul.mubr.bf16.gmra.mrb[0].mxu0 %v8075
        %v8693 = vpop.f32.mrb[0].mxu0
        %v8694 = vadd.f32 %v8469, %v8693
        %v8695 = vpop.f32.mrb[0].mxu0
        %v8696 = vpop.f32.mrb[0].mxu0
        %v8697 = vadd.f32 %v8472, %v8696
        %v8698 = vpop.f32.mrb[0].mxu0
        %8699 = vmatprep.mubr.bf16.mxu0 0
        %8700 = vmatmul.mubr.bf16.gmra.mrb[0].mxu0 %v8081
        %v8701 = vpop.f32.mrb[0].mxu0
        %v8702 = vadd.f32 %v8477, %v8701
        %v8703 = vpop.f32.mrb[0].mxu0
        %v8704 = vpop.f32.mrb[0].mxu0
        %v8705 = vadd.f32 %v8480, %v8704
        %v8706 = vpop.f32.mrb[0].mxu0
        %8707 = vmatprep.mubr.bf16.mxu0 0
        %8708 = vmatmul.mubr.bf16.gmra.mrb[0].mxu0 %v8087
        %v8709 = vpop.f32.mrb[0].mxu0
        %v8710 = vadd.f32 %v8485, %v8709
        %v8711 = vpop.f32.mrb[0].mxu0
        %v8712 = vpop.f32.mrb[0].mxu0
        %v8713 = vadd.f32 %v8488, %v8712
        %v8714 = vpop.f32.mrb[0].mxu0
        %8715 = vmatprep.mubr.bf16.mxu0 0
        %8716 = vmatmul.mubr.bf16.gmra.mrb[0].mxu0 %v8093
        %v8717 = vpop.f32.mrb[0].mxu0
        %v8718 = vadd.f32 %v8493, %v8717
        %v8719 = vpop.f32.mrb[0].mxu0
        %v8720 = vpop.f32.mrb[0].mxu0
        %v8721 = vadd.f32 %v8496, %v8720
        %v8722 = vpop.f32.mrb[0].mxu0
        %8723 = vmatprep.mubr.bf16.mxu0 0
        %8724 = vmatmul.mubr.bf16.gmra.mrb[0].mxu0 %v8099
        %v8725 = vpop.f32.mrb[0].mxu0
        %v8726 = vadd.f32 %v8501, %v8725
        %v8727 = vpop.f32.mrb[0].mxu0
        %v8728 = vpop.f32.mrb[0].mxu0
        %v8729 = vadd.f32 %v8504, %v8728
        %v8730 = vpop.f32.mrb[0].mxu0
        %8731 = vmatprep.mubr.bf16.mxu0 0
        %8732 = vmatmul.mubr.bf16.gmra.mrb[0].mxu0 %v8105
        %v8733 = vpop.f32.mrb[0].mxu0
        %v8734 = vadd.f32 %v8509, %v8733
        %v8735 = vpop.f32.mrb[0].mxu0
        %v8736 = vpop.f32.mrb[0].mxu0
        %v8737 = vadd.f32 %v8512, %v8736
        %v8738 = vpop.f32.mrb[0].mxu0
        %8739 = vmatprep.mubr.bf16.mxu0 0
        %8740 = vmatmul.mubr.bf16.gmra.mrb[0].mxu0 %v8111
        %v8741 = vpop.f32.mrb[0].mxu0
        %v8742 = vadd.f32 %v8517, %v8741
        %v8743 = vpop.f32.mrb[0].mxu0
        %v8744 = vpop.f32.mrb[0].mxu0
        %v8745 = vadd.f32 %v8520, %v8744
        %v8746 = vpop.f32.mrb[0].mxu0
        %8747 = vmatprep.mubr.bf16.mxu0 0
        %8748 = vmatmul.mubr.bf16.gmra.mrb[0].mxu0 %v8117
        %v8749 = vpop.f32.mrb[0].mxu0
        %v8750 = vadd.f32 %v8525, %v8749
        %v8751 = vpop.f32.mrb[0].mxu0
        %v8752 = vpop.f32.mrb[0].mxu0
        %v8753 = vadd.f32 %v8528, %v8752
        %v8754 = vpop.f32.mrb[0].mxu0
        %8755 = vmatprep.mubr.bf16.mxu0 0
        %8756 = vmatmul.mubr.bf16.gmra.mrb[0].mxu0 %v8123
        %v8757 = vpop.f32.mrb[0].mxu0
        %v8758 = vadd.f32 %v8533, %v8757
        %v8759 = vpop.f32.mrb[0].mxu0
        %v8760 = vpop.f32.mrb[0].mxu0
        %v8761 = vadd.f32 %v8536, %v8760
        %v8762 = vpop.f32.mrb[0].mxu0
        %8763 = vmatprep.mubr.bf16.mxu0 0
        %8764 = vmatmul.mubr.bf16.gmra.mrb[0].mxu0 %v8129
        %v8765 = vpop.f32.mrb[0].mxu0
        %v8766 = vadd.f32 %v8541, %v8765
        %v8767 = vpop.f32.mrb[0].mxu0
        %v8768 = vpop.f32.mrb[0].mxu0
        %v8769 = vadd.f32 %v8544, %v8768
        %v8770 = vpop.f32.mrb[0].mxu0
        %8771 = vmatprep.mubr.bf16.mxu0 0
        %8772 = vmatmul.mubr.bf16.gmra.mrb[0].mxu0 %v8135
        %v8773 = vpop.f32.mrb[0].mxu0
        %v8774 = vadd.f32 %v8549, %v8773
        %v8775 = vpop.f32.mrb[0].mxu0
        %v8776 = vpop.f32.mrb[0].mxu0
        %v8777 = vadd.f32 %v8552, %v8776
        %v8778 = vpop.f32.mrb[0].mxu0
        %8779 = vmatprep.mubr.bf16.mxu0 0
        %8780 = vmatmul.mubr.bf16.gmra.mrb[0].mxu0 %v8141
        %v8781 = vpop.f32.mrb[0].mxu0
        %v8782 = vadd.f32 %v8557, %v8781
        %v8783 = vpop.f32.mrb[0].mxu0
        %v8784 = vpop.f32.mrb[0].mxu0
        %v8785 = vadd.f32 %v8560, %v8784
        %v8786 = vpop.f32.mrb[0].mxu0
        %8787 = vmatprep.mubr.bf16.mxu0 0
        %8788 = vmatmul.mubr.bf16.gmra.mrb[0].mxu0 %v8147
        %v8789 = vpop.f32.mrb[0].mxu0
        %v8790 = vadd.f32 %v8565, %v8789
        %v8791 = vpop.f32.mrb[0].mxu0
        %v8792 = vpop.f32.mrb[0].mxu0
        %v8793 = vadd.f32 %v8568, %v8792
        %v8794 = vpop.f32.mrb[0].mxu0
        %8795 = vmatprep.mubr.bf16.mxu0 0
        %8796 = vmatmul.mubr.bf16.gmra.mrb[0].mxu0 %v8153
        %v8797 = vpop.f32.mrb[0].mxu0
        %v8798 = vadd.f32 %v8573, %v8797
        %v8799 = vpop.f32.mrb[0].mxu0
        %v8800 = vpop.f32.mrb[0].mxu0
        %v8801 = vadd.f32 %v8576, %v8800
        %v8802 = vpop.f32.mrb[0].mxu0
        %8803 = vmatprep.mubr.bf16.mxu0 0
        %8804 = vmatmul.mubr.bf16.gmra.mrb[0].mxu0 %v8159
        %v8805 = vpop.f32.mrb[0].mxu0
        %v8806 = vadd.f32 %v8581, %v8805
        %v8807 = vpop.f32.mrb[0].mxu0
        %v8808 = vpop.f32.mrb[0].mxu0
        %v8809 = vadd.f32 %v8584, %v8808
        %v8810 = vpop.f32.mrb[0].mxu0
        %8811 = vmatprep.mubr.bf16.mxu0 0
        %8812 = vmatmul.mubr.bf16.gmra.mrb[0].mxu0 %v8165
        %v8813 = vpop.f32.mrb[0].mxu0
        %v8814 = vadd.f32 %v8589, %v8813
        %v8815 = vpop.f32.mrb[0].mxu0
        %v8816 = vpop.f32.mrb[0].mxu0
        %v8817 = vadd.f32 %v8592, %v8816
        %v8818 = vpop.f32.mrb[0].mxu0
        %8819 = vmatprep.mubr.bf16.mxu0 0
        %8820 = vmatmul.mubr.bf16.gmra.mrb[0].mxu0 %v8171
        %v8821 = vpop.f32.mrb[0].mxu0
        %v8822 = vadd.f32 %v8597, %v8821
        %v8823 = vpop.f32.mrb[0].mxu0
        %v8824 = vpop.f32.mrb[0].mxu0
        %v8825 = vadd.f32 %v8600, %v8824
        %v8826 = vpop.f32.mrb[0].mxu0
        %8827 = vmatprep.mubr.bf16.mxu0 0
        %8828 = vmatmul.mubr.bf16.gmra.mrb[0].mxu0 %v8177
        %v8829 = vpop.f32.mrb[0].mxu0
        %v8830 = vadd.f32 %v8605, %v8829
        %v8831 = vpop.f32.mrb[0].mxu0
        %v8832 = vpop.f32.mrb[0].mxu0
        %v8833 = vadd.f32 %v8608, %v8832
        %v8834 = vpop.f32.mrb[0].mxu0
        %8835 = vmatprep.mubr.bf16.mxu0 0
        %8836 = vmatmul.mubr.bf16.gmra.mrb[0].mxu0 %v8183
        %v8837 = vpop.f32.mrb[0].mxu0
        %v8838 = vadd.f32 %v8613, %v8837
        %v8839 = vpop.f32.mrb[0].mxu0
        %v8840 = vpop.f32.mrb[0].mxu0
        %v8841 = vadd.f32 %v8616, %v8840
        %v8842 = vpop.f32.mrb[0].mxu0
        %8843 = vmatprep.mubr.bf16.mxu0 0
        %8844 = vmatmul.mubr.bf16.gmra.mrb[0].mxu0 %v8189
        %v8845 = vpop.f32.mrb[0].mxu0
        %v8846 = vadd.f32 %v8621, %v8845
        %v8847 = vpop.f32.mrb[0].mxu0
        %v8848 = vpop.f32.mrb[0].mxu0
        %v8849 = vadd.f32 %v8624, %v8848
        %v8850 = vpop.f32.mrb[0].mxu0
        %8851 = vmatprep.mubr.bf16.mxu0 0
        %8852 = vmatmul.mubr.bf16.gmra.mrb[0].mxu0 %v8195
        %v8853 = vpop.f32.mrb[0].mxu0
        %v8854 = vadd.f32 %v8629, %v8853
        %v8855 = vpop.f32.mrb[0].mxu0
        %v8856 = vpop.f32.mrb[0].mxu0
        %v8857 = vadd.f32 %v8632, %v8856
        %v8858 = vpop.f32.mrb[0].mxu0
        %8859 = vmatprep.mubr.bf16.mxu0 0
        %8860 = vmatmul.mubr.bf16.gmra.mrb[0].mxu0 %v8201
        %v8861 = vpop.f32.mrb[0].mxu0
        %v8862 = vadd.f32 %v8637, %v8861
        %v8863 = vpop.f32.mrb[0].mxu0
        %v8864 = vpop.f32.mrb[0].mxu0
        %v8865 = vadd.f32 %v8640, %v8864
        %v8866 = vpop.f32.mrb[0].mxu0
        %8867 = vdwg.mxu0
        %v8868 = vadd.f32 %v7808, %v8678
        %v8869 = vadd.f32 %v7809, %v8681
        %v8870 = vadd.f32 %v7810, %v8686
        %v8871 = vadd.f32 %v7811, %v8689
        %v8872 = vadd.f32 %v7812, %v8694
        %v8873 = vadd.f32 %v7813, %v8697
        %v8874 = vadd.f32 %v7814, %v8702
        %v8875 = vadd.f32 %v7815, %v8705
        %v8876 = vadd.f32 %v7816, %v8710
        %v8877 = vadd.f32 %v7817, %v8713
        %v8878 = vadd.f32 %v7818, %v8718
        %v8879 = vadd.f32 %v7819, %v8721
        %v8880 = vadd.f32 %v7820, %v8726
        %v8881 = vadd.f32 %v7821, %v8729
        %v8882 = vadd.f32 %v7822, %v8734
        %v8883 = vadd.f32 %v7823, %v8737
        %v8884 = vadd.f32 %v7824, %v8742
        %v8885 = vadd.f32 %v7825, %v8745
        %v8886 = vadd.f32 %v7826, %v8750
        %v8887 = vadd.f32 %v7827, %v8753
        %v8888 = vadd.f32 %v7828, %v8758
        %v8889 = vadd.f32 %v7829, %v8761
        %v8890 = vadd.f32 %v7830, %v8766
        %v8891 = vadd.f32 %v7831, %v8769
        %v8892 = vadd.f32 %v7832, %v8774
        %v8893 = vadd.f32 %v7833, %v8777
        %v8894 = vadd.f32 %v7834, %v8782
        %v8895 = vadd.f32 %v7835, %v8785
        %v8896 = vadd.f32 %v7836, %v8790
        %v8897 = vadd.f32 %v7837, %v8793
        %v8898 = vadd.f32 %v7838, %v8798
        %v8899 = vadd.f32 %v7839, %v8801
        %v8900 = vadd.f32 %v7840, %v8806
        %v8901 = vadd.f32 %v7841, %v8809
        %v8902 = vadd.f32 %v7842, %v8814
        %v8903 = vadd.f32 %v7843, %v8817
        %v8904 = vadd.f32 %v7844, %v8822
        %v8905 = vadd.f32 %v7845, %v8825
        %v8906 = vadd.f32 %v7846, %v8830
        %v8907 = vadd.f32 %v7847, %v8833
        %v8908 = vadd.f32 %v7848, %v8838
        %v8909 = vadd.f32 %v7849, %v8841
        %v8910 = vadd.f32 %v7850, %v8846
        %v8911 = vadd.f32 %v7851, %v8849
        %v8912 = vadd.f32 %v7852, %v8854
        %v8913 = vadd.f32 %v7853, %v8857
        %v8914 = vadd.f32 %v7854, %v8862
        %v8915 = vadd.f32 %v7855, %v8865
        %8916 = vst [vmem:[#allocation4] sm:$0xff] %v8868
        %8917 = vst [vmem:[#allocation4 + $0x8] sm:$0xff] %v8869
        %8918 = vst [vmem:[#allocation4 + $0x10] sm:$0xff] %v8870
        %8919 = vst [vmem:[#allocation4 + $0x18] sm:$0xff] %v8871
        %8920 = vst [vmem:[#allocation4 + $0x20] sm:$0xff] %v8872
        %8921 = vst [vmem:[#allocation4 + $0x28] sm:$0xff] %v8873
        %8922 = vst [vmem:[#allocation4 + $0x30] sm:$0xff] %v8874
        %8923 = vst [vmem:[#allocation4 + $0x38] sm:$0xff] %v8875
        %8924 = vst [vmem:[#allocation4 + $0x40] sm:$0xff] %v8876
        %8925 = vst [vmem:[#allocation4 + $0x48] sm:$0xff] %v8877
        %8926 = vst [vmem:[#allocation4 + $0x50] sm:$0xff] %v8878
        %8927 = vst [vmem:[#allocation4 + $0x58] sm:$0xff] %v8879
        %8928 = vst [vmem:[#allocation4 + $0x60] sm:$0xff] %v8880
        %8929 = vst [vmem:[#allocation4 + $0x68] sm:$0xff] %v8881
        %8930 = vst [vmem:[#allocation4 + $0x70] sm:$0xff] %v8882
        %8931 = vst [vmem:[#allocation4 + $0x78] sm:$0xff] %v8883
        %8932 = vst [vmem:[#allocation4 + $0x80] sm:$0xff] %v8884
        %8933 = vst [vmem:[#allocation4 + $0x88] sm:$0xff] %v8885
        %8934 = vst [vmem:[#allocation4 + $0x90] sm:$0xff] %v8886
        %8935 = vst [vmem:[#allocation4 + $0x98] sm:$0xff] %v8887
        %8936 = vst [vmem:[#allocation4 + $0xa0] sm:$0xff] %v8888
        %8937 = vst [vmem:[#allocation4 + $0xa8] sm:$0xff] %v8889
        %8938 = vst [vmem:[#allocation4 + $0xb0] sm:$0xff] %v8890
        %8939 = vst [vmem:[#allocation4 + $0xb8] sm:$0xff] %v8891
        %8940 = vst [vmem:[#allocation4 + $0xc0] sm:$0xff] %v8892
        %8941 = vst [vmem:[#allocation4 + $0xc8] sm:$0xff] %v8893
        %8942 = vst [vmem:[#allocation4 + $0xd0] sm:$0xff] %v8894
        %8943 = vst [vmem:[#allocation4 + $0xd8] sm:$0xff] %v8895
        %8944 = vst [vmem:[#allocation4 + $0xe0] sm:$0xff] %v8896
        %8945 = vst [vmem:[#allocation4 + $0xe8] sm:$0xff] %v8897
        %8946 = vst [vmem:[#allocation4 + $0xf0] sm:$0xff] %v8898
        %8947 = vst [vmem:[#allocation4 + $0xf8] sm:$0xff] %v8899
        %8948 = vst [vmem:[#allocation4 + $0x100] sm:$0xff] %v8900
        %8949 = vst [vmem:[#allocation4 + $0x108] sm:$0xff] %v8901
        %8950 = vst [vmem:[#allocation4 + $0x110] sm:$0xff] %v8902
        %8951 = vst [vmem:[#allocation4 + $0x118] sm:$0xff] %v8903
        %8952 = vst [vmem:[#allocation4 + $0x120] sm:$0xff] %v8904
        %8953 = vst [vmem:[#allocation4 + $0x128] sm:$0xff] %v8905
        %8954 = vst [vmem:[#allocation4 + $0x130] sm:$0xff] %v8906
        %8955 = vst [vmem:[#allocation4 + $0x138] sm:$0xff] %v8907
        %8956 = vst [vmem:[#allocation4 + $0x140] sm:$0xff] %v8908
        %8957 = vst [vmem:[#allocation4 + $0x148] sm:$0xff] %v8909
        %8958 = vst [vmem:[#allocation4 + $0x150] sm:$0xff] %v8910
        %8959 = vst [vmem:[#allocation4 + $0x158] sm:$0xff] %v8911
        %8960 = vst [vmem:[#allocation4 + $0x160] sm:$0xff] %v8912
        %8961 = vst [vmem:[#allocation4 + $0x168] sm:$0xff] %v8913
        %8962 = vst [vmem:[#allocation4 + $0x170] sm:$0xff] %v8914
        %8963 = vst [vmem:[#allocation4 + $0x178] sm:$0xff] %v8915
        %v8964 = vld [vmem:[#allocation4] sm:$0xff]
        %v8965 = vld [vmem:[#allocation4 + $0x8] sm:$0xff]
        %v8966 = vld [vmem:[#allocation4 + $0x10] sm:$0xff]
        %v8967 = vld [vmem:[#allocation4 + $0x18] sm:$0xff]
        %v8968 = vld [vmem:[#allocation4 + $0x20] sm:$0xff]
        %v8969 = vld [vmem:[#allocation4 + $0x28] sm:$0xff]
        %v8970 = vld [vmem:[#allocation4 + $0x30] sm:$0xff]
        %v8971 = vld [vmem:[#allocation4 + $0x38] sm:$0xff]
        %v8972 = vld [vmem:[#allocation4 + $0x40] sm:$0xff]
        %v8973 = vld [vmem:[#allocation4 + $0x48] sm:$0xff]
        %v8974 = vld [vmem:[#allocation4 + $0x50] sm:$0xff]
        %v8975 = vld [vmem:[#allocation4 + $0x58] sm:$0xff]
        %v8976 = vld [vmem:[#allocation4 + $0x60] sm:$0xff]
        %v8977 = vld [vmem:[#allocation4 + $0x68] sm:$0xff]
        %v8978 = vld [vmem:[#allocation4 + $0x70] sm:$0xff]
        %v8979 = vld [vmem:[#allocation4 + $0x78] sm:$0xff]
        %v8980 = vld [vmem:[#allocation4 + $0x80] sm:$0xff]
        %v8981 = vld [vmem:[#allocation4 + $0x88] sm:$0xff]
        %v8982 = vld [vmem:[#allocation4 + $0x90] sm:$0xff]
        %v8983 = vld [vmem:[#allocation4 + $0x98] sm:$0xff]
        %v8984 = vld [vmem:[#allocation4 + $0xa0] sm:$0xff]
        %v8985 = vld [vmem:[#allocation4 + $0xa8] sm:$0xff]
        %v8986 = vld [vmem:[#allocation4 + $0xb0] sm:$0xff]
        %v8987 = vld [vmem:[#allocation4 + $0xb8] sm:$0xff]
        %v8988 = vld [vmem:[#allocation4 + $0xc0] sm:$0xff]
        %v8989 = vld [vmem:[#allocation4 + $0xc8] sm:$0xff]
        %v8990 = vld [vmem:[#allocation4 + $0xd0] sm:$0xff]
        %v8991 = vld [vmem:[#allocation4 + $0xd8] sm:$0xff]
        %v8992 = vld [vmem:[#allocation4 + $0xe0] sm:$0xff]
        %v8993 = vld [vmem:[#allocation4 + $0xe8] sm:$0xff]
        %v8994 = vld [vmem:[#allocation4 + $0xf0] sm:$0xff]
        %v8995 = vld [vmem:[#allocation4 + $0xf8] sm:$0xff]
        %v8996 = vld [vmem:[#allocation4 + $0x100] sm:$0xff]
        %v8997 = vld [vmem:[#allocation4 + $0x108] sm:$0xff]
        %v8998 = vld [vmem:[#allocation4 + $0x110] sm:$0xff]
        %v8999 = vld [vmem:[#allocation4 + $0x118] sm:$0xff]
        %v9000 = vld [vmem:[#allocation4 + $0x120] sm:$0xff]
        %v9001 = vld [vmem:[#allocation4 + $0x128] sm:$0xff]
        %v9002 = vld [vmem:[#allocation4 + $0x130] sm:$0xff]
        %v9003 = vld [vmem:[#allocation4 + $0x138] sm:$0xff]
        %v9004 = vld [vmem:[#allocation4 + $0x140] sm:$0xff]
        %v9005 = vld [vmem:[#allocation4 + $0x148] sm:$0xff]
        %v9006 = vld [vmem:[#allocation4 + $0x150] sm:$0xff]
        %v9007 = vld [vmem:[#allocation4 + $0x158] sm:$0xff]
        %v9008 = vld [vmem:[#allocation4 + $0x160] sm:$0xff]
        %v9009 = vld [vmem:[#allocation4 + $0x168] sm:$0xff]
        %v9010 = vld [vmem:[#allocation4 + $0x170] sm:$0xff]
        %v9011 = vld [vmem:[#allocation4 + $0x178] sm:$0xff]
        %v9012 = vld [vmem:[#allocation2 + $0x48] sm:$0xff]
        %v9013 = vld [vmem:[#allocation2 + $0x50] sm:$0xff]
        %v9014 = vld [vmem:[#allocation2 + $0x58] sm:$0xff]
        %v9015 = vld [vmem:[#allocation2 + $0x60] sm:$0xff]
        %v9016 = vld [vmem:[#allocation2 + $0x68] sm:$0xff]
        %v9017 = vld [vmem:[#allocation2 + $0x70] sm:$0xff]
        %v9018 = vld [vmem:[#allocation2 + $0x78] sm:$0xff]
        %v9019 = vld [vmem:[#allocation2 + $0x80] sm:$0xff]
        %v9020 = vld [vmem:[#allocation2 + $0x88] sm:$0xff]
        %v9021 = vld [vmem:[#allocation2 + $0x90] sm:$0xff]
        %v9022 = vld [vmem:[#allocation2 + $0x98] sm:$0xff]
        %v9023 = vld [vmem:[#allocation2 + $0xa0] sm:$0xff]
        %v9024 = vld [vmem:[#allocation2 + $0xa8] sm:$0xff]
        %v9025 = vld [vmem:[#allocation2 + $0xb0] sm:$0xff]
        %v9026 = vld [vmem:[#allocation2 + $0xb8] sm:$0xff]
        %v9027 = vld [vmem:[#allocation2 + $0xc0] sm:$0xff]
        %v9028 = vld [vmem:[#allocation2 + $0xc8] sm:$0xff]
        %v9029 = vld [vmem:[#allocation2 + $0xd0] sm:$0xff]
        %v9030 = vld [vmem:[#allocation2 + $0xd8] sm:$0xff]
        %v9031 = vld [vmem:[#allocation2 + $0xe0] sm:$0xff]
        %v9032 = vld [vmem:[#allocation2 + $0xe8] sm:$0xff]
        %v9033 = vld [vmem:[#allocation2 + $0xf0] sm:$0xff]
        %v9034 = vld [vmem:[#allocation2 + $0xf8] sm:$0xff]
        %v9035 = vld [vmem:[#allocation2 + $0x100] sm:$0xff]
        %v9036 = vld [vmem:[#allocation2 + $0x108] sm:$0xff]
        %v9037 = vld [vmem:[#allocation2 + $0x110] sm:$0xff]
        %v9038 = vld [vmem:[#allocation2 + $0x118] sm:$0xff]
        %v9039 = vld [vmem:[#allocation2 + $0x120] sm:$0xff]
        %v9040 = vld [vmem:[#allocation2 + $0x128] sm:$0xff]
        %v9041 = vld [vmem:[#allocation2 + $0x130] sm:$0xff]
        %v9042 = vld [vmem:[#allocation2 + $0x138] sm:$0xff]
        %v9043 = vld [vmem:[#allocation2 + $0x140] sm:$0xff]
        %v9044 = vld [vmem:[#allocation2 + $0x148] sm:$0xff]
        %v9045 = vld [vmem:[#allocation2 + $0x150] sm:$0xff]
        %v9046 = vld [vmem:[#allocation2 + $0x158] sm:$0xff]
        %v9047 = vld [vmem:[#allocation2 + $0x160] sm:$0xff]
        %v9048 = vld [vmem:[#allocation2 + $0x168] sm:$0xff]
        %v9049 = vld [vmem:[#allocation2 + $0x170] sm:$0xff]
        %v9050 = vld [vmem:[#allocation2 + $0x178] sm:$0xff]
        %v9051 = vld [vmem:[#allocation2 + $0x180] sm:$0xff]
        %v9052 = vld [vmem:[#allocation2 + $0x188] sm:$0xff]
        %v9053 = vld [vmem:[#allocation2 + $0x190] sm:$0xff]
        %v9054 = vld [vmem:[#allocation2 + $0x198] sm:$0xff]
        %v9055 = vld [vmem:[#allocation2 + $0x1a0] sm:$0xff]
        %v9056 = vld [vmem:[#allocation2 + $0x1a8] sm:$0xff]
        %v9057 = vld [vmem:[#allocation2 + $0x1b0] sm:$0xff]
        %v9058 = vld [vmem:[#allocation2 + $0x1b8] sm:$0xff]
        %v9059 = vld [vmem:[#allocation2 + $0x1c0] sm:$0xff]
        %v9060 = vld [vmem:[#allocation2 + $0x1c8] sm:$0xff]
        %v9061 = vld [vmem:[#allocation2 + $0x1d0] sm:$0xff]
        %v9062 = vld [vmem:[#allocation2 + $0x1d8] sm:$0xff]
        %v9063 = vld [vmem:[#allocation2 + $0x1e0] sm:$0xff]
        %v9064 = vld [vmem:[#allocation2 + $0x1e8] sm:$0xff]
        %v9065 = vld [vmem:[#allocation2 + $0x1f0] sm:$0xff]
        %v9066 = vld [vmem:[#allocation2 + $0x1f8] sm:$0xff]
        %v9067 = vld [vmem:[#allocation2 + $0x200] sm:$0xff]
        %v9068 = vld [vmem:[#allocation2 + $0x208] sm:$0xff]
        %v9069 = vld [vmem:[#allocation2 + $0x210] sm:$0xff]
        %v9070 = vld [vmem:[#allocation2 + $0x218] sm:$0xff]
        %v9071 = vld [vmem:[#allocation2 + $0x220] sm:$0xff]
        %v9072 = vld [vmem:[#allocation2 + $0x228] sm:$0xff]
        %v9073 = vld [vmem:[#allocation2 + $0x230] sm:$0xff]
        %v9074 = vld [vmem:[#allocation2 + $0x238] sm:$0xff]
        %v9075 = vld [vmem:[#allocation2 + $0x240] sm:$0xff]
        %v9076 = vld [vmem:[#allocation2 + $0x248] sm:$0xff]
        %v9077 = vld [vmem:[#allocation2 + $0x250] sm:$0xff]
        %v9078 = vld [vmem:[#allocation2 + $0x258] sm:$0xff]
        %v9079 = vld [vmem:[#allocation2 + $0x260] sm:$0xff]
        %v9080 = vld [vmem:[#allocation2 + $0x268] sm:$0xff]
        %v9081 = vld [vmem:[#allocation2 + $0x270] sm:$0xff]
        %v9082 = vld [vmem:[#allocation2 + $0x278] sm:$0xff]
        %v9083 = vld [vmem:[#allocation2 + $0x280] sm:$0xff]
        %s9084 = scalar_lea.vmem [#allocation10], 384
        %v9085 = vld [vmem:[%s9084] sm:$0xf]
        %v9086 = vld [vmem:[%s9084 + $0x4] sm:$0xf]
        %v9087 = vld [vmem:[%s9084 + $0x8] sm:$0xf]
        %v9088 = vld [vmem:[%s9084 + $0xc] sm:$0xf]
        %v9089 = vld [vmem:[%s9084 + $0x10] sm:$0xf]
        %v9090 = vld [vmem:[%s9084 + $0x14] sm:$0xf]
        %v9091 = vld [vmem:[%s9084 + $0x18] sm:$0xf]
        %v9092 = vld [vmem:[%s9084 + $0x1c] sm:$0xf]
        %v9093 = vld [vmem:[%s9084 + $0x20] sm:$0xf]
        %v9094 = vld [vmem:[%s9084 + $0x24] sm:$0xf]
        %v9095 = vld [vmem:[%s9084 + $0x28] sm:$0xf]
        %v9096 = vld [vmem:[%s9084 + $0x2c] sm:$0xf]
        %v9097 = vld [vmem:[%s9084 + $0x30] sm:$0xf]
        %v9098 = vld [vmem:[%s9084 + $0x34] sm:$0xf]
        %v9099 = vld [vmem:[%s9084 + $0x38] sm:$0xf]
        %v9100 = vld [vmem:[%s9084 + $0x3c] sm:$0xf]
        %v9101 = vld [vmem:[%s9084 + $0x40] sm:$0xf]
        %v9102 = vld [vmem:[%s9084 + $0x44] sm:$0xf]
        %v9103 = vld [vmem:[%s9084 + $0x48] sm:$0xf]
        %v9104 = vld [vmem:[%s9084 + $0x4c] sm:$0xf]
        %v9105 = vld [vmem:[%s9084 + $0x50] sm:$0xf]
        %v9106 = vld [vmem:[%s9084 + $0x54] sm:$0xf]
        %v9107 = vld [vmem:[%s9084 + $0x58] sm:$0xf]
        %v9108 = vld [vmem:[%s9084 + $0x5c] sm:$0xf]
        %v9109 = vld [vmem:[%s9084 + $0x60] sm:$0xf]
        %v9110 = vld [vmem:[%s9084 + $0x64] sm:$0xf]
        %v9111 = vld [vmem:[%s9084 + $0x68] sm:$0xf]
        %v9112 = vld [vmem:[%s9084 + $0x6c] sm:$0xf]
        %v9113 = vld [vmem:[%s9084 + $0x70] sm:$0xf]
        %v9114 = vld [vmem:[%s9084 + $0x74] sm:$0xf]
        %v9115 = vld [vmem:[%s9084 + $0x78] sm:$0xf]
        %v9116 = vld [vmem:[%s9084 + $0x7c] sm:$0xf]
        %v9117 = vld [vmem:[%s9084 + $0x80] sm:$0xf]
        %v9118 = vld [vmem:[%s9084 + $0x84] sm:$0xf]
        %v9119 = vld [vmem:[%s9084 + $0x88] sm:$0xf]
        %v9120 = vld [vmem:[%s9084 + $0x8c] sm:$0xf]
        %v9121 = vld [vmem:[%s9084 + $0x90] sm:$0xf]
        %v9122 = vld [vmem:[%s9084 + $0x94] sm:$0xf]
        %v9123 = vld [vmem:[%s9084 + $0x98] sm:$0xf]
        %v9124 = vld [vmem:[%s9084 + $0x9c] sm:$0xf]
        %v9125 = vld [vmem:[%s9084 + $0xa0] sm:$0xf]
        %v9126 = vld [vmem:[%s9084 + $0xa4] sm:$0xf]
        %v9127 = vld [vmem:[%s9084 + $0xa8] sm:$0xf]
        %v9128 = vld [vmem:[%s9084 + $0xac] sm:$0xf]
        %v9129 = vld [vmem:[%s9084 + $0xb0] sm:$0xf]
        %v9130 = vld [vmem:[%s9084 + $0xb4] sm:$0xf]
        %v9131 = vld [vmem:[%s9084 + $0xb8] sm:$0xf]
        %v9132 = vld [vmem:[%s9084 + $0xbc] sm:$0xf]
        %v9181 = vunpack.c.l.b16 %v9085
        %v9182 = vunpack.c.l.b16 %v9086
        %v9183 = vunpack.c.l.b16 %v9087
        %v9184 = vunpack.c.l.b16 %v9088
        %v9185 = vunpack.c.l.b16 %v9089
        %v9186 = vunpack.c.l.b16 %v9090
        %v9187 = vunpack.c.l.b16 %v9091
        %v9188 = vunpack.c.l.b16 %v9092
        %v9189 = vunpack.c.l.b16 %v9093
        %v9190 = vunpack.c.l.b16 %v9094
        %v9191 = vunpack.c.l.b16 %v9095
        %v9192 = vunpack.c.l.b16 %v9096
        %v9193 = vunpack.c.l.b16 %v9097
        %v9194 = vunpack.c.l.b16 %v9098
        %v9195 = vunpack.c.l.b16 %v9099
        %v9196 = vunpack.c.l.b16 %v9100
        %v9197 = vunpack.c.l.b16 %v9101
        %v9198 = vunpack.c.l.b16 %v9102
        %v9199 = vunpack.c.l.b16 %v9103
        %v9200 = vunpack.c.l.b16 %v9104
        %v9201 = vunpack.c.l.b16 %v9105
        %v9202 = vunpack.c.l.b16 %v9106
        %v9203 = vunpack.c.l.b16 %v9107
        %v9204 = vunpack.c.l.b16 %v9108
        %v9205 = vunpack.c.l.b16 %v9109
        %v9206 = vunpack.c.l.b16 %v9110
        %v9207 = vunpack.c.l.b16 %v9111
        %v9208 = vunpack.c.l.b16 %v9112
        %v9209 = vunpack.c.l.b16 %v9113
        %v9210 = vunpack.c.l.b16 %v9114
        %v9211 = vunpack.c.l.b16 %v9115
        %v9212 = vunpack.c.l.b16 %v9116
        %v9213 = vunpack.c.l.b16 %v9117
        %v9214 = vunpack.c.l.b16 %v9118
        %v9215 = vunpack.c.l.b16 %v9119
        %v9216 = vunpack.c.l.b16 %v9120
        %v9217 = vunpack.c.l.b16 %v9121
        %v9218 = vunpack.c.l.b16 %v9122
        %v9219 = vunpack.c.l.b16 %v9123
        %v9220 = vunpack.c.l.b16 %v9124
        %v9221 = vunpack.c.l.b16 %v9125
        %v9222 = vunpack.c.l.b16 %v9126
        %v9223 = vunpack.c.l.b16 %v9127
        %v9224 = vunpack.c.l.b16 %v9128
        %v9225 = vunpack.c.l.b16 %v9129
        %v9226 = vunpack.c.l.b16 %v9130
        %v9227 = vunpack.c.l.b16 %v9131
        %v9228 = vunpack.c.l.b16 %v9132
        %v9229 = vpack.c.b16 %v9182, %v9181
        %v9230 = vpack.c.b16 %v9184, %v9183
        %v9231 = vpack.c.b16 %v9186, %v9185
        %v9232 = vpack.c.b16 %v9188, %v9187
        %v9233 = vpack.c.b16 %v9190, %v9189
        %v9234 = vpack.c.b16 %v9192, %v9191
        %v9235 = vpack.c.b16 %v9194, %v9193
        %v9236 = vpack.c.b16 %v9196, %v9195
        %v9237 = vpack.c.b16 %v9198, %v9197
        %v9238 = vpack.c.b16 %v9200, %v9199
        %v9239 = vpack.c.b16 %v9202, %v9201
        %v9240 = vpack.c.b16 %v9204, %v9203
        %v9241 = vpack.c.b16 %v9206, %v9205
        %v9242 = vpack.c.b16 %v9208, %v9207
        %v9243 = vpack.c.b16 %v9210, %v9209
        %v9244 = vpack.c.b16 %v9212, %v9211
        %v9245 = vpack.c.b16 %v9214, %v9213
        %v9246 = vpack.c.b16 %v9216, %v9215
        %v9247 = vpack.c.b16 %v9218, %v9217
        %v9248 = vpack.c.b16 %v9220, %v9219
        %v9249 = vpack.c.b16 %v9222, %v9221
        %v9250 = vpack.c.b16 %v9224, %v9223
        %v9251 = vpack.c.b16 %v9226, %v9225
        %v9252 = vpack.c.b16 %v9228, %v9227
        %9277 = vmatprep.subr.bf16.mxu0 0
        %9278 = vmatpush1.bf16.msra.mxu0 %v9229
        %9279 = vmatprep.subr.bf16.mxu0 0
        %9280 = vmatpush1.bf16.msra.mxu0 %v9230
        %9281 = vmatprep.subr.bf16.mxu0 0
        %9282 = vmatpush1.bf16.msra.mxu0 %v9231
        %9283 = vmatprep.subr.bf16.mxu0 0
        %9284 = vmatpush1.bf16.msra.mxu0 %v9232
        %9285 = vmatprep.subr.bf16.mxu0 0
        %9286 = vmatpush1.bf16.msra.mxu0 %v9233
        %9287 = vmatprep.subr.bf16.mxu0 0
        %9288 = vmatpush1.bf16.msra.mxu0 %v9234
        %9289 = vmatprep.subr.bf16.mxu0 0
        %9290 = vmatpush1.bf16.msra.mxu0 %v9235
        %9291 = vmatprep.subr.bf16.mxu0 0
        %9292 = vmatpush1.bf16.msra.mxu0 %v9236
        %9293 = vmatprep.subr.bf16.mxu0 0
        %9294 = vmatpush1.bf16.msra.mxu0 %v9237
        %9295 = vmatprep.subr.bf16.mxu0 0
        %9296 = vmatpush1.bf16.msra.mxu0 %v9238
        %9297 = vmatprep.subr.bf16.mxu0 0
        %9298 = vmatpush1.bf16.msra.mxu0 %v9239
        %9299 = vmatprep.subr.bf16.mxu0 0
        %9300 = vmatpush1.bf16.msra.mxu0 %v9240
        %9301 = vmatprep.subr.bf16.mxu0 0
        %9302 = vmatpush1.bf16.msra.mxu0 %v9241
        %9303 = vmatprep.subr.bf16.mxu0 0
        %9304 = vmatpush1.bf16.msra.mxu0 %v9242
        %9305 = vmatprep.subr.bf16.mxu0 0
        %9306 = vmatpush1.bf16.msra.mxu0 %v9243
        %9307 = vmatprep.subr.bf16.mxu0 0
        %9308 = vmatpush1.bf16.msra.mxu0 %v9244
        %9309 = vmatprep.mubr.bf16.mxu0 %v9013
        %9310 = vmatmul.mubr.bf16.gmra.mrb[0].mxu0 %v9012
        %v9311 = vpop.f32.mrb[0].mxu0
        %v9312 = vadd.f32 0.0, %v9311
        %v9313 = vpop.f32.mrb[0].mxu0
        %v9314 = vpop.f32.mrb[0].mxu0
        %v9315 = vadd.f32 0.0, %v9314
        %v9316 = vpop.f32.mrb[0].mxu0
        %9317 = vmatprep.mubr.bf16.mxu0 %v9016
        %9318 = vmatmul.mubr.bf16.gmra.mrb[0].mxu0 %v9015
        %v9319 = vpop.f32.mrb[0].mxu0
        %v9320 = vadd.f32 0.0, %v9319
        %v9321 = vpop.f32.mrb[0].mxu0
        %v9322 = vpop.f32.mrb[0].mxu0
        %v9323 = vadd.f32 0.0, %v9322
        %v9324 = vpop.f32.mrb[0].mxu0
        %9325 = vmatprep.mubr.bf16.mxu0 %v9019
        %9326 = vmatmul.mubr.bf16.gmra.mrb[0].mxu0 %v9018
        %v9327 = vpop.f32.mrb[0].mxu0
        %v9328 = vadd.f32 0.0, %v9327
        %v9329 = vpop.f32.mrb[0].mxu0
        %v9330 = vpop.f32.mrb[0].mxu0
        %v9331 = vadd.f32 0.0, %v9330
        %v9332 = vpop.f32.mrb[0].mxu0
        %9333 = vmatprep.mubr.bf16.mxu0 %v9022
        %9334 = vmatmul.mubr.bf16.gmra.mrb[0].mxu0 %v9021
        %v9335 = vpop.f32.mrb[0].mxu0
        %v9336 = vadd.f32 0.0, %v9335
        %v9337 = vpop.f32.mrb[0].mxu0
        %v9338 = vpop.f32.mrb[0].mxu0
        %v9339 = vadd.f32 0.0, %v9338
        %v9340 = vpop.f32.mrb[0].mxu0
        %9341 = vmatprep.mubr.bf16.mxu0 %v9025
        %9342 = vmatmul.mubr.bf16.gmra.mrb[0].mxu0 %v9024
        %v9343 = vpop.f32.mrb[0].mxu0
        %v9344 = vadd.f32 0.0, %v9343
        %v9345 = vpop.f32.mrb[0].mxu0
        %v9346 = vpop.f32.mrb[0].mxu0
        %v9347 = vadd.f32 0.0, %v9346
        %v9348 = vpop.f32.mrb[0].mxu0
        %9349 = vmatprep.mubr.bf16.mxu0 %v9028
        %9350 = vmatmul.mubr.bf16.gmra.mrb[0].mxu0 %v9027
        %v9351 = vpop.f32.mrb[0].mxu0
        %v9352 = vadd.f32 0.0, %v9351
        %v9353 = vpop.f32.mrb[0].mxu0
        %v9354 = vpop.f32.mrb[0].mxu0
        %v9355 = vadd.f32 0.0, %v9354
        %v9356 = vpop.f32.mrb[0].mxu0
        %9357 = vmatprep.mubr.bf16.mxu0 %v9031
        %9358 = vmatmul.mubr.bf16.gmra.mrb[0].mxu0 %v9030
        %v9359 = vpop.f32.mrb[0].mxu0
        %v9360 = vadd.f32 0.0, %v9359
        %v9361 = vpop.f32.mrb[0].mxu0
        %v9362 = vpop.f32.mrb[0].mxu0
        %v9363 = vadd.f32 0.0, %v9362
        %v9364 = vpop.f32.mrb[0].mxu0
        %9365 = vmatprep.mubr.bf16.mxu0 %v9034
        %9366 = vmatmul.mubr.bf16.gmra.mrb[0].mxu0 %v9033
        %v9367 = vpop.f32.mrb[0].mxu0
        %v9368 = vadd.f32 0.0, %v9367
        %v9369 = vpop.f32.mrb[0].mxu0
        %v9370 = vpop.f32.mrb[0].mxu0
        %v9371 = vadd.f32 0.0, %v9370
        %v9372 = vpop.f32.mrb[0].mxu0
        %9373 = vmatprep.mubr.bf16.mxu0 %v9037
        %9374 = vmatmul.mubr.bf16.gmra.mrb[0].mxu0 %v9036
        %v9375 = vpop.f32.mrb[0].mxu0
        %v9376 = vadd.f32 0.0, %v9375
        %v9377 = vpop.f32.mrb[0].mxu0
        %v9378 = vpop.f32.mrb[0].mxu0
        %v9379 = vadd.f32 0.0, %v9378
        %v9380 = vpop.f32.mrb[0].mxu0
        %9381 = vmatprep.mubr.bf16.mxu0 %v9040
        %9382 = vmatmul.mubr.bf16.gmra.mrb[0].mxu0 %v9039
        %v9383 = vpop.f32.mrb[0].mxu0
        %v9384 = vadd.f32 0.0, %v9383
        %v9385 = vpop.f32.mrb[0].mxu0
        %v9386 = vpop.f32.mrb[0].mxu0
        %v9387 = vadd.f32 0.0, %v9386
        %v9388 = vpop.f32.mrb[0].mxu0
        %9389 = vmatprep.mubr.bf16.mxu0 %v9043
        %9390 = vmatmul.mubr.bf16.gmra.mrb[0].mxu0 %v9042
        %v9391 = vpop.f32.mrb[0].mxu0
        %v9392 = vadd.f32 0.0, %v9391
        %v9393 = vpop.f32.mrb[0].mxu0
        %v9394 = vpop.f32.mrb[0].mxu0
        %v9395 = vadd.f32 0.0, %v9394
        %v9396 = vpop.f32.mrb[0].mxu0
        %9397 = vmatprep.mubr.bf16.mxu0 %v9046
        %9398 = vmatmul.mubr.bf16.gmra.mrb[0].mxu0 %v9045
        %v9399 = vpop.f32.mrb[0].mxu0
        %v9400 = vadd.f32 0.0, %v9399
        %v9401 = vpop.f32.mrb[0].mxu0
        %v9402 = vpop.f32.mrb[0].mxu0
        %v9403 = vadd.f32 0.0, %v9402
        %v9404 = vpop.f32.mrb[0].mxu0
        %9405 = vmatprep.mubr.bf16.mxu0 %v9049
        %9406 = vmatmul.mubr.bf16.gmra.mrb[0].mxu0 %v9048
        %v9407 = vpop.f32.mrb[0].mxu0
        %v9408 = vadd.f32 0.0, %v9407
        %v9409 = vpop.f32.mrb[0].mxu0
        %v9410 = vpop.f32.mrb[0].mxu0
        %v9411 = vadd.f32 0.0, %v9410
        %v9412 = vpop.f32.mrb[0].mxu0
        %9413 = vmatprep.mubr.bf16.mxu0 %v9052
        %9414 = vmatmul.mubr.bf16.gmra.mrb[0].mxu0 %v9051
        %v9415 = vpop.f32.mrb[0].mxu0
        %v9416 = vadd.f32 0.0, %v9415
        %v9417 = vpop.f32.mrb[0].mxu0
        %v9418 = vpop.f32.mrb[0].mxu0
        %v9419 = vadd.f32 0.0, %v9418
        %v9420 = vpop.f32.mrb[0].mxu0
        %9421 = vmatprep.mubr.bf16.mxu0 %v9055
        %9422 = vmatmul.mubr.bf16.gmra.mrb[0].mxu0 %v9054
        %v9423 = vpop.f32.mrb[0].mxu0
        %v9424 = vadd.f32 0.0, %v9423
        %v9425 = vpop.f32.mrb[0].mxu0
        %v9426 = vpop.f32.mrb[0].mxu0
        %v9427 = vadd.f32 0.0, %v9426
        %v9428 = vpop.f32.mrb[0].mxu0
        %9429 = vmatprep.mubr.bf16.mxu0 %v9058
        %9430 = vmatmul.mubr.bf16.gmra.mrb[0].mxu0 %v9057
        %v9431 = vpop.f32.mrb[0].mxu0
        %v9432 = vadd.f32 0.0, %v9431
        %v9433 = vpop.f32.mrb[0].mxu0
        %v9434 = vpop.f32.mrb[0].mxu0
        %v9435 = vadd.f32 0.0, %v9434
        %v9436 = vpop.f32.mrb[0].mxu0
        %9437 = vmatprep.mubr.bf16.mxu0 %v9061
        %9438 = vmatmul.mubr.bf16.gmra.mrb[0].mxu0 %v9060
        %v9439 = vpop.f32.mrb[0].mxu0
        %v9440 = vadd.f32 0.0, %v9439
        %v9441 = vpop.f32.mrb[0].mxu0
        %v9442 = vpop.f32.mrb[0].mxu0
        %v9443 = vadd.f32 0.0, %v9442
        %v9444 = vpop.f32.mrb[0].mxu0
        %9445 = vmatprep.mubr.bf16.mxu0 %v9064
        %9446 = vmatmul.mubr.bf16.gmra.mrb[0].mxu0 %v9063
        %v9447 = vpop.f32.mrb[0].mxu0
        %v9448 = vadd.f32 0.0, %v9447
        %v9449 = vpop.f32.mrb[0].mxu0
        %v9450 = vpop.f32.mrb[0].mxu0
        %v9451 = vadd.f32 0.0, %v9450
        %v9452 = vpop.f32.mrb[0].mxu0
        %9453 = vmatprep.mubr.bf16.mxu0 %v9067
        %9454 = vmatmul.mubr.bf16.gmra.mrb[0].mxu0 %v9066
        %v9455 = vpop.f32.mrb[0].mxu0
        %v9456 = vadd.f32 0.0, %v9455
        %v9457 = vpop.f32.mrb[0].mxu0
        %v9458 = vpop.f32.mrb[0].mxu0
        %v9459 = vadd.f32 0.0, %v9458
        %v9460 = vpop.f32.mrb[0].mxu0
        %9461 = vmatprep.mubr.bf16.mxu0 %v9070
        %9462 = vmatmul.mubr.bf16.gmra.mrb[0].mxu0 %v9069
        %v9463 = vpop.f32.mrb[0].mxu0
        %v9464 = vadd.f32 0.0, %v9463
        %v9465 = vpop.f32.mrb[0].mxu0
        %v9466 = vpop.f32.mrb[0].mxu0
        %v9467 = vadd.f32 0.0, %v9466
        %v9468 = vpop.f32.mrb[0].mxu0
        %9469 = vmatprep.mubr.bf16.mxu0 %v9073
        %9470 = vmatmul.mubr.bf16.gmra.mrb[0].mxu0 %v9072
        %v9471 = vpop.f32.mrb[0].mxu0
        %v9472 = vadd.f32 0.0, %v9471
        %v9473 = vpop.f32.mrb[0].mxu0
        %v9474 = vpop.f32.mrb[0].mxu0
        %v9475 = vadd.f32 0.0, %v9474
        %v9476 = vpop.f32.mrb[0].mxu0
        %9477 = vmatprep.mubr.bf16.mxu0 %v9076
        %9478 = vmatmul.mubr.bf16.gmra.mrb[0].mxu0 %v9075
        %v9479 = vpop.f32.mrb[0].mxu0
        %v9480 = vadd.f32 0.0, %v9479
        %v9481 = vpop.f32.mrb[0].mxu0
        %v9482 = vpop.f32.mrb[0].mxu0
        %v9483 = vadd.f32 0.0, %v9482
        %v9484 = vpop.f32.mrb[0].mxu0
        %9485 = vmatprep.mubr.bf16.mxu0 %v9079
        %9486 = vmatmul.mubr.bf16.gmra.mrb[0].mxu0 %v9078
        %v9487 = vpop.f32.mrb[0].mxu0
        %v9488 = vadd.f32 0.0, %v9487
        %v9489 = vpop.f32.mrb[0].mxu0
        %v9490 = vpop.f32.mrb[0].mxu0
        %v9491 = vadd.f32 0.0, %v9490
        %v9492 = vpop.f32.mrb[0].mxu0
        %9493 = vmatprep.mubr.bf16.mxu0 %v9082
        %9494 = vmatmul.mubr.bf16.gmra.mrb[0].mxu0 %v9081
        %v9495 = vpop.f32.mrb[0].mxu0
        %v9496 = vadd.f32 0.0, %v9495
        %v9497 = vpop.f32.mrb[0].mxu0
        %v9498 = vpop.f32.mrb[0].mxu0
        %v9499 = vadd.f32 0.0, %v9498
        %v9500 = vpop.f32.mrb[0].mxu0
        %9501 = vdwg.mxu0
        %9502 = vmatprep.subr.bf16.mxu0 0
        %9503 = vmatpush1.bf16.msra.mxu0 %v9245
        %9504 = vmatprep.subr.bf16.mxu0 0
        %9505 = vmatpush1.bf16.msra.mxu0 %v9246
        %9506 = vmatprep.subr.bf16.mxu0 0
        %9507 = vmatpush1.bf16.msra.mxu0 %v9247
        %9508 = vmatprep.subr.bf16.mxu0 0
        %9509 = vmatpush1.bf16.msra.mxu0 %v9248
        %9510 = vmatprep.subr.bf16.mxu0 0
        %9511 = vmatpush1.bf16.msra.mxu0 %v9249
        %9512 = vmatprep.subr.bf16.mxu0 0
        %9513 = vmatpush1.bf16.msra.mxu0 %v9250
        %9514 = vmatprep.subr.bf16.mxu0 0
        %9515 = vmatpush1.bf16.msra.mxu0 %v9251
        %9516 = vmatprep.subr.bf16.mxu0 0
        %9517 = vmatpush1.bf16.msra.mxu0 %v9252
        %9518 = vmatprep.subr.bf16.mxu0 0
        %9519 = vmatpush1.bf16.msra.mxu0 0
        %9520 = vmatprep.subr.bf16.mxu0 0
        %9521 = vmatpush1.bf16.msra.mxu0 0
        %9522 = vmatprep.subr.bf16.mxu0 0
        %9523 = vmatpush1.bf16.msra.mxu0 0
        %9524 = vmatprep.subr.bf16.mxu0 0
        %9525 = vmatpush1.bf16.msra.mxu0 0
        %9526 = vmatprep.subr.bf16.mxu0 0
        %9527 = vmatpush1.bf16.msra.mxu0 0
        %9528 = vmatprep.subr.bf16.mxu0 0
        %9529 = vmatpush1.bf16.msra.mxu0 0
        %9530 = vmatprep.subr.bf16.mxu0 0
        %9531 = vmatpush1.bf16.msra.mxu0 0
        %9532 = vmatprep.subr.bf16.mxu0 0
        %9533 = vmatpush1.bf16.msra.mxu0 0
        %9534 = vmatprep.mubr.bf16.mxu0 0
        %9535 = vmatmul.mubr.bf16.gmra.mrb[0].mxu0 %v9014
        %v9536 = vpop.f32.mrb[0].mxu0
        %v9537 = vadd.f32 %v9312, %v9536
        %v9538 = vpop.f32.mrb[0].mxu0
        %v9539 = vpop.f32.mrb[0].mxu0
        %v9540 = vadd.f32 %v9315, %v9539
        %v9541 = vpop.f32.mrb[0].mxu0
        %9542 = vmatprep.mubr.bf16.mxu0 0
        %9543 = vmatmul.mubr.bf16.gmra.mrb[0].mxu0 %v9017
        %v9544 = vpop.f32.mrb[0].mxu0
        %v9545 = vadd.f32 %v9320, %v9544
        %v9546 = vpop.f32.mrb[0].mxu0
        %v9547 = vpop.f32.mrb[0].mxu0
        %v9548 = vadd.f32 %v9323, %v9547
        %v9549 = vpop.f32.mrb[0].mxu0
        %9550 = vmatprep.mubr.bf16.mxu0 0
        %9551 = vmatmul.mubr.bf16.gmra.mrb[0].mxu0 %v9020
        %v9552 = vpop.f32.mrb[0].mxu0
        %v9553 = vadd.f32 %v9328, %v9552
        %v9554 = vpop.f32.mrb[0].mxu0
        %v9555 = vpop.f32.mrb[0].mxu0
        %v9556 = vadd.f32 %v9331, %v9555
        %v9557 = vpop.f32.mrb[0].mxu0
        %9558 = vmatprep.mubr.bf16.mxu0 0
        %9559 = vmatmul.mubr.bf16.gmra.mrb[0].mxu0 %v9023
        %v9560 = vpop.f32.mrb[0].mxu0
        %v9561 = vadd.f32 %v9336, %v9560
        %v9562 = vpop.f32.mrb[0].mxu0
        %v9563 = vpop.f32.mrb[0].mxu0
        %v9564 = vadd.f32 %v9339, %v9563
        %v9565 = vpop.f32.mrb[0].mxu0
        %9566 = vmatprep.mubr.bf16.mxu0 0
        %9567 = vmatmul.mubr.bf16.gmra.mrb[0].mxu0 %v9026
        %v9568 = vpop.f32.mrb[0].mxu0
        %v9569 = vadd.f32 %v9344, %v9568
        %v9570 = vpop.f32.mrb[0].mxu0
        %v9571 = vpop.f32.mrb[0].mxu0
        %v9572 = vadd.f32 %v9347, %v9571
        %v9573 = vpop.f32.mrb[0].mxu0
        %9574 = vmatprep.mubr.bf16.mxu0 0
        %9575 = vmatmul.mubr.bf16.gmra.mrb[0].mxu0 %v9029
        %v9576 = vpop.f32.mrb[0].mxu0
        %v9577 = vadd.f32 %v9352, %v9576
        %v9578 = vpop.f32.mrb[0].mxu0
        %v9579 = vpop.f32.mrb[0].mxu0
        %v9580 = vadd.f32 %v9355, %v9579
        %v9581 = vpop.f32.mrb[0].mxu0
        %9582 = vmatprep.mubr.bf16.mxu0 0
        %9583 = vmatmul.mubr.bf16.gmra.mrb[0].mxu0 %v9032
        %v9584 = vpop.f32.mrb[0].mxu0
        %v9585 = vadd.f32 %v9360, %v9584
        %v9586 = vpop.f32.mrb[0].mxu0
        %v9587 = vpop.f32.mrb[0].mxu0
        %v9588 = vadd.f32 %v9363, %v9587
        %v9589 = vpop.f32.mrb[0].mxu0
        %9590 = vmatprep.mubr.bf16.mxu0 0
        %9591 = vmatmul.mubr.bf16.gmra.mrb[0].mxu0 %v9035
        %v9592 = vpop.f32.mrb[0].mxu0
        %v9593 = vadd.f32 %v9368, %v9592
        %v9594 = vpop.f32.mrb[0].mxu0
        %v9595 = vpop.f32.mrb[0].mxu0
        %v9596 = vadd.f32 %v9371, %v9595
        %v9597 = vpop.f32.mrb[0].mxu0
        %9598 = vmatprep.mubr.bf16.mxu0 0
        %9599 = vmatmul.mubr.bf16.gmra.mrb[0].mxu0 %v9038
        %v9600 = vpop.f32.mrb[0].mxu0
        %v9601 = vadd.f32 %v9376, %v9600
        %v9602 = vpop.f32.mrb[0].mxu0
        %v9603 = vpop.f32.mrb[0].mxu0
        %v9604 = vadd.f32 %v9379, %v9603
        %v9605 = vpop.f32.mrb[0].mxu0
        %9606 = vmatprep.mubr.bf16.mxu0 0
        %9607 = vmatmul.mubr.bf16.gmra.mrb[0].mxu0 %v9041
        %v9608 = vpop.f32.mrb[0].mxu0
        %v9609 = vadd.f32 %v9384, %v9608
        %v9610 = vpop.f32.mrb[0].mxu0
        %v9611 = vpop.f32.mrb[0].mxu0
        %v9612 = vadd.f32 %v9387, %v9611
        %v9613 = vpop.f32.mrb[0].mxu0
        %9614 = vmatprep.mubr.bf16.mxu0 0
        %9615 = vmatmul.mubr.bf16.gmra.mrb[0].mxu0 %v9044
        %v9616 = vpop.f32.mrb[0].mxu0
        %v9617 = vadd.f32 %v9392, %v9616
        %v9618 = vpop.f32.mrb[0].mxu0
        %v9619 = vpop.f32.mrb[0].mxu0
        %v9620 = vadd.f32 %v9395, %v9619
        %v9621 = vpop.f32.mrb[0].mxu0
        %9622 = vmatprep.mubr.bf16.mxu0 0
        %9623 = vmatmul.mubr.bf16.gmra.mrb[0].mxu0 %v9047
        %v9624 = vpop.f32.mrb[0].mxu0
        %v9625 = vadd.f32 %v9400, %v9624
        %v9626 = vpop.f32.mrb[0].mxu0
        %v9627 = vpop.f32.mrb[0].mxu0
        %v9628 = vadd.f32 %v9403, %v9627
        %v9629 = vpop.f32.mrb[0].mxu0
        %9630 = vmatprep.mubr.bf16.mxu0 0
        %9631 = vmatmul.mubr.bf16.gmra.mrb[0].mxu0 %v9050
        %v9632 = vpop.f32.mrb[0].mxu0
        %v9633 = vadd.f32 %v9408, %v9632
        %v9634 = vpop.f32.mrb[0].mxu0
        %v9635 = vpop.f32.mrb[0].mxu0
        %v9636 = vadd.f32 %v9411, %v9635
        %v9637 = vpop.f32.mrb[0].mxu0
        %9638 = vmatprep.mubr.bf16.mxu0 0
        %9639 = vmatmul.mubr.bf16.gmra.mrb[0].mxu0 %v9053
        %v9640 = vpop.f32.mrb[0].mxu0
        %v9641 = vadd.f32 %v9416, %v9640
        %v9642 = vpop.f32.mrb[0].mxu0
        %v9643 = vpop.f32.mrb[0].mxu0
        %v9644 = vadd.f32 %v9419, %v9643
        %v9645 = vpop.f32.mrb[0].mxu0
        %9646 = vmatprep.mubr.bf16.mxu0 0
        %9647 = vmatmul.mubr.bf16.gmra.mrb[0].mxu0 %v9056
        %v9648 = vpop.f32.mrb[0].mxu0
        %v9649 = vadd.f32 %v9424, %v9648
        %v9650 = vpop.f32.mrb[0].mxu0
        %v9651 = vpop.f32.mrb[0].mxu0
        %v9652 = vadd.f32 %v9427, %v9651
        %v9653 = vpop.f32.mrb[0].mxu0
        %9654 = vmatprep.mubr.bf16.mxu0 0
        %9655 = vmatmul.mubr.bf16.gmra.mrb[0].mxu0 %v9059
        %v9656 = vpop.f32.mrb[0].mxu0
        %v9657 = vadd.f32 %v9432, %v9656
        %v9658 = vpop.f32.mrb[0].mxu0
        %v9659 = vpop.f32.mrb[0].mxu0
        %v9660 = vadd.f32 %v9435, %v9659
        %v9661 = vpop.f32.mrb[0].mxu0
        %9662 = vmatprep.mubr.bf16.mxu0 0
        %9663 = vmatmul.mubr.bf16.gmra.mrb[0].mxu0 %v9062
        %v9664 = vpop.f32.mrb[0].mxu0
        %v9665 = vadd.f32 %v9440, %v9664
        %v9666 = vpop.f32.mrb[0].mxu0
        %v9667 = vpop.f32.mrb[0].mxu0
        %v9668 = vadd.f32 %v9443, %v9667
        %v9669 = vpop.f32.mrb[0].mxu0
        %9670 = vmatprep.mubr.bf16.mxu0 0
        %9671 = vmatmul.mubr.bf16.gmra.mrb[0].mxu0 %v9065
        %v9672 = vpop.f32.mrb[0].mxu0
        %v9673 = vadd.f32 %v9448, %v9672
        %v9674 = vpop.f32.mrb[0].mxu0
        %v9675 = vpop.f32.mrb[0].mxu0
        %v9676 = vadd.f32 %v9451, %v9675
        %v9677 = vpop.f32.mrb[0].mxu0
        %9678 = vmatprep.mubr.bf16.mxu0 0
        %9679 = vmatmul.mubr.bf16.gmra.mrb[0].mxu0 %v9068
        %v9680 = vpop.f32.mrb[0].mxu0
        %v9681 = vadd.f32 %v9456, %v9680
        %v9682 = vpop.f32.mrb[0].mxu0
        %v9683 = vpop.f32.mrb[0].mxu0
        %v9684 = vadd.f32 %v9459, %v9683
        %v9685 = vpop.f32.mrb[0].mxu0
        %9686 = vmatprep.mubr.bf16.mxu0 0
        %9687 = vmatmul.mubr.bf16.gmra.mrb[0].mxu0 %v9071
        %v9688 = vpop.f32.mrb[0].mxu0
        %v9689 = vadd.f32 %v9464, %v9688
        %v9690 = vpop.f32.mrb[0].mxu0
        %v9691 = vpop.f32.mrb[0].mxu0
        %v9692 = vadd.f32 %v9467, %v9691
        %v9693 = vpop.f32.mrb[0].mxu0
        %9694 = vmatprep.mubr.bf16.mxu0 0
        %9695 = vmatmul.mubr.bf16.gmra.mrb[0].mxu0 %v9074
        %v9696 = vpop.f32.mrb[0].mxu0
        %v9697 = vadd.f32 %v9472, %v9696
        %v9698 = vpop.f32.mrb[0].mxu0
        %v9699 = vpop.f32.mrb[0].mxu0
        %v9700 = vadd.f32 %v9475, %v9699
        %v9701 = vpop.f32.mrb[0].mxu0
        %9702 = vmatprep.mubr.bf16.mxu0 0
        %9703 = vmatmul.mubr.bf16.gmra.mrb[0].mxu0 %v9077
        %v9704 = vpop.f32.mrb[0].mxu0
        %v9705 = vadd.f32 %v9480, %v9704
        %v9706 = vpop.f32.mrb[0].mxu0
        %v9707 = vpop.f32.mrb[0].mxu0
        %v9708 = vadd.f32 %v9483, %v9707
        %v9709 = vpop.f32.mrb[0].mxu0
        %9710 = vmatprep.mubr.bf16.mxu0 0
        %9711 = vmatmul.mubr.bf16.gmra.mrb[0].mxu0 %v9080
        %v9712 = vpop.f32.mrb[0].mxu0
        %v9713 = vadd.f32 %v9488, %v9712
        %v9714 = vpop.f32.mrb[0].mxu0
        %v9715 = vpop.f32.mrb[0].mxu0
        %v9716 = vadd.f32 %v9491, %v9715
        %v9717 = vpop.f32.mrb[0].mxu0
        %9718 = vmatprep.mubr.bf16.mxu0 0
        %9719 = vmatmul.mubr.bf16.gmra.mrb[0].mxu0 %v9083
        %v9720 = vpop.f32.mrb[0].mxu0
        %v9721 = vadd.f32 %v9496, %v9720
        %v9722 = vpop.f32.mrb[0].mxu0
        %v9723 = vpop.f32.mrb[0].mxu0
        %v9724 = vadd.f32 %v9499, %v9723
        %v9725 = vpop.f32.mrb[0].mxu0
        %9726 = vdwg.mxu0
        %v9727 = vadd.f32 %v8964, %v9537
        %v9728 = vadd.f32 %v8965, %v9540
        %v9729 = vadd.f32 %v8966, %v9545
        %v9730 = vadd.f32 %v8967, %v9548
        %v9731 = vadd.f32 %v8968, %v9553
        %v9732 = vadd.f32 %v8969, %v9556
        %v9733 = vadd.f32 %v8970, %v9561
        %v9734 = vadd.f32 %v8971, %v9564
        %v9735 = vadd.f32 %v8972, %v9569
        %v9736 = vadd.f32 %v8973, %v9572
        %v9737 = vadd.f32 %v8974, %v9577
        %v9738 = vadd.f32 %v8975, %v9580
        %v9739 = vadd.f32 %v8976, %v9585
        %v9740 = vadd.f32 %v8977, %v9588
        %v9741 = vadd.f32 %v8978, %v9593
        %v9742 = vadd.f32 %v8979, %v9596
        %v9743 = vadd.f32 %v8980, %v9601
        %v9744 = vadd.f32 %v8981, %v9604
        %v9745 = vadd.f32 %v8982, %v9609
        %v9746 = vadd.f32 %v8983, %v9612
        %v9747 = vadd.f32 %v8984, %v9617
        %v9748 = vadd.f32 %v8985, %v9620
        %v9749 = vadd.f32 %v8986, %v9625
        %v9750 = vadd.f32 %v8987, %v9628
        %v9751 = vadd.f32 %v8988, %v9633
        %v9752 = vadd.f32 %v8989, %v9636
        %v9753 = vadd.f32 %v8990, %v9641
        %v9754 = vadd.f32 %v8991, %v9644
        %v9755 = vadd.f32 %v8992, %v9649
        %v9756 = vadd.f32 %v8993, %v9652
        %v9757 = vadd.f32 %v8994, %v9657
        %v9758 = vadd.f32 %v8995, %v9660
        %v9759 = vadd.f32 %v8996, %v9665
        %v9760 = vadd.f32 %v8997, %v9668
        %v9761 = vadd.f32 %v8998, %v9673
        %v9762 = vadd.f32 %v8999, %v9676
        %v9763 = vadd.f32 %v9000, %v9681
        %v9764 = vadd.f32 %v9001, %v9684
        %v9765 = vadd.f32 %v9002, %v9689
        %v9766 = vadd.f32 %v9003, %v9692
        %v9767 = vadd.f32 %v9004, %v9697
        %v9768 = vadd.f32 %v9005, %v9700
        %v9769 = vadd.f32 %v9006, %v9705
        %v9770 = vadd.f32 %v9007, %v9708
        %v9771 = vadd.f32 %v9008, %v9713
        %v9772 = vadd.f32 %v9009, %v9716
        %v9773 = vadd.f32 %v9010, %v9721
        %v9774 = vadd.f32 %v9011, %v9724
        %9775 = vst [vmem:[#allocation4] sm:$0xff] %v9727
        %9776 = vst [vmem:[#allocation4 + $0x8] sm:$0xff] %v9728
        %9777 = vst [vmem:[#allocation4 + $0x10] sm:$0xff] %v9729
        %9778 = vst [vmem:[#allocation4 + $0x18] sm:$0xff] %v9730
        %9779 = vst [vmem:[#allocation4 + $0x20] sm:$0xff] %v9731
        %9780 = vst [vmem:[#allocation4 + $0x28] sm:$0xff] %v9732
        %9781 = vst [vmem:[#allocation4 + $0x30] sm:$0xff] %v9733
        %9782 = vst [vmem:[#allocation4 + $0x38] sm:$0xff] %v9734
        %9783 = vst [vmem:[#allocation4 + $0x40] sm:$0xff] %v9735
        %9784 = vst [vmem:[#allocation4 + $0x48] sm:$0xff] %v9736
        %9785 = vst [vmem:[#allocation4 + $0x50] sm:$0xff] %v9737
        %9786 = vst [vmem:[#allocation4 + $0x58] sm:$0xff] %v9738
        %9787 = vst [vmem:[#allocation4 + $0x60] sm:$0xff] %v9739
        %9788 = vst [vmem:[#allocation4 + $0x68] sm:$0xff] %v9740
        %9789 = vst [vmem:[#allocation4 + $0x70] sm:$0xff] %v9741
        %9790 = vst [vmem:[#allocation4 + $0x78] sm:$0xff] %v9742
        %9791 = vst [vmem:[#allocation4 + $0x80] sm:$0xff] %v9743
        %9792 = vst [vmem:[#allocation4 + $0x88] sm:$0xff] %v9744
        %9793 = vst [vmem:[#allocation4 + $0x90] sm:$0xff] %v9745
        %9794 = vst [vmem:[#allocation4 + $0x98] sm:$0xff] %v9746
        %9795 = vst [vmem:[#allocation4 + $0xa0] sm:$0xff] %v9747
        %9796 = vst [vmem:[#allocation4 + $0xa8] sm:$0xff] %v9748
        %9797 = vst [vmem:[#allocation4 + $0xb0] sm:$0xff] %v9749
        %9798 = vst [vmem:[#allocation4 + $0xb8] sm:$0xff] %v9750
        %9799 = vst [vmem:[#allocation4 + $0xc0] sm:$0xff] %v9751
        %9800 = vst [vmem:[#allocation4 + $0xc8] sm:$0xff] %v9752
        %9801 = vst [vmem:[#allocation4 + $0xd0] sm:$0xff] %v9753
        %9802 = vst [vmem:[#allocation4 + $0xd8] sm:$0xff] %v9754
        %9803 = vst [vmem:[#allocation4 + $0xe0] sm:$0xff] %v9755
        %9804 = vst [vmem:[#allocation4 + $0xe8] sm:$0xff] %v9756
        %9805 = vst [vmem:[#allocation4 + $0xf0] sm:$0xff] %v9757
        %9806 = vst [vmem:[#allocation4 + $0xf8] sm:$0xff] %v9758
        %9807 = vst [vmem:[#allocation4 + $0x100] sm:$0xff] %v9759
        %9808 = vst [vmem:[#allocation4 + $0x108] sm:$0xff] %v9760
        %9809 = vst [vmem:[#allocation4 + $0x110] sm:$0xff] %v9761
        %9810 = vst [vmem:[#allocation4 + $0x118] sm:$0xff] %v9762
        %9811 = vst [vmem:[#allocation4 + $0x120] sm:$0xff] %v9763
        %9812 = vst [vmem:[#allocation4 + $0x128] sm:$0xff] %v9764
        %9813 = vst [vmem:[#allocation4 + $0x130] sm:$0xff] %v9765
        %9814 = vst [vmem:[#allocation4 + $0x138] sm:$0xff] %v9766
        %9815 = vst [vmem:[#allocation4 + $0x140] sm:$0xff] %v9767
        %9816 = vst [vmem:[#allocation4 + $0x148] sm:$0xff] %v9768
        %9817 = vst [vmem:[#allocation4 + $0x150] sm:$0xff] %v9769
        %9818 = vst [vmem:[#allocation4 + $0x158] sm:$0xff] %v9770
        %9819 = vst [vmem:[#allocation4 + $0x160] sm:$0xff] %v9771
        %9820 = vst [vmem:[#allocation4 + $0x168] sm:$0xff] %v9772
        %9821 = vst [vmem:[#allocation4 + $0x170] sm:$0xff] %v9773
        %9822 = vst [vmem:[#allocation4 + $0x178] sm:$0xff] %v9774
        %v9823 = vld [vmem:[%s287 + $0xc] sm:$0xf]
        %v9824 = vld [vmem:[%s287 + $0x10] sm:$0xf]
        %v9825 = vld [vmem:[%s287 + $0x14] sm:$0xf]
        %v9826 = vld [vmem:[%s287 + $0x18] sm:$0xf]
        %v9827 = vld [vmem:[%s287 + $0x1c] sm:$0xf]
        %v9828 = vld [vmem:[%s287 + $0x20] sm:$0xf]
        %v9829 = vld [vmem:[%s287 + $0x24] sm:$0xf]
        %v9830 = vld [vmem:[%s287 + $0x28] sm:$0xf]
        %v9831 = vld [vmem:[%s287 + $0x2c] sm:$0xf]
        %v9832 = vld [vmem:[%s287 + $0x30] sm:$0xf]
        %v9833 = vld [vmem:[%s287 + $0x34] sm:$0xf]
        %v9834 = vld [vmem:[%s287 + $0x38] sm:$0xf]
        %v9835 = vld [vmem:[%s287 + $0x3c] sm:$0xf]
        %v9836 = vld [vmem:[%s287 + $0x40] sm:$0xf]
        %v9837 = vld [vmem:[%s287 + $0x44] sm:$0xf]
        %v9838 = vld [vmem:[%s287 + $0x48] sm:$0xf]
        %v9839 = vld [vmem:[%s287 + $0x4c] sm:$0xf]
        %v9840 = vld [vmem:[%s287 + $0x50] sm:$0xf]
        %v9841 = vld [vmem:[%s287 + $0x54] sm:$0xf]
        %v9842 = vld [vmem:[%s287 + $0x58] sm:$0xf]
        %v9843 = vld [vmem:[%s287 + $0x5c] sm:$0xf]
        %v9844 = vld [vmem:[%s287 + $0x60] sm:$0xf]
        %v9845 = vld [vmem:[%s287 + $0x64] sm:$0xf]
        %v9846 = vld [vmem:[%s287 + $0x68] sm:$0xf]
        %v9847 = vld [vmem:[%s287 + $0x6c] sm:$0xf]
        %v9848 = vld [vmem:[%s287 + $0x70] sm:$0xf]
        %v9849 = vld [vmem:[%s287 + $0x74] sm:$0xf]
        %v9850 = vld [vmem:[%s287 + $0x78] sm:$0xf]
        %v9851 = vld [vmem:[%s287 + $0x7c] sm:$0xf]
        %v9852 = vld [vmem:[%s287 + $0x80] sm:$0xf]
        %v9853 = vld [vmem:[%s287 + $0x84] sm:$0xf]
        %v9854 = vld [vmem:[%s287 + $0x88] sm:$0xf]
        %v9855 = vld [vmem:[%s287 + $0x8c] sm:$0xf]
        %v9856 = vld [vmem:[%s287 + $0x90] sm:$0xf]
        %v9857 = vld [vmem:[%s287 + $0x94] sm:$0xf]
        %v9858 = vld [vmem:[%s287 + $0x98] sm:$0xf]
        %v9859 = vld [vmem:[%s287 + $0x9c] sm:$0xf]
        %v9860 = vld [vmem:[%s287 + $0xa0] sm:$0xf]
        %v9861 = vld [vmem:[%s287 + $0xa4] sm:$0xf]
        %v9862 = vld [vmem:[%s287 + $0xa8] sm:$0xf]
        %v9863 = vld [vmem:[%s287 + $0xac] sm:$0xf]
        %v9864 = vld [vmem:[%s287 + $0xb0] sm:$0xf]
        %v9865 = vld [vmem:[%s287 + $0xb4] sm:$0xf]
        %v9866 = vld [vmem:[%s287 + $0xb8] sm:$0xf]
        %v9867 = vld [vmem:[%s287 + $0xbc] sm:$0xf]
        %v9868 = vld [vmem:[%s287 + $0xc0] sm:$0xf]
        %v9869 = vld [vmem:[%s287 + $0xc4] sm:$0xf]
        %v9870 = vld [vmem:[%s287 + $0xc8] sm:$0xf]
        %v9871 = vld [vmem:[%s287 + $0xcc] sm:$0x1]
        %v9872 = vunpack.c.l.bf16 %v9823
        %v9873 = vunpack.c.l.bf16 %v9824
        %v9874 = vunpack.c.l.bf16 %v9825
        %v9875 = vunpack.c.l.bf16 %v9826
        %v9876 = vunpack.c.l.bf16 %v9827
        %v9877 = vunpack.c.l.bf16 %v9828
        %v9878 = vunpack.c.l.bf16 %v9829
        %v9879 = vunpack.c.l.bf16 %v9830
        %v9880 = vunpack.c.l.bf16 %v9831
        %v9881 = vunpack.c.l.bf16 %v9832
        %v9882 = vunpack.c.l.bf16 %v9833
        %v9883 = vunpack.c.l.bf16 %v9834
        %v9884 = vunpack.c.l.bf16 %v9835
        %v9885 = vunpack.c.l.bf16 %v9836
        %v9886 = vunpack.c.l.bf16 %v9837
        %v9887 = vunpack.c.l.bf16 %v9838
        %v9888 = vunpack.c.l.bf16 %v9839
        %v9889 = vunpack.c.l.bf16 %v9840
        %v9890 = vunpack.c.l.bf16 %v9841
        %v9891 = vunpack.c.l.bf16 %v9842
        %v9892 = vunpack.c.l.bf16 %v9843
        %v9893 = vunpack.c.l.bf16 %v9844
        %v9894 = vunpack.c.l.bf16 %v9845
        %v9895 = vunpack.c.l.bf16 %v9846
        %v9896 = vunpack.c.l.bf16 %v9847
        %v9897 = vunpack.c.l.bf16 %v9848
        %v9898 = vunpack.c.l.bf16 %v9849
        %v9899 = vunpack.c.l.bf16 %v9850
        %v9900 = vunpack.c.l.bf16 %v9851
        %v9901 = vunpack.c.l.bf16 %v9852
        %v9902 = vunpack.c.l.bf16 %v9853
        %v9903 = vunpack.c.l.bf16 %v9854
        %v9904 = vunpack.c.l.bf16 %v9855
        %v9905 = vunpack.c.l.bf16 %v9856
        %v9906 = vunpack.c.l.bf16 %v9857
        %v9907 = vunpack.c.l.bf16 %v9858
        %v9908 = vunpack.c.l.bf16 %v9859
        %v9909 = vunpack.c.l.bf16 %v9860
        %v9910 = vunpack.c.l.bf16 %v9861
        %v9911 = vunpack.c.l.bf16 %v9862
        %v9912 = vunpack.c.l.bf16 %v9863
        %v9913 = vunpack.c.l.bf16 %v9864
        %v9914 = vunpack.c.l.bf16 %v9865
        %v9915 = vunpack.c.l.bf16 %v9866
        %v9916 = vunpack.c.l.bf16 %v9867
        %v9917 = vunpack.c.l.bf16 %v9868
        %v9918 = vunpack.c.l.bf16 %v9869
        %v9919 = vunpack.c.l.bf16 %v9870
        %v9920 = vunpack.c.l.bf16 %v9871
        %v9921 = vld [vmem:[#allocation4] sm:$0xff]
        %v9922 = vld [vmem:[#allocation4 + $0x8] sm:$0xff]
        %v9923 = vld [vmem:[#allocation4 + $0x10] sm:$0xff]
        %v9924 = vld [vmem:[#allocation4 + $0x18] sm:$0xff]
        %v9925 = vld [vmem:[#allocation4 + $0x20] sm:$0xff]
        %v9926 = vld [vmem:[#allocation4 + $0x28] sm:$0xff]
        %v9927 = vld [vmem:[#allocation4 + $0x30] sm:$0xff]
        %v9928 = vld [vmem:[#allocation4 + $0x38] sm:$0xff]
        %v9929 = vld [vmem:[#allocation4 + $0x40] sm:$0xff]
        %v9930 = vld [vmem:[#allocation4 + $0x48] sm:$0xff]
        %v9931 = vld [vmem:[#allocation4 + $0x50] sm:$0xff]
        %v9932 = vld [vmem:[#allocation4 + $0x58] sm:$0xff]
        %v9933 = vld [vmem:[#allocation4 + $0x60] sm:$0xff]
        %v9934 = vld [vmem:[#allocation4 + $0x68] sm:$0xff]
        %v9935 = vld [vmem:[#allocation4 + $0x70] sm:$0xff]
        %v9936 = vld [vmem:[#allocation4 + $0x78] sm:$0xff]
        %v9937 = vld [vmem:[#allocation4 + $0x80] sm:$0xff]
        %v9938 = vld [vmem:[#allocation4 + $0x88] sm:$0xff]
        %v9939 = vld [vmem:[#allocation4 + $0x90] sm:$0xff]
        %v9940 = vld [vmem:[#allocation4 + $0x98] sm:$0xff]
        %v9941 = vld [vmem:[#allocation4 + $0xa0] sm:$0xff]
        %v9942 = vld [vmem:[#allocation4 + $0xa8] sm:$0xff]
        %v9943 = vld [vmem:[#allocation4 + $0xb0] sm:$0xff]
        %v9944 = vld [vmem:[#allocation4 + $0xb8] sm:$0xff]
        %v9945 = vld [vmem:[#allocation4 + $0xc0] sm:$0xff]
        %v9946 = vld [vmem:[#allocation4 + $0xc8] sm:$0xff]
        %v9947 = vld [vmem:[#allocation4 + $0xd0] sm:$0xff]
        %v9948 = vld [vmem:[#allocation4 + $0xd8] sm:$0xff]
        %v9949 = vld [vmem:[#allocation4 + $0xe0] sm:$0xff]
        %v9950 = vld [vmem:[#allocation4 + $0xe8] sm:$0xff]
        %v9951 = vld [vmem:[#allocation4 + $0xf0] sm:$0xff]
        %v9952 = vld [vmem:[#allocation4 + $0xf8] sm:$0xff]
        %v9953 = vld [vmem:[#allocation4 + $0x100] sm:$0xff]
        %v9954 = vld [vmem:[#allocation4 + $0x108] sm:$0xff]
        %v9955 = vld [vmem:[#allocation4 + $0x110] sm:$0xff]
        %v9956 = vld [vmem:[#allocation4 + $0x118] sm:$0xff]
        %v9957 = vld [vmem:[#allocation4 + $0x120] sm:$0xff]
        %v9958 = vld [vmem:[#allocation4 + $0x128] sm:$0xff]
        %v9959 = vld [vmem:[#allocation4 + $0x130] sm:$0xff]
        %v9960 = vld [vmem:[#allocation4 + $0x138] sm:$0xff]
        %v9961 = vld [vmem:[#allocation4 + $0x140] sm:$0xff]
        %v9962 = vld [vmem:[#allocation4 + $0x148] sm:$0xff]
        %v9963 = vld [vmem:[#allocation4 + $0x150] sm:$0xff]
        %v9964 = vld [vmem:[#allocation4 + $0x158] sm:$0xff]
        %v9965 = vld [vmem:[#allocation4 + $0x160] sm:$0xff]
        %v9966 = vld [vmem:[#allocation4 + $0x168] sm:$0xff]
        %v9967 = vld [vmem:[#allocation4 + $0x170] sm:$0xff]
        %v9968 = vld [vmem:[#allocation4 + $0x178] sm:$0xff]
        %v9970 = vlaneseq
        %v9971 = vshrl.u32 %v9970, 7
        %v9972 = vsub.s32 0, %v9971
        %v9973 = vrot.slane %v329, %v9972
        %v9975 = vmul.f32 %v9921, %v9973
        %v9976 = vmul.f32 %v9922, %v9973
        %v9977 = vmul.f32 %v9923, %v9973
        %v9978 = vmul.f32 %v9924, %v9973
        %v9979 = vmul.f32 %v9925, %v9973
        %v9980 = vmul.f32 %v9926, %v9973
        %v9981 = vmul.f32 %v9927, %v9973
        %v9982 = vmul.f32 %v9928, %v9973
        %v9983 = vmul.f32 %v9929, %v9973
        %v9984 = vmul.f32 %v9930, %v9973
        %v9985 = vmul.f32 %v9931, %v9973
        %v9986 = vmul.f32 %v9932, %v9973
        %v9987 = vmul.f32 %v9933, %v9973
        %v9988 = vmul.f32 %v9934, %v9973
        %v9989 = vmul.f32 %v9935, %v9973
        %v9990 = vmul.f32 %v9936, %v9973
        %v9991 = vmul.f32 %v9937, %v9973
        %v9992 = vmul.f32 %v9938, %v9973
        %v9993 = vmul.f32 %v9939, %v9973
        %v9994 = vmul.f32 %v9940, %v9973
        %v9995 = vmul.f32 %v9941, %v9973
        %v9996 = vmul.f32 %v9942, %v9973
        %v9997 = vmul.f32 %v9943, %v9973
        %v9998 = vmul.f32 %v9944, %v9973
        %v9999 = vmul.f32 %v9945, %v9973
        %v10000 = vmul.f32 %v9946, %v9973
        %v10001 = vmul.f32 %v9947, %v9973
        %v10002 = vmul.f32 %v9948, %v9973
        %v10003 = vmul.f32 %v9949, %v9973
        %v10004 = vmul.f32 %v9950, %v9973
        %v10005 = vmul.f32 %v9951, %v9973
        %v10006 = vmul.f32 %v9952, %v9973
        %v10007 = vmul.f32 %v9953, %v9973
        %v10008 = vmul.f32 %v9954, %v9973
        %v10009 = vmul.f32 %v9955, %v9973
        %v10010 = vmul.f32 %v9956, %v9973
        %v10011 = vmul.f32 %v9957, %v9973
        %v10012 = vmul.f32 %v9958, %v9973
        %v10013 = vmul.f32 %v9959, %v9973
        %v10014 = vmul.f32 %v9960, %v9973
        %v10015 = vmul.f32 %v9961, %v9973
        %v10016 = vmul.f32 %v9962, %v9973
        %v10017 = vmul.f32 %v9963, %v9973
        %v10018 = vmul.f32 %v9964, %v9973
        %v10019 = vmul.f32 %v9965, %v9973
        %v10020 = vmul.f32 %v9966, %v9973
        %v10021 = vmul.f32 %v9967, %v9973
        %v10022 = vmul.f32 %v9968, %v9973
        %v10024 = vlaneseq
        %v10025 = vshrl.u32 %v10024, 7
        %v10026 = vsub.s32 0, %v10025
        %v10027 = vrot.slane %v330, %v10026
        %v10029 = vadd.f32 %v9975, %v10027
        %v10030 = vadd.f32 %v9976, %v10027
        %v10031 = vadd.f32 %v9977, %v10027
        %v10032 = vadd.f32 %v9978, %v10027
        %v10033 = vadd.f32 %v9979, %v10027
        %v10034 = vadd.f32 %v9980, %v10027
        %v10035 = vadd.f32 %v9981, %v10027
        %v10036 = vadd.f32 %v9982, %v10027
        %v10037 = vadd.f32 %v9983, %v10027
        %v10038 = vadd.f32 %v9984, %v10027
        %v10039 = vadd.f32 %v9985, %v10027
        %v10040 = vadd.f32 %v9986, %v10027
        %v10041 = vadd.f32 %v9987, %v10027
        %v10042 = vadd.f32 %v9988, %v10027
        %v10043 = vadd.f32 %v9989, %v10027
        %v10044 = vadd.f32 %v9990, %v10027
        %v10045 = vadd.f32 %v9991, %v10027
        %v10046 = vadd.f32 %v9992, %v10027
        %v10047 = vadd.f32 %v9993, %v10027
        %v10048 = vadd.f32 %v9994, %v10027
        %v10049 = vadd.f32 %v9995, %v10027
        %v10050 = vadd.f32 %v9996, %v10027
        %v10051 = vadd.f32 %v9997, %v10027
        %v10052 = vadd.f32 %v9998, %v10027
        %v10053 = vadd.f32 %v9999, %v10027
        %v10054 = vadd.f32 %v10000, %v10027
        %v10055 = vadd.f32 %v10001, %v10027
        %v10056 = vadd.f32 %v10002, %v10027
        %v10057 = vadd.f32 %v10003, %v10027
        %v10058 = vadd.f32 %v10004, %v10027
        %v10059 = vadd.f32 %v10005, %v10027
        %v10060 = vadd.f32 %v10006, %v10027
        %v10061 = vadd.f32 %v10007, %v10027
        %v10062 = vadd.f32 %v10008, %v10027
        %v10063 = vadd.f32 %v10009, %v10027
        %v10064 = vadd.f32 %v10010, %v10027
        %v10065 = vadd.f32 %v10011, %v10027
        %v10066 = vadd.f32 %v10012, %v10027
        %v10067 = vadd.f32 %v10013, %v10027
        %v10068 = vadd.f32 %v10014, %v10027
        %v10069 = vadd.f32 %v10015, %v10027
        %v10070 = vadd.f32 %v10016, %v10027
        %v10071 = vadd.f32 %v10017, %v10027
        %v10072 = vadd.f32 %v10018, %v10027
        %v10073 = vadd.f32 %v10019, %v10027
        %v10074 = vadd.f32 %v10020, %v10027
        %v10075 = vadd.f32 %v10021, %v10027
        %v10076 = vadd.f32 %v10022, %v10027
        %vm10126 = vcmask 1046528
        %v10127 = vrot.slane %v9872, 1
        %v10128 = vrot.slane %v9873, 1
        %v10129 = vsel %vm10126, %v10127, %v10128
        %v10130 = vrot.slane %v9874, 1
        %v10131 = vsel %vm10126, %v10128, %v10130
        %v10132 = vrot.slane %v9875, 1
        %v10133 = vsel %vm10126, %v10130, %v10132
        %v10134 = vrot.slane %v9876, 1
        %v10135 = vsel %vm10126, %v10132, %v10134
        %v10136 = vrot.slane %v9877, 1
        %v10137 = vsel %vm10126, %v10134, %v10136
        %v10138 = vrot.slane %v9878, 1
        %v10139 = vsel %vm10126, %v10136, %v10138
        %v10140 = vrot.slane %v9879, 1
        %v10141 = vsel %vm10126, %v10138, %v10140
        %v10142 = vrot.slane %v9880, 1
        %v10143 = vsel %vm10126, %v10140, %v10142
        %v10144 = vrot.slane %v9881, 1
        %v10145 = vsel %vm10126, %v10142, %v10144
        %v10146 = vrot.slane %v9882, 1
        %v10147 = vsel %vm10126, %v10144, %v10146
        %v10148 = vrot.slane %v9883, 1
        %v10149 = vsel %vm10126, %v10146, %v10148
        %v10150 = vrot.slane %v9884, 1
        %v10151 = vsel %vm10126, %v10148, %v10150
        %v10152 = vrot.slane %v9885, 1
        %v10153 = vsel %vm10126, %v10150, %v10152
        %v10154 = vrot.slane %v9886, 1
        %v10155 = vsel %vm10126, %v10152, %v10154
        %v10156 = vrot.slane %v9887, 1
        %v10157 = vsel %vm10126, %v10154, %v10156
        %v10158 = vrot.slane %v9888, 1
        %v10159 = vsel %vm10126, %v10156, %v10158
        %v10160 = vrot.slane %v9889, 1
        %v10161 = vsel %vm10126, %v10158, %v10160
        %v10162 = vrot.slane %v9890, 1
        %v10163 = vsel %vm10126, %v10160, %v10162
        %v10164 = vrot.slane %v9891, 1
        %v10165 = vsel %vm10126, %v10162, %v10164
        %v10166 = vrot.slane %v9892, 1
        %v10167 = vsel %vm10126, %v10164, %v10166
        %v10168 = vrot.slane %v9893, 1
        %v10169 = vsel %vm10126, %v10166, %v10168
        %v10170 = vrot.slane %v9894, 1
        %v10171 = vsel %vm10126, %v10168, %v10170
        %v10172 = vrot.slane %v9895, 1
        %v10173 = vsel %vm10126, %v10170, %v10172
        %v10174 = vrot.slane %v9896, 1
        %v10175 = vsel %vm10126, %v10172, %v10174
        %v10176 = vrot.slane %v9897, 1
        %v10177 = vsel %vm10126, %v10174, %v10176
        %v10178 = vrot.slane %v9898, 1
        %v10179 = vsel %vm10126, %v10176, %v10178
        %v10180 = vrot.slane %v9899, 1
        %v10181 = vsel %vm10126, %v10178, %v10180
        %v10182 = vrot.slane %v9900, 1
        %v10183 = vsel %vm10126, %v10180, %v10182
        %v10184 = vrot.slane %v9901, 1
        %v10185 = vsel %vm10126, %v10182, %v10184
        %v10186 = vrot.slane %v9902, 1
        %v10187 = vsel %vm10126, %v10184, %v10186
        %v10188 = vrot.slane %v9903, 1
        %v10189 = vsel %vm10126, %v10186, %v10188
        %v10190 = vrot.slane %v9904, 1
        %v10191 = vsel %vm10126, %v10188, %v10190
        %v10192 = vrot.slane %v9905, 1
        %v10193 = vsel %vm10126, %v10190, %v10192
        %v10194 = vrot.slane %v9906, 1
        %v10195 = vsel %vm10126, %v10192, %v10194
        %v10196 = vrot.slane %v9907, 1
        %v10197 = vsel %vm10126, %v10194, %v10196
        %v10198 = vrot.slane %v9908, 1
        %v10199 = vsel %vm10126, %v10196, %v10198
        %v10200 = vrot.slane %v9909, 1
        %v10201 = vsel %vm10126, %v10198, %v10200
        %v10202 = vrot.slane %v9910, 1
        %v10203 = vsel %vm10126, %v10200, %v10202
        %v10204 = vrot.slane %v9911, 1
        %v10205 = vsel %vm10126, %v10202, %v10204
        %v10206 = vrot.slane %v9912, 1
        %v10207 = vsel %vm10126, %v10204, %v10206
        %v10208 = vrot.slane %v9913, 1
        %v10209 = vsel %vm10126, %v10206, %v10208
        %v10210 = vrot.slane %v9914, 1
        %v10211 = vsel %vm10126, %v10208, %v10210
        %v10212 = vrot.slane %v9915, 1
        %v10213 = vsel %vm10126, %v10210, %v10212
        %v10214 = vrot.slane %v9916, 1
        %v10215 = vsel %vm10126, %v10212, %v10214
        %v10216 = vrot.slane %v9917, 1
        %v10217 = vsel %vm10126, %v10214, %v10216
        %v10218 = vrot.slane %v9918, 1
        %v10219 = vsel %vm10126, %v10216, %v10218
        %v10220 = vrot.slane %v9919, 1
        %v10221 = vsel %vm10126, %v10218, %v10220
        %v10222 = vrot.slane %v9920, 1
        %v10223 = vsel %vm10126, %v10220, %v10222
        %v10272 = vadd.f32 %v10029, %v10129
        %v10273 = vadd.f32 %v10030, %v10131
        %v10274 = vadd.f32 %v10031, %v10133
        %v10275 = vadd.f32 %v10032, %v10135
        %v10276 = vadd.f32 %v10033, %v10137
        %v10277 = vadd.f32 %v10034, %v10139
        %v10278 = vadd.f32 %v10035, %v10141
        %v10279 = vadd.f32 %v10036, %v10143
        %v10280 = vadd.f32 %v10037, %v10145
        %v10281 = vadd.f32 %v10038, %v10147
        %v10282 = vadd.f32 %v10039, %v10149
        %v10283 = vadd.f32 %v10040, %v10151
        %v10284 = vadd.f32 %v10041, %v10153
        %v10285 = vadd.f32 %v10042, %v10155
        %v10286 = vadd.f32 %v10043, %v10157
        %v10287 = vadd.f32 %v10044, %v10159
        %v10288 = vadd.f32 %v10045, %v10161
        %v10289 = vadd.f32 %v10046, %v10163
        %v10290 = vadd.f32 %v10047, %v10165
        %v10291 = vadd.f32 %v10048, %v10167
        %v10292 = vadd.f32 %v10049, %v10169
        %v10293 = vadd.f32 %v10050, %v10171
        %v10294 = vadd.f32 %v10051, %v10173
        %v10295 = vadd.f32 %v10052, %v10175
        %v10296 = vadd.f32 %v10053, %v10177
        %v10297 = vadd.f32 %v10054, %v10179
        %v10298 = vadd.f32 %v10055, %v10181
        %v10299 = vadd.f32 %v10056, %v10183
        %v10300 = vadd.f32 %v10057, %v10185
        %v10301 = vadd.f32 %v10058, %v10187
        %v10302 = vadd.f32 %v10059, %v10189
        %v10303 = vadd.f32 %v10060, %v10191
        %v10304 = vadd.f32 %v10061, %v10193
        %v10305 = vadd.f32 %v10062, %v10195
        %v10306 = vadd.f32 %v10063, %v10197
        %v10307 = vadd.f32 %v10064, %v10199
        %v10308 = vadd.f32 %v10065, %v10201
        %v10309 = vadd.f32 %v10066, %v10203
        %v10310 = vadd.f32 %v10067, %v10205
        %v10311 = vadd.f32 %v10068, %v10207
        %v10312 = vadd.f32 %v10069, %v10209
        %v10313 = vadd.f32 %v10070, %v10211
        %v10314 = vadd.f32 %v10071, %v10213
        %v10315 = vadd.f32 %v10072, %v10215
        %v10316 = vadd.f32 %v10073, %v10217
        %v10317 = vadd.f32 %v10074, %v10219
        %v10318 = vadd.f32 %v10075, %v10221
        %v10319 = vadd.f32 %v10076, %v10223
        %v10320 = vmax.f32 %v10272, 0.0
        %v10321 = vmax.f32 %v10273, 0.0
        %v10322 = vmax.f32 %v10274, 0.0
        %v10323 = vmax.f32 %v10275, 0.0
        %v10324 = vmax.f32 %v10276, 0.0
        %v10325 = vmax.f32 %v10277, 0.0
        %v10326 = vmax.f32 %v10278, 0.0
        %v10327 = vmax.f32 %v10279, 0.0
        %v10328 = vmax.f32 %v10280, 0.0
        %v10329 = vmax.f32 %v10281, 0.0
        %v10330 = vmax.f32 %v10282, 0.0
        %v10331 = vmax.f32 %v10283, 0.0
        %v10332 = vmax.f32 %v10284, 0.0
        %v10333 = vmax.f32 %v10285, 0.0
        %v10334 = vmax.f32 %v10286, 0.0
        %v10335 = vmax.f32 %v10287, 0.0
        %v10336 = vmax.f32 %v10288, 0.0
        %v10337 = vmax.f32 %v10289, 0.0
        %v10338 = vmax.f32 %v10290, 0.0
        %v10339 = vmax.f32 %v10291, 0.0
        %v10340 = vmax.f32 %v10292, 0.0
        %v10341 = vmax.f32 %v10293, 0.0
        %v10342 = vmax.f32 %v10294, 0.0
        %v10343 = vmax.f32 %v10295, 0.0
        %v10344 = vmax.f32 %v10296, 0.0
        %v10345 = vmax.f32 %v10297, 0.0
        %v10346 = vmax.f32 %v10298, 0.0
        %v10347 = vmax.f32 %v10299, 0.0
        %v10348 = vmax.f32 %v10300, 0.0
        %v10349 = vmax.f32 %v10301, 0.0
        %v10350 = vmax.f32 %v10302, 0.0
        %v10351 = vmax.f32 %v10303, 0.0
        %v10352 = vmax.f32 %v10304, 0.0
        %v10353 = vmax.f32 %v10305, 0.0
        %v10354 = vmax.f32 %v10306, 0.0
        %v10355 = vmax.f32 %v10307, 0.0
        %v10356 = vmax.f32 %v10308, 0.0
        %v10357 = vmax.f32 %v10309, 0.0
        %v10358 = vmax.f32 %v10310, 0.0
        %v10359 = vmax.f32 %v10311, 0.0
        %v10360 = vmax.f32 %v10312, 0.0
        %v10361 = vmax.f32 %v10313, 0.0
        %v10362 = vmax.f32 %v10314, 0.0
        %v10363 = vmax.f32 %v10315, 0.0
        %v10364 = vmax.f32 %v10316, 0.0
        %v10365 = vmax.f32 %v10317, 0.0
        %v10366 = vmax.f32 %v10318, 0.0
        %v10367 = vmax.f32 %v10319, 0.0
        %v10368 = vpack.c.bf16 %v10321, %v10320
        %v10369 = vpack.c.bf16 %v10323, %v10322
        %v10370 = vpack.c.bf16 %v10325, %v10324
        %v10371 = vpack.c.bf16 %v10327, %v10326
        %v10372 = vpack.c.bf16 %v10329, %v10328
        %v10373 = vpack.c.bf16 %v10331, %v10330
        %v10374 = vpack.c.bf16 %v10333, %v10332
        %v10375 = vpack.c.bf16 %v10335, %v10334
        %v10376 = vpack.c.bf16 %v10337, %v10336
        %v10377 = vpack.c.bf16 %v10339, %v10338
        %v10378 = vpack.c.bf16 %v10341, %v10340
        %v10379 = vpack.c.bf16 %v10343, %v10342
        %v10380 = vpack.c.bf16 %v10345, %v10344
        %v10381 = vpack.c.bf16 %v10347, %v10346
        %v10382 = vpack.c.bf16 %v10349, %v10348
        %v10383 = vpack.c.bf16 %v10351, %v10350
        %v10384 = vpack.c.bf16 %v10353, %v10352
        %v10385 = vpack.c.bf16 %v10355, %v10354
        %v10386 = vpack.c.bf16 %v10357, %v10356
        %v10387 = vpack.c.bf16 %v10359, %v10358
        %v10388 = vpack.c.bf16 %v10361, %v10360
        %v10389 = vpack.c.bf16 %v10363, %v10362
        %v10390 = vpack.c.bf16 %v10365, %v10364
        %v10391 = vpack.c.bf16 %v10367, %v10366
        %v10416 = vunpack.c.l.b16 %v10368
        %v10417 = vunpack.c.h.b16 %v10368
        %v10418 = vunpack.c.l.b16 %v10369
        %v10419 = vunpack.c.h.b16 %v10369
        %v10420 = vunpack.c.l.b16 %v10370
        %v10421 = vunpack.c.h.b16 %v10370
        %v10422 = vunpack.c.l.b16 %v10371
        %v10423 = vunpack.c.h.b16 %v10371
        %v10424 = vunpack.c.l.b16 %v10372
        %v10425 = vunpack.c.h.b16 %v10372
        %v10426 = vunpack.c.l.b16 %v10373
        %v10427 = vunpack.c.h.b16 %v10373
        %v10428 = vunpack.c.l.b16 %v10374
        %v10429 = vunpack.c.h.b16 %v10374
        %v10430 = vunpack.c.l.b16 %v10375
        %v10431 = vunpack.c.h.b16 %v10375
        %v10432 = vunpack.c.l.b16 %v10376
        %v10433 = vunpack.c.h.b16 %v10376
        %v10434 = vunpack.c.l.b16 %v10377
        %v10435 = vunpack.c.h.b16 %v10377
        %v10436 = vunpack.c.l.b16 %v10378
        %v10437 = vunpack.c.h.b16 %v10378
        %v10438 = vunpack.c.l.b16 %v10379
        %v10439 = vunpack.c.h.b16 %v10379
        %v10440 = vunpack.c.l.b16 %v10380
        %v10441 = vunpack.c.h.b16 %v10380
        %v10442 = vunpack.c.l.b16 %v10381
        %v10443 = vunpack.c.h.b16 %v10381
        %v10444 = vunpack.c.l.b16 %v10382
        %v10445 = vunpack.c.h.b16 %v10382
        %v10446 = vunpack.c.l.b16 %v10383
        %v10447 = vunpack.c.h.b16 %v10383
        %v10448 = vunpack.c.l.b16 %v10384
        %v10449 = vunpack.c.h.b16 %v10384
        %v10450 = vunpack.c.l.b16 %v10385
        %v10451 = vunpack.c.h.b16 %v10385
        %v10452 = vunpack.c.l.b16 %v10386
        %v10453 = vunpack.c.h.b16 %v10386
        %v10454 = vunpack.c.l.b16 %v10387
        %v10455 = vunpack.c.h.b16 %v10387
        %v10456 = vunpack.c.l.b16 %v10388
        %v10457 = vunpack.c.h.b16 %v10388
        %v10458 = vunpack.c.l.b16 %v10389
        %v10459 = vunpack.c.h.b16 %v10389
        %v10460 = vunpack.c.l.b16 %v10390
        %v10461 = vunpack.c.h.b16 %v10390
        %v10462 = vunpack.c.l.b16 %v10391
        %v10463 = vunpack.c.h.b16 %v10391
        %v10464 = vpack.c.b16 %v10416, %v10416
        %v10465 = vpack.c.b16 %v10417, %v10417
        %v10466 = vpack.c.b16 %v10418, %v10418
        %v10467 = vpack.c.b16 %v10419, %v10419
        %v10468 = vpack.c.b16 %v10420, %v10420
        %v10469 = vpack.c.b16 %v10421, %v10421
        %v10470 = vpack.c.b16 %v10422, %v10422
        %v10471 = vpack.c.b16 %v10423, %v10423
        %v10472 = vpack.c.b16 %v10424, %v10424
        %v10473 = vpack.c.b16 %v10425, %v10425
        %v10474 = vpack.c.b16 %v10426, %v10426
        %v10475 = vpack.c.b16 %v10427, %v10427
        %v10476 = vpack.c.b16 %v10428, %v10428
        %v10477 = vpack.c.b16 %v10429, %v10429
        %v10478 = vpack.c.b16 %v10430, %v10430
        %v10479 = vpack.c.b16 %v10431, %v10431
        %v10480 = vpack.c.b16 %v10432, %v10432
        %v10481 = vpack.c.b16 %v10433, %v10433
        %v10482 = vpack.c.b16 %v10434, %v10434
        %v10483 = vpack.c.b16 %v10435, %v10435
        %v10484 = vpack.c.b16 %v10436, %v10436
        %v10485 = vpack.c.b16 %v10437, %v10437
        %v10486 = vpack.c.b16 %v10438, %v10438
        %v10487 = vpack.c.b16 %v10439, %v10439
        %v10488 = vpack.c.b16 %v10440, %v10440
        %v10489 = vpack.c.b16 %v10441, %v10441
        %v10490 = vpack.c.b16 %v10442, %v10442
        %v10491 = vpack.c.b16 %v10443, %v10443
        %v10492 = vpack.c.b16 %v10444, %v10444
        %v10493 = vpack.c.b16 %v10445, %v10445
        %v10494 = vpack.c.b16 %v10446, %v10446
        %v10495 = vpack.c.b16 %v10447, %v10447
        %v10496 = vpack.c.b16 %v10448, %v10448
        %v10497 = vpack.c.b16 %v10449, %v10449
        %v10498 = vpack.c.b16 %v10450, %v10450
        %v10499 = vpack.c.b16 %v10451, %v10451
        %v10500 = vpack.c.b16 %v10452, %v10452
        %v10501 = vpack.c.b16 %v10453, %v10453
        %v10502 = vpack.c.b16 %v10454, %v10454
        %v10503 = vpack.c.b16 %v10455, %v10455
        %v10504 = vpack.c.b16 %v10456, %v10456
        %v10505 = vpack.c.b16 %v10457, %v10457
        %v10506 = vpack.c.b16 %v10458, %v10458
        %v10507 = vpack.c.b16 %v10459, %v10459
        %v10508 = vpack.c.b16 %v10460, %v10460
        %v10509 = vpack.c.b16 %v10461, %v10461
        %v10510 = vpack.c.b16 %v10462, %v10462
        %v10511 = vpack.c.b16 %v10463, %v10463
        %10560 = vst [vmem:[%s325] sm:$0xf] %v10464
        %10561 = vst [vmem:[%s325 + $0x4] sm:$0xf] %v10465
        %10562 = vst [vmem:[%s325 + $0x8] sm:$0xf] %v10466
        %10563 = vst [vmem:[%s325 + $0xc] sm:$0xf] %v10467
        %10564 = vst [vmem:[%s325 + $0x10] sm:$0xf] %v10468
        %10565 = vst [vmem:[%s325 + $0x14] sm:$0xf] %v10469
        %10566 = vst [vmem:[%s325 + $0x18] sm:$0xf] %v10470
        %10567 = vst [vmem:[%s325 + $0x1c] sm:$0xf] %v10471
        %10568 = vst [vmem:[%s325 + $0x20] sm:$0xf] %v10472
        %10569 = vst [vmem:[%s325 + $0x24] sm:$0xf] %v10473
        %10570 = vst [vmem:[%s325 + $0x28] sm:$0xf] %v10474
        %10571 = vst [vmem:[%s325 + $0x2c] sm:$0xf] %v10475
        %10572 = vst [vmem:[%s325 + $0x30] sm:$0xf] %v10476
        %10573 = vst [vmem:[%s325 + $0x34] sm:$0xf] %v10477
        %10574 = vst [vmem:[%s325 + $0x38] sm:$0xf] %v10478
        %10575 = vst [vmem:[%s325 + $0x3c] sm:$0xf] %v10479
        %10576 = vst [vmem:[%s325 + $0x40] sm:$0xf] %v10480
        %10577 = vst [vmem:[%s325 + $0x44] sm:$0xf] %v10481
        %10578 = vst [vmem:[%s325 + $0x48] sm:$0xf] %v10482
        %10579 = vst [vmem:[%s325 + $0x4c] sm:$0xf] %v10483
        %10580 = vst [vmem:[%s325 + $0x50] sm:$0xf] %v10484
        %10581 = vst [vmem:[%s325 + $0x54] sm:$0xf] %v10485
        %10582 = vst [vmem:[%s325 + $0x58] sm:$0xf] %v10486
        %10583 = vst [vmem:[%s325 + $0x5c] sm:$0xf] %v10487
        %10584 = vst [vmem:[%s325 + $0x60] sm:$0xf] %v10488
        %10585 = vst [vmem:[%s325 + $0x64] sm:$0xf] %v10489
        %10586 = vst [vmem:[%s325 + $0x68] sm:$0xf] %v10490
        %10587 = vst [vmem:[%s325 + $0x6c] sm:$0xf] %v10491
        %10588 = vst [vmem:[%s325 + $0x70] sm:$0xf] %v10492
        %10589 = vst [vmem:[%s325 + $0x74] sm:$0xf] %v10493
        %10590 = vst [vmem:[%s325 + $0x78] sm:$0xf] %v10494
        %10591 = vst [vmem:[%s325 + $0x7c] sm:$0xf] %v10495
        %10592 = vst [vmem:[%s325 + $0x80] sm:$0xf] %v10496
        %10593 = vst [vmem:[%s325 + $0x84] sm:$0xf] %v10497
        %10594 = vst [vmem:[%s325 + $0x88] sm:$0xf] %v10498
        %10595 = vst [vmem:[%s325 + $0x8c] sm:$0xf] %v10499
        %10596 = vst [vmem:[%s325 + $0x90] sm:$0xf] %v10500
        %10597 = vst [vmem:[%s325 + $0x94] sm:$0xf] %v10501
        %10598 = vst [vmem:[%s325 + $0x98] sm:$0xf] %v10502
        %10599 = vst [vmem:[%s325 + $0x9c] sm:$0xf] %v10503
        %10600 = vst [vmem:[%s325 + $0xa0] sm:$0xf] %v10504
        %10601 = vst [vmem:[%s325 + $0xa4] sm:$0xf] %v10505
        %10602 = vst [vmem:[%s325 + $0xa8] sm:$0xf] %v10506
        %10603 = vst [vmem:[%s325 + $0xac] sm:$0xf] %v10507
        %10604 = vst [vmem:[%s325 + $0xb0] sm:$0xf] %v10508
        %10605 = vst [vmem:[%s325 + $0xb4] sm:$0xf] %v10509
        %10606 = vst [vmem:[%s325 + $0xb8] sm:$0xf] %v10510
        %10607 = vst [vmem:[%s325 + $0xbc] sm:$0xf] %v10511
        %s10608 = sand.u32 %s185, 1
        %s10609 = scalar_lea.sflag [#allocation7], %s10608
        %s10610 = sand.u32 %s185, 1
        %s10611 = smul.addr %s10610, 192
        %s10612 = scalar_lea.vmem [#allocation11], %s10611
        // Predicated region
        $region61: #{tpu_custom_call.1} parent=47 // pred_check
          %p10613 = pneg %p195
        $region62: #{tpu_custom_call.1} parent=47 // pred_check_branch
          %10615 = sbr.rel (%p10613) target = $region64
        $region63: #{tpu_custom_call.1} parent=47 // pred_region
          %s10617 = ssub.s32 3072, 3072
          %10618 = vsyncadd %s10609, %s10617
          %s10619 = smul.addr %s25, 48
          %s10620 = smul.addr %s10619, 64
          %s10621 = scalar_lea.hbm %s7, %s10620
          %s10622 = sshll.u32 %s10612, 4
          %s10623 = int_to_ptr.vmem [resolvable:$true] %s10622
          %10628 = dma.vmem_to_hbm [thread:$0]  %s10623, 3072, %s10621, %s10609, 64, 64, 4
        $region64: #{tpu_custom_call.1} parent=47 // pred_fallthru
          _
      $region48: #{tpu_custom_call.1} parent=5 // pred_fallthru
        _
      %p10629 = scmp.le.s32.totalorder 2, %s20
      // Predicated region
      $region65: #{tpu_custom_call.1} parent=5 // pred_check
        %p10630 = pneg %p10629
      $region66: #{tpu_custom_call.1} parent=5 // pred_check_branch
        %10632 = sbr.rel (%p10630) target = $region68
      $region67: #{tpu_custom_call.1} parent=5 // pred_region
        %s10633 = ssub.s32 %s20, 2
        // Predicated region
        $region69: #{tpu_custom_call.1} parent=67 // pred_check
          %p10634 = pneg %p201
        $region70: #{tpu_custom_call.1} parent=67 // pred_check_branch
          %10636 = sbr.rel (%p10634) target = $region72
        $region71: #{tpu_custom_call.1} parent=67 // pred_region
          %s10637 = sand.u32 %s186, 1
          %s10638 = scalar_lea.sflag [#allocation7], %s10637
          %s10639 = sand.u32 %s186, 1
          %s10640 = smul.addr %s10639, 192
          %s10641 = scalar_lea.vmem [#allocation11], %s10640
          %10642 = dma.done %s10638, 3072
        $region72: #{tpu_custom_call.1} parent=67 // pred_fallthru
          _
      $region68: #{tpu_custom_call.1} parent=5 // pred_fallthru
        _
    $region6: #{tpu_custom_call.1} parent=1 // loop_footer
      %s24 = sadd.s32 1, %s20
    $region7: #{tpu_custom_call.1} parent=1 // loop_footer_branch
      %19 = sbr.rel target = $region3
    $region8: #{tpu_custom_call.1} parent=1 // loop_exit
      _
    %10643 = vsyncpa [#allocation6], 1
    %s10644 = scalar_lea.sflag [#allocation6], 1
    %10645 = vsyncpa %s10644, 1
    %10646 = vsyncpa [#allocation9], 1
    %10647 = vsyncpa [#allocation7], 1
    %s10648 = scalar_lea.sflag [#allocation7], 1
    %10649 = vsyncpa %s10648, 1

</llo_original>
